<compile_context>
chip_gen: v7x
topology: tpu7x:2x2x1
jax: 0.10.0
libtpu: 0.0.40
codegen_flags: <defaults>
</compile_context>

<pallas_src>
import numpy as np

import jax
import jax.numpy as jnp
from jax.experimental import pallas as pl
from jax.experimental.pallas import tpu as pltpu

NUM_FEATURES = 3
NUM_ASSETS = 8
NUM_PERIODS = 50

LEAKY_SLOPE = 0.01  # F.leaky_relu default


def _round_up(x, m):
  return ((x + m - 1) // m) * m


# ----------------------------------------------------------------------------
# Trace-time constant selection tensors (numpy; tiny)
# ----------------------------------------------------------------------------
def _shift_sel(k, size_in, size_out, step=1):
  """S[d, i, o] = 1 iff i == step*o + d."""
  s = np.zeros((k, size_in, size_out), np.float32)
  for d in range(k):
    for o in range(size_out):
      i = step * o + d
      if 0 <= i < size_in:
        s[d, i, o] = 1.0
  return jnp.asarray(s)


def _gather_sel(k, size_in, size_out):
  """S[d, v, w] = 1 iff w == v - d  (and in range)."""
  s = np.zeros((k, size_in, size_out), np.float32)
  for d in range(k):
    for v in range(size_in):
      w = v - d
      if 0 <= w < size_out:
        s[d, v, w] = 1.0
  return jnp.asarray(s)


def _gather_sel_groups(n_groups, k, rpg, h_out):
  """S[g, d, r, h] = 1 iff h == g*rpg + r - d  (and in range)."""
  s = np.zeros((n_groups, k, rpg, h_out), np.float32)
  for g in range(n_groups):
    for d in range(k):
      for r in range(rpg):
        h = g * rpg + r - d
        if 0 <= h < h_out:
          s[g, d, r, h] = 1.0
  return jnp.asarray(s)


# ----------------------------------------------------------------------------
# Trace-time weight lowering (all tensors here are tiny: ~1.3 MB of bf16)
# ----------------------------------------------------------------------------
def _lower_params(params):
  f32, bf16 = jnp.float32, jnp.bfloat16
  w1 = params["w1"].astype(f32); b1 = params["b1"].astype(f32)
  w2 = params["w2"].astype(f32); b2 = params["b2"].astype(f32)
  w3 = params["w3"].astype(f32); b3 = params["b3"].astype(f32)
  wf1 = params["wf1"].astype(f32); bf1 = params["bf1"].astype(f32)
  wf2 = params["wf2"].astype(f32); bf2 = params["bf2"].astype(f32)
  wf3 = params["wf3"].astype(f32); bf3 = params["bf3"].astype(f32)

  c1o, cin, kh1, kw1 = w1.shape
  c2o, _, kh2, kw2 = w2.shape
  c3o, _, kh3, kw3 = w3.shape
  H, W = NUM_PERIODS, NUM_ASSETS
  h1, wo1 = H - kh1 + 1, W - kw1 + 1            # 46, 8
  h2, wo2 = h1 - kh2 + 1, wo1 - kw2 + 1         # 42, 6
  hp = h2 // 2                                  # 21 pooled rows
  h3, wo3 = hp - kh3 + 1, wo2 - kw3 + 1         # 17, 5
  nf1 = wf1.shape[1]
  assert wf1.shape[0] == c3o * h3 * wo3, "fc1.in_features mismatch"
  n_groups = 3
  rpg = hp // n_groups                          # 7 pooled rows per group
  assert hp == n_groups * rpg
  srows = 2 * (rpg - 1) + kh2                   # 17 c1 rows feed one group/parity

  # conv1 -> ONE Toeplitz matmul: [cin*H*W, h1*c1o*wo1] (output h-major).
  w1t = jnp.einsum("ocde,dih,evw->civhow", w1,
                   _shift_sel(kh1, H, h1), _shift_sel(kw1, W, wo1))
  w1t = w1t.reshape(cin * H * W, h1 * c1o * wo1)
  b1v = jnp.broadcast_to(b1[None, :, None], (h1, c1o, wo1)).reshape(1, -1)

  # conv2 for one (group, parity): [srows*c1o*wo1, rpg*c2o*wo2] (shared by all 6).
  w2g = jnp.einsum("ocde,dlr,eiv->lcirov", w2,
                   _shift_sel(kh2, srows, rpg, step=2),
                   _shift_sel(kw2, wo1, wo2))
  w2g = w2g.reshape(srows * c1o * wo1, rpg * c2o * wo2)
  b2v = jnp.broadcast_to(b2[None, :, None], (rpg, c2o, wo2)).reshape(1, -1)

  # conv3 + flatten + fc1 folded per group: [n_groups, rpg*c2o*wo2, nf1]
  wf1r = wf1.reshape(c3o, h3, wo3, nf1)
  g3 = jnp.einsum("ncde,gdrh,evw,nhwf->grcvf", w3,
                  _gather_sel_groups(n_groups, kh3, rpg, h3),
                  _gather_sel(kw3, wo2, wo3), wf1r)
  g3 = g3.reshape(n_groups, rpg * c2o * wo2, nf1)
  bf1e = (bf1 + jnp.einsum("n,nhwf->f", b3, wf1r))[None, :]   # conv3 bias folded

  nc = wf2.shape[1]                               # 32 (concat split point)
  low = dict(
      w1=w1t.astype(bf16), b1=b1v,
      w2=w2g.astype(bf16), b2=b2v,
      g3=g3.astype(bf16), bf1=bf1e,
      wf2=wf2, bf2=bf2[None, :],
      wf3a=wf3[:nc], wf3b=wf3[nc:], bf3=bf3[None, :])
  meta = dict(n_groups=n_groups,
              slice_w=srows * c1o * wo1,           # 272
              group_stride=2 * rpg * c1o * wo1,    # 224
              odd_off=c1o * wo1,                   # 16
              n_out=wf3.shape[1])
  return low, meta


# ----------------------------------------------------------------------------
# The single fused Pallas kernel (closure over static layout constants)
# ----------------------------------------------------------------------------
def _make_kernel(n_groups, group_stride, odd_off, slice_w):

  def kernel(x_ref, a1_ref, w1_ref, b1_ref, w2_ref, b2_ref,
             g3_ref, bf1_ref, wf2_ref, bf2_ref,
             wf3a_ref, wf3b_ref, bf3_ref, out_ref):
    f32, bf16 = jnp.float32, jnp.bfloat16

    def lrelu(v):
      return jnp.maximum(v, LEAKY_SLOPE * v)

    # ---- conv1: one Toeplitz matmul over the flattened (C,H,W) input -------
    x = x_ref[...].astype(bf16)                                    # [tb, 1200]
    c1 = jnp.dot(x, w1_ref[...], preferred_element_type=f32)       # [tb, 736]
    c1 = lrelu(c1 + b1_ref[...])
    # TODO(synk): Dropout2d(p=0.1) after conv1/conv3 is identity in eval mode.

    # ---- conv2 + leaky_relu + max_pool2d(2,1), 3 H-groups x even/odd rows --
    # lrelu/bias commute with the pairwise max, so pooling is one jnp.maximum.
    w2 = w2_ref[...]
    f1 = None
    for g in range(n_groups):
      base = g * group_stride
      even = jnp.dot(c1[:, base:base + slice_w].astype(bf16), w2,
                     preferred_element_type=f32)                   # [tb, 840]
      odd = jnp.dot(c1[:, base + odd_off:base + odd_off + slice_w].astype(bf16),
                    w2, preferred_element_type=f32)
      pooled = lrelu(jnp.maximum(even, odd) + b2_ref[...]).astype(bf16)
      # conv3 + flatten + fc1 folded into g3_ref[g]; accumulate over groups.
      part = jnp.dot(pooled, g3_ref[g], preferred_element_type=f32)  # [tb, 64]
      f1 = part if f1 is None else f1 + part
    f1 = lrelu(f1 + bf1_ref[...])

    # ---- fc2 ----------------------------------------------------------------
    f2 = lrelu(jnp.dot(f1, wf2_ref[...], preferred_element_type=f32)
               + bf2_ref[...])

    # ---- fc3 with torch.cat((fc2_out, action_1)) folded into a split matmul -
    act = (jnp.dot(f2, wf3a_ref[...], preferred_element_type=f32)
           + jnp.dot(a1_ref[...], wf3b_ref[...], preferred_element_type=f32)
           + bf3_ref[...])

    # ---- L2 normalize over the asset dim (rsqrt on EUP; eps guards zero rows)
    ss = jnp.sum(act * act, axis=-1, keepdims=True)
    out_ref[...] = (act * jax.lax.rsqrt(ss + 1e-12)).astype(out_ref.dtype)

  return kernel


# ----------------------------------------------------------------------------
# Wrapper: parameter lowering + single pallas_call
# ----------------------------------------------------------------------------
def actor_forward(params, state_value, action_1, *, batch_tile=512):
  """state_value: [B, NUM_FEATURES, 50, 8], action_1: [B, 1, 1, 8] -> [B, 8]."""
  f32 = jnp.float32
  B, C, H, W = state_value.shape

  low, meta = _lower_params(params)
  n_out = meta["n_out"]

  # Input plumbing: NO transpose -- the NCHW flatten is a free reshape; the
  # bf16 cast happens inside the kernel (keeps total HBM passes minimal).
  x2 = state_value.astype(f32).reshape(B, C * H * W)
  a1 = action_1.astype(f32).reshape(B, -1)

  # Batch tiling: multiple of 8 sublanes; cap at ceil(B/2) so the grid has at
  # least 2 steps when possible (v7x megacore: both TensorCores get work).
  tb = max(8, min(batch_tile, _round_up(-(-B // 2), 8)))
  bp = _round_up(B, tb)
  if bp != B:
    x2 = jnp.pad(x2, ((0, bp - B), (0, 0)))
    a1 = jnp.pad(a1, ((0, bp - B), (0, 0)))

  kernel = _make_kernel(meta["n_groups"], meta["group_stride"],
                        meta["odd_off"], meta["slice_w"])

  grid = (bp // tb,)
  full2 = lambda i: (0, 0)
  full3 = lambda i: (0, 0, 0)

  # Advisory cost estimate (per-sample ~4.9 MFLOP, 1 rsqrt, ~4.9 KB I/O).
  k1, n1 = low["w1"].shape
  k2, n2 = low["w2"].shape
  _, k3, nf1 = low["g3"].shape
  flops_per = (2 * k1 * n1 + meta["n_groups"] * 2 * 2 * k2 * n2
               + meta["n_groups"] * 2 * k3 * nf1
               + 2 * low["wf2"].shape[0] * low["wf2"].shape[1]
               + 2 * (low["wf3a"].shape[0] + low["wf3b"].shape[0]) * n_out)
  wbytes = sum(int(np.prod(v.shape)) * v.dtype.itemsize for v in low.values())
  cost = pl.CostEstimate(
      flops=int(bp) * int(flops_per),
      transcendentals=int(bp),
      bytes_accessed=int(bp) * (x2.shape[1] * 4 + a1.shape[1] * 4 + n_out * 4)
                     + int(wbytes))

  out = pl.pallas_call(
      kernel,
      out_shape=jax.ShapeDtypeStruct((bp, n_out), f32),
      grid=grid,
      in_specs=[
          pl.BlockSpec((tb, x2.shape[1]), lambda i: (i, 0)),
          pl.BlockSpec((tb, a1.shape[1]), lambda i: (i, 0)),
          pl.BlockSpec(low["w1"].shape, full2),
          pl.BlockSpec(low["b1"].shape, full2),
          pl.BlockSpec(low["w2"].shape, full2),
          pl.BlockSpec(low["b2"].shape, full2),
          pl.BlockSpec(low["g3"].shape, full3),
          pl.BlockSpec(low["bf1"].shape, full2),
          pl.BlockSpec(low["wf2"].shape, full2),
          pl.BlockSpec(low["bf2"].shape, full2),
          pl.BlockSpec(low["wf3a"].shape, full2),
          pl.BlockSpec(low["wf3b"].shape, full2),
          pl.BlockSpec(low["bf3"].shape, full2),
      ],
      out_specs=pl.BlockSpec((tb, n_out), lambda i: (i, 0)),
      compiler_params=pltpu.CompilerParams(
          dimension_semantics=("parallel",),
          vmem_limit_bytes=48 * 1024 * 1024),
      cost_estimate=cost,
  )(x2, a1, low["w1"], low["b1"], low["w2"], low["b2"], low["g3"],
    low["bf1"], low["wf2"], low["bf2"], low["wf3a"], low["wf3b"], low["bf3"])

  # TODO(synk): the PyTorch .squeeze() is intentionally dropped (fragile for
  # B==1); normalization is over dim=-1 either way so values are identical.
  return out[:B]


# ----------------------------------------------------------------------------
# Parameter construction (deterministic, PyTorch-default-style uniform init)
# ----------------------------------------------------------------------------
def _uniform(key, shape, fan_in):
  bound = 1.0 / jnp.sqrt(jnp.float32(fan_in))
  return jax.random.uniform(key, shape, jnp.float32, -bound, bound)


def init_params(key, conv1_out=2, conv2_out=20, conv3_out=1, fc1_out=64):
  ks = jax.random.split(key, 12)
  p = {}
  p["w1"] = _uniform(ks[0], (conv1_out, NUM_FEATURES, 5, 1), NUM_FEATURES * 5)
  p["b1"] = _uniform(ks[1], (conv1_out,), NUM_FEATURES * 5)
  p["w2"] = _uniform(ks[2], (conv2_out, conv1_out, 5, 3), conv1_out * 15)
  p["b2"] = _uniform(ks[3], (conv2_out,), conv1_out * 15)
  p["w3"] = _uniform(ks[4], (conv3_out, conv2_out, 5, 2), conv2_out * 10)
  p["b3"] = _uniform(ks[5], (conv3_out,), conv2_out * 10)
  fc1_in = conv3_out * 17 * 5
  p["wf1"] = _uniform(ks[6], (fc1_in, fc1_out), fc1_in)
  p["bf1"] = _uniform(ks[7], (fc1_out,), fc1_in)
  p["wf2"] = _uniform(ks[8], (fc1_out, 32), fc1_out)
  p["bf2"] = _uniform(ks[9], (32,), fc1_out)
  p["wf3"] = _uniform(ks[10], (40, NUM_ASSETS), 40)
  p["bf3"] = _uniform(ks[11], (NUM_ASSETS,), 40)
  return p


# ----------------------------------------------------------------------------
# Pure-JAX reference (for correctness check only)
# ----------------------------------------------------------------------------
def _reference_forward(params, state_value, action_1):
  hi = jax.lax.Precision.HIGHEST
  dn = ("NCHW", "OIHW", "NCHW")

  def lrelu(v):
    return jnp.where(v > 0, v, LEAKY_SLOPE * v)

  def conv(x, w, b):
    y = jax.lax.conv_general_dilated(x, w, (1, 1), "VALID",
                                     dimension_numbers=dn, precision=hi)
    return y + b[None, :, None, None]

  x = lrelu(conv(state_value, params["w1"], params["b1"]))
  x = lrelu(conv(x, params["w2"], params["b2"]))
  b_, c_, h_, w_ = x.shape
  x = x[:, :, :(h_ // 2) * 2, :].reshape(b_, c_, h_ // 2, 2, w_).max(axis=3)
  x = conv(x, params["w3"], params["b3"])
  x = x.reshape(b_, -1)
  x = lrelu(jnp.dot(x, params["wf1"], precision=hi) + params["bf1"])
  a = lrelu(jnp.dot(x, params["wf2"], precision=hi) + params["bf2"])
  a = jnp.concatenate([a, action_1.reshape(b_, -1)], axis=-1)
  a = jnp.dot(a, params["wf3"], precision=hi) + params["bf3"]
  return a / jnp.linalg.norm(a, axis=-1, keepdims=True)


# TODO(synk): training-mode Dropout2d, the declared-but-unused BatchNorm1d /
#             LayerNorm layers, and the `args.ab` debug print are not part of
#             this eval forward and are not implemented.

if __name__ == "__main__":
  key = jax.random.PRNGKey(0)
  kp, kx, ka = jax.random.split(key, 3)

  params = init_params(kp)

  B = 2
  state_value = jax.random.normal(
      kx, (B, NUM_FEATURES, NUM_PERIODS, NUM_ASSETS), dtype=jnp.float32)
  action_1 = jax.random.normal(ka, (B, 1, 1, NUM_ASSETS), dtype=jnp.float32)

  fwd = jax.jit(actor_forward)
  out = jax.block_until_ready(fwd(params, state_value, action_1))

  assert out.shape == (B, NUM_ASSETS), out.shape
  norms = jnp.linalg.norm(out, axis=-1)
  assert bool(jnp.all(jnp.abs(norms - 1.0) < 1e-3)), norms

  ref = _reference_forward(params, state_value, action_1)
  max_err = float(jnp.max(jnp.abs(out - ref)))
  # bf16 matmul operands (f32 accumulate) on the conv path; unit-norm output.
  assert max_err < 2e-2, f"mismatch vs pure-JAX reference: {max_err}"

  print("KERNEL_OK")
</pallas_src>

<mosaic_0001>
module attributes {stable_mosaic.version = 11 : i64} {
  func.func @kernel(%arg0: i32, %arg1: memref<8x1200xf32, #tpu.memory_space<vmem>>, %arg2: memref<8x8xf32, #tpu.memory_space<vmem>>, %arg3: memref<1200x736xbf16, #tpu.memory_space<vmem>>, %arg4: memref<1x736xf32, #tpu.memory_space<vmem>>, %arg5: memref<272x840xbf16, #tpu.memory_space<vmem>>, %arg6: memref<1x840xf32, #tpu.memory_space<vmem>>, %arg7: memref<3x840x64xbf16, #tpu.memory_space<vmem>>, %arg8: memref<1x64xf32, #tpu.memory_space<vmem>>, %arg9: memref<64x32xf32, #tpu.memory_space<vmem>>, %arg10: memref<1x32xf32, #tpu.memory_space<vmem>>, %arg11: memref<32x8xf32, #tpu.memory_space<vmem>>, %arg12: memref<8x8xf32, #tpu.memory_space<vmem>>, %arg13: memref<1x8xf32, #tpu.memory_space<vmem>>, %arg14: memref<8x8xf32, #tpu.memory_space<vmem>>) attributes {dimension_semantics = [#tpu.dimension_semantics<parallel>], iteration_bounds = array<i64: 1>, scalar_prefetch = 0 : i64, scratch_operands = 0 : i64, tpu.core_type = #tpu.core_type<tc>, window_params = [{transform_indices = @transform_0, window_bounds = array<i64: 8, 1200>}, {transform_indices = @transform_1, window_bounds = array<i64: 8, 8>}, {pipeline_mode = #tpu.pipeline_mode<synchronous>, transform_indices = @transform_2, window_bounds = array<i64: 1200, 736>}, {pipeline_mode = #tpu.pipeline_mode<synchronous>, transform_indices = @transform_3, window_bounds = array<i64: 1, 736>}, {pipeline_mode = #tpu.pipeline_mode<synchronous>, transform_indices = @transform_4, window_bounds = array<i64: 272, 840>}, {pipeline_mode = #tpu.pipeline_mode<synchronous>, transform_indices = @transform_5, window_bounds = array<i64: 1, 840>}, {pipeline_mode = #tpu.pipeline_mode<synchronous>, transform_indices = @transform_6, window_bounds = array<i64: 3, 840, 64>}, {pipeline_mode = #tpu.pipeline_mode<synchronous>, transform_indices = @transform_7, window_bounds = array<i64: 1, 64>}, {pipeline_mode = #tpu.pipeline_mode<synchronous>, transform_indices = @transform_8, window_bounds = array<i64: 64, 32>}, {pipeline_mode = #tpu.pipeline_mode<synchronous>, transform_indices = @transform_9, window_bounds = array<i64: 1, 32>}, {pipeline_mode = #tpu.pipeline_mode<synchronous>, transform_indices = @transform_10, window_bounds = array<i64: 32, 8>}, {pipeline_mode = #tpu.pipeline_mode<synchronous>, transform_indices = @transform_11, window_bounds = array<i64: 8, 8>}, {pipeline_mode = #tpu.pipeline_mode<synchronous>, transform_indices = @transform_12, window_bounds = array<i64: 1, 8>}, {transform_indices = @transform_13, window_bounds = array<i64: 8, 8>}]} {
    %c0 = arith.constant 0 : index
    %c0_0 = arith.constant 0 : index
    %0 = vector.load %arg1[%c0, %c0_0] : memref<8x1200xf32, #tpu.memory_space<vmem>>, vector<8x1200xf32>
    %1 = arith.truncf %0 : vector<8x1200xf32> to vector<8x1200xbf16>
    %c0_1 = arith.constant 0 : index
    %c0_2 = arith.constant 0 : index
    %2 = vector.load %arg3[%c0_1, %c0_2] : memref<1200x736xbf16, #tpu.memory_space<vmem>>, vector<1200x736xbf16>
    %cst = arith.constant dense<0.000000e+00> : vector<8x736xf32>
    %3 = tpu.matmul %1, %2, %cst {dimension_numbers = #tpu.dot_dimension_numbers<[1], [0], [0], [1], [0, 0, 1, 1], [], []>} : vector<8x1200xbf16>, vector<1200x736xbf16>, vector<8x736xf32> -> vector<8x736xf32>
    %c0_3 = arith.constant 0 : index
    %c0_4 = arith.constant 0 : index
    %4 = vector.load %arg4[%c0_3, %c0_4] : memref<1x736xf32, #tpu.memory_space<vmem>>, vector<1x736xf32>
    %5 = vector.broadcast %4 : vector<1x736xf32> to vector<8x736xf32>
    %6 = arith.addf %3, %5 : vector<8x736xf32>
    %cst_5 = arith.constant 0.00999999977 : f32
    %7 = vector.broadcast %cst_5 : f32 to vector<8x736xf32>
    %8 = arith.mulf %7, %6 : vector<8x736xf32>
    %9 = arith.maximumf %6, %8 : vector<8x736xf32>
    %c0_6 = arith.constant 0 : index
    %c0_7 = arith.constant 0 : index
    %10 = vector.load %arg5[%c0_6, %c0_7] : memref<272x840xbf16, #tpu.memory_space<vmem>>, vector<272x840xbf16>
    %11 = vector.extract_strided_slice %9 {offsets = [0, 0], sizes = [8, 272], strides = [1, 1]} : vector<8x736xf32> to vector<8x272xf32>
    %12 = arith.truncf %11 : vector<8x272xf32> to vector<8x272xbf16>
    %cst_8 = arith.constant dense<0.000000e+00> : vector<8x840xf32>
    %13 = tpu.matmul %12, %10, %cst_8 {dimension_numbers = #tpu.dot_dimension_numbers<[1], [0], [0], [1], [0, 0, 1, 1], [], []>} : vector<8x272xbf16>, vector<272x840xbf16>, vector<8x840xf32> -> vector<8x840xf32>
    %14 = vector.extract_strided_slice %9 {offsets = [0, 16], sizes = [8, 272], strides = [1, 1]} : vector<8x736xf32> to vector<8x272xf32>
    %15 = arith.truncf %14 : vector<8x272xf32> to vector<8x272xbf16>
    %cst_9 = arith.constant dense<0.000000e+00> : vector<8x840xf32>
    %16 = tpu.matmul %15, %10, %cst_9 {dimension_numbers = #tpu.dot_dimension_numbers<[1], [0], [0], [1], [0, 0, 1, 1], [], []>} : vector<8x272xbf16>, vector<272x840xbf16>, vector<8x840xf32> -> vector<8x840xf32>
    %17 = arith.maximumf %13, %16 : vector<8x840xf32>
    %c0_10 = arith.constant 0 : index
    %c0_11 = arith.constant 0 : index
    %18 = vector.load %arg6[%c0_10, %c0_11] : memref<1x840xf32, #tpu.memory_space<vmem>>, vector<1x840xf32>
    %19 = vector.broadcast %18 : vector<1x840xf32> to vector<8x840xf32>
    %20 = arith.addf %17, %19 : vector<8x840xf32>
    %cst_12 = arith.constant 0.00999999977 : f32
    %21 = vector.broadcast %cst_12 : f32 to vector<8x840xf32>
    %22 = arith.mulf %21, %20 : vector<8x840xf32>
    %23 = arith.maximumf %20, %22 : vector<8x840xf32>
    %24 = arith.truncf %23 : vector<8x840xf32> to vector<8x840xbf16>
    %c0_13 = arith.constant 0 : index
    %c0_14 = arith.constant 0 : index
    %c0_15 = arith.constant 0 : index
    %25 = vector.load %arg7[%c0_13, %c0_14, %c0_15] : memref<3x840x64xbf16, #tpu.memory_space<vmem>>, vector<1x840x64xbf16>
    %26 = vector.shape_cast %25 : vector<1x840x64xbf16> to vector<840x64xbf16>
    %cst_16 = arith.constant dense<0.000000e+00> : vector<8x64xf32>
    %27 = tpu.matmul %24, %26, %cst_16 {dimension_numbers = #tpu.dot_dimension_numbers<[1], [0], [0], [1], [0, 0, 1, 1], [], []>} : vector<8x840xbf16>, vector<840x64xbf16>, vector<8x64xf32> -> vector<8x64xf32>
    %28 = vector.extract_strided_slice %9 {offsets = [0, 224], sizes = [8, 272], strides = [1, 1]} : vector<8x736xf32> to vector<8x272xf32>
    %29 = arith.truncf %28 : vector<8x272xf32> to vector<8x272xbf16>
    %cst_17 = arith.constant dense<0.000000e+00> : vector<8x840xf32>
    %30 = tpu.matmul %29, %10, %cst_17 {dimension_numbers = #tpu.dot_dimension_numbers<[1], [0], [0], [1], [0, 0, 1, 1], [], []>} : vector<8x272xbf16>, vector<272x840xbf16>, vector<8x840xf32> -> vector<8x840xf32>
    %31 = vector.extract_strided_slice %9 {offsets = [0, 240], sizes = [8, 272], strides = [1, 1]} : vector<8x736xf32> to vector<8x272xf32>
    %32 = arith.truncf %31 : vector<8x272xf32> to vector<8x272xbf16>
    %cst_18 = arith.constant dense<0.000000e+00> : vector<8x840xf32>
    %33 = tpu.matmul %32, %10, %cst_18 {dimension_numbers = #tpu.dot_dimension_numbers<[1], [0], [0], [1], [0, 0, 1, 1], [], []>} : vector<8x272xbf16>, vector<272x840xbf16>, vector<8x840xf32> -> vector<8x840xf32>
    %34 = arith.maximumf %30, %33 : vector<8x840xf32>
    %c0_19 = arith.constant 0 : index
    %c0_20 = arith.constant 0 : index
    %35 = vector.load %arg6[%c0_19, %c0_20] : memref<1x840xf32, #tpu.memory_space<vmem>>, vector<1x840xf32>
    %36 = vector.broadcast %35 : vector<1x840xf32> to vector<8x840xf32>
    %37 = arith.addf %34, %36 : vector<8x840xf32>
    %cst_21 = arith.constant 0.00999999977 : f32
    %38 = vector.broadcast %cst_21 : f32 to vector<8x840xf32>
    %39 = arith.mulf %38, %37 : vector<8x840xf32>
    %40 = arith.maximumf %37, %39 : vector<8x840xf32>
    %41 = arith.truncf %40 : vector<8x840xf32> to vector<8x840xbf16>
    %c1 = arith.constant 1 : index
    %c0_22 = arith.constant 0 : index
    %c0_23 = arith.constant 0 : index
    %42 = vector.load %arg7[%c1, %c0_22, %c0_23] : memref<3x840x64xbf16, #tpu.memory_space<vmem>>, vector<1x840x64xbf16>
    %43 = vector.shape_cast %42 : vector<1x840x64xbf16> to vector<840x64xbf16>
    %cst_24 = arith.constant dense<0.000000e+00> : vector<8x64xf32>
    %44 = tpu.matmul %41, %43, %cst_24 {dimension_numbers = #tpu.dot_dimension_numbers<[1], [0], [0], [1], [0, 0, 1, 1], [], []>} : vector<8x840xbf16>, vector<840x64xbf16>, vector<8x64xf32> -> vector<8x64xf32>
    %45 = arith.addf %27, %44 : vector<8x64xf32>
    %46 = vector.extract_strided_slice %9 {offsets = [0, 448], sizes = [8, 272], strides = [1, 1]} : vector<8x736xf32> to vector<8x272xf32>
    %47 = arith.truncf %46 : vector<8x272xf32> to vector<8x272xbf16>
    %cst_25 = arith.constant dense<0.000000e+00> : vector<8x840xf32>
    %48 = tpu.matmul %47, %10, %cst_25 {dimension_numbers = #tpu.dot_dimension_numbers<[1], [0], [0], [1], [0, 0, 1, 1], [], []>} : vector<8x272xbf16>, vector<272x840xbf16>, vector<8x840xf32> -> vector<8x840xf32>
    %49 = vector.extract_strided_slice %9 {offsets = [0, 464], sizes = [8, 272], strides = [1, 1]} : vector<8x736xf32> to vector<8x272xf32>
    %50 = arith.truncf %49 : vector<8x272xf32> to vector<8x272xbf16>
    %cst_26 = arith.constant dense<0.000000e+00> : vector<8x840xf32>
    %51 = tpu.matmul %50, %10, %cst_26 {dimension_numbers = #tpu.dot_dimension_numbers<[1], [0], [0], [1], [0, 0, 1, 1], [], []>} : vector<8x272xbf16>, vector<272x840xbf16>, vector<8x840xf32> -> vector<8x840xf32>
    %52 = arith.maximumf %48, %51 : vector<8x840xf32>
    %c0_27 = arith.constant 0 : index
    %c0_28 = arith.constant 0 : index
    %53 = vector.load %arg6[%c0_27, %c0_28] : memref<1x840xf32, #tpu.memory_space<vmem>>, vector<1x840xf32>
    %54 = vector.broadcast %53 : vector<1x840xf32> to vector<8x840xf32>
    %55 = arith.addf %52, %54 : vector<8x840xf32>
    %cst_29 = arith.constant 0.00999999977 : f32
    %56 = vector.broadcast %cst_29 : f32 to vector<8x840xf32>
    %57 = arith.mulf %56, %55 : vector<8x840xf32>
    %58 = arith.maximumf %55, %57 : vector<8x840xf32>
    %59 = arith.truncf %58 : vector<8x840xf32> to vector<8x840xbf16>
    %c2 = arith.constant 2 : index
    %c0_30 = arith.constant 0 : index
    %c0_31 = arith.constant 0 : index
    %60 = vector.load %arg7[%c2, %c0_30, %c0_31] : memref<3x840x64xbf16, #tpu.memory_space<vmem>>, vector<1x840x64xbf16>
    %61 = vector.shape_cast %60 : vector<1x840x64xbf16> to vector<840x64xbf16>
    %cst_32 = arith.constant dense<0.000000e+00> : vector<8x64xf32>
    %62 = tpu.matmul %59, %61, %cst_32 {dimension_numbers = #tpu.dot_dimension_numbers<[1], [0], [0], [1], [0, 0, 1, 1], [], []>} : vector<8x840xbf16>, vector<840x64xbf16>, vector<8x64xf32> -> vector<8x64xf32>
    %63 = arith.addf %45, %62 : vector<8x64xf32>
    %c0_33 = arith.constant 0 : index
    %c0_34 = arith.constant 0 : index
    %64 = vector.load %arg8[%c0_33, %c0_34] : memref<1x64xf32, #tpu.memory_space<vmem>>, vector<1x64xf32>
    %65 = vector.broadcast %64 : vector<1x64xf32> to vector<8x64xf32>
    %66 = arith.addf %63, %65 : vector<8x64xf32>
    %cst_35 = arith.constant 0.00999999977 : f32
    %67 = vector.broadcast %cst_35 : f32 to vector<8x64xf32>
    %68 = arith.mulf %67, %66 : vector<8x64xf32>
    %69 = arith.maximumf %66, %68 : vector<8x64xf32>
    %c0_36 = arith.constant 0 : index
    %c0_37 = arith.constant 0 : index
    %70 = vector.load %arg9[%c0_36, %c0_37] : memref<64x32xf32, #tpu.memory_space<vmem>>, vector<64x32xf32>
    %cst_38 = arith.constant dense<0.000000e+00> : vector<8x32xf32>
    %71 = tpu.matmul %69, %70, %cst_38 {dimension_numbers = #tpu.dot_dimension_numbers<[1], [0], [0], [1], [0, 0, 1, 1], [], []>} : vector<8x64xf32>, vector<64x32xf32>, vector<8x32xf32> -> vector<8x32xf32>
    %c0_39 = arith.constant 0 : index
    %c0_40 = arith.constant 0 : index
    %72 = vector.load %arg10[%c0_39, %c0_40] : memref<1x32xf32, #tpu.memory_space<vmem>>, vector<1x32xf32>
    %73 = vector.broadcast %72 : vector<1x32xf32> to vector<8x32xf32>
    %74 = arith.addf %71, %73 : vector<8x32xf32>
    %cst_41 = arith.constant 0.00999999977 : f32
    %75 = vector.broadcast %cst_41 : f32 to vector<8x32xf32>
    %76 = arith.mulf %75, %74 : vector<8x32xf32>
    %77 = arith.maximumf %74, %76 : vector<8x32xf32>
    %c0_42 = arith.constant 0 : index
    %c0_43 = arith.constant 0 : index
    %78 = vector.load %arg11[%c0_42, %c0_43] : memref<32x8xf32, #tpu.memory_space<vmem>>, vector<32x8xf32>
    %cst_44 = arith.constant dense<0.000000e+00> : vector<8x8xf32>
    %79 = tpu.matmul %77, %78, %cst_44 {dimension_numbers = #tpu.dot_dimension_numbers<[1], [0], [0], [1], [0, 0, 1, 1], [], []>} : vector<8x32xf32>, vector<32x8xf32>, vector<8x8xf32> -> vector<8x8xf32>
    %c0_45 = arith.constant 0 : index
    %c0_46 = arith.constant 0 : index
    %80 = vector.load %arg2[%c0_45, %c0_46] : memref<8x8xf32, #tpu.memory_space<vmem>>, vector<8x8xf32>
    %c0_47 = arith.constant 0 : index
    %c0_48 = arith.constant 0 : index
    %81 = vector.load %arg12[%c0_47, %c0_48] : memref<8x8xf32, #tpu.memory_space<vmem>>, vector<8x8xf32>
    %cst_49 = arith.constant dense<0.000000e+00> : vector<8x8xf32>
    %82 = tpu.matmul %80, %81, %cst_49 {dimension_numbers = #tpu.dot_dimension_numbers<[1], [0], [0], [1], [0, 0, 1, 1], [], []>} : vector<8x8xf32>, vector<8x8xf32>, vector<8x8xf32> -> vector<8x8xf32>
    %83 = arith.addf %79, %82 : vector<8x8xf32>
    %c0_50 = arith.constant 0 : index
    %c0_51 = arith.constant 0 : index
    %84 = vector.load %arg13[%c0_50, %c0_51] : memref<1x8xf32, #tpu.memory_space<vmem>>, vector<1x8xf32>
    %85 = vector.broadcast %84 : vector<1x8xf32> to vector<8x8xf32>
    %86 = arith.addf %83, %85 : vector<8x8xf32>
    %87 = arith.mulf %86, %86 : vector<8x8xf32>
    %cst_52 = arith.constant dense<0.000000e+00> : vector<8xf32>
    %88 = vector.multi_reduction <add>, %87, %cst_52 [1] : vector<8x8xf32> to vector<8xf32>
    %89 = vector.shape_cast %88 : vector<8xf32> to vector<8x1xf32>
    %cst_53 = arith.constant 9.99999996E-13 : f32
    %90 = vector.broadcast %cst_53 : f32 to vector<8x1xf32>
    %91 = arith.addf %89, %90 : vector<8x1xf32>
    %92 = math.rsqrt %91 : vector<8x1xf32>
    %93 = vector.broadcast %92 : vector<8x1xf32> to vector<8x8xf32>
    %94 = arith.mulf %86, %93 : vector<8x8xf32>
    %c0_54 = arith.constant 0 : index
    %c0_55 = arith.constant 0 : index
    %95 = vector.load %arg14[%c0_54, %c0_55] : memref<8x8xf32, #tpu.memory_space<vmem>>, vector<8x8xf32>
    tpu.vector_store %arg14[%c0_54, %c0_55], %94 {strides = array<i32>} : memref<8x8xf32, #tpu.memory_space<vmem>>, vector<8x8xf32>,
    return
  }
  func.func @transform_0(%arg0: i32) -> (i32, i32) {
    %c0_i32 = arith.constant 0 : i32
    %c0_i32_0 = arith.constant 0 : i32
    return %arg0, %c0_i32 : i32, i32
  }
  func.func @transform_1(%arg0: i32) -> (i32, i32) {
    %c0_i32 = arith.constant 0 : i32
    %c0_i32_0 = arith.constant 0 : i32
    return %arg0, %c0_i32 : i32, i32
  }
  func.func @transform_2(%arg0: i32) -> (i32, i32) {
    %c0_i32 = arith.constant 0 : i32
    %c0_i32_0 = arith.constant 0 : i32
    %c0_i32_1 = arith.constant 0 : i32
    return %c0_i32, %c0_i32_0 : i32, i32
  }
  func.func @transform_3(%arg0: i32) -> (i32, i32) {
    %c0_i32 = arith.constant 0 : i32
    %c0_i32_0 = arith.constant 0 : i32
    %c0_i32_1 = arith.constant 0 : i32
    return %c0_i32, %c0_i32_0 : i32, i32
  }
  func.func @transform_4(%arg0: i32) -> (i32, i32) {
    %c0_i32 = arith.constant 0 : i32
    %c0_i32_0 = arith.constant 0 : i32
    %c0_i32_1 = arith.constant 0 : i32
    return %c0_i32, %c0_i32_0 : i32, i32
  }
  func.func @transform_5(%arg0: i32) -> (i32, i32) {
    %c0_i32 = arith.constant 0 : i32
    %c0_i32_0 = arith.constant 0 : i32
    %c0_i32_1 = arith.constant 0 : i32
    return %c0_i32, %c0_i32_0 : i32, i32
  }
  func.func @transform_6(%arg0: i32) -> (i32, i32, i32) {
    %c0_i32 = arith.constant 0 : i32
    %c0_i32_0 = arith.constant 0 : i32
    %c0_i32_1 = arith.constant 0 : i32
    %c0_i32_2 = arith.constant 0 : i32
    return %c0_i32, %c0_i32_0, %c0_i32_1 : i32, i32, i32
  }
  func.func @transform_7(%arg0: i32) -> (i32, i32) {
    %c0_i32 = arith.constant 0 : i32
    %c0_i32_0 = arith.constant 0 : i32
    %c0_i32_1 = arith.constant 0 : i32
    return %c0_i32, %c0_i32_0 : i32, i32
  }
  func.func @transform_8(%arg0: i32) -> (i32, i32) {
    %c0_i32 = arith.constant 0 : i32
    %c0_i32_0 = arith.constant 0 : i32
    %c0_i32_1 = arith.constant 0 : i32
    return %c0_i32, %c0_i32_0 : i32, i32
  }
  func.func @transform_9(%arg0: i32) -> (i32, i32) {
    %c0_i32 = arith.constant 0 : i32
    %c0_i32_0 = arith.constant 0 : i32
    %c0_i32_1 = arith.constant 0 : i32
    return %c0_i32, %c0_i32_0 : i32, i32
  }
  func.func @transform_10(%arg0: i32) -> (i32, i32) {
    %c0_i32 = arith.constant 0 : i32
    %c0_i32_0 = arith.constant 0 : i32
    %c0_i32_1 = arith.constant 0 : i32
    return %c0_i32, %c0_i32_0 : i32, i32
  }
  func.func @transform_11(%arg0: i32) -> (i32, i32) {
    %c0_i32 = arith.constant 0 : i32
    %c0_i32_0 = arith.constant 0 : i32
    %c0_i32_1 = arith.constant 0 : i32
    return %c0_i32, %c0_i32_0 : i32, i32
  }
  func.func @transform_12(%arg0: i32) -> (i32, i32) {
    %c0_i32 = arith.constant 0 : i32
    %c0_i32_0 = arith.constant 0 : i32
    %c0_i32_1 = arith.constant 0 : i32
    return %c0_i32, %c0_i32_0 : i32, i32
  }
  func.func @transform_13(%arg0: i32) -> (i32, i32) {
    %c0_i32 = arith.constant 0 : i32
    %c0_i32_0 = arith.constant 0 : i32
    return %arg0, %c0_i32 : i32, i32
  }
}

</mosaic_0001>

<llo_original>
// kernel: actor_forward.1
$region0: #{actor_forward.1}
  #allocation0 [shape = 'u32[]', space=smem, size = 0x4, offset = 0x4, fixed_abs, tag = 'smem constant byte address 0x4 - core index']
  #allocation1 [shape = 'u32[144,128]{1,0:T(1,128)}', space=vmem, size = 0x12000, scoped, tag = 'internal scratch']
  %s0 = inlined_call_operand.vmem [shape: f32[8,1200], index: 0, kind: input, shape index: {}]
  %s1 = inlined_call_operand.vmem [shape: f32[8,8], index: 1, kind: input, shape index: {}]
  %s2 = inlined_call_operand.vmem [shape: bf16[1200,736], index: 2, kind: input, shape index: {}]
  %s3 = inlined_call_operand.vmem [shape: f32[1,736], index: 3, kind: input, shape index: {}]
  %s4 = inlined_call_operand.vmem [shape: bf16[272,840], index: 4, kind: input, shape index: {}]
  %s5 = inlined_call_operand.vmem [shape: f32[1,840], index: 5, kind: input, shape index: {}]
  %s6 = inlined_call_operand.vmem [shape: bf16[3,840,64], index: 6, kind: input, shape index: {}]
  %s7 = inlined_call_operand.vmem [shape: f32[1,64], index: 7, kind: input, shape index: {}]
  %s8 = inlined_call_operand.vmem [shape: f32[64,32], index: 8, kind: input, shape index: {}]
  %s9 = inlined_call_operand.vmem [shape: f32[1,32], index: 9, kind: input, shape index: {}]
  %s10 = inlined_call_operand.vmem [shape: f32[32,8], index: 10, kind: input, shape index: {}]
  %s11 = inlined_call_operand.vmem [shape: f32[8,8], index: 11, kind: input, shape index: {}]
  %s12 = inlined_call_operand.vmem [shape: f32[1,8], index: 12, kind: input, shape index: {}]
  %s13 = inlined_call_operand.vmem [shape: f32[8,8], index: 13, kind: output, shape index: {}]
  %s14 = sld [smem:[#allocation0]]
  $region62: #{actor_forward.1} parent=0
    _
  %s16 = ssub.s32 1, %s14
  %s17 = scalar_select 0, %s16, %s14
  // Predicated region
  $region2: #{actor_forward.1} parent=0 // pred_check
    _
  $region3: #{actor_forward.1} parent=0 // pred_check_branch
    %19 = sbr.rel (0) target = $region5
  $region4: #{actor_forward.1} parent=0 // pred_region
    _
  $region5: #{actor_forward.1} parent=0 // pred_fallthru
    _
  // Predicated region
  $region6: #{actor_forward.1} parent=0 // pred_check
    _
  $region7: #{actor_forward.1} parent=0 // pred_check_branch
    %21 = sbr.rel (0) target = $region9
  $region8: #{actor_forward.1} parent=0 // pred_region
    _
  $region9: #{actor_forward.1} parent=0 // pred_fallthru
    _
  // Predicated region
  $region10: #{actor_forward.1} parent=0 // pred_check
    _
  $region11: #{actor_forward.1} parent=0 // pred_check_branch
    %23 = sbr.rel (0) target = $region13
  $region12: #{actor_forward.1} parent=0 // pred_region
    _
  $region13: #{actor_forward.1} parent=0 // pred_fallthru
    _
  // Predicated region
  $region14: #{actor_forward.1} parent=0 // pred_check
    _
  $region15: #{actor_forward.1} parent=0 // pred_check_branch
    %25 = sbr.rel (0) target = $region17
  $region16: #{actor_forward.1} parent=0 // pred_region
    _
  $region17: #{actor_forward.1} parent=0 // pred_fallthru
    _
  // Predicated region
  $region18: #{actor_forward.1} parent=0 // pred_check
    _
  $region19: #{actor_forward.1} parent=0 // pred_check_branch
    %27 = sbr.rel (0) target = $region21
  $region20: #{actor_forward.1} parent=0 // pred_region
    _
  $region21: #{actor_forward.1} parent=0 // pred_fallthru
    _
  // Predicated region
  $region22: #{actor_forward.1} parent=0 // pred_check
    _
  $region23: #{actor_forward.1} parent=0 // pred_check_branch
    %29 = sbr.rel (0) target = $region25
  $region24: #{actor_forward.1} parent=0 // pred_region
    _
  $region25: #{actor_forward.1} parent=0 // pred_fallthru
    _
  // Predicated region
  $region26: #{actor_forward.1} parent=0 // pred_check
    _
  $region27: #{actor_forward.1} parent=0 // pred_check_branch
    %31 = sbr.rel (0) target = $region29
  $region28: #{actor_forward.1} parent=0 // pred_region
    _
  $region29: #{actor_forward.1} parent=0 // pred_fallthru
    _
  // Predicated region
  $region30: #{actor_forward.1} parent=0 // pred_check
    _
  $region31: #{actor_forward.1} parent=0 // pred_check_branch
    %33 = sbr.rel (0) target = $region33
  $region32: #{actor_forward.1} parent=0 // pred_region
    _
  $region33: #{actor_forward.1} parent=0 // pred_fallthru
    _
  // Predicated region
  $region34: #{actor_forward.1} parent=0 // pred_check
    _
  $region35: #{actor_forward.1} parent=0 // pred_check_branch
    %35 = sbr.rel (0) target = $region37
  $region36: #{actor_forward.1} parent=0 // pred_region
    _
  $region37: #{actor_forward.1} parent=0 // pred_fallthru
    _
  // Predicated region
  $region38: #{actor_forward.1} parent=0 // pred_check
    _
  $region39: #{actor_forward.1} parent=0 // pred_check_branch
    %37 = sbr.rel (0) target = $region41
  $region40: #{actor_forward.1} parent=0 // pred_region
    _
  $region41: #{actor_forward.1} parent=0 // pred_fallthru
    _
  // Predicated region
  $region42: #{actor_forward.1} parent=0 // pred_check
    _
  $region43: #{actor_forward.1} parent=0 // pred_check_branch
    %39 = sbr.rel (0) target = $region45
  $region44: #{actor_forward.1} parent=0 // pred_region
    _
  $region45: #{actor_forward.1} parent=0 // pred_fallthru
    _
  // Predicated region
  $region46: #{actor_forward.1} parent=0 // pred_check
    _
  $region47: #{actor_forward.1} parent=0 // pred_check_branch
    %41 = sbr.rel (0) target = $region49
  $region48: #{actor_forward.1} parent=0 // pred_region
    _
  $region49: #{actor_forward.1} parent=0 // pred_fallthru
    _
  // Predicated region
  $region50: #{actor_forward.1} parent=0 // pred_check
    _
  $region51: #{actor_forward.1} parent=0 // pred_check_branch
    %43 = sbr.rel (0) target = $region53
  $region52: #{actor_forward.1} parent=0 // pred_region
    _
  $region53: #{actor_forward.1} parent=0 // pred_fallthru
    _
  %v45 = vld [vmem:[%s0] sm:$0xff]
  %v46 = vld [vmem:[%s0 + $0x8] sm:$0xff]
  %v47 = vld [vmem:[%s0 + $0x10] sm:$0xff]
  %v48 = vld [vmem:[%s0 + $0x18] sm:$0xff]
  %v49 = vld [vmem:[%s0 + $0x20] sm:$0xff]
  %v50 = vld [vmem:[%s0 + $0x28] sm:$0xff]
  %v51 = vld [vmem:[%s0 + $0x30] sm:$0xff]
  %v52 = vld [vmem:[%s0 + $0x38] sm:$0xff]
  %v53 = vld [vmem:[%s0 + $0x40] sm:$0xff]
  %v54 = vld [vmem:[%s0 + $0x48] sm:$0xff]
  %v55 = vpack.c.bf16 %v45, %v45
  %v56 = vpack.c.bf16 %v46, %v46
  %v57 = vpack.c.bf16 %v47, %v47
  %v58 = vpack.c.bf16 %v48, %v48
  %v59 = vpack.c.bf16 %v49, %v49
  %v60 = vpack.c.bf16 %v50, %v50
  %v61 = vpack.c.bf16 %v51, %v51
  %v62 = vpack.c.bf16 %v52, %v52
  %v63 = vpack.c.bf16 %v53, %v53
  %v64 = vpack.c.bf16 %v54, %v54
  %v65 = vld [vmem:[%s2] sm:$0xff]
  %v66 = vld [vmem:[%s2 + $0x8] sm:$0xff]
  %v67 = vld [vmem:[%s2 + $0x10] sm:$0xff]
  %v68 = vld [vmem:[%s2 + $0x18] sm:$0xff]
  %v69 = vld [vmem:[%s2 + $0x20] sm:$0xff]
  %v70 = vld [vmem:[%s2 + $0x28] sm:$0xff]
  %v71 = vld [vmem:[%s2 + $0x30] sm:$0xff]
  %v72 = vld [vmem:[%s2 + $0x38] sm:$0xff]
  %v73 = vld [vmem:[%s2 + $0x40] sm:$0xff]
  %v74 = vld [vmem:[%s2 + $0x48] sm:$0xff]
  %v75 = vld [vmem:[%s2 + $0x50] sm:$0xff]
  %v76 = vld [vmem:[%s2 + $0x58] sm:$0xff]
  %v77 = vld [vmem:[%s2 + $0x60] sm:$0xff]
  %v78 = vld [vmem:[%s2 + $0x68] sm:$0xff]
  %v79 = vld [vmem:[%s2 + $0x70] sm:$0xff]
  %v80 = vld [vmem:[%s2 + $0x78] sm:$0xff]
  %v81 = vld [vmem:[%s2 + $0x80] sm:$0xff]
  %v82 = vld [vmem:[%s2 + $0x88] sm:$0xff]
  %v83 = vld [vmem:[%s2 + $0x90] sm:$0xff]
  %v84 = vld [vmem:[%s2 + $0x98] sm:$0xff]
  %v85 = vld [vmem:[%s2 + $0xa0] sm:$0xff]
  %v86 = vld [vmem:[%s2 + $0xa8] sm:$0xff]
  %v87 = vld [vmem:[%s2 + $0xb0] sm:$0xff]
  %v88 = vld [vmem:[%s2 + $0xb8] sm:$0xff]
  %v89 = vld [vmem:[%s2 + $0xc0] sm:$0xff]
  %v90 = vld [vmem:[%s2 + $0xc8] sm:$0xff]
  %v91 = vld [vmem:[%s2 + $0xd0] sm:$0xff]
  %v92 = vld [vmem:[%s2 + $0xd8] sm:$0xff]
  %v93 = vld [vmem:[%s2 + $0xe0] sm:$0xff]
  %v94 = vld [vmem:[%s2 + $0xe8] sm:$0xff]
  %v95 = vld [vmem:[%s2 + $0xf0] sm:$0xff]
  %v96 = vld [vmem:[%s2 + $0xf8] sm:$0xff]
  %v97 = vld [vmem:[%s2 + $0x100] sm:$0xff]
  %v98 = vld [vmem:[%s2 + $0x108] sm:$0xff]
  %v99 = vld [vmem:[%s2 + $0x110] sm:$0xff]
  %v100 = vld [vmem:[%s2 + $0x118] sm:$0xff]
  %v101 = vld [vmem:[%s2 + $0x120] sm:$0xff]
  %v102 = vld [vmem:[%s2 + $0x128] sm:$0xff]
  %v103 = vld [vmem:[%s2 + $0x130] sm:$0xff]
  %v104 = vld [vmem:[%s2 + $0x138] sm:$0xff]
  %v105 = vld [vmem:[%s2 + $0x140] sm:$0xff]
  %v106 = vld [vmem:[%s2 + $0x148] sm:$0xff]
  %v107 = vld [vmem:[%s2 + $0x150] sm:$0xff]
  %v108 = vld [vmem:[%s2 + $0x158] sm:$0xff]
  %v109 = vld [vmem:[%s2 + $0x160] sm:$0xff]
  %v110 = vld [vmem:[%s2 + $0x168] sm:$0xff]
  %v111 = vld [vmem:[%s2 + $0x170] sm:$0xff]
  %v112 = vld [vmem:[%s2 + $0x178] sm:$0xff]
  %v113 = vld [vmem:[%s2 + $0x180] sm:$0xff]
  %v114 = vld [vmem:[%s2 + $0x188] sm:$0xff]
  %v115 = vld [vmem:[%s2 + $0x190] sm:$0xff]
  %v116 = vld [vmem:[%s2 + $0x198] sm:$0xff]
  %v117 = vld [vmem:[%s2 + $0x1a0] sm:$0xff]
  %v118 = vld [vmem:[%s2 + $0x1a8] sm:$0xff]
  %v119 = vld [vmem:[%s2 + $0x1b0] sm:$0xff]
  %v120 = vld [vmem:[%s2 + $0x1b8] sm:$0xff]
  %v121 = vld [vmem:[%s2 + $0x1c0] sm:$0xff]
  %v122 = vld [vmem:[%s2 + $0x1c8] sm:$0xff]
  %v123 = vld [vmem:[%s2 + $0x1d0] sm:$0xff]
  %v124 = vld [vmem:[%s2 + $0x1d8] sm:$0xff]
  %v125 = vld [vmem:[%s2 + $0x1e0] sm:$0xff]
  %v126 = vld [vmem:[%s2 + $0x1e8] sm:$0xff]
  %v127 = vld [vmem:[%s2 + $0x1f0] sm:$0xff]
  %v128 = vld [vmem:[%s2 + $0x1f8] sm:$0xff]
  %v129 = vld [vmem:[%s2 + $0x200] sm:$0xff]
  %v130 = vld [vmem:[%s2 + $0x208] sm:$0xff]
  %v131 = vld [vmem:[%s2 + $0x210] sm:$0xff]
  %v132 = vld [vmem:[%s2 + $0x218] sm:$0xff]
  %v133 = vld [vmem:[%s2 + $0x220] sm:$0xff]
  %v134 = vld [vmem:[%s2 + $0x228] sm:$0xff]
  %v135 = vld [vmem:[%s2 + $0x230] sm:$0xff]
  %v136 = vld [vmem:[%s2 + $0x238] sm:$0xff]
  %v137 = vld [vmem:[%s2 + $0x240] sm:$0xff]
  %v138 = vld [vmem:[%s2 + $0x248] sm:$0xff]
  %v139 = vld [vmem:[%s2 + $0x250] sm:$0xff]
  %v140 = vld [vmem:[%s2 + $0x258] sm:$0xff]
  %v141 = vld [vmem:[%s2 + $0x260] sm:$0xff]
  %v142 = vld [vmem:[%s2 + $0x268] sm:$0xff]
  %v143 = vld [vmem:[%s2 + $0x270] sm:$0xff]
  %v144 = vld [vmem:[%s2 + $0x278] sm:$0xff]
  %v145 = vld [vmem:[%s2 + $0x280] sm:$0xff]
  %v146 = vld [vmem:[%s2 + $0x288] sm:$0xff]
  %v147 = vld [vmem:[%s2 + $0x290] sm:$0xff]
  %v148 = vld [vmem:[%s2 + $0x298] sm:$0xff]
  %v149 = vld [vmem:[%s2 + $0x2a0] sm:$0xff]
  %v150 = vld [vmem:[%s2 + $0x2a8] sm:$0xff]
  %v151 = vld [vmem:[%s2 + $0x2b0] sm:$0xff]
  %v152 = vld [vmem:[%s2 + $0x2b8] sm:$0xff]
  %v153 = vld [vmem:[%s2 + $0x2c0] sm:$0xff]
  %v154 = vld [vmem:[%s2 + $0x2c8] sm:$0xff]
  %v155 = vld [vmem:[%s2 + $0x2d0] sm:$0xff]
  %v156 = vld [vmem:[%s2 + $0x2d8] sm:$0xff]
  %v157 = vld [vmem:[%s2 + $0x2e0] sm:$0xff]
  %v158 = vld [vmem:[%s2 + $0x2e8] sm:$0xff]
  %v159 = vld [vmem:[%s2 + $0x2f0] sm:$0xff]
  %v160 = vld [vmem:[%s2 + $0x2f8] sm:$0xff]
  %v161 = vld [vmem:[%s2 + $0x300] sm:$0xff]
  %v162 = vld [vmem:[%s2 + $0x308] sm:$0xff]
  %v163 = vld [vmem:[%s2 + $0x310] sm:$0xff]
  %v164 = vld [vmem:[%s2 + $0x318] sm:$0xff]
  %v165 = vld [vmem:[%s2 + $0x320] sm:$0xff]
  %v166 = vld [vmem:[%s2 + $0x328] sm:$0xff]
  %v167 = vld [vmem:[%s2 + $0x330] sm:$0xff]
  %v168 = vld [vmem:[%s2 + $0x338] sm:$0xff]
  %v169 = vld [vmem:[%s2 + $0x340] sm:$0xff]
  %v170 = vld [vmem:[%s2 + $0x348] sm:$0xff]
  %v171 = vld [vmem:[%s2 + $0x350] sm:$0xff]
  %v172 = vld [vmem:[%s2 + $0x358] sm:$0xff]
  %v173 = vld [vmem:[%s2 + $0x360] sm:$0xff]
  %v174 = vld [vmem:[%s2 + $0x368] sm:$0xff]
  %v175 = vld [vmem:[%s2 + $0x370] sm:$0xff]
  %v176 = vld [vmem:[%s2 + $0x378] sm:$0xff]
  %v177 = vld [vmem:[%s2 + $0x380] sm:$0xff]
  %v178 = vld [vmem:[%s2 + $0x388] sm:$0xff]
  %v179 = vld [vmem:[%s2 + $0x390] sm:$0xff]
  %v180 = vld [vmem:[%s2 + $0x398] sm:$0xff]
  %v181 = vld [vmem:[%s2 + $0x3a0] sm:$0xff]
  %v182 = vld [vmem:[%s2 + $0x3a8] sm:$0xff]
  %v183 = vld [vmem:[%s2 + $0x3b0] sm:$0xff]
  %v184 = vld [vmem:[%s2 + $0x3b8] sm:$0xff]
  %v185 = vld [vmem:[%s2 + $0x3c0] sm:$0xff]
  %v186 = vld [vmem:[%s2 + $0x3c8] sm:$0xff]
  %v187 = vld [vmem:[%s2 + $0x3d0] sm:$0xff]
  %v188 = vld [vmem:[%s2 + $0x3d8] sm:$0xff]
  %v189 = vld [vmem:[%s2 + $0x3e0] sm:$0xff]
  %v190 = vld [vmem:[%s2 + $0x3e8] sm:$0xff]
  %v191 = vld [vmem:[%s2 + $0x3f0] sm:$0xff]
  %v192 = vld [vmem:[%s2 + $0x3f8] sm:$0xff]
  %v193 = vld [vmem:[%s2 + $0x400] sm:$0xff]
  %v194 = vld [vmem:[%s2 + $0x408] sm:$0xff]
  %v195 = vld [vmem:[%s2 + $0x410] sm:$0xff]
  %v196 = vld [vmem:[%s2 + $0x418] sm:$0xff]
  %v197 = vld [vmem:[%s2 + $0x420] sm:$0xff]
  %v198 = vld [vmem:[%s2 + $0x428] sm:$0xff]
  %v199 = vld [vmem:[%s2 + $0x430] sm:$0xff]
  %v200 = vld [vmem:[%s2 + $0x438] sm:$0xff]
  %v201 = vld [vmem:[%s2 + $0x440] sm:$0xff]
  %v202 = vld [vmem:[%s2 + $0x448] sm:$0xff]
  %v203 = vld [vmem:[%s2 + $0x450] sm:$0xff]
  %v204 = vld [vmem:[%s2 + $0x458] sm:$0xff]
  %v205 = vld [vmem:[%s2 + $0x460] sm:$0xff]
  %v206 = vld [vmem:[%s2 + $0x468] sm:$0xff]
  %v207 = vld [vmem:[%s2 + $0x470] sm:$0xff]
  %v208 = vld [vmem:[%s2 + $0x478] sm:$0xff]
  %v209 = vld [vmem:[%s2 + $0x480] sm:$0xff]
  %v210 = vld [vmem:[%s2 + $0x488] sm:$0xff]
  %v211 = vld [vmem:[%s2 + $0x490] sm:$0xff]
  %v212 = vld [vmem:[%s2 + $0x498] sm:$0xff]
  %v213 = vld [vmem:[%s2 + $0x4a0] sm:$0xff]
  %v214 = vld [vmem:[%s2 + $0x4a8] sm:$0xff]
  %v215 = vld [vmem:[%s2 + $0x4b0] sm:$0xff]
  %v216 = vld [vmem:[%s2 + $0x4b8] sm:$0xff]
  %v217 = vld [vmem:[%s2 + $0x4c0] sm:$0xff]
  %v218 = vld [vmem:[%s2 + $0x4c8] sm:$0xff]
  %v219 = vld [vmem:[%s2 + $0x4d0] sm:$0xff]
  %v220 = vld [vmem:[%s2 + $0x4d8] sm:$0xff]
  %v221 = vld [vmem:[%s2 + $0x4e0] sm:$0xff]
  %v222 = vld [vmem:[%s2 + $0x4e8] sm:$0xff]
  %v223 = vld [vmem:[%s2 + $0x4f0] sm:$0xff]
  %v224 = vld [vmem:[%s2 + $0x4f8] sm:$0xff]
  %v225 = vld [vmem:[%s2 + $0x500] sm:$0xff]
  %v226 = vld [vmem:[%s2 + $0x508] sm:$0xff]
  %v227 = vld [vmem:[%s2 + $0x510] sm:$0xff]
  %v228 = vld [vmem:[%s2 + $0x518] sm:$0xff]
  %v229 = vld [vmem:[%s2 + $0x520] sm:$0xff]
  %v230 = vld [vmem:[%s2 + $0x528] sm:$0xff]
  %v231 = vld [vmem:[%s2 + $0x530] sm:$0xff]
  %v232 = vld [vmem:[%s2 + $0x538] sm:$0xff]
  %v233 = vld [vmem:[%s2 + $0x540] sm:$0xff]
  %v234 = vld [vmem:[%s2 + $0x548] sm:$0xff]
  %v235 = vld [vmem:[%s2 + $0x550] sm:$0xff]
  %v236 = vld [vmem:[%s2 + $0x558] sm:$0xff]
  %v237 = vld [vmem:[%s2 + $0x560] sm:$0xff]
  %v238 = vld [vmem:[%s2 + $0x568] sm:$0xff]
  %v239 = vld [vmem:[%s2 + $0x570] sm:$0xff]
  %v240 = vld [vmem:[%s2 + $0x578] sm:$0xff]
  %v241 = vld [vmem:[%s2 + $0x580] sm:$0xff]
  %v242 = vld [vmem:[%s2 + $0x588] sm:$0xff]
  %v243 = vld [vmem:[%s2 + $0x590] sm:$0xff]
  %v244 = vld [vmem:[%s2 + $0x598] sm:$0xff]
  %v245 = vld [vmem:[%s2 + $0x5a0] sm:$0xff]
  %v246 = vld [vmem:[%s2 + $0x5a8] sm:$0xff]
  %v247 = vld [vmem:[%s2 + $0x5b0] sm:$0xff]
  %v248 = vld [vmem:[%s2 + $0x5b8] sm:$0xff]
  %v249 = vld [vmem:[%s2 + $0x5c0] sm:$0xff]
  %v250 = vld [vmem:[%s2 + $0x5c8] sm:$0xff]
  %v251 = vld [vmem:[%s2 + $0x5d0] sm:$0xff]
  %v252 = vld [vmem:[%s2 + $0x5d8] sm:$0xff]
  %v253 = vld [vmem:[%s2 + $0x5e0] sm:$0xff]
  %v254 = vld [vmem:[%s2 + $0x5e8] sm:$0xff]
  %v255 = vld [vmem:[%s2 + $0x5f0] sm:$0xff]
  %v256 = vld [vmem:[%s2 + $0x5f8] sm:$0xff]
  %v257 = vld [vmem:[%s2 + $0x600] sm:$0xff]
  %v258 = vld [vmem:[%s2 + $0x608] sm:$0xff]
  %v259 = vld [vmem:[%s2 + $0x610] sm:$0xff]
  %v260 = vld [vmem:[%s2 + $0x618] sm:$0xff]
  %v261 = vld [vmem:[%s2 + $0x620] sm:$0xff]
  %v262 = vld [vmem:[%s2 + $0x628] sm:$0xff]
  %v263 = vld [vmem:[%s2 + $0x630] sm:$0xff]
  %v264 = vld [vmem:[%s2 + $0x638] sm:$0xff]
  %v265 = vld [vmem:[%s2 + $0x640] sm:$0xff]
  %v266 = vld [vmem:[%s2 + $0x648] sm:$0xff]
  %v267 = vld [vmem:[%s2 + $0x650] sm:$0xff]
  %v268 = vld [vmem:[%s2 + $0x658] sm:$0xff]
  %v269 = vld [vmem:[%s2 + $0x660] sm:$0xff]
  %v270 = vld [vmem:[%s2 + $0x668] sm:$0xff]
  %v271 = vld [vmem:[%s2 + $0x670] sm:$0xff]
  %v272 = vld [vmem:[%s2 + $0x678] sm:$0xff]
  %v273 = vld [vmem:[%s2 + $0x680] sm:$0xff]
  %v274 = vld [vmem:[%s2 + $0x688] sm:$0xff]
  %v275 = vld [vmem:[%s2 + $0x690] sm:$0xff]
  %v276 = vld [vmem:[%s2 + $0x698] sm:$0xff]
  %v277 = vld [vmem:[%s2 + $0x6a0] sm:$0xff]
  %v278 = vld [vmem:[%s2 + $0x6a8] sm:$0xff]
  %v279 = vld [vmem:[%s2 + $0x6b0] sm:$0xff]
  %v280 = vld [vmem:[%s2 + $0x6b8] sm:$0xff]
  %v281 = vld [vmem:[%s2 + $0x6c0] sm:$0xff]
  %v282 = vld [vmem:[%s2 + $0x6c8] sm:$0xff]
  %v283 = vld [vmem:[%s2 + $0x6d0] sm:$0xff]
  %v284 = vld [vmem:[%s2 + $0x6d8] sm:$0xff]
  %v285 = vld [vmem:[%s2 + $0x6e0] sm:$0xff]
  %v286 = vld [vmem:[%s2 + $0x6e8] sm:$0xff]
  %v287 = vld [vmem:[%s2 + $0x6f0] sm:$0xff]
  %v288 = vld [vmem:[%s2 + $0x6f8] sm:$0xff]
  %v289 = vld [vmem:[%s2 + $0x700] sm:$0xff]
  %v290 = vld [vmem:[%s2 + $0x708] sm:$0xff]
  %v291 = vld [vmem:[%s2 + $0x710] sm:$0xff]
  %v292 = vld [vmem:[%s2 + $0x718] sm:$0xff]
  %v293 = vld [vmem:[%s2 + $0x720] sm:$0xff]
  %v294 = vld [vmem:[%s2 + $0x728] sm:$0xff]
  %v295 = vld [vmem:[%s2 + $0x730] sm:$0xff]
  %v296 = vld [vmem:[%s2 + $0x738] sm:$0xff]
  %v297 = vld [vmem:[%s2 + $0x740] sm:$0xff]
  %v298 = vld [vmem:[%s2 + $0x748] sm:$0xff]
  %v299 = vld [vmem:[%s2 + $0x750] sm:$0xff]
  %v300 = vld [vmem:[%s2 + $0x758] sm:$0xff]
  %v301 = vld [vmem:[%s2 + $0x760] sm:$0xff]
  %v302 = vld [vmem:[%s2 + $0x768] sm:$0xff]
  %v303 = vld [vmem:[%s2 + $0x770] sm:$0xff]
  %v304 = vld [vmem:[%s2 + $0x778] sm:$0xff]
  %v305 = vld [vmem:[%s2 + $0x780] sm:$0xff]
  %v306 = vld [vmem:[%s2 + $0x788] sm:$0xff]
  %v307 = vld [vmem:[%s2 + $0x790] sm:$0xff]
  %v308 = vld [vmem:[%s2 + $0x798] sm:$0xff]
  %v309 = vld [vmem:[%s2 + $0x7a0] sm:$0xff]
  %v310 = vld [vmem:[%s2 + $0x7a8] sm:$0xff]
  %v311 = vld [vmem:[%s2 + $0x7b0] sm:$0xff]
  %v312 = vld [vmem:[%s2 + $0x7b8] sm:$0xff]
  %v313 = vld [vmem:[%s2 + $0x7c0] sm:$0xff]
  %v314 = vld [vmem:[%s2 + $0x7c8] sm:$0xff]
  %v315 = vld [vmem:[%s2 + $0x7d0] sm:$0xff]
  %v316 = vld [vmem:[%s2 + $0x7d8] sm:$0xff]
  %v317 = vld [vmem:[%s2 + $0x7e0] sm:$0xff]
  %v318 = vld [vmem:[%s2 + $0x7e8] sm:$0xff]
  %v319 = vld [vmem:[%s2 + $0x7f0] sm:$0xff]
  %v320 = vld [vmem:[%s2 + $0x7f8] sm:$0xff]
  %v321 = vld [vmem:[%s2 + $0x800] sm:$0xff]
  %v322 = vld [vmem:[%s2 + $0x808] sm:$0xff]
  %v323 = vld [vmem:[%s2 + $0x810] sm:$0xff]
  %v324 = vld [vmem:[%s2 + $0x818] sm:$0xff]
  %v325 = vld [vmem:[%s2 + $0x820] sm:$0xff]
  %v326 = vld [vmem:[%s2 + $0x828] sm:$0xff]
  %v327 = vld [vmem:[%s2 + $0x830] sm:$0xff]
  %v328 = vld [vmem:[%s2 + $0x838] sm:$0xff]
  %v329 = vld [vmem:[%s2 + $0x840] sm:$0xff]
  %v330 = vld [vmem:[%s2 + $0x848] sm:$0xff]
  %v331 = vld [vmem:[%s2 + $0x850] sm:$0xff]
  %v332 = vld [vmem:[%s2 + $0x858] sm:$0xff]
  %v333 = vld [vmem:[%s2 + $0x860] sm:$0xff]
  %v334 = vld [vmem:[%s2 + $0x868] sm:$0xff]
  %v335 = vld [vmem:[%s2 + $0x870] sm:$0xff]
  %v336 = vld [vmem:[%s2 + $0x878] sm:$0xff]
  %v337 = vld [vmem:[%s2 + $0x880] sm:$0xff]
  %v338 = vld [vmem:[%s2 + $0x888] sm:$0xff]
  %v339 = vld [vmem:[%s2 + $0x890] sm:$0xff]
  %v340 = vld [vmem:[%s2 + $0x898] sm:$0xff]
  %v341 = vld [vmem:[%s2 + $0x8a0] sm:$0xff]
  %v342 = vld [vmem:[%s2 + $0x8a8] sm:$0xff]
  %v343 = vld [vmem:[%s2 + $0x8b0] sm:$0xff]
  %v344 = vld [vmem:[%s2 + $0x8b8] sm:$0xff]
  %v345 = vld [vmem:[%s2 + $0x8c0] sm:$0xff]
  %v346 = vld [vmem:[%s2 + $0x8c8] sm:$0xff]
  %v347 = vld [vmem:[%s2 + $0x8d0] sm:$0xff]
  %v348 = vld [vmem:[%s2 + $0x8d8] sm:$0xff]
  %v349 = vld [vmem:[%s2 + $0x8e0] sm:$0xff]
  %v350 = vld [vmem:[%s2 + $0x8e8] sm:$0xff]
  %v351 = vld [vmem:[%s2 + $0x8f0] sm:$0xff]
  %v352 = vld [vmem:[%s2 + $0x8f8] sm:$0xff]
  %v353 = vld [vmem:[%s2 + $0x900] sm:$0xff]
  %v354 = vld [vmem:[%s2 + $0x908] sm:$0xff]
  %v355 = vld [vmem:[%s2 + $0x910] sm:$0xff]
  %v356 = vld [vmem:[%s2 + $0x918] sm:$0xff]
  %v357 = vld [vmem:[%s2 + $0x920] sm:$0xff]
  %v358 = vld [vmem:[%s2 + $0x928] sm:$0xff]
  %v359 = vld [vmem:[%s2 + $0x930] sm:$0xff]
  %v360 = vld [vmem:[%s2 + $0x938] sm:$0xff]
  %v361 = vld [vmem:[%s2 + $0x940] sm:$0xff]
  %v362 = vld [vmem:[%s2 + $0x948] sm:$0xff]
  %v363 = vld [vmem:[%s2 + $0x950] sm:$0xff]
  %v364 = vld [vmem:[%s2 + $0x958] sm:$0xff]
  %v365 = vld [vmem:[%s2 + $0x960] sm:$0xff]
  %v366 = vld [vmem:[%s2 + $0x968] sm:$0xff]
  %v367 = vld [vmem:[%s2 + $0x970] sm:$0xff]
  %v368 = vld [vmem:[%s2 + $0x978] sm:$0xff]
  %v369 = vld [vmem:[%s2 + $0x980] sm:$0xff]
  %v370 = vld [vmem:[%s2 + $0x988] sm:$0xff]
  %v371 = vld [vmem:[%s2 + $0x990] sm:$0xff]
  %v372 = vld [vmem:[%s2 + $0x998] sm:$0xff]
  %v373 = vld [vmem:[%s2 + $0x9a0] sm:$0xff]
  %v374 = vld [vmem:[%s2 + $0x9a8] sm:$0xff]
  %v375 = vld [vmem:[%s2 + $0x9b0] sm:$0xff]
  %v376 = vld [vmem:[%s2 + $0x9b8] sm:$0xff]
  %v377 = vld [vmem:[%s2 + $0x9c0] sm:$0xff]
  %v378 = vld [vmem:[%s2 + $0x9c8] sm:$0xff]
  %v379 = vld [vmem:[%s2 + $0x9d0] sm:$0xff]
  %v380 = vld [vmem:[%s2 + $0x9d8] sm:$0xff]
  %v381 = vld [vmem:[%s2 + $0x9e0] sm:$0xff]
  %v382 = vld [vmem:[%s2 + $0x9e8] sm:$0xff]
  %v383 = vld [vmem:[%s2 + $0x9f0] sm:$0xff]
  %v384 = vld [vmem:[%s2 + $0x9f8] sm:$0xff]
  %v385 = vld [vmem:[%s2 + $0xa00] sm:$0xff]
  %v386 = vld [vmem:[%s2 + $0xa08] sm:$0xff]
  %v387 = vld [vmem:[%s2 + $0xa10] sm:$0xff]
  %v388 = vld [vmem:[%s2 + $0xa18] sm:$0xff]
  %v389 = vld [vmem:[%s2 + $0xa20] sm:$0xff]
  %v390 = vld [vmem:[%s2 + $0xa28] sm:$0xff]
  %v391 = vld [vmem:[%s2 + $0xa30] sm:$0xff]
  %v392 = vld [vmem:[%s2 + $0xa38] sm:$0xff]
  %v393 = vld [vmem:[%s2 + $0xa40] sm:$0xff]
  %v394 = vld [vmem:[%s2 + $0xa48] sm:$0xff]
  %v395 = vld [vmem:[%s2 + $0xa50] sm:$0xff]
  %v396 = vld [vmem:[%s2 + $0xa58] sm:$0xff]
  %v397 = vld [vmem:[%s2 + $0xa60] sm:$0xff]
  %v398 = vld [vmem:[%s2 + $0xa68] sm:$0xff]
  %v399 = vld [vmem:[%s2 + $0xa70] sm:$0xff]
  %v400 = vld [vmem:[%s2 + $0xa78] sm:$0xff]
  %v401 = vld [vmem:[%s2 + $0xa80] sm:$0xff]
  %v402 = vld [vmem:[%s2 + $0xa88] sm:$0xff]
  %v403 = vld [vmem:[%s2 + $0xa90] sm:$0xff]
  %v404 = vld [vmem:[%s2 + $0xa98] sm:$0xff]
  %v405 = vld [vmem:[%s2 + $0xaa0] sm:$0xff]
  %v406 = vld [vmem:[%s2 + $0xaa8] sm:$0xff]
  %v407 = vld [vmem:[%s2 + $0xab0] sm:$0xff]
  %v408 = vld [vmem:[%s2 + $0xab8] sm:$0xff]
  %v409 = vld [vmem:[%s2 + $0xac0] sm:$0xff]
  %v410 = vld [vmem:[%s2 + $0xac8] sm:$0xff]
  %v411 = vld [vmem:[%s2 + $0xad0] sm:$0xff]
  %v412 = vld [vmem:[%s2 + $0xad8] sm:$0xff]
  %v413 = vld [vmem:[%s2 + $0xae0] sm:$0xff]
  %v414 = vld [vmem:[%s2 + $0xae8] sm:$0xff]
  %v415 = vld [vmem:[%s2 + $0xaf0] sm:$0xff]
  %v416 = vld [vmem:[%s2 + $0xaf8] sm:$0xff]
  %v417 = vld [vmem:[%s2 + $0xb00] sm:$0xff]
  %v418 = vld [vmem:[%s2 + $0xb08] sm:$0xff]
  %v419 = vld [vmem:[%s2 + $0xb10] sm:$0xff]
  %v420 = vld [vmem:[%s2 + $0xb18] sm:$0xff]
  %v421 = vld [vmem:[%s2 + $0xb20] sm:$0xff]
  %v422 = vld [vmem:[%s2 + $0xb28] sm:$0xff]
  %v423 = vld [vmem:[%s2 + $0xb30] sm:$0xff]
  %v424 = vld [vmem:[%s2 + $0xb38] sm:$0xff]
  %v425 = vld [vmem:[%s2 + $0xb40] sm:$0xff]
  %v426 = vld [vmem:[%s2 + $0xb48] sm:$0xff]
  %v427 = vld [vmem:[%s2 + $0xb50] sm:$0xff]
  %v428 = vld [vmem:[%s2 + $0xb58] sm:$0xff]
  %v429 = vld [vmem:[%s2 + $0xb60] sm:$0xff]
  %v430 = vld [vmem:[%s2 + $0xb68] sm:$0xff]
  %v431 = vld [vmem:[%s2 + $0xb70] sm:$0xff]
  %v432 = vld [vmem:[%s2 + $0xb78] sm:$0xff]
  %v433 = vld [vmem:[%s2 + $0xb80] sm:$0xff]
  %v434 = vld [vmem:[%s2 + $0xb88] sm:$0xff]
  %v435 = vld [vmem:[%s2 + $0xb90] sm:$0xff]
  %v436 = vld [vmem:[%s2 + $0xb98] sm:$0xff]
  %v437 = vld [vmem:[%s2 + $0xba0] sm:$0xff]
  %v438 = vld [vmem:[%s2 + $0xba8] sm:$0xff]
  %v439 = vld [vmem:[%s2 + $0xbb0] sm:$0xff]
  %v440 = vld [vmem:[%s2 + $0xbb8] sm:$0xff]
  %v441 = vld [vmem:[%s2 + $0xbc0] sm:$0xff]
  %v442 = vld [vmem:[%s2 + $0xbc8] sm:$0xff]
  %v443 = vld [vmem:[%s2 + $0xbd0] sm:$0xff]
  %v444 = vld [vmem:[%s2 + $0xbd8] sm:$0xff]
  %v445 = vld [vmem:[%s2 + $0xbe0] sm:$0xff]
  %v446 = vld [vmem:[%s2 + $0xbe8] sm:$0xff]
  %v447 = vld [vmem:[%s2 + $0xbf0] sm:$0xff]
  %v448 = vld [vmem:[%s2 + $0xbf8] sm:$0xff]
  %v449 = vld [vmem:[%s2 + $0xc00] sm:$0xff]
  %v450 = vld [vmem:[%s2 + $0xc08] sm:$0xff]
  %v451 = vld [vmem:[%s2 + $0xc10] sm:$0xff]
  %v452 = vld [vmem:[%s2 + $0xc18] sm:$0xff]
  %v453 = vld [vmem:[%s2 + $0xc20] sm:$0xff]
  %v454 = vld [vmem:[%s2 + $0xc28] sm:$0xff]
  %v455 = vld [vmem:[%s2 + $0xc30] sm:$0xff]
  %v456 = vld [vmem:[%s2 + $0xc38] sm:$0xff]
  %v457 = vld [vmem:[%s2 + $0xc40] sm:$0xff]
  %v458 = vld [vmem:[%s2 + $0xc48] sm:$0xff]
  %v459 = vld [vmem:[%s2 + $0xc50] sm:$0xff]
  %v460 = vld [vmem:[%s2 + $0xc58] sm:$0xff]
  %v461 = vld [vmem:[%s2 + $0xc60] sm:$0xff]
  %v462 = vld [vmem:[%s2 + $0xc68] sm:$0xff]
  %v463 = vld [vmem:[%s2 + $0xc70] sm:$0xff]
  %v464 = vld [vmem:[%s2 + $0xc78] sm:$0xff]
  %v465 = vld [vmem:[%s2 + $0xc80] sm:$0xff]
  %v466 = vld [vmem:[%s2 + $0xc88] sm:$0xff]
  %v467 = vld [vmem:[%s2 + $0xc90] sm:$0xff]
  %v468 = vld [vmem:[%s2 + $0xc98] sm:$0xff]
  %v469 = vld [vmem:[%s2 + $0xca0] sm:$0xff]
  %v470 = vld [vmem:[%s2 + $0xca8] sm:$0xff]
  %v471 = vld [vmem:[%s2 + $0xcb0] sm:$0xff]
  %v472 = vld [vmem:[%s2 + $0xcb8] sm:$0xff]
  %v473 = vld [vmem:[%s2 + $0xcc0] sm:$0xff]
  %v474 = vld [vmem:[%s2 + $0xcc8] sm:$0xff]
  %v475 = vld [vmem:[%s2 + $0xcd0] sm:$0xff]
  %v476 = vld [vmem:[%s2 + $0xcd8] sm:$0xff]
  %v477 = vld [vmem:[%s2 + $0xce0] sm:$0xff]
  %v478 = vld [vmem:[%s2 + $0xce8] sm:$0xff]
  %v479 = vld [vmem:[%s2 + $0xcf0] sm:$0xff]
  %v480 = vld [vmem:[%s2 + $0xcf8] sm:$0xff]
  %v481 = vld [vmem:[%s2 + $0xd00] sm:$0xff]
  %v482 = vld [vmem:[%s2 + $0xd08] sm:$0xff]
  %v483 = vld [vmem:[%s2 + $0xd10] sm:$0xff]
  %v484 = vld [vmem:[%s2 + $0xd18] sm:$0xff]
  %v485 = vld [vmem:[%s2 + $0xd20] sm:$0xff]
  %v486 = vld [vmem:[%s2 + $0xd28] sm:$0xff]
  %v487 = vld [vmem:[%s2 + $0xd30] sm:$0xff]
  %v488 = vld [vmem:[%s2 + $0xd38] sm:$0xff]
  %v489 = vld [vmem:[%s2 + $0xd40] sm:$0xff]
  %v490 = vld [vmem:[%s2 + $0xd48] sm:$0xff]
  %v491 = vld [vmem:[%s2 + $0xd50] sm:$0xff]
  %v492 = vld [vmem:[%s2 + $0xd58] sm:$0xff]
  %v493 = vld [vmem:[%s2 + $0xd60] sm:$0xff]
  %v494 = vld [vmem:[%s2 + $0xd68] sm:$0xff]
  %v495 = vld [vmem:[%s2 + $0xd70] sm:$0xff]
  %v496 = vld [vmem:[%s2 + $0xd78] sm:$0xff]
  %v497 = vld [vmem:[%s2 + $0xd80] sm:$0xff]
  %v498 = vld [vmem:[%s2 + $0xd88] sm:$0xff]
  %v499 = vld [vmem:[%s2 + $0xd90] sm:$0xff]
  %v500 = vld [vmem:[%s2 + $0xd98] sm:$0xff]
  %v501 = vld [vmem:[%s2 + $0xda0] sm:$0xff]
  %v502 = vld [vmem:[%s2 + $0xda8] sm:$0xff]
  %v503 = vld [vmem:[%s2 + $0xdb0] sm:$0xff]
  %v504 = vld [vmem:[%s2 + $0xdb8] sm:$0xff]
  %v505 = vld [vmem:[%s2 + $0xdc0] sm:$0xff]
  %v506 = vld [vmem:[%s2 + $0xdc8] sm:$0xff]
  %v507 = vld [vmem:[%s2 + $0xdd0] sm:$0xff]
  %v508 = vld [vmem:[%s2 + $0xdd8] sm:$0xff]
  %v509 = vld [vmem:[%s2 + $0xde0] sm:$0xff]
  %v510 = vld [vmem:[%s2 + $0xde8] sm:$0xff]
  %v511 = vld [vmem:[%s2 + $0xdf0] sm:$0xff]
  %v512 = vld [vmem:[%s2 + $0xdf8] sm:$0xff]
  %v513 = vld [vmem:[%s2 + $0xe00] sm:$0xff]
  %v514 = vld [vmem:[%s2 + $0xe08] sm:$0xff]
  %v515 = vld [vmem:[%s3] sm:$0x3f]
  %v517 = vlaneseq
  %v518 = vshrl.u32 %v517, 7
  %v519 = vsub.s32 0, %v518
  %v520 = vrot.slane %v515, %v519
  %v521 = vlaneseq
  %v522 = vshrl.u32 %v521, 7
  %v523 = vsub.s32 1, %v522
  %v524 = vrot.slane %v515, %v523
  %v525 = vlaneseq
  %v526 = vshrl.u32 %v525, 7
  %v527 = vsub.s32 2, %v526
  %v528 = vrot.slane %v515, %v527
  %v529 = vlaneseq
  %v530 = vshrl.u32 %v529, 7
  %v531 = vsub.s32 3, %v530
  %v532 = vrot.slane %v515, %v531
  %v533 = vlaneseq
  %v534 = vshrl.u32 %v533, 7
  %v535 = vsub.s32 4, %v534
  %v536 = vrot.slane %v515, %v535
  %v537 = vlaneseq
  %v538 = vshrl.u32 %v537, 7
  %v539 = vsub.s32 5, %v538
  %v540 = vrot.slane %v515, %v539
  %v997 = vunpack.c.l.b16 %v65
  %v998 = vunpack.c.h.b16 %v65
  %v999 = vunpack.c.l.b16 %v66
  %v1000 = vunpack.c.h.b16 %v66
  %v1001 = vunpack.c.l.b16 %v67
  %v1002 = vunpack.c.h.b16 %v67
  %v1003 = vunpack.c.l.b16 %v68
  %v1004 = vunpack.c.h.b16 %v68
  %v1005 = vunpack.c.l.b16 %v69
  %v1006 = vunpack.c.h.b16 %v69
  %v1007 = vunpack.c.l.b16 %v70
  %v1008 = vunpack.c.h.b16 %v70
  %v1009 = vunpack.c.l.b16 %v71
  %v1010 = vunpack.c.h.b16 %v71
  %v1011 = vunpack.c.l.b16 %v72
  %v1012 = vunpack.c.h.b16 %v72
  %v1013 = vunpack.c.l.b16 %v73
  %v1014 = vunpack.c.h.b16 %v73
  %v1015 = vunpack.c.l.b16 %v74
  %v1016 = vunpack.c.h.b16 %v74
  %v1017 = vunpack.c.l.b16 %v75
  %v1018 = vunpack.c.h.b16 %v75
  %v1019 = vunpack.c.l.b16 %v76
  %v1020 = vunpack.c.h.b16 %v76
  %v1021 = vunpack.c.l.b16 %v77
  %v1022 = vunpack.c.h.b16 %v77
  %v1023 = vunpack.c.l.b16 %v78
  %v1024 = vunpack.c.h.b16 %v78
  %v1025 = vunpack.c.l.b16 %v79
  %v1026 = vunpack.c.h.b16 %v79
  %v1027 = vunpack.c.l.b16 %v80
  %v1028 = vunpack.c.h.b16 %v80
  %v1029 = vunpack.c.l.b16 %v81
  %v1030 = vunpack.c.h.b16 %v81
  %v1031 = vunpack.c.l.b16 %v82
  %v1032 = vunpack.c.h.b16 %v82
  %v1033 = vunpack.c.l.b16 %v83
  %v1034 = vunpack.c.h.b16 %v83
  %v1035 = vunpack.c.l.b16 %v84
  %v1036 = vunpack.c.h.b16 %v84
  %v1037 = vunpack.c.l.b16 %v85
  %v1038 = vunpack.c.h.b16 %v85
  %v1039 = vunpack.c.l.b16 %v86
  %v1040 = vunpack.c.h.b16 %v86
  %v1041 = vunpack.c.l.b16 %v87
  %v1042 = vunpack.c.h.b16 %v87
  %v1043 = vunpack.c.l.b16 %v88
  %v1044 = vunpack.c.h.b16 %v88
  %v1045 = vunpack.c.l.b16 %v89
  %v1046 = vunpack.c.h.b16 %v89
  %v1047 = vunpack.c.l.b16 %v90
  %v1048 = vunpack.c.h.b16 %v90
  %v1049 = vunpack.c.l.b16 %v91
  %v1050 = vunpack.c.h.b16 %v91
  %v1051 = vunpack.c.l.b16 %v92
  %v1052 = vunpack.c.h.b16 %v92
  %v1053 = vunpack.c.l.b16 %v93
  %v1054 = vunpack.c.h.b16 %v93
  %v1055 = vunpack.c.l.b16 %v94
  %v1056 = vunpack.c.h.b16 %v94
  %v1057 = vunpack.c.l.b16 %v95
  %v1058 = vunpack.c.h.b16 %v95
  %v1059 = vunpack.c.l.b16 %v96
  %v1060 = vunpack.c.h.b16 %v96
  %v1061 = vunpack.c.l.b16 %v97
  %v1062 = vunpack.c.h.b16 %v97
  %v1063 = vunpack.c.l.b16 %v98
  %v1064 = vunpack.c.h.b16 %v98
  %v1065 = vunpack.c.l.b16 %v99
  %v1066 = vunpack.c.h.b16 %v99
  %v1067 = vunpack.c.l.b16 %v100
  %v1068 = vunpack.c.h.b16 %v100
  %v1069 = vunpack.c.l.b16 %v101
  %v1070 = vunpack.c.h.b16 %v101
  %v1071 = vunpack.c.l.b16 %v102
  %v1072 = vunpack.c.h.b16 %v102
  %v1073 = vunpack.c.l.b16 %v103
  %v1074 = vunpack.c.h.b16 %v103
  %v1075 = vunpack.c.l.b16 %v104
  %v1076 = vunpack.c.h.b16 %v104
  %v1077 = vunpack.c.l.b16 %v105
  %v1078 = vunpack.c.h.b16 %v105
  %v1079 = vunpack.c.l.b16 %v106
  %v1080 = vunpack.c.h.b16 %v106
  %v1081 = vunpack.c.l.b16 %v107
  %v1082 = vunpack.c.h.b16 %v107
  %v1083 = vunpack.c.l.b16 %v108
  %v1084 = vunpack.c.h.b16 %v108
  %v1085 = vunpack.c.l.b16 %v109
  %v1086 = vunpack.c.h.b16 %v109
  %v1087 = vunpack.c.l.b16 %v110
  %v1088 = vunpack.c.h.b16 %v110
  %v1089 = vunpack.c.l.b16 %v111
  %v1090 = vunpack.c.h.b16 %v111
  %v1091 = vunpack.c.l.b16 %v112
  %v1092 = vunpack.c.h.b16 %v112
  %v1093 = vunpack.c.l.b16 %v113
  %v1094 = vunpack.c.h.b16 %v113
  %v1095 = vunpack.c.l.b16 %v114
  %v1096 = vunpack.c.h.b16 %v114
  %v1097 = vunpack.c.l.b16 %v115
  %v1098 = vunpack.c.h.b16 %v115
  %v1099 = vunpack.c.l.b16 %v116
  %v1100 = vunpack.c.h.b16 %v116
  %v1101 = vunpack.c.l.b16 %v117
  %v1102 = vunpack.c.h.b16 %v117
  %v1103 = vunpack.c.l.b16 %v118
  %v1104 = vunpack.c.h.b16 %v118
  %v1105 = vunpack.c.l.b16 %v119
  %v1106 = vunpack.c.h.b16 %v119
  %v1107 = vunpack.c.l.b16 %v120
  %v1108 = vunpack.c.h.b16 %v120
  %v1109 = vunpack.c.l.b16 %v121
  %v1110 = vunpack.c.h.b16 %v121
  %v1111 = vunpack.c.l.b16 %v122
  %v1112 = vunpack.c.h.b16 %v122
  %v1113 = vunpack.c.l.b16 %v123
  %v1114 = vunpack.c.h.b16 %v123
  %v1115 = vunpack.c.l.b16 %v124
  %v1116 = vunpack.c.h.b16 %v124
  %v1117 = vunpack.c.l.b16 %v125
  %v1118 = vunpack.c.h.b16 %v125
  %v1119 = vunpack.c.l.b16 %v126
  %v1120 = vunpack.c.h.b16 %v126
  %v1121 = vunpack.c.l.b16 %v127
  %v1122 = vunpack.c.h.b16 %v127
  %v1123 = vunpack.c.l.b16 %v128
  %v1124 = vunpack.c.h.b16 %v128
  %v1125 = vunpack.c.l.b16 %v129
  %v1126 = vunpack.c.h.b16 %v129
  %v1127 = vunpack.c.l.b16 %v130
  %v1128 = vunpack.c.h.b16 %v130
  %v1129 = vunpack.c.l.b16 %v131
  %v1130 = vunpack.c.h.b16 %v131
  %v1131 = vunpack.c.l.b16 %v132
  %v1132 = vunpack.c.h.b16 %v132
  %v1133 = vunpack.c.l.b16 %v133
  %v1134 = vunpack.c.h.b16 %v133
  %v1135 = vunpack.c.l.b16 %v134
  %v1136 = vunpack.c.h.b16 %v134
  %v1137 = vunpack.c.l.b16 %v135
  %v1138 = vunpack.c.h.b16 %v135
  %v1139 = vunpack.c.l.b16 %v136
  %v1140 = vunpack.c.h.b16 %v136
  %v1141 = vunpack.c.l.b16 %v137
  %v1142 = vunpack.c.h.b16 %v137
  %v1143 = vunpack.c.l.b16 %v138
  %v1144 = vunpack.c.h.b16 %v138
  %v1145 = vunpack.c.l.b16 %v139
  %v1146 = vunpack.c.h.b16 %v139
  %v1147 = vunpack.c.l.b16 %v140
  %v1148 = vunpack.c.h.b16 %v140
  %v1149 = vunpack.c.l.b16 %v141
  %v1150 = vunpack.c.h.b16 %v141
  %v1151 = vunpack.c.l.b16 %v142
  %v1152 = vunpack.c.h.b16 %v142
  %v1153 = vunpack.c.l.b16 %v143
  %v1154 = vunpack.c.h.b16 %v143
  %v1155 = vunpack.c.l.b16 %v144
  %v1156 = vunpack.c.h.b16 %v144
  %v1157 = vunpack.c.l.b16 %v145
  %v1158 = vunpack.c.h.b16 %v145
  %v1159 = vunpack.c.l.b16 %v146
  %v1160 = vunpack.c.h.b16 %v146
  %v1161 = vunpack.c.l.b16 %v147
  %v1162 = vunpack.c.h.b16 %v147
  %v1163 = vunpack.c.l.b16 %v148
  %v1164 = vunpack.c.h.b16 %v148
  %v1165 = vunpack.c.l.b16 %v149
  %v1166 = vunpack.c.h.b16 %v149
  %v1167 = vunpack.c.l.b16 %v150
  %v1168 = vunpack.c.h.b16 %v150
  %v1169 = vunpack.c.l.b16 %v151
  %v1170 = vunpack.c.h.b16 %v151
  %v1171 = vunpack.c.l.b16 %v152
  %v1172 = vunpack.c.h.b16 %v152
  %v1173 = vunpack.c.l.b16 %v153
  %v1174 = vunpack.c.h.b16 %v153
  %v1175 = vunpack.c.l.b16 %v154
  %v1176 = vunpack.c.h.b16 %v154
  %v1177 = vunpack.c.l.b16 %v155
  %v1178 = vunpack.c.h.b16 %v155
  %v1179 = vunpack.c.l.b16 %v156
  %v1180 = vunpack.c.h.b16 %v156
  %v1181 = vunpack.c.l.b16 %v157
  %v1182 = vunpack.c.h.b16 %v157
  %v1183 = vunpack.c.l.b16 %v158
  %v1184 = vunpack.c.h.b16 %v158
  %v1185 = vunpack.c.l.b16 %v159
  %v1186 = vunpack.c.h.b16 %v159
  %v1187 = vunpack.c.l.b16 %v160
  %v1188 = vunpack.c.h.b16 %v160
  %v1189 = vunpack.c.l.b16 %v161
  %v1190 = vunpack.c.h.b16 %v161
  %v1191 = vunpack.c.l.b16 %v162
  %v1192 = vunpack.c.h.b16 %v162
  %v1193 = vunpack.c.l.b16 %v163
  %v1194 = vunpack.c.h.b16 %v163
  %v1195 = vunpack.c.l.b16 %v164
  %v1196 = vunpack.c.h.b16 %v164
  %v1197 = vunpack.c.l.b16 %v165
  %v1198 = vunpack.c.h.b16 %v165
  %v1199 = vunpack.c.l.b16 %v166
  %v1200 = vunpack.c.h.b16 %v166
  %v1201 = vunpack.c.l.b16 %v167
  %v1202 = vunpack.c.h.b16 %v167
  %v1203 = vunpack.c.l.b16 %v168
  %v1204 = vunpack.c.h.b16 %v168
  %v1205 = vunpack.c.l.b16 %v169
  %v1206 = vunpack.c.h.b16 %v169
  %v1207 = vunpack.c.l.b16 %v170
  %v1208 = vunpack.c.h.b16 %v170
  %v1209 = vunpack.c.l.b16 %v171
  %v1210 = vunpack.c.h.b16 %v171
  %v1211 = vunpack.c.l.b16 %v172
  %v1212 = vunpack.c.h.b16 %v172
  %v1213 = vunpack.c.l.b16 %v173
  %v1214 = vunpack.c.h.b16 %v173
  %v1215 = vunpack.c.l.b16 %v174
  %v1216 = vunpack.c.h.b16 %v174
  %v1217 = vunpack.c.l.b16 %v175
  %v1218 = vunpack.c.h.b16 %v175
  %v1219 = vunpack.c.l.b16 %v176
  %v1220 = vunpack.c.h.b16 %v176
  %v1221 = vunpack.c.l.b16 %v177
  %v1222 = vunpack.c.h.b16 %v177
  %v1223 = vunpack.c.l.b16 %v178
  %v1224 = vunpack.c.h.b16 %v178
  %v1225 = vunpack.c.l.b16 %v179
  %v1226 = vunpack.c.h.b16 %v179
  %v1227 = vunpack.c.l.b16 %v180
  %v1228 = vunpack.c.h.b16 %v180
  %v1229 = vunpack.c.l.b16 %v181
  %v1230 = vunpack.c.h.b16 %v181
  %v1231 = vunpack.c.l.b16 %v182
  %v1232 = vunpack.c.h.b16 %v182
  %v1233 = vunpack.c.l.b16 %v183
  %v1234 = vunpack.c.h.b16 %v183
  %v1235 = vunpack.c.l.b16 %v184
  %v1236 = vunpack.c.h.b16 %v184
  %v1237 = vunpack.c.l.b16 %v185
  %v1238 = vunpack.c.h.b16 %v185
  %v1239 = vunpack.c.l.b16 %v186
  %v1240 = vunpack.c.h.b16 %v186
  %v1241 = vunpack.c.l.b16 %v187
  %v1242 = vunpack.c.h.b16 %v187
  %v1243 = vunpack.c.l.b16 %v188
  %v1244 = vunpack.c.h.b16 %v188
  %v1245 = vunpack.c.l.b16 %v189
  %v1246 = vunpack.c.h.b16 %v189
  %v1247 = vunpack.c.l.b16 %v190
  %v1248 = vunpack.c.h.b16 %v190
  %v1249 = vunpack.c.l.b16 %v191
  %v1250 = vunpack.c.h.b16 %v191
  %v1251 = vunpack.c.l.b16 %v192
  %v1252 = vunpack.c.h.b16 %v192
  %v1253 = vunpack.c.l.b16 %v193
  %v1254 = vunpack.c.h.b16 %v193
  %v1255 = vunpack.c.l.b16 %v194
  %v1256 = vunpack.c.h.b16 %v194
  %v1257 = vunpack.c.l.b16 %v195
  %v1258 = vunpack.c.h.b16 %v195
  %v1259 = vunpack.c.l.b16 %v196
  %v1260 = vunpack.c.h.b16 %v196
  %v1261 = vunpack.c.l.b16 %v197
  %v1262 = vunpack.c.h.b16 %v197
  %v1263 = vunpack.c.l.b16 %v198
  %v1264 = vunpack.c.h.b16 %v198
  %v1265 = vunpack.c.l.b16 %v199
  %v1266 = vunpack.c.h.b16 %v199
  %v1267 = vunpack.c.l.b16 %v200
  %v1268 = vunpack.c.h.b16 %v200
  %v1269 = vunpack.c.l.b16 %v201
  %v1270 = vunpack.c.h.b16 %v201
  %v1271 = vunpack.c.l.b16 %v202
  %v1272 = vunpack.c.h.b16 %v202
  %v1273 = vunpack.c.l.b16 %v203
  %v1274 = vunpack.c.h.b16 %v203
  %v1275 = vunpack.c.l.b16 %v204
  %v1276 = vunpack.c.h.b16 %v204
  %v1277 = vunpack.c.l.b16 %v205
  %v1278 = vunpack.c.h.b16 %v205
  %v1279 = vunpack.c.l.b16 %v206
  %v1280 = vunpack.c.h.b16 %v206
  %v1281 = vunpack.c.l.b16 %v207
  %v1282 = vunpack.c.h.b16 %v207
  %v1283 = vunpack.c.l.b16 %v208
  %v1284 = vunpack.c.h.b16 %v208
  %v1285 = vunpack.c.l.b16 %v209
  %v1286 = vunpack.c.h.b16 %v209
  %v1287 = vunpack.c.l.b16 %v210
  %v1288 = vunpack.c.h.b16 %v210
  %v1289 = vunpack.c.l.b16 %v211
  %v1290 = vunpack.c.h.b16 %v211
  %v1291 = vunpack.c.l.b16 %v212
  %v1292 = vunpack.c.h.b16 %v212
  %v1293 = vunpack.c.l.b16 %v213
  %v1294 = vunpack.c.h.b16 %v213
  %v1295 = vunpack.c.l.b16 %v214
  %v1296 = vunpack.c.h.b16 %v214
  %v1297 = vunpack.c.l.b16 %v215
  %v1298 = vunpack.c.h.b16 %v215
  %v1299 = vunpack.c.l.b16 %v216
  %v1300 = vunpack.c.h.b16 %v216
  %v1301 = vunpack.c.l.b16 %v217
  %v1302 = vunpack.c.h.b16 %v217
  %v1303 = vunpack.c.l.b16 %v218
  %v1304 = vunpack.c.h.b16 %v218
  %v1305 = vunpack.c.l.b16 %v219
  %v1306 = vunpack.c.h.b16 %v219
  %v1307 = vunpack.c.l.b16 %v220
  %v1308 = vunpack.c.h.b16 %v220
  %v1309 = vunpack.c.l.b16 %v221
  %v1310 = vunpack.c.h.b16 %v221
  %v1311 = vunpack.c.l.b16 %v222
  %v1312 = vunpack.c.h.b16 %v222
  %v1313 = vunpack.c.l.b16 %v223
  %v1314 = vunpack.c.h.b16 %v223
  %v1315 = vunpack.c.l.b16 %v224
  %v1316 = vunpack.c.h.b16 %v224
  %v1317 = vunpack.c.l.b16 %v225
  %v1318 = vunpack.c.h.b16 %v225
  %v1319 = vunpack.c.l.b16 %v226
  %v1320 = vunpack.c.h.b16 %v226
  %v1321 = vunpack.c.l.b16 %v227
  %v1322 = vunpack.c.h.b16 %v227
  %v1323 = vunpack.c.l.b16 %v228
  %v1324 = vunpack.c.h.b16 %v228
  %v1325 = vunpack.c.l.b16 %v229
  %v1326 = vunpack.c.h.b16 %v229
  %v1327 = vunpack.c.l.b16 %v230
  %v1328 = vunpack.c.h.b16 %v230
  %v1329 = vunpack.c.l.b16 %v231
  %v1330 = vunpack.c.h.b16 %v231
  %v1331 = vunpack.c.l.b16 %v232
  %v1332 = vunpack.c.h.b16 %v232
  %v1333 = vunpack.c.l.b16 %v233
  %v1334 = vunpack.c.h.b16 %v233
  %v1335 = vunpack.c.l.b16 %v234
  %v1336 = vunpack.c.h.b16 %v234
  %v1337 = vunpack.c.l.b16 %v235
  %v1338 = vunpack.c.h.b16 %v235
  %v1339 = vunpack.c.l.b16 %v236
  %v1340 = vunpack.c.h.b16 %v236
  %v1341 = vunpack.c.l.b16 %v237
  %v1342 = vunpack.c.h.b16 %v237
  %v1343 = vunpack.c.l.b16 %v238
  %v1344 = vunpack.c.h.b16 %v238
  %v1345 = vunpack.c.l.b16 %v239
  %v1346 = vunpack.c.h.b16 %v239
  %v1347 = vunpack.c.l.b16 %v240
  %v1348 = vunpack.c.h.b16 %v240
  %v1349 = vunpack.c.l.b16 %v241
  %v1350 = vunpack.c.h.b16 %v241
  %v1351 = vunpack.c.l.b16 %v242
  %v1352 = vunpack.c.h.b16 %v242
  %v1353 = vunpack.c.l.b16 %v243
  %v1354 = vunpack.c.h.b16 %v243
  %v1355 = vunpack.c.l.b16 %v244
  %v1356 = vunpack.c.h.b16 %v244
  %v1357 = vunpack.c.l.b16 %v245
  %v1358 = vunpack.c.h.b16 %v245
  %v1359 = vunpack.c.l.b16 %v246
  %v1360 = vunpack.c.h.b16 %v246
  %v1361 = vunpack.c.l.b16 %v247
  %v1362 = vunpack.c.h.b16 %v247
  %v1363 = vunpack.c.l.b16 %v248
  %v1364 = vunpack.c.h.b16 %v248
  %v1365 = vunpack.c.l.b16 %v249
  %v1366 = vunpack.c.h.b16 %v249
  %v1367 = vunpack.c.l.b16 %v250
  %v1368 = vunpack.c.h.b16 %v250
  %v1369 = vunpack.c.l.b16 %v251
  %v1370 = vunpack.c.h.b16 %v251
  %v1371 = vunpack.c.l.b16 %v252
  %v1372 = vunpack.c.h.b16 %v252
  %v1373 = vunpack.c.l.b16 %v253
  %v1374 = vunpack.c.h.b16 %v253
  %v1375 = vunpack.c.l.b16 %v254
  %v1376 = vunpack.c.h.b16 %v254
  %v1377 = vunpack.c.l.b16 %v255
  %v1378 = vunpack.c.h.b16 %v255
  %v1379 = vunpack.c.l.b16 %v256
  %v1380 = vunpack.c.h.b16 %v256
  %v1381 = vunpack.c.l.b16 %v257
  %v1382 = vunpack.c.h.b16 %v257
  %v1383 = vunpack.c.l.b16 %v258
  %v1384 = vunpack.c.h.b16 %v258
  %v1385 = vunpack.c.l.b16 %v259
  %v1386 = vunpack.c.h.b16 %v259
  %v1387 = vunpack.c.l.b16 %v260
  %v1388 = vunpack.c.h.b16 %v260
  %v1389 = vunpack.c.l.b16 %v261
  %v1390 = vunpack.c.h.b16 %v261
  %v1391 = vunpack.c.l.b16 %v262
  %v1392 = vunpack.c.h.b16 %v262
  %v1393 = vunpack.c.l.b16 %v263
  %v1394 = vunpack.c.h.b16 %v263
  %v1395 = vunpack.c.l.b16 %v264
  %v1396 = vunpack.c.h.b16 %v264
  %v1397 = vunpack.c.l.b16 %v265
  %v1398 = vunpack.c.h.b16 %v265
  %v1399 = vunpack.c.l.b16 %v266
  %v1400 = vunpack.c.h.b16 %v266
  %v1401 = vunpack.c.l.b16 %v267
  %v1402 = vunpack.c.h.b16 %v267
  %v1403 = vunpack.c.l.b16 %v268
  %v1404 = vunpack.c.h.b16 %v268
  %v1405 = vunpack.c.l.b16 %v269
  %v1406 = vunpack.c.h.b16 %v269
  %v1407 = vunpack.c.l.b16 %v270
  %v1408 = vunpack.c.h.b16 %v270
  %v1409 = vunpack.c.l.b16 %v271
  %v1410 = vunpack.c.h.b16 %v271
  %v1411 = vunpack.c.l.b16 %v272
  %v1412 = vunpack.c.h.b16 %v272
  %v1413 = vunpack.c.l.b16 %v273
  %v1414 = vunpack.c.h.b16 %v273
  %v1415 = vunpack.c.l.b16 %v274
  %v1416 = vunpack.c.h.b16 %v274
  %v1417 = vunpack.c.l.b16 %v275
  %v1418 = vunpack.c.h.b16 %v275
  %v1419 = vunpack.c.l.b16 %v276
  %v1420 = vunpack.c.h.b16 %v276
  %v1421 = vunpack.c.l.b16 %v277
  %v1422 = vunpack.c.h.b16 %v277
  %v1423 = vunpack.c.l.b16 %v278
  %v1424 = vunpack.c.h.b16 %v278
  %v1425 = vunpack.c.l.b16 %v279
  %v1426 = vunpack.c.h.b16 %v279
  %v1427 = vunpack.c.l.b16 %v280
  %v1428 = vunpack.c.h.b16 %v280
  %v1429 = vunpack.c.l.b16 %v281
  %v1430 = vunpack.c.h.b16 %v281
  %v1431 = vunpack.c.l.b16 %v282
  %v1432 = vunpack.c.h.b16 %v282
  %v1433 = vunpack.c.l.b16 %v283
  %v1434 = vunpack.c.h.b16 %v283
  %v1435 = vunpack.c.l.b16 %v284
  %v1436 = vunpack.c.h.b16 %v284
  %v1437 = vunpack.c.l.b16 %v285
  %v1438 = vunpack.c.h.b16 %v285
  %v1439 = vunpack.c.l.b16 %v286
  %v1440 = vunpack.c.h.b16 %v286
  %v1441 = vunpack.c.l.b16 %v287
  %v1442 = vunpack.c.h.b16 %v287
  %v1443 = vunpack.c.l.b16 %v288
  %v1444 = vunpack.c.h.b16 %v288
  %v1445 = vunpack.c.l.b16 %v289
  %v1446 = vunpack.c.h.b16 %v289
  %v1447 = vunpack.c.l.b16 %v290
  %v1448 = vunpack.c.h.b16 %v290
  %v1449 = vunpack.c.l.b16 %v291
  %v1450 = vunpack.c.h.b16 %v291
  %v1451 = vunpack.c.l.b16 %v292
  %v1452 = vunpack.c.h.b16 %v292
  %v1453 = vunpack.c.l.b16 %v293
  %v1454 = vunpack.c.h.b16 %v293
  %v1455 = vunpack.c.l.b16 %v294
  %v1456 = vunpack.c.h.b16 %v294
  %v1457 = vunpack.c.l.b16 %v295
  %v1458 = vunpack.c.h.b16 %v295
  %v1459 = vunpack.c.l.b16 %v296
  %v1460 = vunpack.c.h.b16 %v296
  %v1461 = vunpack.c.l.b16 %v297
  %v1462 = vunpack.c.h.b16 %v297
  %v1463 = vunpack.c.l.b16 %v298
  %v1464 = vunpack.c.h.b16 %v298
  %v1465 = vunpack.c.l.b16 %v299
  %v1466 = vunpack.c.h.b16 %v299
  %v1467 = vunpack.c.l.b16 %v300
  %v1468 = vunpack.c.h.b16 %v300
  %v1469 = vunpack.c.l.b16 %v301
  %v1470 = vunpack.c.h.b16 %v301
  %v1471 = vunpack.c.l.b16 %v302
  %v1472 = vunpack.c.h.b16 %v302
  %v1473 = vunpack.c.l.b16 %v303
  %v1474 = vunpack.c.h.b16 %v303
  %v1475 = vunpack.c.l.b16 %v304
  %v1476 = vunpack.c.h.b16 %v304
  %v1477 = vunpack.c.l.b16 %v305
  %v1478 = vunpack.c.h.b16 %v305
  %v1479 = vunpack.c.l.b16 %v306
  %v1480 = vunpack.c.h.b16 %v306
  %v1481 = vunpack.c.l.b16 %v307
  %v1482 = vunpack.c.h.b16 %v307
  %v1483 = vunpack.c.l.b16 %v308
  %v1484 = vunpack.c.h.b16 %v308
  %v1485 = vunpack.c.l.b16 %v309
  %v1486 = vunpack.c.h.b16 %v309
  %v1487 = vunpack.c.l.b16 %v310
  %v1488 = vunpack.c.h.b16 %v310
  %v1489 = vunpack.c.l.b16 %v311
  %v1490 = vunpack.c.h.b16 %v311
  %v1491 = vunpack.c.l.b16 %v312
  %v1492 = vunpack.c.h.b16 %v312
  %v1493 = vunpack.c.l.b16 %v313
  %v1494 = vunpack.c.h.b16 %v313
  %v1495 = vunpack.c.l.b16 %v314
  %v1496 = vunpack.c.h.b16 %v314
  %v1497 = vunpack.c.l.b16 %v315
  %v1498 = vunpack.c.h.b16 %v315
  %v1499 = vunpack.c.l.b16 %v316
  %v1500 = vunpack.c.h.b16 %v316
  %v1501 = vunpack.c.l.b16 %v317
  %v1502 = vunpack.c.h.b16 %v317
  %v1503 = vunpack.c.l.b16 %v318
  %v1504 = vunpack.c.h.b16 %v318
  %v1505 = vunpack.c.l.b16 %v319
  %v1506 = vunpack.c.h.b16 %v319
  %v1507 = vunpack.c.l.b16 %v320
  %v1508 = vunpack.c.h.b16 %v320
  %v1509 = vunpack.c.l.b16 %v321
  %v1510 = vunpack.c.h.b16 %v321
  %v1511 = vunpack.c.l.b16 %v322
  %v1512 = vunpack.c.h.b16 %v322
  %v1513 = vunpack.c.l.b16 %v323
  %v1514 = vunpack.c.h.b16 %v323
  %v1515 = vunpack.c.l.b16 %v324
  %v1516 = vunpack.c.h.b16 %v324
  %v1517 = vunpack.c.l.b16 %v325
  %v1518 = vunpack.c.h.b16 %v325
  %v1519 = vunpack.c.l.b16 %v326
  %v1520 = vunpack.c.h.b16 %v326
  %v1521 = vunpack.c.l.b16 %v327
  %v1522 = vunpack.c.h.b16 %v327
  %v1523 = vunpack.c.l.b16 %v328
  %v1524 = vunpack.c.h.b16 %v328
  %v1525 = vunpack.c.l.b16 %v329
  %v1526 = vunpack.c.h.b16 %v329
  %v1527 = vunpack.c.l.b16 %v330
  %v1528 = vunpack.c.h.b16 %v330
  %v1529 = vunpack.c.l.b16 %v331
  %v1530 = vunpack.c.h.b16 %v331
  %v1531 = vunpack.c.l.b16 %v332
  %v1532 = vunpack.c.h.b16 %v332
  %v1533 = vunpack.c.l.b16 %v333
  %v1534 = vunpack.c.h.b16 %v333
  %v1535 = vunpack.c.l.b16 %v334
  %v1536 = vunpack.c.h.b16 %v334
  %v1537 = vunpack.c.l.b16 %v335
  %v1538 = vunpack.c.h.b16 %v335
  %v1539 = vunpack.c.l.b16 %v336
  %v1540 = vunpack.c.h.b16 %v336
  %v1541 = vunpack.c.l.b16 %v337
  %v1542 = vunpack.c.h.b16 %v337
  %v1543 = vunpack.c.l.b16 %v338
  %v1544 = vunpack.c.h.b16 %v338
  %v1545 = vunpack.c.l.b16 %v339
  %v1546 = vunpack.c.h.b16 %v339
  %v1547 = vunpack.c.l.b16 %v340
  %v1548 = vunpack.c.h.b16 %v340
  %v1549 = vunpack.c.l.b16 %v341
  %v1550 = vunpack.c.h.b16 %v341
  %v1551 = vunpack.c.l.b16 %v342
  %v1552 = vunpack.c.h.b16 %v342
  %v1553 = vunpack.c.l.b16 %v343
  %v1554 = vunpack.c.h.b16 %v343
  %v1555 = vunpack.c.l.b16 %v344
  %v1556 = vunpack.c.h.b16 %v344
  %v1557 = vunpack.c.l.b16 %v345
  %v1558 = vunpack.c.h.b16 %v345
  %v1559 = vunpack.c.l.b16 %v346
  %v1560 = vunpack.c.h.b16 %v346
  %v1561 = vunpack.c.l.b16 %v347
  %v1562 = vunpack.c.h.b16 %v347
  %v1563 = vunpack.c.l.b16 %v348
  %v1564 = vunpack.c.h.b16 %v348
  %v1565 = vunpack.c.l.b16 %v349
  %v1566 = vunpack.c.h.b16 %v349
  %v1567 = vunpack.c.l.b16 %v350
  %v1568 = vunpack.c.h.b16 %v350
  %v1569 = vunpack.c.l.b16 %v351
  %v1570 = vunpack.c.h.b16 %v351
  %v1571 = vunpack.c.l.b16 %v352
  %v1572 = vunpack.c.h.b16 %v352
  %v1573 = vunpack.c.l.b16 %v353
  %v1574 = vunpack.c.h.b16 %v353
  %v1575 = vunpack.c.l.b16 %v354
  %v1576 = vunpack.c.h.b16 %v354
  %v1577 = vunpack.c.l.b16 %v355
  %v1578 = vunpack.c.h.b16 %v355
  %v1579 = vunpack.c.l.b16 %v356
  %v1580 = vunpack.c.h.b16 %v356
  %v1581 = vunpack.c.l.b16 %v357
  %v1582 = vunpack.c.h.b16 %v357
  %v1583 = vunpack.c.l.b16 %v358
  %v1584 = vunpack.c.h.b16 %v358
  %v1585 = vunpack.c.l.b16 %v359
  %v1586 = vunpack.c.h.b16 %v359
  %v1587 = vunpack.c.l.b16 %v360
  %v1588 = vunpack.c.h.b16 %v360
  %v1589 = vunpack.c.l.b16 %v361
  %v1590 = vunpack.c.h.b16 %v361
  %v1591 = vunpack.c.l.b16 %v362
  %v1592 = vunpack.c.h.b16 %v362
  %v1593 = vunpack.c.l.b16 %v363
  %v1594 = vunpack.c.h.b16 %v363
  %v1595 = vunpack.c.l.b16 %v364
  %v1596 = vunpack.c.h.b16 %v364
  %v1597 = vunpack.c.l.b16 %v365
  %v1598 = vunpack.c.h.b16 %v365
  %v1599 = vunpack.c.l.b16 %v366
  %v1600 = vunpack.c.h.b16 %v366
  %v1601 = vunpack.c.l.b16 %v367
  %v1602 = vunpack.c.h.b16 %v367
  %v1603 = vunpack.c.l.b16 %v368
  %v1604 = vunpack.c.h.b16 %v368
  %v1605 = vunpack.c.l.b16 %v369
  %v1606 = vunpack.c.h.b16 %v369
  %v1607 = vunpack.c.l.b16 %v370
  %v1608 = vunpack.c.h.b16 %v370
  %v1609 = vunpack.c.l.b16 %v371
  %v1610 = vunpack.c.h.b16 %v371
  %v1611 = vunpack.c.l.b16 %v372
  %v1612 = vunpack.c.h.b16 %v372
  %v1613 = vunpack.c.l.b16 %v373
  %v1614 = vunpack.c.h.b16 %v373
  %v1615 = vunpack.c.l.b16 %v374
  %v1616 = vunpack.c.h.b16 %v374
  %v1617 = vunpack.c.l.b16 %v375
  %v1618 = vunpack.c.h.b16 %v375
  %v1619 = vunpack.c.l.b16 %v376
  %v1620 = vunpack.c.h.b16 %v376
  %v1621 = vunpack.c.l.b16 %v377
  %v1622 = vunpack.c.h.b16 %v377
  %v1623 = vunpack.c.l.b16 %v378
  %v1624 = vunpack.c.h.b16 %v378
  %v1625 = vunpack.c.l.b16 %v379
  %v1626 = vunpack.c.h.b16 %v379
  %v1627 = vunpack.c.l.b16 %v380
  %v1628 = vunpack.c.h.b16 %v380
  %v1629 = vunpack.c.l.b16 %v381
  %v1630 = vunpack.c.h.b16 %v381
  %v1631 = vunpack.c.l.b16 %v382
  %v1632 = vunpack.c.h.b16 %v382
  %v1633 = vunpack.c.l.b16 %v383
  %v1634 = vunpack.c.h.b16 %v383
  %v1635 = vunpack.c.l.b16 %v384
  %v1636 = vunpack.c.h.b16 %v384
  %v1637 = vunpack.c.l.b16 %v385
  %v1638 = vunpack.c.h.b16 %v385
  %v1639 = vunpack.c.l.b16 %v386
  %v1640 = vunpack.c.h.b16 %v386
  %v1641 = vunpack.c.l.b16 %v387
  %v1642 = vunpack.c.h.b16 %v387
  %v1643 = vunpack.c.l.b16 %v388
  %v1644 = vunpack.c.h.b16 %v388
  %v1645 = vunpack.c.l.b16 %v389
  %v1646 = vunpack.c.h.b16 %v389
  %v1647 = vunpack.c.l.b16 %v390
  %v1648 = vunpack.c.h.b16 %v390
  %v1649 = vunpack.c.l.b16 %v391
  %v1650 = vunpack.c.h.b16 %v391
  %v1651 = vunpack.c.l.b16 %v392
  %v1652 = vunpack.c.h.b16 %v392
  %v1653 = vunpack.c.l.b16 %v393
  %v1654 = vunpack.c.h.b16 %v393
  %v1655 = vunpack.c.l.b16 %v394
  %v1656 = vunpack.c.h.b16 %v394
  %v1657 = vunpack.c.l.b16 %v395
  %v1658 = vunpack.c.h.b16 %v395
  %v1659 = vunpack.c.l.b16 %v396
  %v1660 = vunpack.c.h.b16 %v396
  %v1661 = vunpack.c.l.b16 %v397
  %v1662 = vunpack.c.h.b16 %v397
  %v1663 = vunpack.c.l.b16 %v398
  %v1664 = vunpack.c.h.b16 %v398
  %v1665 = vunpack.c.l.b16 %v399
  %v1666 = vunpack.c.h.b16 %v399
  %v1667 = vunpack.c.l.b16 %v400
  %v1668 = vunpack.c.h.b16 %v400
  %v1669 = vunpack.c.l.b16 %v401
  %v1670 = vunpack.c.h.b16 %v401
  %v1671 = vunpack.c.l.b16 %v402
  %v1672 = vunpack.c.h.b16 %v402
  %v1673 = vunpack.c.l.b16 %v403
  %v1674 = vunpack.c.h.b16 %v403
  %v1675 = vunpack.c.l.b16 %v404
  %v1676 = vunpack.c.h.b16 %v404
  %v1677 = vunpack.c.l.b16 %v405
  %v1678 = vunpack.c.h.b16 %v405
  %v1679 = vunpack.c.l.b16 %v406
  %v1680 = vunpack.c.h.b16 %v406
  %v1681 = vunpack.c.l.b16 %v407
  %v1682 = vunpack.c.h.b16 %v407
  %v1683 = vunpack.c.l.b16 %v408
  %v1684 = vunpack.c.h.b16 %v408
  %v1685 = vunpack.c.l.b16 %v409
  %v1686 = vunpack.c.h.b16 %v409
  %v1687 = vunpack.c.l.b16 %v410
  %v1688 = vunpack.c.h.b16 %v410
  %v1689 = vunpack.c.l.b16 %v411
  %v1690 = vunpack.c.h.b16 %v411
  %v1691 = vunpack.c.l.b16 %v412
  %v1692 = vunpack.c.h.b16 %v412
  %v1693 = vunpack.c.l.b16 %v413
  %v1694 = vunpack.c.h.b16 %v413
  %v1695 = vunpack.c.l.b16 %v414
  %v1696 = vunpack.c.h.b16 %v414
  %v1697 = vunpack.c.l.b16 %v415
  %v1698 = vunpack.c.h.b16 %v415
  %v1699 = vunpack.c.l.b16 %v416
  %v1700 = vunpack.c.h.b16 %v416
  %v1701 = vunpack.c.l.b16 %v417
  %v1702 = vunpack.c.h.b16 %v417
  %v1703 = vunpack.c.l.b16 %v418
  %v1704 = vunpack.c.h.b16 %v418
  %v1705 = vunpack.c.l.b16 %v419
  %v1706 = vunpack.c.h.b16 %v419
  %v1707 = vunpack.c.l.b16 %v420
  %v1708 = vunpack.c.h.b16 %v420
  %v1709 = vunpack.c.l.b16 %v421
  %v1710 = vunpack.c.h.b16 %v421
  %v1711 = vunpack.c.l.b16 %v422
  %v1712 = vunpack.c.h.b16 %v422
  %v1713 = vunpack.c.l.b16 %v423
  %v1714 = vunpack.c.h.b16 %v423
  %v1715 = vunpack.c.l.b16 %v424
  %v1716 = vunpack.c.h.b16 %v424
  %v1717 = vunpack.c.l.b16 %v425
  %v1718 = vunpack.c.h.b16 %v425
  %v1719 = vunpack.c.l.b16 %v426
  %v1720 = vunpack.c.h.b16 %v426
  %v1721 = vunpack.c.l.b16 %v427
  %v1722 = vunpack.c.h.b16 %v427
  %v1723 = vunpack.c.l.b16 %v428
  %v1724 = vunpack.c.h.b16 %v428
  %v1725 = vunpack.c.l.b16 %v429
  %v1726 = vunpack.c.h.b16 %v429
  %v1727 = vunpack.c.l.b16 %v430
  %v1728 = vunpack.c.h.b16 %v430
  %v1729 = vunpack.c.l.b16 %v431
  %v1730 = vunpack.c.h.b16 %v431
  %v1731 = vunpack.c.l.b16 %v432
  %v1732 = vunpack.c.h.b16 %v432
  %v1733 = vunpack.c.l.b16 %v433
  %v1734 = vunpack.c.h.b16 %v433
  %v1735 = vunpack.c.l.b16 %v434
  %v1736 = vunpack.c.h.b16 %v434
  %v1737 = vunpack.c.l.b16 %v435
  %v1738 = vunpack.c.h.b16 %v435
  %v1739 = vunpack.c.l.b16 %v436
  %v1740 = vunpack.c.h.b16 %v436
  %v1741 = vunpack.c.l.b16 %v437
  %v1742 = vunpack.c.h.b16 %v437
  %v1743 = vunpack.c.l.b16 %v438
  %v1744 = vunpack.c.h.b16 %v438
  %v1745 = vunpack.c.l.b16 %v439
  %v1746 = vunpack.c.h.b16 %v439
  %v1747 = vunpack.c.l.b16 %v440
  %v1748 = vunpack.c.h.b16 %v440
  %v1749 = vunpack.c.l.b16 %v441
  %v1750 = vunpack.c.h.b16 %v441
  %v1751 = vunpack.c.l.b16 %v442
  %v1752 = vunpack.c.h.b16 %v442
  %v1753 = vunpack.c.l.b16 %v443
  %v1754 = vunpack.c.h.b16 %v443
  %v1755 = vunpack.c.l.b16 %v444
  %v1756 = vunpack.c.h.b16 %v444
  %v1757 = vunpack.c.l.b16 %v445
  %v1758 = vunpack.c.h.b16 %v445
  %v1759 = vunpack.c.l.b16 %v446
  %v1760 = vunpack.c.h.b16 %v446
  %v1761 = vunpack.c.l.b16 %v447
  %v1762 = vunpack.c.h.b16 %v447
  %v1763 = vunpack.c.l.b16 %v448
  %v1764 = vunpack.c.h.b16 %v448
  %v1765 = vunpack.c.l.b16 %v449
  %v1766 = vunpack.c.h.b16 %v449
  %v1767 = vunpack.c.l.b16 %v450
  %v1768 = vunpack.c.h.b16 %v450
  %v1769 = vunpack.c.l.b16 %v451
  %v1770 = vunpack.c.h.b16 %v451
  %v1771 = vunpack.c.l.b16 %v452
  %v1772 = vunpack.c.h.b16 %v452
  %v1773 = vunpack.c.l.b16 %v453
  %v1774 = vunpack.c.h.b16 %v453
  %v1775 = vunpack.c.l.b16 %v454
  %v1776 = vunpack.c.h.b16 %v454
  %v1777 = vunpack.c.l.b16 %v455
  %v1778 = vunpack.c.h.b16 %v455
  %v1779 = vunpack.c.l.b16 %v456
  %v1780 = vunpack.c.h.b16 %v456
  %v1781 = vunpack.c.l.b16 %v457
  %v1782 = vunpack.c.h.b16 %v457
  %v1783 = vunpack.c.l.b16 %v458
  %v1784 = vunpack.c.h.b16 %v458
  %v1785 = vunpack.c.l.b16 %v459
  %v1786 = vunpack.c.h.b16 %v459
  %v1787 = vunpack.c.l.b16 %v460
  %v1788 = vunpack.c.h.b16 %v460
  %v1789 = vunpack.c.l.b16 %v461
  %v1790 = vunpack.c.h.b16 %v461
  %v1791 = vunpack.c.l.b16 %v462
  %v1792 = vunpack.c.h.b16 %v462
  %v1793 = vunpack.c.l.b16 %v463
  %v1794 = vunpack.c.h.b16 %v463
  %v1795 = vunpack.c.l.b16 %v464
  %v1796 = vunpack.c.h.b16 %v464
  %v1797 = vunpack.c.l.b16 %v465
  %v1798 = vunpack.c.h.b16 %v465
  %v1799 = vunpack.c.l.b16 %v466
  %v1800 = vunpack.c.h.b16 %v466
  %v1801 = vunpack.c.l.b16 %v467
  %v1802 = vunpack.c.h.b16 %v467
  %v1803 = vunpack.c.l.b16 %v468
  %v1804 = vunpack.c.h.b16 %v468
  %v1805 = vunpack.c.l.b16 %v469
  %v1806 = vunpack.c.h.b16 %v469
  %v1807 = vunpack.c.l.b16 %v470
  %v1808 = vunpack.c.h.b16 %v470
  %v1809 = vunpack.c.l.b16 %v471
  %v1810 = vunpack.c.h.b16 %v471
  %v1811 = vunpack.c.l.b16 %v472
  %v1812 = vunpack.c.h.b16 %v472
  %v1813 = vunpack.c.l.b16 %v473
  %v1814 = vunpack.c.h.b16 %v473
  %v1815 = vunpack.c.l.b16 %v474
  %v1816 = vunpack.c.h.b16 %v474
  %v1817 = vunpack.c.l.b16 %v475
  %v1818 = vunpack.c.h.b16 %v475
  %v1819 = vunpack.c.l.b16 %v476
  %v1820 = vunpack.c.h.b16 %v476
  %v1821 = vunpack.c.l.b16 %v477
  %v1822 = vunpack.c.h.b16 %v477
  %v1823 = vunpack.c.l.b16 %v478
  %v1824 = vunpack.c.h.b16 %v478
  %v1825 = vunpack.c.l.b16 %v479
  %v1826 = vunpack.c.h.b16 %v479
  %v1827 = vunpack.c.l.b16 %v480
  %v1828 = vunpack.c.h.b16 %v480
  %v1829 = vunpack.c.l.b16 %v481
  %v1830 = vunpack.c.h.b16 %v481
  %v1831 = vunpack.c.l.b16 %v482
  %v1832 = vunpack.c.h.b16 %v482
  %v1833 = vunpack.c.l.b16 %v483
  %v1834 = vunpack.c.h.b16 %v483
  %v1835 = vunpack.c.l.b16 %v484
  %v1836 = vunpack.c.h.b16 %v484
  %v1837 = vunpack.c.l.b16 %v485
  %v1838 = vunpack.c.h.b16 %v485
  %v1839 = vunpack.c.l.b16 %v486
  %v1840 = vunpack.c.h.b16 %v486
  %v1841 = vunpack.c.l.b16 %v487
  %v1842 = vunpack.c.h.b16 %v487
  %v1843 = vunpack.c.l.b16 %v488
  %v1844 = vunpack.c.h.b16 %v488
  %v1845 = vunpack.c.l.b16 %v489
  %v1846 = vunpack.c.h.b16 %v489
  %v1847 = vunpack.c.l.b16 %v490
  %v1848 = vunpack.c.h.b16 %v490
  %v1849 = vunpack.c.l.b16 %v491
  %v1850 = vunpack.c.h.b16 %v491
  %v1851 = vunpack.c.l.b16 %v492
  %v1852 = vunpack.c.h.b16 %v492
  %v1853 = vunpack.c.l.b16 %v493
  %v1854 = vunpack.c.h.b16 %v493
  %v1855 = vunpack.c.l.b16 %v494
  %v1856 = vunpack.c.h.b16 %v494
  %v1857 = vunpack.c.l.b16 %v495
  %v1858 = vunpack.c.h.b16 %v495
  %v1859 = vunpack.c.l.b16 %v496
  %v1860 = vunpack.c.h.b16 %v496
  %v1861 = vunpack.c.l.b16 %v497
  %v1862 = vunpack.c.h.b16 %v497
  %v1863 = vunpack.c.l.b16 %v498
  %v1864 = vunpack.c.h.b16 %v498
  %v1865 = vunpack.c.l.b16 %v499
  %v1866 = vunpack.c.h.b16 %v499
  %v1867 = vunpack.c.l.b16 %v500
  %v1868 = vunpack.c.h.b16 %v500
  %v1869 = vunpack.c.l.b16 %v501
  %v1870 = vunpack.c.h.b16 %v501
  %v1871 = vunpack.c.l.b16 %v502
  %v1872 = vunpack.c.h.b16 %v502
  %v1873 = vunpack.c.l.b16 %v503
  %v1874 = vunpack.c.h.b16 %v503
  %v1875 = vunpack.c.l.b16 %v504
  %v1876 = vunpack.c.h.b16 %v504
  %v1877 = vunpack.c.l.b16 %v505
  %v1878 = vunpack.c.h.b16 %v505
  %v1879 = vunpack.c.l.b16 %v506
  %v1880 = vunpack.c.h.b16 %v506
  %v1881 = vunpack.c.l.b16 %v507
  %v1882 = vunpack.c.h.b16 %v507
  %v1883 = vunpack.c.l.b16 %v508
  %v1884 = vunpack.c.h.b16 %v508
  %v1885 = vunpack.c.l.b16 %v509
  %v1886 = vunpack.c.h.b16 %v509
  %v1887 = vunpack.c.l.b16 %v510
  %v1888 = vunpack.c.h.b16 %v510
  %v1889 = vunpack.c.l.b16 %v511
  %v1890 = vunpack.c.h.b16 %v511
  %v1891 = vunpack.c.l.b16 %v512
  %v1892 = vunpack.c.h.b16 %v512
  %v1893 = vunpack.c.l.b16 %v513
  %v1894 = vunpack.c.h.b16 %v513
  %v1895 = vunpack.c.l.b16 %v514
  %v1896 = vunpack.c.h.b16 %v514
  %v1897 = vpack.c.b16 %v1003, %v997
  %v1898 = vpack.c.b16 %v1004, %v998
  %v1899 = vpack.c.b16 %v1005, %v999
  %v1900 = vpack.c.b16 %v1006, %v1000
  %v1901 = vpack.c.b16 %v1007, %v1001
  %v1902 = vpack.c.b16 %v1008, %v1002
  %v1903 = vpack.c.b16 %v1015, %v1009
  %v1904 = vpack.c.b16 %v1016, %v1010
  %v1905 = vpack.c.b16 %v1017, %v1011
  %v1906 = vpack.c.b16 %v1018, %v1012
  %v1907 = vpack.c.b16 %v1019, %v1013
  %v1908 = vpack.c.b16 %v1020, %v1014
  %v1909 = vpack.c.b16 %v1027, %v1021
  %v1910 = vpack.c.b16 %v1028, %v1022
  %v1911 = vpack.c.b16 %v1029, %v1023
  %v1912 = vpack.c.b16 %v1030, %v1024
  %v1913 = vpack.c.b16 %v1031, %v1025
  %v1914 = vpack.c.b16 %v1032, %v1026
  %v1915 = vpack.c.b16 %v1039, %v1033
  %v1916 = vpack.c.b16 %v1040, %v1034
  %v1917 = vpack.c.b16 %v1041, %v1035
  %v1918 = vpack.c.b16 %v1042, %v1036
  %v1919 = vpack.c.b16 %v1043, %v1037
  %v1920 = vpack.c.b16 %v1044, %v1038
  %v1921 = vpack.c.b16 %v1051, %v1045
  %v1922 = vpack.c.b16 %v1052, %v1046
  %v1923 = vpack.c.b16 %v1053, %v1047
  %v1924 = vpack.c.b16 %v1054, %v1048
  %v1925 = vpack.c.b16 %v1055, %v1049
  %v1926 = vpack.c.b16 %v1056, %v1050
  %v1927 = vpack.c.b16 %v1063, %v1057
  %v1928 = vpack.c.b16 %v1064, %v1058
  %v1929 = vpack.c.b16 %v1065, %v1059
  %v1930 = vpack.c.b16 %v1066, %v1060
  %v1931 = vpack.c.b16 %v1067, %v1061
  %v1932 = vpack.c.b16 %v1068, %v1062
  %v1933 = vpack.c.b16 %v1075, %v1069
  %v1934 = vpack.c.b16 %v1076, %v1070
  %v1935 = vpack.c.b16 %v1077, %v1071
  %v1936 = vpack.c.b16 %v1078, %v1072
  %v1937 = vpack.c.b16 %v1079, %v1073
  %v1938 = vpack.c.b16 %v1080, %v1074
  %v1939 = vpack.c.b16 %v1087, %v1081
  %v1940 = vpack.c.b16 %v1088, %v1082
  %v1941 = vpack.c.b16 %v1089, %v1083
  %v1942 = vpack.c.b16 %v1090, %v1084
  %v1943 = vpack.c.b16 %v1091, %v1085
  %v1944 = vpack.c.b16 %v1092, %v1086
  %v1945 = vpack.c.b16 %v1099, %v1093
  %v1946 = vpack.c.b16 %v1100, %v1094
  %v1947 = vpack.c.b16 %v1101, %v1095
  %v1948 = vpack.c.b16 %v1102, %v1096
  %v1949 = vpack.c.b16 %v1103, %v1097
  %v1950 = vpack.c.b16 %v1104, %v1098
  %v1951 = vpack.c.b16 %v1111, %v1105
  %v1952 = vpack.c.b16 %v1112, %v1106
  %v1953 = vpack.c.b16 %v1113, %v1107
  %v1954 = vpack.c.b16 %v1114, %v1108
  %v1955 = vpack.c.b16 %v1115, %v1109
  %v1956 = vpack.c.b16 %v1116, %v1110
  %v1957 = vpack.c.b16 %v1123, %v1117
  %v1958 = vpack.c.b16 %v1124, %v1118
  %v1959 = vpack.c.b16 %v1125, %v1119
  %v1960 = vpack.c.b16 %v1126, %v1120
  %v1961 = vpack.c.b16 %v1127, %v1121
  %v1962 = vpack.c.b16 %v1128, %v1122
  %v1963 = vpack.c.b16 %v1135, %v1129
  %v1964 = vpack.c.b16 %v1136, %v1130
  %v1965 = vpack.c.b16 %v1137, %v1131
  %v1966 = vpack.c.b16 %v1138, %v1132
  %v1967 = vpack.c.b16 %v1139, %v1133
  %v1968 = vpack.c.b16 %v1140, %v1134
  %v1969 = vpack.c.b16 %v1147, %v1141
  %v1970 = vpack.c.b16 %v1148, %v1142
  %v1971 = vpack.c.b16 %v1149, %v1143
  %v1972 = vpack.c.b16 %v1150, %v1144
  %v1973 = vpack.c.b16 %v1151, %v1145
  %v1974 = vpack.c.b16 %v1152, %v1146
  %v1975 = vpack.c.b16 %v1159, %v1153
  %v1976 = vpack.c.b16 %v1160, %v1154
  %v1977 = vpack.c.b16 %v1161, %v1155
  %v1978 = vpack.c.b16 %v1162, %v1156
  %v1979 = vpack.c.b16 %v1163, %v1157
  %v1980 = vpack.c.b16 %v1164, %v1158
  %v1981 = vpack.c.b16 %v1171, %v1165
  %v1982 = vpack.c.b16 %v1172, %v1166
  %v1983 = vpack.c.b16 %v1173, %v1167
  %v1984 = vpack.c.b16 %v1174, %v1168
  %v1985 = vpack.c.b16 %v1175, %v1169
  %v1986 = vpack.c.b16 %v1176, %v1170
  %v1987 = vpack.c.b16 %v1183, %v1177
  %v1988 = vpack.c.b16 %v1184, %v1178
  %v1989 = vpack.c.b16 %v1185, %v1179
  %v1990 = vpack.c.b16 %v1186, %v1180
  %v1991 = vpack.c.b16 %v1187, %v1181
  %v1992 = vpack.c.b16 %v1188, %v1182
  %v1993 = vpack.c.b16 %v1195, %v1189
  %v1994 = vpack.c.b16 %v1196, %v1190
  %v1995 = vpack.c.b16 %v1197, %v1191
  %v1996 = vpack.c.b16 %v1198, %v1192
  %v1997 = vpack.c.b16 %v1199, %v1193
  %v1998 = vpack.c.b16 %v1200, %v1194
  %v1999 = vpack.c.b16 %v1207, %v1201
  %v2000 = vpack.c.b16 %v1208, %v1202
  %v2001 = vpack.c.b16 %v1209, %v1203
  %v2002 = vpack.c.b16 %v1210, %v1204
  %v2003 = vpack.c.b16 %v1211, %v1205
  %v2004 = vpack.c.b16 %v1212, %v1206
  %v2005 = vpack.c.b16 %v1219, %v1213
  %v2006 = vpack.c.b16 %v1220, %v1214
  %v2007 = vpack.c.b16 %v1221, %v1215
  %v2008 = vpack.c.b16 %v1222, %v1216
  %v2009 = vpack.c.b16 %v1223, %v1217
  %v2010 = vpack.c.b16 %v1224, %v1218
  %v2011 = vpack.c.b16 %v1231, %v1225
  %v2012 = vpack.c.b16 %v1232, %v1226
  %v2013 = vpack.c.b16 %v1233, %v1227
  %v2014 = vpack.c.b16 %v1234, %v1228
  %v2015 = vpack.c.b16 %v1235, %v1229
  %v2016 = vpack.c.b16 %v1236, %v1230
  %v2017 = vpack.c.b16 %v1243, %v1237
  %v2018 = vpack.c.b16 %v1244, %v1238
  %v2019 = vpack.c.b16 %v1245, %v1239
  %v2020 = vpack.c.b16 %v1246, %v1240
  %v2021 = vpack.c.b16 %v1247, %v1241
  %v2022 = vpack.c.b16 %v1248, %v1242
  %v2023 = vpack.c.b16 %v1255, %v1249
  %v2024 = vpack.c.b16 %v1256, %v1250
  %v2025 = vpack.c.b16 %v1257, %v1251
  %v2026 = vpack.c.b16 %v1258, %v1252
  %v2027 = vpack.c.b16 %v1259, %v1253
  %v2028 = vpack.c.b16 %v1260, %v1254
  %v2029 = vpack.c.b16 %v1267, %v1261
  %v2030 = vpack.c.b16 %v1268, %v1262
  %v2031 = vpack.c.b16 %v1269, %v1263
  %v2032 = vpack.c.b16 %v1270, %v1264
  %v2033 = vpack.c.b16 %v1271, %v1265
  %v2034 = vpack.c.b16 %v1272, %v1266
  %v2035 = vpack.c.b16 %v1279, %v1273
  %v2036 = vpack.c.b16 %v1280, %v1274
  %v2037 = vpack.c.b16 %v1281, %v1275
  %v2038 = vpack.c.b16 %v1282, %v1276
  %v2039 = vpack.c.b16 %v1283, %v1277
  %v2040 = vpack.c.b16 %v1284, %v1278
  %v2041 = vpack.c.b16 %v1291, %v1285
  %v2042 = vpack.c.b16 %v1292, %v1286
  %v2043 = vpack.c.b16 %v1293, %v1287
  %v2044 = vpack.c.b16 %v1294, %v1288
  %v2045 = vpack.c.b16 %v1295, %v1289
  %v2046 = vpack.c.b16 %v1296, %v1290
  %v2047 = vpack.c.b16 %v1303, %v1297
  %v2048 = vpack.c.b16 %v1304, %v1298
  %v2049 = vpack.c.b16 %v1305, %v1299
  %v2050 = vpack.c.b16 %v1306, %v1300
  %v2051 = vpack.c.b16 %v1307, %v1301
  %v2052 = vpack.c.b16 %v1308, %v1302
  %v2053 = vpack.c.b16 %v1315, %v1309
  %v2054 = vpack.c.b16 %v1316, %v1310
  %v2055 = vpack.c.b16 %v1317, %v1311
  %v2056 = vpack.c.b16 %v1318, %v1312
  %v2057 = vpack.c.b16 %v1319, %v1313
  %v2058 = vpack.c.b16 %v1320, %v1314
  %v2059 = vpack.c.b16 %v1327, %v1321
  %v2060 = vpack.c.b16 %v1328, %v1322
  %v2061 = vpack.c.b16 %v1329, %v1323
  %v2062 = vpack.c.b16 %v1330, %v1324
  %v2063 = vpack.c.b16 %v1331, %v1325
  %v2064 = vpack.c.b16 %v1332, %v1326
  %v2065 = vpack.c.b16 %v1339, %v1333
  %v2066 = vpack.c.b16 %v1340, %v1334
  %v2067 = vpack.c.b16 %v1341, %v1335
  %v2068 = vpack.c.b16 %v1342, %v1336
  %v2069 = vpack.c.b16 %v1343, %v1337
  %v2070 = vpack.c.b16 %v1344, %v1338
  %v2071 = vpack.c.b16 %v1351, %v1345
  %v2072 = vpack.c.b16 %v1352, %v1346
  %v2073 = vpack.c.b16 %v1353, %v1347
  %v2074 = vpack.c.b16 %v1354, %v1348
  %v2075 = vpack.c.b16 %v1355, %v1349
  %v2076 = vpack.c.b16 %v1356, %v1350
  %v2077 = vpack.c.b16 %v1363, %v1357
  %v2078 = vpack.c.b16 %v1364, %v1358
  %v2079 = vpack.c.b16 %v1365, %v1359
  %v2080 = vpack.c.b16 %v1366, %v1360
  %v2081 = vpack.c.b16 %v1367, %v1361
  %v2082 = vpack.c.b16 %v1368, %v1362
  %v2083 = vpack.c.b16 %v1375, %v1369
  %v2084 = vpack.c.b16 %v1376, %v1370
  %v2085 = vpack.c.b16 %v1377, %v1371
  %v2086 = vpack.c.b16 %v1378, %v1372
  %v2087 = vpack.c.b16 %v1379, %v1373
  %v2088 = vpack.c.b16 %v1380, %v1374
  %v2089 = vpack.c.b16 %v1387, %v1381
  %v2090 = vpack.c.b16 %v1388, %v1382
  %v2091 = vpack.c.b16 %v1389, %v1383
  %v2092 = vpack.c.b16 %v1390, %v1384
  %v2093 = vpack.c.b16 %v1391, %v1385
  %v2094 = vpack.c.b16 %v1392, %v1386
  %v2095 = vpack.c.b16 %v1399, %v1393
  %v2096 = vpack.c.b16 %v1400, %v1394
  %v2097 = vpack.c.b16 %v1401, %v1395
  %v2098 = vpack.c.b16 %v1402, %v1396
  %v2099 = vpack.c.b16 %v1403, %v1397
  %v2100 = vpack.c.b16 %v1404, %v1398
  %v2101 = vpack.c.b16 %v1411, %v1405
  %v2102 = vpack.c.b16 %v1412, %v1406
  %v2103 = vpack.c.b16 %v1413, %v1407
  %v2104 = vpack.c.b16 %v1414, %v1408
  %v2105 = vpack.c.b16 %v1415, %v1409
  %v2106 = vpack.c.b16 %v1416, %v1410
  %v2107 = vpack.c.b16 %v1423, %v1417
  %v2108 = vpack.c.b16 %v1424, %v1418
  %v2109 = vpack.c.b16 %v1425, %v1419
  %v2110 = vpack.c.b16 %v1426, %v1420
  %v2111 = vpack.c.b16 %v1427, %v1421
  %v2112 = vpack.c.b16 %v1428, %v1422
  %v2113 = vpack.c.b16 %v1435, %v1429
  %v2114 = vpack.c.b16 %v1436, %v1430
  %v2115 = vpack.c.b16 %v1437, %v1431
  %v2116 = vpack.c.b16 %v1438, %v1432
  %v2117 = vpack.c.b16 %v1439, %v1433
  %v2118 = vpack.c.b16 %v1440, %v1434
  %v2119 = vpack.c.b16 %v1447, %v1441
  %v2120 = vpack.c.b16 %v1448, %v1442
  %v2121 = vpack.c.b16 %v1449, %v1443
  %v2122 = vpack.c.b16 %v1450, %v1444
  %v2123 = vpack.c.b16 %v1451, %v1445
  %v2124 = vpack.c.b16 %v1452, %v1446
  %v2125 = vpack.c.b16 %v1459, %v1453
  %v2126 = vpack.c.b16 %v1460, %v1454
  %v2127 = vpack.c.b16 %v1461, %v1455
  %v2128 = vpack.c.b16 %v1462, %v1456
  %v2129 = vpack.c.b16 %v1463, %v1457
  %v2130 = vpack.c.b16 %v1464, %v1458
  %v2131 = vpack.c.b16 %v1471, %v1465
  %v2132 = vpack.c.b16 %v1472, %v1466
  %v2133 = vpack.c.b16 %v1473, %v1467
  %v2134 = vpack.c.b16 %v1474, %v1468
  %v2135 = vpack.c.b16 %v1475, %v1469
  %v2136 = vpack.c.b16 %v1476, %v1470
  %v2137 = vpack.c.b16 %v1483, %v1477
  %v2138 = vpack.c.b16 %v1484, %v1478
  %v2139 = vpack.c.b16 %v1485, %v1479
  %v2140 = vpack.c.b16 %v1486, %v1480
  %v2141 = vpack.c.b16 %v1487, %v1481
  %v2142 = vpack.c.b16 %v1488, %v1482
  %v2143 = vpack.c.b16 %v1495, %v1489
  %v2144 = vpack.c.b16 %v1496, %v1490
  %v2145 = vpack.c.b16 %v1497, %v1491
  %v2146 = vpack.c.b16 %v1498, %v1492
  %v2147 = vpack.c.b16 %v1499, %v1493
  %v2148 = vpack.c.b16 %v1500, %v1494
  %v2149 = vpack.c.b16 %v1507, %v1501
  %v2150 = vpack.c.b16 %v1508, %v1502
  %v2151 = vpack.c.b16 %v1509, %v1503
  %v2152 = vpack.c.b16 %v1510, %v1504
  %v2153 = vpack.c.b16 %v1511, %v1505
  %v2154 = vpack.c.b16 %v1512, %v1506
  %v2155 = vpack.c.b16 %v1519, %v1513
  %v2156 = vpack.c.b16 %v1520, %v1514
  %v2157 = vpack.c.b16 %v1521, %v1515
  %v2158 = vpack.c.b16 %v1522, %v1516
  %v2159 = vpack.c.b16 %v1523, %v1517
  %v2160 = vpack.c.b16 %v1524, %v1518
  %v2161 = vpack.c.b16 %v1531, %v1525
  %v2162 = vpack.c.b16 %v1532, %v1526
  %v2163 = vpack.c.b16 %v1533, %v1527
  %v2164 = vpack.c.b16 %v1534, %v1528
  %v2165 = vpack.c.b16 %v1535, %v1529
  %v2166 = vpack.c.b16 %v1536, %v1530
  %v2167 = vpack.c.b16 %v1543, %v1537
  %v2168 = vpack.c.b16 %v1544, %v1538
  %v2169 = vpack.c.b16 %v1545, %v1539
  %v2170 = vpack.c.b16 %v1546, %v1540
  %v2171 = vpack.c.b16 %v1547, %v1541
  %v2172 = vpack.c.b16 %v1548, %v1542
  %v2173 = vpack.c.b16 %v1555, %v1549
  %v2174 = vpack.c.b16 %v1556, %v1550
  %v2175 = vpack.c.b16 %v1557, %v1551
  %v2176 = vpack.c.b16 %v1558, %v1552
  %v2177 = vpack.c.b16 %v1559, %v1553
  %v2178 = vpack.c.b16 %v1560, %v1554
  %v2179 = vpack.c.b16 %v1567, %v1561
  %v2180 = vpack.c.b16 %v1568, %v1562
  %v2181 = vpack.c.b16 %v1569, %v1563
  %v2182 = vpack.c.b16 %v1570, %v1564
  %v2183 = vpack.c.b16 %v1571, %v1565
  %v2184 = vpack.c.b16 %v1572, %v1566
  %v2185 = vpack.c.b16 %v1579, %v1573
  %v2186 = vpack.c.b16 %v1580, %v1574
  %v2187 = vpack.c.b16 %v1581, %v1575
  %v2188 = vpack.c.b16 %v1582, %v1576
  %v2189 = vpack.c.b16 %v1583, %v1577
  %v2190 = vpack.c.b16 %v1584, %v1578
  %v2191 = vpack.c.b16 %v1591, %v1585
  %v2192 = vpack.c.b16 %v1592, %v1586
  %v2193 = vpack.c.b16 %v1593, %v1587
  %v2194 = vpack.c.b16 %v1594, %v1588
  %v2195 = vpack.c.b16 %v1595, %v1589
  %v2196 = vpack.c.b16 %v1596, %v1590
  %v2197 = vpack.c.b16 %v1603, %v1597
  %v2198 = vpack.c.b16 %v1604, %v1598
  %v2199 = vpack.c.b16 %v1605, %v1599
  %v2200 = vpack.c.b16 %v1606, %v1600
  %v2201 = vpack.c.b16 %v1607, %v1601
  %v2202 = vpack.c.b16 %v1608, %v1602
  %v2203 = vpack.c.b16 %v1615, %v1609
  %v2204 = vpack.c.b16 %v1616, %v1610
  %v2205 = vpack.c.b16 %v1617, %v1611
  %v2206 = vpack.c.b16 %v1618, %v1612
  %v2207 = vpack.c.b16 %v1619, %v1613
  %v2208 = vpack.c.b16 %v1620, %v1614
  %v2209 = vpack.c.b16 %v1627, %v1621
  %v2210 = vpack.c.b16 %v1628, %v1622
  %v2211 = vpack.c.b16 %v1629, %v1623
  %v2212 = vpack.c.b16 %v1630, %v1624
  %v2213 = vpack.c.b16 %v1631, %v1625
  %v2214 = vpack.c.b16 %v1632, %v1626
  %v2215 = vpack.c.b16 %v1639, %v1633
  %v2216 = vpack.c.b16 %v1640, %v1634
  %v2217 = vpack.c.b16 %v1641, %v1635
  %v2218 = vpack.c.b16 %v1642, %v1636
  %v2219 = vpack.c.b16 %v1643, %v1637
  %v2220 = vpack.c.b16 %v1644, %v1638
  %v2221 = vpack.c.b16 %v1651, %v1645
  %v2222 = vpack.c.b16 %v1652, %v1646
  %v2223 = vpack.c.b16 %v1653, %v1647
  %v2224 = vpack.c.b16 %v1654, %v1648
  %v2225 = vpack.c.b16 %v1655, %v1649
  %v2226 = vpack.c.b16 %v1656, %v1650
  %v2227 = vpack.c.b16 %v1663, %v1657
  %v2228 = vpack.c.b16 %v1664, %v1658
  %v2229 = vpack.c.b16 %v1665, %v1659
  %v2230 = vpack.c.b16 %v1666, %v1660
  %v2231 = vpack.c.b16 %v1667, %v1661
  %v2232 = vpack.c.b16 %v1668, %v1662
  %v2233 = vpack.c.b16 %v1675, %v1669
  %v2234 = vpack.c.b16 %v1676, %v1670
  %v2235 = vpack.c.b16 %v1677, %v1671
  %v2236 = vpack.c.b16 %v1678, %v1672
  %v2237 = vpack.c.b16 %v1679, %v1673
  %v2238 = vpack.c.b16 %v1680, %v1674
  %v2239 = vpack.c.b16 %v1687, %v1681
  %v2240 = vpack.c.b16 %v1688, %v1682
  %v2241 = vpack.c.b16 %v1689, %v1683
  %v2242 = vpack.c.b16 %v1690, %v1684
  %v2243 = vpack.c.b16 %v1691, %v1685
  %v2244 = vpack.c.b16 %v1692, %v1686
  %v2245 = vpack.c.b16 %v1699, %v1693
  %v2246 = vpack.c.b16 %v1700, %v1694
  %v2247 = vpack.c.b16 %v1701, %v1695
  %v2248 = vpack.c.b16 %v1702, %v1696
  %v2249 = vpack.c.b16 %v1703, %v1697
  %v2250 = vpack.c.b16 %v1704, %v1698
  %v2251 = vpack.c.b16 %v1711, %v1705
  %v2252 = vpack.c.b16 %v1712, %v1706
  %v2253 = vpack.c.b16 %v1713, %v1707
  %v2254 = vpack.c.b16 %v1714, %v1708
  %v2255 = vpack.c.b16 %v1715, %v1709
  %v2256 = vpack.c.b16 %v1716, %v1710
  %v2257 = vpack.c.b16 %v1723, %v1717
  %v2258 = vpack.c.b16 %v1724, %v1718
  %v2259 = vpack.c.b16 %v1725, %v1719
  %v2260 = vpack.c.b16 %v1726, %v1720
  %v2261 = vpack.c.b16 %v1727, %v1721
  %v2262 = vpack.c.b16 %v1728, %v1722
  %v2263 = vpack.c.b16 %v1735, %v1729
  %v2264 = vpack.c.b16 %v1736, %v1730
  %v2265 = vpack.c.b16 %v1737, %v1731
  %v2266 = vpack.c.b16 %v1738, %v1732
  %v2267 = vpack.c.b16 %v1739, %v1733
  %v2268 = vpack.c.b16 %v1740, %v1734
  %v2269 = vpack.c.b16 %v1747, %v1741
  %v2270 = vpack.c.b16 %v1748, %v1742
  %v2271 = vpack.c.b16 %v1749, %v1743
  %v2272 = vpack.c.b16 %v1750, %v1744
  %v2273 = vpack.c.b16 %v1751, %v1745
  %v2274 = vpack.c.b16 %v1752, %v1746
  %v2275 = vpack.c.b16 %v1759, %v1753
  %v2276 = vpack.c.b16 %v1760, %v1754
  %v2277 = vpack.c.b16 %v1761, %v1755
  %v2278 = vpack.c.b16 %v1762, %v1756
  %v2279 = vpack.c.b16 %v1763, %v1757
  %v2280 = vpack.c.b16 %v1764, %v1758
  %v2281 = vpack.c.b16 %v1771, %v1765
  %v2282 = vpack.c.b16 %v1772, %v1766
  %v2283 = vpack.c.b16 %v1773, %v1767
  %v2284 = vpack.c.b16 %v1774, %v1768
  %v2285 = vpack.c.b16 %v1775, %v1769
  %v2286 = vpack.c.b16 %v1776, %v1770
  %v2287 = vpack.c.b16 %v1783, %v1777
  %v2288 = vpack.c.b16 %v1784, %v1778
  %v2289 = vpack.c.b16 %v1785, %v1779
  %v2290 = vpack.c.b16 %v1786, %v1780
  %v2291 = vpack.c.b16 %v1787, %v1781
  %v2292 = vpack.c.b16 %v1788, %v1782
  %v2293 = vpack.c.b16 %v1795, %v1789
  %v2294 = vpack.c.b16 %v1796, %v1790
  %v2295 = vpack.c.b16 %v1797, %v1791
  %v2296 = vpack.c.b16 %v1798, %v1792
  %v2297 = vpack.c.b16 %v1799, %v1793
  %v2298 = vpack.c.b16 %v1800, %v1794
  %v2299 = vpack.c.b16 %v1807, %v1801
  %v2300 = vpack.c.b16 %v1808, %v1802
  %v2301 = vpack.c.b16 %v1809, %v1803
  %v2302 = vpack.c.b16 %v1810, %v1804
  %v2303 = vpack.c.b16 %v1811, %v1805
  %v2304 = vpack.c.b16 %v1812, %v1806
  %v2305 = vpack.c.b16 %v1819, %v1813
  %v2306 = vpack.c.b16 %v1820, %v1814
  %v2307 = vpack.c.b16 %v1821, %v1815
  %v2308 = vpack.c.b16 %v1822, %v1816
  %v2309 = vpack.c.b16 %v1823, %v1817
  %v2310 = vpack.c.b16 %v1824, %v1818
  %v2311 = vpack.c.b16 %v1831, %v1825
  %v2312 = vpack.c.b16 %v1832, %v1826
  %v2313 = vpack.c.b16 %v1833, %v1827
  %v2314 = vpack.c.b16 %v1834, %v1828
  %v2315 = vpack.c.b16 %v1835, %v1829
  %v2316 = vpack.c.b16 %v1836, %v1830
  %v2317 = vpack.c.b16 %v1843, %v1837
  %v2318 = vpack.c.b16 %v1844, %v1838
  %v2319 = vpack.c.b16 %v1845, %v1839
  %v2320 = vpack.c.b16 %v1846, %v1840
  %v2321 = vpack.c.b16 %v1847, %v1841
  %v2322 = vpack.c.b16 %v1848, %v1842
  %v2323 = vpack.c.b16 %v1855, %v1849
  %v2324 = vpack.c.b16 %v1856, %v1850
  %v2325 = vpack.c.b16 %v1857, %v1851
  %v2326 = vpack.c.b16 %v1858, %v1852
  %v2327 = vpack.c.b16 %v1859, %v1853
  %v2328 = vpack.c.b16 %v1860, %v1854
  %v2329 = vpack.c.b16 %v1867, %v1861
  %v2330 = vpack.c.b16 %v1868, %v1862
  %v2331 = vpack.c.b16 %v1869, %v1863
  %v2332 = vpack.c.b16 %v1870, %v1864
  %v2333 = vpack.c.b16 %v1871, %v1865
  %v2334 = vpack.c.b16 %v1872, %v1866
  %v2335 = vpack.c.b16 %v1879, %v1873
  %v2336 = vpack.c.b16 %v1880, %v1874
  %v2337 = vpack.c.b16 %v1881, %v1875
  %v2338 = vpack.c.b16 %v1882, %v1876
  %v2339 = vpack.c.b16 %v1883, %v1877
  %v2340 = vpack.c.b16 %v1884, %v1878
  %v2341 = vpack.c.b16 %v1891, %v1885
  %v2342 = vpack.c.b16 %v1892, %v1886
  %v2343 = vpack.c.b16 %v1893, %v1887
  %v2344 = vpack.c.b16 %v1894, %v1888
  %v2345 = vpack.c.b16 %v1895, %v1889
  %v2346 = vpack.c.b16 %v1896, %v1890
  %vm2797 = vcmask 392192
  %v2799 = vsel %vm2797, %v64, 0
  %2801 = vmatprep.subr.bf16.mxu0 %v1898
  %2802 = vmatpush1.bf16.msra.mxu0 %v1897
  %2803 = vmatprep.subr.bf16.mxu0 %v1904
  %2804 = vmatpush1.bf16.msra.mxu0 %v1903
  %2805 = vmatprep.subr.bf16.mxu0 %v1910
  %2806 = vmatpush1.bf16.msra.mxu0 %v1909
  %2807 = vmatprep.subr.bf16.mxu0 %v1916
  %2808 = vmatpush1.bf16.msra.mxu0 %v1915
  %2809 = vmatprep.subr.bf16.mxu0 %v1922
  %2810 = vmatpush1.bf16.msra.mxu0 %v1921
  %2811 = vmatprep.subr.bf16.mxu0 %v1928
  %2812 = vmatpush1.bf16.msra.mxu0 %v1927
  %2813 = vmatprep.subr.bf16.mxu0 %v1934
  %2814 = vmatpush1.bf16.msra.mxu0 %v1933
  %2815 = vmatprep.subr.bf16.mxu0 %v1940
  %2816 = vmatpush1.bf16.msra.mxu0 %v1939
  %2817 = vmatprep.subr.bf16.mxu0 %v1946
  %2818 = vmatpush1.bf16.msra.mxu0 %v1945
  %2819 = vmatprep.subr.bf16.mxu0 %v1952
  %2820 = vmatpush1.bf16.msra.mxu0 %v1951
  %2821 = vmatprep.subr.bf16.mxu0 %v1958
  %2822 = vmatpush1.bf16.msra.mxu0 %v1957
  %2823 = vmatprep.subr.bf16.mxu0 %v1964
  %2824 = vmatpush1.bf16.msra.mxu0 %v1963
  %2825 = vmatprep.subr.bf16.mxu0 %v1970
  %2826 = vmatpush1.bf16.msra.mxu0 %v1969
  %2827 = vmatprep.subr.bf16.mxu0 %v1976
  %2828 = vmatpush1.bf16.msra.mxu0 %v1975
  %2829 = vmatprep.subr.bf16.mxu0 %v1982
  %2830 = vmatpush1.bf16.msra.mxu0 %v1981
  %2831 = vmatprep.subr.bf16.mxu0 %v1988
  %2832 = vmatpush1.bf16.msra.mxu0 %v1987
  %2833 = vmatprep.mubr.bf16.mxu0 %v56
  %2834 = vmatmul.mubr.bf16.gmra.mrb[0].mxu0 %v55
  %v2835 = vpop.f32.mrb[0].mxu0
  %v2836 = vadd.f32 %v520, %v2835
  %v2837 = vpop.f32.mrb[0].mxu0
  %v2838 = vadd.f32 %v524, %v2837
  %v2839 = vpop.f32.mrb[0].mxu0
  %v2840 = vpop.f32.mrb[0].mxu0
  %2841 = vdwg.mxu0
  %2842 = vmatprep.subr.bf16.mxu0 %v1994
  %2843 = vmatpush1.bf16.msra.mxu0 %v1993
  %2844 = vmatprep.subr.bf16.mxu0 %v2000
  %2845 = vmatpush1.bf16.msra.mxu0 %v1999
  %2846 = vmatprep.subr.bf16.mxu0 %v2006
  %2847 = vmatpush1.bf16.msra.mxu0 %v2005
  %2848 = vmatprep.subr.bf16.mxu0 %v2012
  %2849 = vmatpush1.bf16.msra.mxu0 %v2011
  %2850 = vmatprep.subr.bf16.mxu0 %v2018
  %2851 = vmatpush1.bf16.msra.mxu0 %v2017
  %2852 = vmatprep.subr.bf16.mxu0 %v2024
  %2853 = vmatpush1.bf16.msra.mxu0 %v2023
  %2854 = vmatprep.subr.bf16.mxu0 %v2030
  %2855 = vmatpush1.bf16.msra.mxu0 %v2029
  %2856 = vmatprep.subr.bf16.mxu0 %v2036
  %2857 = vmatpush1.bf16.msra.mxu0 %v2035
  %2858 = vmatprep.subr.bf16.mxu0 %v2042
  %2859 = vmatpush1.bf16.msra.mxu0 %v2041
  %2860 = vmatprep.subr.bf16.mxu0 %v2048
  %2861 = vmatpush1.bf16.msra.mxu0 %v2047
  %2862 = vmatprep.subr.bf16.mxu0 %v2054
  %2863 = vmatpush1.bf16.msra.mxu0 %v2053
  %2864 = vmatprep.subr.bf16.mxu0 %v2060
  %2865 = vmatpush1.bf16.msra.mxu0 %v2059
  %2866 = vmatprep.subr.bf16.mxu0 %v2066
  %2867 = vmatpush1.bf16.msra.mxu0 %v2065
  %2868 = vmatprep.subr.bf16.mxu0 %v2072
  %2869 = vmatpush1.bf16.msra.mxu0 %v2071
  %2870 = vmatprep.subr.bf16.mxu0 %v2078
  %2871 = vmatpush1.bf16.msra.mxu0 %v2077
  %2872 = vmatprep.subr.bf16.mxu0 %v2084
  %2873 = vmatpush1.bf16.msra.mxu0 %v2083
  %2874 = vmatprep.mubr.bf16.mxu0 %v58
  %2875 = vmatmul.mubr.bf16.gmra.mrb[0].mxu0 %v57
  %v2876 = vpop.f32.mrb[0].mxu0
  %v2877 = vadd.f32 %v2836, %v2876
  %v2878 = vpop.f32.mrb[0].mxu0
  %v2879 = vadd.f32 %v2838, %v2878
  %v2880 = vpop.f32.mrb[0].mxu0
  %v2881 = vpop.f32.mrb[0].mxu0
  %2882 = vdwg.mxu0
  %2883 = vmatprep.subr.bf16.mxu0 %v2090
  %2884 = vmatpush1.bf16.msra.mxu0 %v2089
  %2885 = vmatprep.subr.bf16.mxu0 %v2096
  %2886 = vmatpush1.bf16.msra.mxu0 %v2095
  %2887 = vmatprep.subr.bf16.mxu0 %v2102
  %2888 = vmatpush1.bf16.msra.mxu0 %v2101
  %2889 = vmatprep.subr.bf16.mxu0 %v2108
  %2890 = vmatpush1.bf16.msra.mxu0 %v2107
  %2891 = vmatprep.subr.bf16.mxu0 %v2114
  %2892 = vmatpush1.bf16.msra.mxu0 %v2113
  %2893 = vmatprep.subr.bf16.mxu0 %v2120
  %2894 = vmatpush1.bf16.msra.mxu0 %v2119
  %2895 = vmatprep.subr.bf16.mxu0 %v2126
  %2896 = vmatpush1.bf16.msra.mxu0 %v2125
  %2897 = vmatprep.subr.bf16.mxu0 %v2132
  %2898 = vmatpush1.bf16.msra.mxu0 %v2131
  %2899 = vmatprep.subr.bf16.mxu0 %v2138
  %2900 = vmatpush1.bf16.msra.mxu0 %v2137
  %2901 = vmatprep.subr.bf16.mxu0 %v2144
  %2902 = vmatpush1.bf16.msra.mxu0 %v2143
  %2903 = vmatprep.subr.bf16.mxu0 %v2150
  %2904 = vmatpush1.bf16.msra.mxu0 %v2149
  %2905 = vmatprep.subr.bf16.mxu0 %v2156
  %2906 = vmatpush1.bf16.msra.mxu0 %v2155
  %2907 = vmatprep.subr.bf16.mxu0 %v2162
  %2908 = vmatpush1.bf16.msra.mxu0 %v2161
  %2909 = vmatprep.subr.bf16.mxu0 %v2168
  %2910 = vmatpush1.bf16.msra.mxu0 %v2167
  %2911 = vmatprep.subr.bf16.mxu0 %v2174
  %2912 = vmatpush1.bf16.msra.mxu0 %v2173
  %2913 = vmatprep.subr.bf16.mxu0 %v2180
  %2914 = vmatpush1.bf16.msra.mxu0 %v2179
  %2915 = vmatprep.mubr.bf16.mxu0 %v60
  %2916 = vmatmul.mubr.bf16.gmra.mrb[0].mxu0 %v59
  %v2917 = vpop.f32.mrb[0].mxu0
  %v2918 = vadd.f32 %v2877, %v2917
  %v2919 = vpop.f32.mrb[0].mxu0
  %v2920 = vadd.f32 %v2879, %v2919
  %v2921 = vpop.f32.mrb[0].mxu0
  %v2922 = vpop.f32.mrb[0].mxu0
  %2923 = vdwg.mxu0
  %2924 = vmatprep.subr.bf16.mxu0 %v2186
  %2925 = vmatpush1.bf16.msra.mxu0 %v2185
  %2926 = vmatprep.subr.bf16.mxu0 %v2192
  %2927 = vmatpush1.bf16.msra.mxu0 %v2191
  %2928 = vmatprep.subr.bf16.mxu0 %v2198
  %2929 = vmatpush1.bf16.msra.mxu0 %v2197
  %2930 = vmatprep.subr.bf16.mxu0 %v2204
  %2931 = vmatpush1.bf16.msra.mxu0 %v2203
  %2932 = vmatprep.subr.bf16.mxu0 %v2210
  %2933 = vmatpush1.bf16.msra.mxu0 %v2209
  %2934 = vmatprep.subr.bf16.mxu0 %v2216
  %2935 = vmatpush1.bf16.msra.mxu0 %v2215
  %2936 = vmatprep.subr.bf16.mxu0 %v2222
  %2937 = vmatpush1.bf16.msra.mxu0 %v2221
  %2938 = vmatprep.subr.bf16.mxu0 %v2228
  %2939 = vmatpush1.bf16.msra.mxu0 %v2227
  %2940 = vmatprep.subr.bf16.mxu0 %v2234
  %2941 = vmatpush1.bf16.msra.mxu0 %v2233
  %2942 = vmatprep.subr.bf16.mxu0 %v2240
  %2943 = vmatpush1.bf16.msra.mxu0 %v2239
  %2944 = vmatprep.subr.bf16.mxu0 %v2246
  %2945 = vmatpush1.bf16.msra.mxu0 %v2245
  %2946 = vmatprep.subr.bf16.mxu0 %v2252
  %2947 = vmatpush1.bf16.msra.mxu0 %v2251
  %2948 = vmatprep.subr.bf16.mxu0 %v2258
  %2949 = vmatpush1.bf16.msra.mxu0 %v2257
  %2950 = vmatprep.subr.bf16.mxu0 %v2264
  %2951 = vmatpush1.bf16.msra.mxu0 %v2263
  %2952 = vmatprep.subr.bf16.mxu0 %v2270
  %2953 = vmatpush1.bf16.msra.mxu0 %v2269
  %2954 = vmatprep.subr.bf16.mxu0 %v2276
  %2955 = vmatpush1.bf16.msra.mxu0 %v2275
  %2956 = vmatprep.mubr.bf16.mxu0 %v62
  %2957 = vmatmul.mubr.bf16.gmra.mrb[0].mxu0 %v61
  %v2958 = vpop.f32.mrb[0].mxu0
  %v2959 = vadd.f32 %v2918, %v2958
  %v2960 = vpop.f32.mrb[0].mxu0
  %v2961 = vadd.f32 %v2920, %v2960
  %v2962 = vpop.f32.mrb[0].mxu0
  %v2963 = vpop.f32.mrb[0].mxu0
  %2964 = vdwg.mxu0
  %2965 = vmatprep.subr.bf16.mxu0 %v2282
  %2966 = vmatpush1.bf16.msra.mxu0 %v2281
  %2967 = vmatprep.subr.bf16.mxu0 %v2288
  %2968 = vmatpush1.bf16.msra.mxu0 %v2287
  %2969 = vmatprep.subr.bf16.mxu0 %v2294
  %2970 = vmatpush1.bf16.msra.mxu0 %v2293
  %2971 = vmatprep.subr.bf16.mxu0 %v2300
  %2972 = vmatpush1.bf16.msra.mxu0 %v2299
  %2973 = vmatprep.subr.bf16.mxu0 %v2306
  %2974 = vmatpush1.bf16.msra.mxu0 %v2305
  %2975 = vmatprep.subr.bf16.mxu0 %v2312
  %2976 = vmatpush1.bf16.msra.mxu0 %v2311
  %2977 = vmatprep.subr.bf16.mxu0 %v2318
  %2978 = vmatpush1.bf16.msra.mxu0 %v2317
  %2979 = vmatprep.subr.bf16.mxu0 %v2324
  %2980 = vmatpush1.bf16.msra.mxu0 %v2323
  %2981 = vmatprep.subr.bf16.mxu0 %v2330
  %2982 = vmatpush1.bf16.msra.mxu0 %v2329
  %2983 = vmatprep.subr.bf16.mxu0 %v2336
  %2984 = vmatpush1.bf16.msra.mxu0 %v2335
  %2985 = vmatprep.subr.bf16.mxu0 %v2342
  %2986 = vmatpush1.bf16.msra.mxu0 %v2341
  %2987 = vmatprep.subr.bf16.mxu0 0
  %2988 = vmatpush1.bf16.msra.mxu0 0
  %2989 = vmatprep.subr.bf16.mxu0 0
  %2990 = vmatpush1.bf16.msra.mxu0 0
  %2991 = vmatprep.subr.bf16.mxu0 0
  %2992 = vmatpush1.bf16.msra.mxu0 0
  %2993 = vmatprep.subr.bf16.mxu0 0
  %2994 = vmatpush1.bf16.msra.mxu0 0
  %2995 = vmatprep.subr.bf16.mxu0 0
  %2996 = vmatpush1.bf16.msra.mxu0 0
  %2997 = vmatprep.mubr.bf16.mxu0 %v2799
  %2998 = vmatmul.mubr.bf16.gmra.mrb[0].mxu0 %v63
  %v2999 = vpop.f32.mrb[0].mxu0
  %v3000 = vadd.f32 %v2959, %v2999
  %v3001 = vpop.f32.mrb[0].mxu0
  %v3002 = vadd.f32 %v2961, %v3001
  %v3003 = vpop.f32.mrb[0].mxu0
  %v3004 = vpop.f32.mrb[0].mxu0
  %3005 = vdwg.mxu0
  %3006 = vmatprep.subr.bf16.mxu0 %v1900
  %3007 = vmatpush1.bf16.msra.mxu0 %v1899
  %3008 = vmatprep.subr.bf16.mxu0 %v1906
  %3009 = vmatpush1.bf16.msra.mxu0 %v1905
  %3010 = vmatprep.subr.bf16.mxu0 %v1912
  %3011 = vmatpush1.bf16.msra.mxu0 %v1911
  %3012 = vmatprep.subr.bf16.mxu0 %v1918
  %3013 = vmatpush1.bf16.msra.mxu0 %v1917
  %3014 = vmatprep.subr.bf16.mxu0 %v1924
  %3015 = vmatpush1.bf16.msra.mxu0 %v1923
  %3016 = vmatprep.subr.bf16.mxu0 %v1930
  %3017 = vmatpush1.bf16.msra.mxu0 %v1929
  %3018 = vmatprep.subr.bf16.mxu0 %v1936
  %3019 = vmatpush1.bf16.msra.mxu0 %v1935
  %3020 = vmatprep.subr.bf16.mxu0 %v1942
  %3021 = vmatpush1.bf16.msra.mxu0 %v1941
  %3022 = vmatprep.subr.bf16.mxu0 %v1948
  %3023 = vmatpush1.bf16.msra.mxu0 %v1947
  %3024 = vmatprep.subr.bf16.mxu0 %v1954
  %3025 = vmatpush1.bf16.msra.mxu0 %v1953
  %3026 = vmatprep.subr.bf16.mxu0 %v1960
  %3027 = vmatpush1.bf16.msra.mxu0 %v1959
  %3028 = vmatprep.subr.bf16.mxu0 %v1966
  %3029 = vmatpush1.bf16.msra.mxu0 %v1965
  %3030 = vmatprep.subr.bf16.mxu0 %v1972
  %3031 = vmatpush1.bf16.msra.mxu0 %v1971
  %3032 = vmatprep.subr.bf16.mxu0 %v1978
  %3033 = vmatpush1.bf16.msra.mxu0 %v1977
  %3034 = vmatprep.subr.bf16.mxu0 %v1984
  %3035 = vmatpush1.bf16.msra.mxu0 %v1983
  %3036 = vmatprep.subr.bf16.mxu0 %v1990
  %3037 = vmatpush1.bf16.msra.mxu0 %v1989
  %3038 = vmatprep.mubr.bf16.mxu0 %v56
  %3039 = vmatmul.mubr.bf16.gmra.mrb[0].mxu0 %v55
  %v3040 = vpop.f32.mrb[0].mxu0
  %v3041 = vadd.f32 %v528, %v3040
  %v3042 = vpop.f32.mrb[0].mxu0
  %v3043 = vadd.f32 %v532, %v3042
  %v3044 = vpop.f32.mrb[0].mxu0
  %v3045 = vpop.f32.mrb[0].mxu0
  %3046 = vdwg.mxu0
  %3047 = vmatprep.subr.bf16.mxu0 %v1996
  %3048 = vmatpush1.bf16.msra.mxu0 %v1995
  %3049 = vmatprep.subr.bf16.mxu0 %v2002
  %3050 = vmatpush1.bf16.msra.mxu0 %v2001
  %3051 = vmatprep.subr.bf16.mxu0 %v2008
  %3052 = vmatpush1.bf16.msra.mxu0 %v2007
  %3053 = vmatprep.subr.bf16.mxu0 %v2014
  %3054 = vmatpush1.bf16.msra.mxu0 %v2013
  %3055 = vmatprep.subr.bf16.mxu0 %v2020
  %3056 = vmatpush1.bf16.msra.mxu0 %v2019
  %3057 = vmatprep.subr.bf16.mxu0 %v2026
  %3058 = vmatpush1.bf16.msra.mxu0 %v2025
  %3059 = vmatprep.subr.bf16.mxu0 %v2032
  %3060 = vmatpush1.bf16.msra.mxu0 %v2031
  %3061 = vmatprep.subr.bf16.mxu0 %v2038
  %3062 = vmatpush1.bf16.msra.mxu0 %v2037
  %3063 = vmatprep.subr.bf16.mxu0 %v2044
  %3064 = vmatpush1.bf16.msra.mxu0 %v2043
  %3065 = vmatprep.subr.bf16.mxu0 %v2050
  %3066 = vmatpush1.bf16.msra.mxu0 %v2049
  %3067 = vmatprep.subr.bf16.mxu0 %v2056
  %3068 = vmatpush1.bf16.msra.mxu0 %v2055
  %3069 = vmatprep.subr.bf16.mxu0 %v2062
  %3070 = vmatpush1.bf16.msra.mxu0 %v2061
  %3071 = vmatprep.subr.bf16.mxu0 %v2068
  %3072 = vmatpush1.bf16.msra.mxu0 %v2067
  %3073 = vmatprep.subr.bf16.mxu0 %v2074
  %3074 = vmatpush1.bf16.msra.mxu0 %v2073
  %3075 = vmatprep.subr.bf16.mxu0 %v2080
  %3076 = vmatpush1.bf16.msra.mxu0 %v2079
  %3077 = vmatprep.subr.bf16.mxu0 %v2086
  %3078 = vmatpush1.bf16.msra.mxu0 %v2085
  %3079 = vmatprep.mubr.bf16.mxu0 %v58
  %3080 = vmatmul.mubr.bf16.gmra.mrb[0].mxu0 %v57
  %v3081 = vpop.f32.mrb[0].mxu0
  %v3082 = vadd.f32 %v3041, %v3081
  %v3083 = vpop.f32.mrb[0].mxu0
  %v3084 = vadd.f32 %v3043, %v3083
  %v3085 = vpop.f32.mrb[0].mxu0
  %v3086 = vpop.f32.mrb[0].mxu0
  %3087 = vdwg.mxu0
  %3088 = vmatprep.subr.bf16.mxu0 %v2092
  %3089 = vmatpush1.bf16.msra.mxu0 %v2091
  %3090 = vmatprep.subr.bf16.mxu0 %v2098
  %3091 = vmatpush1.bf16.msra.mxu0 %v2097
  %3092 = vmatprep.subr.bf16.mxu0 %v2104
  %3093 = vmatpush1.bf16.msra.mxu0 %v2103
  %3094 = vmatprep.subr.bf16.mxu0 %v2110
  %3095 = vmatpush1.bf16.msra.mxu0 %v2109
  %3096 = vmatprep.subr.bf16.mxu0 %v2116
  %3097 = vmatpush1.bf16.msra.mxu0 %v2115
  %3098 = vmatprep.subr.bf16.mxu0 %v2122
  %3099 = vmatpush1.bf16.msra.mxu0 %v2121
  %3100 = vmatprep.subr.bf16.mxu0 %v2128
  %3101 = vmatpush1.bf16.msra.mxu0 %v2127
  %3102 = vmatprep.subr.bf16.mxu0 %v2134
  %3103 = vmatpush1.bf16.msra.mxu0 %v2133
  %3104 = vmatprep.subr.bf16.mxu0 %v2140
  %3105 = vmatpush1.bf16.msra.mxu0 %v2139
  %3106 = vmatprep.subr.bf16.mxu0 %v2146
  %3107 = vmatpush1.bf16.msra.mxu0 %v2145
  %3108 = vmatprep.subr.bf16.mxu0 %v2152
  %3109 = vmatpush1.bf16.msra.mxu0 %v2151
  %3110 = vmatprep.subr.bf16.mxu0 %v2158
  %3111 = vmatpush1.bf16.msra.mxu0 %v2157
  %3112 = vmatprep.subr.bf16.mxu0 %v2164
  %3113 = vmatpush1.bf16.msra.mxu0 %v2163
  %3114 = vmatprep.subr.bf16.mxu0 %v2170
  %3115 = vmatpush1.bf16.msra.mxu0 %v2169
  %3116 = vmatprep.subr.bf16.mxu0 %v2176
  %3117 = vmatpush1.bf16.msra.mxu0 %v2175
  %3118 = vmatprep.subr.bf16.mxu0 %v2182
  %3119 = vmatpush1.bf16.msra.mxu0 %v2181
  %3120 = vmatprep.mubr.bf16.mxu0 %v60
  %3121 = vmatmul.mubr.bf16.gmra.mrb[0].mxu0 %v59
  %v3122 = vpop.f32.mrb[0].mxu0
  %v3123 = vadd.f32 %v3082, %v3122
  %v3124 = vpop.f32.mrb[0].mxu0
  %v3125 = vadd.f32 %v3084, %v3124
  %v3126 = vpop.f32.mrb[0].mxu0
  %v3127 = vpop.f32.mrb[0].mxu0
  %3128 = vdwg.mxu0
  %3129 = vmatprep.subr.bf16.mxu0 %v2188
  %3130 = vmatpush1.bf16.msra.mxu0 %v2187
  %3131 = vmatprep.subr.bf16.mxu0 %v2194
  %3132 = vmatpush1.bf16.msra.mxu0 %v2193
  %3133 = vmatprep.subr.bf16.mxu0 %v2200
  %3134 = vmatpush1.bf16.msra.mxu0 %v2199
  %3135 = vmatprep.subr.bf16.mxu0 %v2206
  %3136 = vmatpush1.bf16.msra.mxu0 %v2205
  %3137 = vmatprep.subr.bf16.mxu0 %v2212
  %3138 = vmatpush1.bf16.msra.mxu0 %v2211
  %3139 = vmatprep.subr.bf16.mxu0 %v2218
  %3140 = vmatpush1.bf16.msra.mxu0 %v2217
  %3141 = vmatprep.subr.bf16.mxu0 %v2224
  %3142 = vmatpush1.bf16.msra.mxu0 %v2223
  %3143 = vmatprep.subr.bf16.mxu0 %v2230
  %3144 = vmatpush1.bf16.msra.mxu0 %v2229
  %3145 = vmatprep.subr.bf16.mxu0 %v2236
  %3146 = vmatpush1.bf16.msra.mxu0 %v2235
  %3147 = vmatprep.subr.bf16.mxu0 %v2242
  %3148 = vmatpush1.bf16.msra.mxu0 %v2241
  %3149 = vmatprep.subr.bf16.mxu0 %v2248
  %3150 = vmatpush1.bf16.msra.mxu0 %v2247
  %3151 = vmatprep.subr.bf16.mxu0 %v2254
  %3152 = vmatpush1.bf16.msra.mxu0 %v2253
  %3153 = vmatprep.subr.bf16.mxu0 %v2260
  %3154 = vmatpush1.bf16.msra.mxu0 %v2259
  %3155 = vmatprep.subr.bf16.mxu0 %v2266
  %3156 = vmatpush1.bf16.msra.mxu0 %v2265
  %3157 = vmatprep.subr.bf16.mxu0 %v2272
  %3158 = vmatpush1.bf16.msra.mxu0 %v2271
  %3159 = vmatprep.subr.bf16.mxu0 %v2278
  %3160 = vmatpush1.bf16.msra.mxu0 %v2277
  %3161 = vmatprep.mubr.bf16.mxu0 %v62
  %3162 = vmatmul.mubr.bf16.gmra.mrb[0].mxu0 %v61
  %v3163 = vpop.f32.mrb[0].mxu0
  %v3164 = vadd.f32 %v3123, %v3163
  %v3165 = vpop.f32.mrb[0].mxu0
  %v3166 = vadd.f32 %v3125, %v3165
  %v3167 = vpop.f32.mrb[0].mxu0
  %v3168 = vpop.f32.mrb[0].mxu0
  %3169 = vdwg.mxu0
  %3170 = vmatprep.subr.bf16.mxu0 %v2284
  %3171 = vmatpush1.bf16.msra.mxu0 %v2283
  %3172 = vmatprep.subr.bf16.mxu0 %v2290
  %3173 = vmatpush1.bf16.msra.mxu0 %v2289
  %3174 = vmatprep.subr.bf16.mxu0 %v2296
  %3175 = vmatpush1.bf16.msra.mxu0 %v2295
  %3176 = vmatprep.subr.bf16.mxu0 %v2302
  %3177 = vmatpush1.bf16.msra.mxu0 %v2301
  %3178 = vmatprep.subr.bf16.mxu0 %v2308
  %3179 = vmatpush1.bf16.msra.mxu0 %v2307
  %3180 = vmatprep.subr.bf16.mxu0 %v2314
  %3181 = vmatpush1.bf16.msra.mxu0 %v2313
  %3182 = vmatprep.subr.bf16.mxu0 %v2320
  %3183 = vmatpush1.bf16.msra.mxu0 %v2319
  %3184 = vmatprep.subr.bf16.mxu0 %v2326
  %3185 = vmatpush1.bf16.msra.mxu0 %v2325
  %3186 = vmatprep.subr.bf16.mxu0 %v2332
  %3187 = vmatpush1.bf16.msra.mxu0 %v2331
  %3188 = vmatprep.subr.bf16.mxu0 %v2338
  %3189 = vmatpush1.bf16.msra.mxu0 %v2337
  %3190 = vmatprep.subr.bf16.mxu0 %v2344
  %3191 = vmatpush1.bf16.msra.mxu0 %v2343
  %3192 = vmatprep.subr.bf16.mxu0 0
  %3193 = vmatpush1.bf16.msra.mxu0 0
  %3194 = vmatprep.subr.bf16.mxu0 0
  %3195 = vmatpush1.bf16.msra.mxu0 0
  %3196 = vmatprep.subr.bf16.mxu0 0
  %3197 = vmatpush1.bf16.msra.mxu0 0
  %3198 = vmatprep.subr.bf16.mxu0 0
  %3199 = vmatpush1.bf16.msra.mxu0 0
  %3200 = vmatprep.subr.bf16.mxu0 0
  %3201 = vmatpush1.bf16.msra.mxu0 0
  %3202 = vmatprep.mubr.bf16.mxu0 %v2799
  %3203 = vmatmul.mubr.bf16.gmra.mrb[0].mxu0 %v63
  %v3204 = vpop.f32.mrb[0].mxu0
  %v3205 = vadd.f32 %v3164, %v3204
  %v3206 = vpop.f32.mrb[0].mxu0
  %v3207 = vadd.f32 %v3166, %v3206
  %v3208 = vpop.f32.mrb[0].mxu0
  %v3209 = vpop.f32.mrb[0].mxu0
  %3210 = vdwg.mxu0
  %3211 = vmatprep.subr.bf16.mxu0 %v1902
  %3212 = vmatpush1.bf16.msra.mxu0 %v1901
  %3213 = vmatprep.subr.bf16.mxu0 %v1908
  %3214 = vmatpush1.bf16.msra.mxu0 %v1907
  %3215 = vmatprep.subr.bf16.mxu0 %v1914
  %3216 = vmatpush1.bf16.msra.mxu0 %v1913
  %3217 = vmatprep.subr.bf16.mxu0 %v1920
  %3218 = vmatpush1.bf16.msra.mxu0 %v1919
  %3219 = vmatprep.subr.bf16.mxu0 %v1926
  %3220 = vmatpush1.bf16.msra.mxu0 %v1925
  %3221 = vmatprep.subr.bf16.mxu0 %v1932
  %3222 = vmatpush1.bf16.msra.mxu0 %v1931
  %3223 = vmatprep.subr.bf16.mxu0 %v1938
  %3224 = vmatpush1.bf16.msra.mxu0 %v1937
  %3225 = vmatprep.subr.bf16.mxu0 %v1944
  %3226 = vmatpush1.bf16.msra.mxu0 %v1943
  %3227 = vmatprep.subr.bf16.mxu0 %v1950
  %3228 = vmatpush1.bf16.msra.mxu0 %v1949
  %3229 = vmatprep.subr.bf16.mxu0 %v1956
  %3230 = vmatpush1.bf16.msra.mxu0 %v1955
  %3231 = vmatprep.subr.bf16.mxu0 %v1962
  %3232 = vmatpush1.bf16.msra.mxu0 %v1961
  %3233 = vmatprep.subr.bf16.mxu0 %v1968
  %3234 = vmatpush1.bf16.msra.mxu0 %v1967
  %3235 = vmatprep.subr.bf16.mxu0 %v1974
  %3236 = vmatpush1.bf16.msra.mxu0 %v1973
  %3237 = vmatprep.subr.bf16.mxu0 %v1980
  %3238 = vmatpush1.bf16.msra.mxu0 %v1979
  %3239 = vmatprep.subr.bf16.mxu0 %v1986
  %3240 = vmatpush1.bf16.msra.mxu0 %v1985
  %3241 = vmatprep.subr.bf16.mxu0 %v1992
  %3242 = vmatpush1.bf16.msra.mxu0 %v1991
  %3243 = vmatprep.mubr.bf16.mxu0 %v56
  %3244 = vmatmul.mubr.bf16.gmra.mrb[0].mxu0 %v55
  %v3245 = vpop.f32.mrb[0].mxu0
  %v3246 = vadd.f32 %v536, %v3245
  %v3247 = vpop.f32.mrb[0].mxu0
  %v3248 = vadd.f32 %v540, %v3247
  %v3249 = vpop.f32.mrb[0].mxu0
  %v3250 = vpop.f32.mrb[0].mxu0
  %3251 = vdwg.mxu0
  %3252 = vmatprep.subr.bf16.mxu0 %v1998
  %3253 = vmatpush1.bf16.msra.mxu0 %v1997
  %3254 = vmatprep.subr.bf16.mxu0 %v2004
  %3255 = vmatpush1.bf16.msra.mxu0 %v2003
  %3256 = vmatprep.subr.bf16.mxu0 %v2010
  %3257 = vmatpush1.bf16.msra.mxu0 %v2009
  %3258 = vmatprep.subr.bf16.mxu0 %v2016
  %3259 = vmatpush1.bf16.msra.mxu0 %v2015
  %3260 = vmatprep.subr.bf16.mxu0 %v2022
  %3261 = vmatpush1.bf16.msra.mxu0 %v2021
  %3262 = vmatprep.subr.bf16.mxu0 %v2028
  %3263 = vmatpush1.bf16.msra.mxu0 %v2027
  %3264 = vmatprep.subr.bf16.mxu0 %v2034
  %3265 = vmatpush1.bf16.msra.mxu0 %v2033
  %3266 = vmatprep.subr.bf16.mxu0 %v2040
  %3267 = vmatpush1.bf16.msra.mxu0 %v2039
  %3268 = vmatprep.subr.bf16.mxu0 %v2046
  %3269 = vmatpush1.bf16.msra.mxu0 %v2045
  %3270 = vmatprep.subr.bf16.mxu0 %v2052
  %3271 = vmatpush1.bf16.msra.mxu0 %v2051
  %3272 = vmatprep.subr.bf16.mxu0 %v2058
  %3273 = vmatpush1.bf16.msra.mxu0 %v2057
  %3274 = vmatprep.subr.bf16.mxu0 %v2064
  %3275 = vmatpush1.bf16.msra.mxu0 %v2063
  %3276 = vmatprep.subr.bf16.mxu0 %v2070
  %3277 = vmatpush1.bf16.msra.mxu0 %v2069
  %3278 = vmatprep.subr.bf16.mxu0 %v2076
  %3279 = vmatpush1.bf16.msra.mxu0 %v2075
  %3280 = vmatprep.subr.bf16.mxu0 %v2082
  %3281 = vmatpush1.bf16.msra.mxu0 %v2081
  %3282 = vmatprep.subr.bf16.mxu0 %v2088
  %3283 = vmatpush1.bf16.msra.mxu0 %v2087
  %3284 = vmatprep.mubr.bf16.mxu0 %v58
  %3285 = vmatmul.mubr.bf16.gmra.mrb[0].mxu0 %v57
  %v3286 = vpop.f32.mrb[0].mxu0
  %v3287 = vadd.f32 %v3246, %v3286
  %v3288 = vpop.f32.mrb[0].mxu0
  %v3289 = vadd.f32 %v3248, %v3288
  %v3290 = vpop.f32.mrb[0].mxu0
  %v3291 = vpop.f32.mrb[0].mxu0
  %3292 = vdwg.mxu0
  %3293 = vmatprep.subr.bf16.mxu0 %v2094
  %3294 = vmatpush1.bf16.msra.mxu0 %v2093
  %3295 = vmatprep.subr.bf16.mxu0 %v2100
  %3296 = vmatpush1.bf16.msra.mxu0 %v2099
  %3297 = vmatprep.subr.bf16.mxu0 %v2106
  %3298 = vmatpush1.bf16.msra.mxu0 %v2105
  %3299 = vmatprep.subr.bf16.mxu0 %v2112
  %3300 = vmatpush1.bf16.msra.mxu0 %v2111
  %3301 = vmatprep.subr.bf16.mxu0 %v2118
  %3302 = vmatpush1.bf16.msra.mxu0 %v2117
  %3303 = vmatprep.subr.bf16.mxu0 %v2124
  %3304 = vmatpush1.bf16.msra.mxu0 %v2123
  %3305 = vmatprep.subr.bf16.mxu0 %v2130
  %3306 = vmatpush1.bf16.msra.mxu0 %v2129
  %3307 = vmatprep.subr.bf16.mxu0 %v2136
  %3308 = vmatpush1.bf16.msra.mxu0 %v2135
  %3309 = vmatprep.subr.bf16.mxu0 %v2142
  %3310 = vmatpush1.bf16.msra.mxu0 %v2141
  %3311 = vmatprep.subr.bf16.mxu0 %v2148
  %3312 = vmatpush1.bf16.msra.mxu0 %v2147
  %3313 = vmatprep.subr.bf16.mxu0 %v2154
  %3314 = vmatpush1.bf16.msra.mxu0 %v2153
  %3315 = vmatprep.subr.bf16.mxu0 %v2160
  %3316 = vmatpush1.bf16.msra.mxu0 %v2159
  %3317 = vmatprep.subr.bf16.mxu0 %v2166
  %3318 = vmatpush1.bf16.msra.mxu0 %v2165
  %3319 = vmatprep.subr.bf16.mxu0 %v2172
  %3320 = vmatpush1.bf16.msra.mxu0 %v2171
  %3321 = vmatprep.subr.bf16.mxu0 %v2178
  %3322 = vmatpush1.bf16.msra.mxu0 %v2177
  %3323 = vmatprep.subr.bf16.mxu0 %v2184
  %3324 = vmatpush1.bf16.msra.mxu0 %v2183
  %3325 = vmatprep.mubr.bf16.mxu0 %v60
  %3326 = vmatmul.mubr.bf16.gmra.mrb[0].mxu0 %v59
  %v3327 = vpop.f32.mrb[0].mxu0
  %v3328 = vadd.f32 %v3287, %v3327
  %v3329 = vpop.f32.mrb[0].mxu0
  %v3330 = vadd.f32 %v3289, %v3329
  %v3331 = vpop.f32.mrb[0].mxu0
  %v3332 = vpop.f32.mrb[0].mxu0
  %3333 = vdwg.mxu0
  %3334 = vmatprep.subr.bf16.mxu0 %v2190
  %3335 = vmatpush1.bf16.msra.mxu0 %v2189
  %3336 = vmatprep.subr.bf16.mxu0 %v2196
  %3337 = vmatpush1.bf16.msra.mxu0 %v2195
  %3338 = vmatprep.subr.bf16.mxu0 %v2202
  %3339 = vmatpush1.bf16.msra.mxu0 %v2201
  %3340 = vmatprep.subr.bf16.mxu0 %v2208
  %3341 = vmatpush1.bf16.msra.mxu0 %v2207
  %3342 = vmatprep.subr.bf16.mxu0 %v2214
  %3343 = vmatpush1.bf16.msra.mxu0 %v2213
  %3344 = vmatprep.subr.bf16.mxu0 %v2220
  %3345 = vmatpush1.bf16.msra.mxu0 %v2219
  %3346 = vmatprep.subr.bf16.mxu0 %v2226
  %3347 = vmatpush1.bf16.msra.mxu0 %v2225
  %3348 = vmatprep.subr.bf16.mxu0 %v2232
  %3349 = vmatpush1.bf16.msra.mxu0 %v2231
  %3350 = vmatprep.subr.bf16.mxu0 %v2238
  %3351 = vmatpush1.bf16.msra.mxu0 %v2237
  %3352 = vmatprep.subr.bf16.mxu0 %v2244
  %3353 = vmatpush1.bf16.msra.mxu0 %v2243
  %3354 = vmatprep.subr.bf16.mxu0 %v2250
  %3355 = vmatpush1.bf16.msra.mxu0 %v2249
  %3356 = vmatprep.subr.bf16.mxu0 %v2256
  %3357 = vmatpush1.bf16.msra.mxu0 %v2255
  %3358 = vmatprep.subr.bf16.mxu0 %v2262
  %3359 = vmatpush1.bf16.msra.mxu0 %v2261
  %3360 = vmatprep.subr.bf16.mxu0 %v2268
  %3361 = vmatpush1.bf16.msra.mxu0 %v2267
  %3362 = vmatprep.subr.bf16.mxu0 %v2274
  %3363 = vmatpush1.bf16.msra.mxu0 %v2273
  %3364 = vmatprep.subr.bf16.mxu0 %v2280
  %3365 = vmatpush1.bf16.msra.mxu0 %v2279
  %3366 = vmatprep.mubr.bf16.mxu0 %v62
  %3367 = vmatmul.mubr.bf16.gmra.mrb[0].mxu0 %v61
  %v3368 = vpop.f32.mrb[0].mxu0
  %v3369 = vadd.f32 %v3328, %v3368
  %v3370 = vpop.f32.mrb[0].mxu0
  %v3371 = vadd.f32 %v3330, %v3370
  %v3372 = vpop.f32.mrb[0].mxu0
  %v3373 = vpop.f32.mrb[0].mxu0
  %3374 = vdwg.mxu0
  %3375 = vmatprep.subr.bf16.mxu0 %v2286
  %3376 = vmatpush1.bf16.msra.mxu0 %v2285
  %3377 = vmatprep.subr.bf16.mxu0 %v2292
  %3378 = vmatpush1.bf16.msra.mxu0 %v2291
  %3379 = vmatprep.subr.bf16.mxu0 %v2298
  %3380 = vmatpush1.bf16.msra.mxu0 %v2297
  %3381 = vmatprep.subr.bf16.mxu0 %v2304
  %3382 = vmatpush1.bf16.msra.mxu0 %v2303
  %3383 = vmatprep.subr.bf16.mxu0 %v2310
  %3384 = vmatpush1.bf16.msra.mxu0 %v2309
  %3385 = vmatprep.subr.bf16.mxu0 %v2316
  %3386 = vmatpush1.bf16.msra.mxu0 %v2315
  %3387 = vmatprep.subr.bf16.mxu0 %v2322
  %3388 = vmatpush1.bf16.msra.mxu0 %v2321
  %3389 = vmatprep.subr.bf16.mxu0 %v2328
  %3390 = vmatpush1.bf16.msra.mxu0 %v2327
  %3391 = vmatprep.subr.bf16.mxu0 %v2334
  %3392 = vmatpush1.bf16.msra.mxu0 %v2333
  %3393 = vmatprep.subr.bf16.mxu0 %v2340
  %3394 = vmatpush1.bf16.msra.mxu0 %v2339
  %3395 = vmatprep.subr.bf16.mxu0 %v2346
  %3396 = vmatpush1.bf16.msra.mxu0 %v2345
  %3397 = vmatprep.subr.bf16.mxu0 0
  %3398 = vmatpush1.bf16.msra.mxu0 0
  %3399 = vmatprep.subr.bf16.mxu0 0
  %3400 = vmatpush1.bf16.msra.mxu0 0
  %3401 = vmatprep.subr.bf16.mxu0 0
  %3402 = vmatpush1.bf16.msra.mxu0 0
  %3403 = vmatprep.subr.bf16.mxu0 0
  %3404 = vmatpush1.bf16.msra.mxu0 0
  %3405 = vmatprep.subr.bf16.mxu0 0
  %3406 = vmatpush1.bf16.msra.mxu0 0
  %3407 = vmatprep.mubr.bf16.mxu0 %v2799
  %3408 = vmatmul.mubr.bf16.gmra.mrb[0].mxu0 %v63
  %v3409 = vpop.f32.mrb[0].mxu0
  %v3410 = vadd.f32 %v3369, %v3409
  %v3411 = vpop.f32.mrb[0].mxu0
  %v3412 = vadd.f32 %v3371, %v3411
  %v3413 = vpop.f32.mrb[0].mxu0
  %v3414 = vpop.f32.mrb[0].mxu0
  %3415 = vdwg.mxu0
  %v3416 = vmul.f32 %v3000, 0.01
  %v3417 = vmul.f32 %v3002, 0.01
  %v3418 = vmul.f32 %v3205, 0.01
  %v3419 = vmul.f32 %v3207, 0.01
  %v3420 = vmul.f32 %v3410, 0.01
  %v3421 = vmul.f32 %v3412, 0.01
  %v3422 = vmax.f32 %v3000, %v3416
  %v3423 = vmax.f32 %v3002, %v3417
  %v3424 = vmax.f32 %v3205, %v3418
  %v3425 = vmax.f32 %v3207, %v3419
  %v3426 = vmax.f32 %v3410, %v3420
  %v3427 = vmax.f32 %v3412, %v3421
  %v3428 = vld [vmem:[%s4] sm:$0xff]
  %v3429 = vld [vmem:[%s4 + $0x8] sm:$0xff]
  %v3430 = vld [vmem:[%s4 + $0x10] sm:$0xff]
  %v3431 = vld [vmem:[%s4 + $0x18] sm:$0xf]
  %v3432 = vld [vmem:[%s4 + $0x1c] sm:$0xff]
  %v3433 = vld [vmem:[%s4 + $0x24] sm:$0xff]
  %v3434 = vld [vmem:[%s4 + $0x2c] sm:$0xff]
  %v3435 = vld [vmem:[%s4 + $0x34] sm:$0xf]
  %v3436 = vld [vmem:[%s4 + $0x38] sm:$0xff]
  %v3437 = vld [vmem:[%s4 + $0x40] sm:$0xff]
  %v3438 = vld [vmem:[%s4 + $0x48] sm:$0xff]
  %v3439 = vld [vmem:[%s4 + $0x50] sm:$0xf]
  %v3440 = vld [vmem:[%s4 + $0x54] sm:$0xff]
  %v3441 = vld [vmem:[%s4 + $0x5c] sm:$0xff]
  %v3442 = vld [vmem:[%s4 + $0x64] sm:$0xff]
  %v3443 = vld [vmem:[%s4 + $0x6c] sm:$0xf]
  %v3444 = vld [vmem:[%s4 + $0x70] sm:$0xff]
  %v3445 = vld [vmem:[%s4 + $0x78] sm:$0xff]
  %v3446 = vld [vmem:[%s4 + $0x80] sm:$0xff]
  %v3447 = vld [vmem:[%s4 + $0x88] sm:$0xf]
  %v3448 = vld [vmem:[%s4 + $0x8c] sm:$0xff]
  %v3449 = vld [vmem:[%s4 + $0x94] sm:$0xff]
  %v3450 = vld [vmem:[%s4 + $0x9c] sm:$0xff]
  %v3451 = vld [vmem:[%s4 + $0xa4] sm:$0xf]
  %v3452 = vld [vmem:[%s4 + $0xa8] sm:$0xff]
  %v3453 = vld [vmem:[%s4 + $0xb0] sm:$0xff]
  %v3454 = vld [vmem:[%s4 + $0xb8] sm:$0xff]
  %v3455 = vld [vmem:[%s4 + $0xc0] sm:$0xf]
  %v3456 = vld [vmem:[%s4 + $0xc4] sm:$0xff]
  %v3457 = vld [vmem:[%s4 + $0xcc] sm:$0xff]
  %v3458 = vld [vmem:[%s4 + $0xd4] sm:$0xff]
  %v3459 = vld [vmem:[%s4 + $0xdc] sm:$0xf]
  %v3460 = vld [vmem:[%s4 + $0xe0] sm:$0xff]
  %v3461 = vld [vmem:[%s4 + $0xe8] sm:$0xff]
  %v3462 = vld [vmem:[%s4 + $0xf0] sm:$0xff]
  %v3463 = vld [vmem:[%s4 + $0xf8] sm:$0xf]
  %v3464 = vld [vmem:[%s4 + $0xfc] sm:$0xff]
  %v3465 = vld [vmem:[%s4 + $0x104] sm:$0xff]
  %v3466 = vld [vmem:[%s4 + $0x10c] sm:$0xff]
  %v3467 = vld [vmem:[%s4 + $0x114] sm:$0xf]
  %v3468 = vld [vmem:[%s4 + $0x118] sm:$0xff]
  %v3469 = vld [vmem:[%s4 + $0x120] sm:$0xff]
  %v3470 = vld [vmem:[%s4 + $0x128] sm:$0xff]
  %v3471 = vld [vmem:[%s4 + $0x130] sm:$0xf]
  %v3472 = vld [vmem:[%s4 + $0x134] sm:$0xff]
  %v3473 = vld [vmem:[%s4 + $0x13c] sm:$0xff]
  %v3474 = vld [vmem:[%s4 + $0x144] sm:$0xff]
  %v3475 = vld [vmem:[%s4 + $0x14c] sm:$0xf]
  %v3476 = vld [vmem:[%s4 + $0x150] sm:$0xff]
  %v3477 = vld [vmem:[%s4 + $0x158] sm:$0xff]
  %v3478 = vld [vmem:[%s4 + $0x160] sm:$0xff]
  %v3479 = vld [vmem:[%s4 + $0x168] sm:$0xf]
  %v3480 = vld [vmem:[%s4 + $0x16c] sm:$0xff]
  %v3481 = vld [vmem:[%s4 + $0x174] sm:$0xff]
  %v3482 = vld [vmem:[%s4 + $0x17c] sm:$0xff]
  %v3483 = vld [vmem:[%s4 + $0x184] sm:$0xf]
  %v3484 = vld [vmem:[%s4 + $0x188] sm:$0xff]
  %v3485 = vld [vmem:[%s4 + $0x190] sm:$0xff]
  %v3486 = vld [vmem:[%s4 + $0x198] sm:$0xff]
  %v3487 = vld [vmem:[%s4 + $0x1a0] sm:$0xf]
  %v3488 = vld [vmem:[%s4 + $0x1a4] sm:$0xff]
  %v3489 = vld [vmem:[%s4 + $0x1ac] sm:$0xff]
  %v3490 = vld [vmem:[%s4 + $0x1b4] sm:$0xff]
  %v3491 = vld [vmem:[%s4 + $0x1bc] sm:$0xf]
  %v3492 = vld [vmem:[%s4 + $0x1c0] sm:$0xff]
  %v3493 = vld [vmem:[%s4 + $0x1c8] sm:$0xff]
  %v3494 = vld [vmem:[%s4 + $0x1d0] sm:$0xff]
  %v3495 = vld [vmem:[%s4 + $0x1d8] sm:$0xf]
  %v3496 = vld [vmem:[%s4 + $0x1dc] sm:$0xff]
  %v3497 = vld [vmem:[%s4 + $0x1e4] sm:$0xff]
  %v3498 = vld [vmem:[%s4 + $0x1ec] sm:$0xff]
  %v3499 = vld [vmem:[%s4 + $0x1f4] sm:$0xf]
  %v3500 = vld [vmem:[%s4 + $0x1f8] sm:$0xff]
  %v3501 = vld [vmem:[%s4 + $0x200] sm:$0xff]
  %v3502 = vld [vmem:[%s4 + $0x208] sm:$0xff]
  %v3503 = vld [vmem:[%s4 + $0x210] sm:$0xf]
  %v3504 = vld [vmem:[%s4 + $0x214] sm:$0xff]
  %v3505 = vld [vmem:[%s4 + $0x21c] sm:$0xff]
  %v3506 = vld [vmem:[%s4 + $0x224] sm:$0xff]
  %v3507 = vld [vmem:[%s4 + $0x22c] sm:$0xf]
  %v3508 = vld [vmem:[%s4 + $0x230] sm:$0xff]
  %v3509 = vld [vmem:[%s4 + $0x238] sm:$0xff]
  %v3510 = vld [vmem:[%s4 + $0x240] sm:$0xff]
  %v3511 = vld [vmem:[%s4 + $0x248] sm:$0xf]
  %v3512 = vld [vmem:[%s4 + $0x24c] sm:$0xff]
  %v3513 = vld [vmem:[%s4 + $0x254] sm:$0xff]
  %v3514 = vld [vmem:[%s4 + $0x25c] sm:$0xff]
  %v3515 = vld [vmem:[%s4 + $0x264] sm:$0xf]
  %v3516 = vld [vmem:[%s4 + $0x268] sm:$0xff]
  %v3517 = vld [vmem:[%s4 + $0x270] sm:$0xff]
  %v3518 = vld [vmem:[%s4 + $0x278] sm:$0xff]
  %v3519 = vld [vmem:[%s4 + $0x280] sm:$0xf]
  %v3520 = vld [vmem:[%s4 + $0x284] sm:$0xff]
  %v3521 = vld [vmem:[%s4 + $0x28c] sm:$0xff]
  %v3522 = vld [vmem:[%s4 + $0x294] sm:$0xff]
  %v3523 = vld [vmem:[%s4 + $0x29c] sm:$0xf]
  %v3524 = vld [vmem:[%s4 + $0x2a0] sm:$0xff]
  %v3525 = vld [vmem:[%s4 + $0x2a8] sm:$0xff]
  %v3526 = vld [vmem:[%s4 + $0x2b0] sm:$0xff]
  %v3527 = vld [vmem:[%s4 + $0x2b8] sm:$0xf]
  %v3528 = vld [vmem:[%s4 + $0x2bc] sm:$0xff]
  %v3529 = vld [vmem:[%s4 + $0x2c4] sm:$0xff]
  %v3530 = vld [vmem:[%s4 + $0x2cc] sm:$0xff]
  %v3531 = vld [vmem:[%s4 + $0x2d4] sm:$0xf]
  %v3532 = vld [vmem:[%s4 + $0x2d8] sm:$0xff]
  %v3533 = vld [vmem:[%s4 + $0x2e0] sm:$0xff]
  %v3534 = vld [vmem:[%s4 + $0x2e8] sm:$0xff]
  %v3535 = vld [vmem:[%s4 + $0x2f0] sm:$0xf]
  %v3536 = vld [vmem:[%s4 + $0x2f4] sm:$0xff]
  %v3537 = vld [vmem:[%s4 + $0x2fc] sm:$0xff]
  %v3538 = vld [vmem:[%s4 + $0x304] sm:$0xff]
  %v3539 = vld [vmem:[%s4 + $0x30c] sm:$0xf]
  %v3540 = vld [vmem:[%s4 + $0x310] sm:$0xff]
  %v3541 = vld [vmem:[%s4 + $0x318] sm:$0xff]
  %v3542 = vld [vmem:[%s4 + $0x320] sm:$0xff]
  %v3543 = vld [vmem:[%s4 + $0x328] sm:$0xf]
  %v3544 = vld [vmem:[%s4 + $0x32c] sm:$0xff]
  %v3545 = vld [vmem:[%s4 + $0x334] sm:$0xff]
  %v3546 = vld [vmem:[%s4 + $0x33c] sm:$0xff]
  %v3547 = vld [vmem:[%s4 + $0x344] sm:$0xf]
  %v3548 = vld [vmem:[%s4 + $0x348] sm:$0xff]
  %v3549 = vld [vmem:[%s4 + $0x350] sm:$0xff]
  %v3550 = vld [vmem:[%s4 + $0x358] sm:$0xff]
  %v3551 = vld [vmem:[%s4 + $0x360] sm:$0xf]
  %v3552 = vld [vmem:[%s4 + $0x364] sm:$0xff]
  %v3553 = vld [vmem:[%s4 + $0x36c] sm:$0xff]
  %v3554 = vld [vmem:[%s4 + $0x374] sm:$0xff]
  %v3555 = vld [vmem:[%s4 + $0x37c] sm:$0xf]
  %v3556 = vld [vmem:[%s4 + $0x380] sm:$0xff]
  %v3557 = vld [vmem:[%s4 + $0x388] sm:$0xff]
  %v3558 = vld [vmem:[%s4 + $0x390] sm:$0xff]
  %v3559 = vld [vmem:[%s4 + $0x398] sm:$0xf]
  %v3560 = vld [vmem:[%s4 + $0x39c] sm:$0xff]
  %v3561 = vld [vmem:[%s4 + $0x3a4] sm:$0xff]
  %v3562 = vld [vmem:[%s4 + $0x3ac] sm:$0xff]
  %v3563 = vld [vmem:[%s4 + $0x3b4] sm:$0xf]
  %v3564 = vpack.c.bf16 %v3422, %v3422
  %v3565 = vpack.c.bf16 %v3423, %v3423
  %v3566 = vpack.c.bf16 %v3424, %v3424
  %v3703 = vunpack.c.l.b16 %v3428
  %v3704 = vunpack.c.h.b16 %v3428
  %v3705 = vunpack.c.l.b16 %v3429
  %v3706 = vunpack.c.h.b16 %v3429
  %v3707 = vunpack.c.l.b16 %v3430
  %v3708 = vunpack.c.h.b16 %v3430
  %v3709 = vunpack.c.l.b16 %v3431
  %v3710 = vunpack.c.l.b16 %v3432
  %v3711 = vunpack.c.h.b16 %v3432
  %v3712 = vunpack.c.l.b16 %v3433
  %v3713 = vunpack.c.h.b16 %v3433
  %v3714 = vunpack.c.l.b16 %v3434
  %v3715 = vunpack.c.h.b16 %v3434
  %v3716 = vunpack.c.l.b16 %v3435
  %v3717 = vunpack.c.l.b16 %v3436
  %v3718 = vunpack.c.h.b16 %v3436
  %v3719 = vunpack.c.l.b16 %v3437
  %v3720 = vunpack.c.h.b16 %v3437
  %v3721 = vunpack.c.l.b16 %v3438
  %v3722 = vunpack.c.h.b16 %v3438
  %v3723 = vunpack.c.l.b16 %v3439
  %v3724 = vunpack.c.l.b16 %v3440
  %v3725 = vunpack.c.h.b16 %v3440
  %v3726 = vunpack.c.l.b16 %v3441
  %v3727 = vunpack.c.h.b16 %v3441
  %v3728 = vunpack.c.l.b16 %v3442
  %v3729 = vunpack.c.h.b16 %v3442
  %v3730 = vunpack.c.l.b16 %v3443
  %v3731 = vunpack.c.l.b16 %v3444
  %v3732 = vunpack.c.h.b16 %v3444
  %v3733 = vunpack.c.l.b16 %v3445
  %v3734 = vunpack.c.h.b16 %v3445
  %v3735 = vunpack.c.l.b16 %v3446
  %v3736 = vunpack.c.h.b16 %v3446
  %v3737 = vunpack.c.l.b16 %v3447
  %v3738 = vunpack.c.l.b16 %v3448
  %v3739 = vunpack.c.h.b16 %v3448
  %v3740 = vunpack.c.l.b16 %v3449
  %v3741 = vunpack.c.h.b16 %v3449
  %v3742 = vunpack.c.l.b16 %v3450
  %v3743 = vunpack.c.h.b16 %v3450
  %v3744 = vunpack.c.l.b16 %v3451
  %v3745 = vunpack.c.l.b16 %v3452
  %v3746 = vunpack.c.h.b16 %v3452
  %v3747 = vunpack.c.l.b16 %v3453
  %v3748 = vunpack.c.h.b16 %v3453
  %v3749 = vunpack.c.l.b16 %v3454
  %v3750 = vunpack.c.h.b16 %v3454
  %v3751 = vunpack.c.l.b16 %v3455
  %v3752 = vunpack.c.l.b16 %v3456
  %v3753 = vunpack.c.h.b16 %v3456
  %v3754 = vunpack.c.l.b16 %v3457
  %v3755 = vunpack.c.h.b16 %v3457
  %v3756 = vunpack.c.l.b16 %v3458
  %v3757 = vunpack.c.h.b16 %v3458
  %v3758 = vunpack.c.l.b16 %v3459
  %v3759 = vunpack.c.l.b16 %v3460
  %v3760 = vunpack.c.h.b16 %v3460
  %v3761 = vunpack.c.l.b16 %v3461
  %v3762 = vunpack.c.h.b16 %v3461
  %v3763 = vunpack.c.l.b16 %v3462
  %v3764 = vunpack.c.h.b16 %v3462
  %v3765 = vunpack.c.l.b16 %v3463
  %v3766 = vunpack.c.l.b16 %v3464
  %v3767 = vunpack.c.h.b16 %v3464
  %v3768 = vunpack.c.l.b16 %v3465
  %v3769 = vunpack.c.h.b16 %v3465
  %v3770 = vunpack.c.l.b16 %v3466
  %v3771 = vunpack.c.h.b16 %v3466
  %v3772 = vunpack.c.l.b16 %v3467
  %v3773 = vunpack.c.l.b16 %v3468
  %v3774 = vunpack.c.h.b16 %v3468
  %v3775 = vunpack.c.l.b16 %v3469
  %v3776 = vunpack.c.h.b16 %v3469
  %v3777 = vunpack.c.l.b16 %v3470
  %v3778 = vunpack.c.h.b16 %v3470
  %v3779 = vunpack.c.l.b16 %v3471
  %v3780 = vunpack.c.l.b16 %v3472
  %v3781 = vunpack.c.h.b16 %v3472
  %v3782 = vunpack.c.l.b16 %v3473
  %v3783 = vunpack.c.h.b16 %v3473
  %v3784 = vunpack.c.l.b16 %v3474
  %v3785 = vunpack.c.h.b16 %v3474
  %v3786 = vunpack.c.l.b16 %v3475
  %v3787 = vunpack.c.l.b16 %v3476
  %v3788 = vunpack.c.h.b16 %v3476
  %v3789 = vunpack.c.l.b16 %v3477
  %v3790 = vunpack.c.h.b16 %v3477
  %v3791 = vunpack.c.l.b16 %v3478
  %v3792 = vunpack.c.h.b16 %v3478
  %v3793 = vunpack.c.l.b16 %v3479
  %v3794 = vunpack.c.l.b16 %v3480
  %v3795 = vunpack.c.h.b16 %v3480
  %v3796 = vunpack.c.l.b16 %v3481
  %v3797 = vunpack.c.h.b16 %v3481
  %v3798 = vunpack.c.l.b16 %v3482
  %v3799 = vunpack.c.h.b16 %v3482
  %v3800 = vunpack.c.l.b16 %v3483
  %v3801 = vunpack.c.l.b16 %v3484
  %v3802 = vunpack.c.h.b16 %v3484
  %v3803 = vunpack.c.l.b16 %v3485
  %v3804 = vunpack.c.h.b16 %v3485
  %v3805 = vunpack.c.l.b16 %v3486
  %v3806 = vunpack.c.h.b16 %v3486
  %v3807 = vunpack.c.l.b16 %v3487
  %v3808 = vunpack.c.l.b16 %v3488
  %v3809 = vunpack.c.h.b16 %v3488
  %v3810 = vunpack.c.l.b16 %v3489
  %v3811 = vunpack.c.h.b16 %v3489
  %v3812 = vunpack.c.l.b16 %v3490
  %v3813 = vunpack.c.h.b16 %v3490
  %v3814 = vunpack.c.l.b16 %v3491
  %v3815 = vunpack.c.l.b16 %v3492
  %v3816 = vunpack.c.h.b16 %v3492
  %v3817 = vunpack.c.l.b16 %v3493
  %v3818 = vunpack.c.h.b16 %v3493
  %v3819 = vunpack.c.l.b16 %v3494
  %v3820 = vunpack.c.h.b16 %v3494
  %v3821 = vunpack.c.l.b16 %v3495
  %v3822 = vunpack.c.l.b16 %v3496
  %v3823 = vunpack.c.h.b16 %v3496
  %v3824 = vunpack.c.l.b16 %v3497
  %v3825 = vunpack.c.h.b16 %v3497
  %v3826 = vunpack.c.l.b16 %v3498
  %v3827 = vunpack.c.h.b16 %v3498
  %v3828 = vunpack.c.l.b16 %v3499
  %v3829 = vunpack.c.l.b16 %v3500
  %v3830 = vunpack.c.h.b16 %v3500
  %v3831 = vunpack.c.l.b16 %v3501
  %v3832 = vunpack.c.h.b16 %v3501
  %v3833 = vunpack.c.l.b16 %v3502
  %v3834 = vunpack.c.h.b16 %v3502
  %v3835 = vunpack.c.l.b16 %v3503
  %v3836 = vunpack.c.l.b16 %v3504
  %v3837 = vunpack.c.h.b16 %v3504
  %v3838 = vunpack.c.l.b16 %v3505
  %v3839 = vunpack.c.h.b16 %v3505
  %v3840 = vunpack.c.l.b16 %v3506
  %v3841 = vunpack.c.h.b16 %v3506
  %v3842 = vunpack.c.l.b16 %v3507
  %v3843 = vunpack.c.l.b16 %v3508
  %v3844 = vunpack.c.h.b16 %v3508
  %v3845 = vunpack.c.l.b16 %v3509
  %v3846 = vunpack.c.h.b16 %v3509
  %v3847 = vunpack.c.l.b16 %v3510
  %v3848 = vunpack.c.h.b16 %v3510
  %v3849 = vunpack.c.l.b16 %v3511
  %v3850 = vunpack.c.l.b16 %v3512
  %v3851 = vunpack.c.h.b16 %v3512
  %v3852 = vunpack.c.l.b16 %v3513
  %v3853 = vunpack.c.h.b16 %v3513
  %v3854 = vunpack.c.l.b16 %v3514
  %v3855 = vunpack.c.h.b16 %v3514
  %v3856 = vunpack.c.l.b16 %v3515
  %v3857 = vunpack.c.l.b16 %v3516
  %v3858 = vunpack.c.h.b16 %v3516
  %v3859 = vunpack.c.l.b16 %v3517
  %v3860 = vunpack.c.h.b16 %v3517
  %v3861 = vunpack.c.l.b16 %v3518
  %v3862 = vunpack.c.h.b16 %v3518
  %v3863 = vunpack.c.l.b16 %v3519
  %v3864 = vunpack.c.l.b16 %v3520
  %v3865 = vunpack.c.h.b16 %v3520
  %v3866 = vunpack.c.l.b16 %v3521
  %v3867 = vunpack.c.h.b16 %v3521
  %v3868 = vunpack.c.l.b16 %v3522
  %v3869 = vunpack.c.h.b16 %v3522
  %v3870 = vunpack.c.l.b16 %v3523
  %v3871 = vunpack.c.l.b16 %v3524
  %v3872 = vunpack.c.h.b16 %v3524
  %v3873 = vunpack.c.l.b16 %v3525
  %v3874 = vunpack.c.h.b16 %v3525
  %v3875 = vunpack.c.l.b16 %v3526
  %v3876 = vunpack.c.h.b16 %v3526
  %v3877 = vunpack.c.l.b16 %v3527
  %v3878 = vunpack.c.l.b16 %v3528
  %v3879 = vunpack.c.h.b16 %v3528
  %v3880 = vunpack.c.l.b16 %v3529
  %v3881 = vunpack.c.h.b16 %v3529
  %v3882 = vunpack.c.l.b16 %v3530
  %v3883 = vunpack.c.h.b16 %v3530
  %v3884 = vunpack.c.l.b16 %v3531
  %v3885 = vunpack.c.l.b16 %v3532
  %v3886 = vunpack.c.h.b16 %v3532
  %v3887 = vunpack.c.l.b16 %v3533
  %v3888 = vunpack.c.h.b16 %v3533
  %v3889 = vunpack.c.l.b16 %v3534
  %v3890 = vunpack.c.h.b16 %v3534
  %v3891 = vunpack.c.l.b16 %v3535
  %v3892 = vunpack.c.l.b16 %v3536
  %v3893 = vunpack.c.h.b16 %v3536
  %v3894 = vunpack.c.l.b16 %v3537
  %v3895 = vunpack.c.h.b16 %v3537
  %v3896 = vunpack.c.l.b16 %v3538
  %v3897 = vunpack.c.h.b16 %v3538
  %v3898 = vunpack.c.l.b16 %v3539
  %v3899 = vunpack.c.l.b16 %v3540
  %v3900 = vunpack.c.h.b16 %v3540
  %v3901 = vunpack.c.l.b16 %v3541
  %v3902 = vunpack.c.h.b16 %v3541
  %v3903 = vunpack.c.l.b16 %v3542
  %v3904 = vunpack.c.h.b16 %v3542
  %v3905 = vunpack.c.l.b16 %v3543
  %v3906 = vunpack.c.l.b16 %v3544
  %v3907 = vunpack.c.h.b16 %v3544
  %v3908 = vunpack.c.l.b16 %v3545
  %v3909 = vunpack.c.h.b16 %v3545
  %v3910 = vunpack.c.l.b16 %v3546
  %v3911 = vunpack.c.h.b16 %v3546
  %v3912 = vunpack.c.l.b16 %v3547
  %v3913 = vunpack.c.l.b16 %v3548
  %v3914 = vunpack.c.h.b16 %v3548
  %v3915 = vunpack.c.l.b16 %v3549
  %v3916 = vunpack.c.h.b16 %v3549
  %v3917 = vunpack.c.l.b16 %v3550
  %v3918 = vunpack.c.h.b16 %v3550
  %v3919 = vunpack.c.l.b16 %v3551
  %v3920 = vunpack.c.l.b16 %v3552
  %v3921 = vunpack.c.h.b16 %v3552
  %v3922 = vunpack.c.l.b16 %v3553
  %v3923 = vunpack.c.h.b16 %v3553
  %v3924 = vunpack.c.l.b16 %v3554
  %v3925 = vunpack.c.h.b16 %v3554
  %v3926 = vunpack.c.l.b16 %v3555
  %v3927 = vunpack.c.l.b16 %v3556
  %v3928 = vunpack.c.h.b16 %v3556
  %v3929 = vunpack.c.l.b16 %v3557
  %v3930 = vunpack.c.h.b16 %v3557
  %v3931 = vunpack.c.l.b16 %v3558
  %v3932 = vunpack.c.h.b16 %v3558
  %v3933 = vunpack.c.l.b16 %v3559
  %v3934 = vunpack.c.l.b16 %v3560
  %v3935 = vunpack.c.h.b16 %v3560
  %v3936 = vunpack.c.l.b16 %v3561
  %v3937 = vunpack.c.h.b16 %v3561
  %v3938 = vunpack.c.l.b16 %v3562
  %v3939 = vunpack.c.h.b16 %v3562
  %v3940 = vunpack.c.l.b16 %v3563
  %v3941 = vpack.c.b16 %v3710, %v3703
  %v3942 = vpack.c.b16 %v3711, %v3704
  %v3943 = vpack.c.b16 %v3712, %v3705
  %v3944 = vpack.c.b16 %v3713, %v3706
  %v3945 = vpack.c.b16 %v3714, %v3707
  %v3946 = vpack.c.b16 %v3715, %v3708
  %v3947 = vpack.c.b16 %v3716, %v3709
  %v3948 = vpack.c.b16 %v3724, %v3717
  %v3949 = vpack.c.b16 %v3725, %v3718
  %v3950 = vpack.c.b16 %v3726, %v3719
  %v3951 = vpack.c.b16 %v3727, %v3720
  %v3952 = vpack.c.b16 %v3728, %v3721
  %v3953 = vpack.c.b16 %v3729, %v3722
  %v3954 = vpack.c.b16 %v3730, %v3723
  %v3955 = vpack.c.b16 %v3738, %v3731
  %v3956 = vpack.c.b16 %v3739, %v3732
  %v3957 = vpack.c.b16 %v3740, %v3733
  %v3958 = vpack.c.b16 %v3741, %v3734
  %v3959 = vpack.c.b16 %v3742, %v3735
  %v3960 = vpack.c.b16 %v3743, %v3736
  %v3961 = vpack.c.b16 %v3744, %v3737
  %v3962 = vpack.c.b16 %v3752, %v3745
  %v3963 = vpack.c.b16 %v3753, %v3746
  %v3964 = vpack.c.b16 %v3754, %v3747
  %v3965 = vpack.c.b16 %v3755, %v3748
  %v3966 = vpack.c.b16 %v3756, %v3749
  %v3967 = vpack.c.b16 %v3757, %v3750
  %v3968 = vpack.c.b16 %v3758, %v3751
  %v3969 = vpack.c.b16 %v3766, %v3759
  %v3970 = vpack.c.b16 %v3767, %v3760
  %v3971 = vpack.c.b16 %v3768, %v3761
  %v3972 = vpack.c.b16 %v3769, %v3762
  %v3973 = vpack.c.b16 %v3770, %v3763
  %v3974 = vpack.c.b16 %v3771, %v3764
  %v3975 = vpack.c.b16 %v3772, %v3765
  %v3976 = vpack.c.b16 %v3780, %v3773
  %v3977 = vpack.c.b16 %v3781, %v3774
  %v3978 = vpack.c.b16 %v3782, %v3775
  %v3979 = vpack.c.b16 %v3783, %v3776
  %v3980 = vpack.c.b16 %v3784, %v3777
  %v3981 = vpack.c.b16 %v3785, %v3778
  %v3982 = vpack.c.b16 %v3786, %v3779
  %v3983 = vpack.c.b16 %v3794, %v3787
  %v3984 = vpack.c.b16 %v3795, %v3788
  %v3985 = vpack.c.b16 %v3796, %v3789
  %v3986 = vpack.c.b16 %v3797, %v3790
  %v3987 = vpack.c.b16 %v3798, %v3791
  %v3988 = vpack.c.b16 %v3799, %v3792
  %v3989 = vpack.c.b16 %v3800, %v3793
  %v3990 = vpack.c.b16 %v3808, %v3801
  %v3991 = vpack.c.b16 %v3809, %v3802
  %v3992 = vpack.c.b16 %v3810, %v3803
  %v3993 = vpack.c.b16 %v3811, %v3804
  %v3994 = vpack.c.b16 %v3812, %v3805
  %v3995 = vpack.c.b16 %v3813, %v3806
  %v3996 = vpack.c.b16 %v3814, %v3807
  %v3997 = vpack.c.b16 %v3822, %v3815
  %v3998 = vpack.c.b16 %v3823, %v3816
  %v3999 = vpack.c.b16 %v3824, %v3817
  %v4000 = vpack.c.b16 %v3825, %v3818
  %v4001 = vpack.c.b16 %v3826, %v3819
  %v4002 = vpack.c.b16 %v3827, %v3820
  %v4003 = vpack.c.b16 %v3828, %v3821
  %v4004 = vpack.c.b16 %v3836, %v3829
  %v4005 = vpack.c.b16 %v3837, %v3830
  %v4006 = vpack.c.b16 %v3838, %v3831
  %v4007 = vpack.c.b16 %v3839, %v3832
  %v4008 = vpack.c.b16 %v3840, %v3833
  %v4009 = vpack.c.b16 %v3841, %v3834
  %v4010 = vpack.c.b16 %v3842, %v3835
  %v4011 = vpack.c.b16 %v3850, %v3843
  %v4012 = vpack.c.b16 %v3851, %v3844
  %v4013 = vpack.c.b16 %v3852, %v3845
  %v4014 = vpack.c.b16 %v3853, %v3846
  %v4015 = vpack.c.b16 %v3854, %v3847
  %v4016 = vpack.c.b16 %v3855, %v3848
  %v4017 = vpack.c.b16 %v3856, %v3849
  %v4018 = vpack.c.b16 %v3864, %v3857
  %v4019 = vpack.c.b16 %v3865, %v3858
  %v4020 = vpack.c.b16 %v3866, %v3859
  %v4021 = vpack.c.b16 %v3867, %v3860
  %v4022 = vpack.c.b16 %v3868, %v3861
  %v4023 = vpack.c.b16 %v3869, %v3862
  %v4024 = vpack.c.b16 %v3870, %v3863
  %v4025 = vpack.c.b16 %v3878, %v3871
  %v4026 = vpack.c.b16 %v3879, %v3872
  %v4027 = vpack.c.b16 %v3880, %v3873
  %v4028 = vpack.c.b16 %v3881, %v3874
  %v4029 = vpack.c.b16 %v3882, %v3875
  %v4030 = vpack.c.b16 %v3883, %v3876
  %v4031 = vpack.c.b16 %v3884, %v3877
  %v4032 = vpack.c.b16 %v3892, %v3885
  %v4033 = vpack.c.b16 %v3893, %v3886
  %v4034 = vpack.c.b16 %v3894, %v3887
  %v4035 = vpack.c.b16 %v3895, %v3888
  %v4036 = vpack.c.b16 %v3896, %v3889
  %v4037 = vpack.c.b16 %v3897, %v3890
  %v4038 = vpack.c.b16 %v3898, %v3891
  %v4039 = vpack.c.b16 %v3906, %v3899
  %v4040 = vpack.c.b16 %v3907, %v3900
  %v4041 = vpack.c.b16 %v3908, %v3901
  %v4042 = vpack.c.b16 %v3909, %v3902
  %v4043 = vpack.c.b16 %v3910, %v3903
  %v4044 = vpack.c.b16 %v3911, %v3904
  %v4045 = vpack.c.b16 %v3912, %v3905
  %v4046 = vpack.c.b16 %v3920, %v3913
  %v4047 = vpack.c.b16 %v3921, %v3914
  %v4048 = vpack.c.b16 %v3922, %v3915
  %v4049 = vpack.c.b16 %v3923, %v3916
  %v4050 = vpack.c.b16 %v3924, %v3917
  %v4051 = vpack.c.b16 %v3925, %v3918
  %v4052 = vpack.c.b16 %v3926, %v3919
  %v4053 = vpack.c.b16 %v3934, %v3927
  %v4054 = vpack.c.b16 %v3935, %v3928
  %v4055 = vpack.c.b16 %v3936, %v3929
  %v4056 = vpack.c.b16 %v3937, %v3930
  %v4057 = vpack.c.b16 %v3938, %v3931
  %v4058 = vpack.c.b16 %v3939, %v3932
  %v4059 = vpack.c.b16 %v3940, %v3933
  %vm4179 = vcmask 130048
  %v4181 = vsel %vm4179, %v3566, 0
  %4183 = vmatprep.subr.bf16.mxu0 %v3942
  %4184 = vmatpush1.bf16.msra.mxu0 %v3941
  %4185 = vmatprep.subr.bf16.mxu0 %v3949
  %4186 = vmatpush1.bf16.msra.mxu0 %v3948
  %4187 = vmatprep.subr.bf16.mxu0 %v3956
  %4188 = vmatpush1.bf16.msra.mxu0 %v3955
  %4189 = vmatprep.subr.bf16.mxu0 %v3963
  %4190 = vmatpush1.bf16.msra.mxu0 %v3962
  %4191 = vmatprep.subr.bf16.mxu0 %v3970
  %4192 = vmatpush1.bf16.msra.mxu0 %v3969
  %4193 = vmatprep.subr.bf16.mxu0 %v3977
  %4194 = vmatpush1.bf16.msra.mxu0 %v3976
  %4195 = vmatprep.subr.bf16.mxu0 %v3984
  %4196 = vmatpush1.bf16.msra.mxu0 %v3983
  %4197 = vmatprep.subr.bf16.mxu0 %v3991
  %4198 = vmatpush1.bf16.msra.mxu0 %v3990
  %4199 = vmatprep.subr.bf16.mxu0 %v3998
  %4200 = vmatpush1.bf16.msra.mxu0 %v3997
  %4201 = vmatprep.subr.bf16.mxu0 %v4005
  %4202 = vmatpush1.bf16.msra.mxu0 %v4004
  %4203 = vmatprep.subr.bf16.mxu0 %v4012
  %4204 = vmatpush1.bf16.msra.mxu0 %v4011
  %4205 = vmatprep.subr.bf16.mxu0 %v4019
  %4206 = vmatpush1.bf16.msra.mxu0 %v4018
  %4207 = vmatprep.subr.bf16.mxu0 %v4026
  %4208 = vmatpush1.bf16.msra.mxu0 %v4025
  %4209 = vmatprep.subr.bf16.mxu0 %v4033
  %4210 = vmatpush1.bf16.msra.mxu0 %v4032
  %4211 = vmatprep.subr.bf16.mxu0 %v4040
  %4212 = vmatpush1.bf16.msra.mxu0 %v4039
  %4213 = vmatprep.subr.bf16.mxu0 %v4047
  %4214 = vmatpush1.bf16.msra.mxu0 %v4046
  %4215 = vmatprep.mubr.bf16.mxu0 %v3565
  %4216 = vmatmul.mubr.bf16.gmra.mrb[0].mxu0 %v3564
  %v4217 = vpop.f32.mrb[0].mxu0
  %v4218 = vadd.f32 0.0, %v4217
  %v4219 = vpop.f32.mrb[0].mxu0
  %v4220 = vadd.f32 0.0, %v4219
  %v4221 = vpop.f32.mrb[0].mxu0
  %v4222 = vpop.f32.mrb[0].mxu0
  %4223 = vdwg.mxu0
  %4224 = vmatprep.subr.bf16.mxu0 %v4054
  %4225 = vmatpush1.bf16.msra.mxu0 %v4053
  %4226 = vmatprep.subr.bf16.mxu0 0
  %4227 = vmatpush1.bf16.msra.mxu0 0
  %4228 = vmatprep.subr.bf16.mxu0 0
  %4229 = vmatpush1.bf16.msra.mxu0 0
  %4230 = vmatprep.subr.bf16.mxu0 0
  %4231 = vmatpush1.bf16.msra.mxu0 0
  %4232 = vmatprep.subr.bf16.mxu0 0
  %4233 = vmatpush1.bf16.msra.mxu0 0
  %4234 = vmatprep.subr.bf16.mxu0 0
  %4235 = vmatpush1.bf16.msra.mxu0 0
  %4236 = vmatprep.subr.bf16.mxu0 0
  %4237 = vmatpush1.bf16.msra.mxu0 0
  %4238 = vmatprep.subr.bf16.mxu0 0
  %4239 = vmatpush1.bf16.msra.mxu0 0
  %4240 = vmatprep.subr.bf16.mxu0 0
  %4241 = vmatpush1.bf16.msra.mxu0 0
  %4242 = vmatprep.subr.bf16.mxu0 0
  %4243 = vmatpush1.bf16.msra.mxu0 0
  %4244 = vmatprep.subr.bf16.mxu0 0
  %4245 = vmatpush1.bf16.msra.mxu0 0
  %4246 = vmatprep.subr.bf16.mxu0 0
  %4247 = vmatpush1.bf16.msra.mxu0 0
  %4248 = vmatprep.subr.bf16.mxu0 0
  %4249 = vmatpush1.bf16.msra.mxu0 0
  %4250 = vmatprep.subr.bf16.mxu0 0
  %4251 = vmatpush1.bf16.msra.mxu0 0
  %4252 = vmatprep.subr.bf16.mxu0 0
  %4253 = vmatpush1.bf16.msra.mxu0 0
  %4254 = vmatprep.subr.bf16.mxu0 0
  %4255 = vmatpush1.bf16.msra.mxu0 0
  %4256 = vmatprep.mubr.bf16.mxu0 0
  %4257 = vmatmul.mubr.bf16.gmra.mrb[0].mxu0 %v4181
  %v4258 = vpop.f32.mrb[0].mxu0
  %v4259 = vadd.f32 %v4218, %v4258
  %v4260 = vpop.f32.mrb[0].mxu0
  %v4261 = vadd.f32 %v4220, %v4260
  %v4262 = vpop.f32.mrb[0].mxu0
  %v4263 = vpop.f32.mrb[0].mxu0
  %4264 = vdwg.mxu0
  %4265 = vmatprep.subr.bf16.mxu0 %v3944
  %4266 = vmatpush1.bf16.msra.mxu0 %v3943
  %4267 = vmatprep.subr.bf16.mxu0 %v3951
  %4268 = vmatpush1.bf16.msra.mxu0 %v3950
  %4269 = vmatprep.subr.bf16.mxu0 %v3958
  %4270 = vmatpush1.bf16.msra.mxu0 %v3957
  %4271 = vmatprep.subr.bf16.mxu0 %v3965
  %4272 = vmatpush1.bf16.msra.mxu0 %v3964
  %4273 = vmatprep.subr.bf16.mxu0 %v3972
  %4274 = vmatpush1.bf16.msra.mxu0 %v3971
  %4275 = vmatprep.subr.bf16.mxu0 %v3979
  %4276 = vmatpush1.bf16.msra.mxu0 %v3978
  %4277 = vmatprep.subr.bf16.mxu0 %v3986
  %4278 = vmatpush1.bf16.msra.mxu0 %v3985
  %4279 = vmatprep.subr.bf16.mxu0 %v3993
  %4280 = vmatpush1.bf16.msra.mxu0 %v3992
  %4281 = vmatprep.subr.bf16.mxu0 %v4000
  %4282 = vmatpush1.bf16.msra.mxu0 %v3999
  %4283 = vmatprep.subr.bf16.mxu0 %v4007
  %4284 = vmatpush1.bf16.msra.mxu0 %v4006
  %4285 = vmatprep.subr.bf16.mxu0 %v4014
  %4286 = vmatpush1.bf16.msra.mxu0 %v4013
  %4287 = vmatprep.subr.bf16.mxu0 %v4021
  %4288 = vmatpush1.bf16.msra.mxu0 %v4020
  %4289 = vmatprep.subr.bf16.mxu0 %v4028
  %4290 = vmatpush1.bf16.msra.mxu0 %v4027
  %4291 = vmatprep.subr.bf16.mxu0 %v4035
  %4292 = vmatpush1.bf16.msra.mxu0 %v4034
  %4293 = vmatprep.subr.bf16.mxu0 %v4042
  %4294 = vmatpush1.bf16.msra.mxu0 %v4041
  %4295 = vmatprep.subr.bf16.mxu0 %v4049
  %4296 = vmatpush1.bf16.msra.mxu0 %v4048
  %4297 = vmatprep.mubr.bf16.mxu0 %v3565
  %4298 = vmatmul.mubr.bf16.gmra.mrb[0].mxu0 %v3564
  %v4299 = vpop.f32.mrb[0].mxu0
  %v4300 = vadd.f32 0.0, %v4299
  %v4301 = vpop.f32.mrb[0].mxu0
  %v4302 = vadd.f32 0.0, %v4301
  %v4303 = vpop.f32.mrb[0].mxu0
  %v4304 = vpop.f32.mrb[0].mxu0
  %4305 = vdwg.mxu0
  %4306 = vmatprep.subr.bf16.mxu0 %v4056
  %4307 = vmatpush1.bf16.msra.mxu0 %v4055
  %4308 = vmatprep.subr.bf16.mxu0 0
  %4309 = vmatpush1.bf16.msra.mxu0 0
  %4310 = vmatprep.subr.bf16.mxu0 0
  %4311 = vmatpush1.bf16.msra.mxu0 0
  %4312 = vmatprep.subr.bf16.mxu0 0
  %4313 = vmatpush1.bf16.msra.mxu0 0
  %4314 = vmatprep.subr.bf16.mxu0 0
  %4315 = vmatpush1.bf16.msra.mxu0 0
  %4316 = vmatprep.subr.bf16.mxu0 0
  %4317 = vmatpush1.bf16.msra.mxu0 0
  %4318 = vmatprep.subr.bf16.mxu0 0
  %4319 = vmatpush1.bf16.msra.mxu0 0
  %4320 = vmatprep.subr.bf16.mxu0 0
  %4321 = vmatpush1.bf16.msra.mxu0 0
  %4322 = vmatprep.subr.bf16.mxu0 0
  %4323 = vmatpush1.bf16.msra.mxu0 0
  %4324 = vmatprep.subr.bf16.mxu0 0
  %4325 = vmatpush1.bf16.msra.mxu0 0
  %4326 = vmatprep.subr.bf16.mxu0 0
  %4327 = vmatpush1.bf16.msra.mxu0 0
  %4328 = vmatprep.subr.bf16.mxu0 0
  %4329 = vmatpush1.bf16.msra.mxu0 0
  %4330 = vmatprep.subr.bf16.mxu0 0
  %4331 = vmatpush1.bf16.msra.mxu0 0
  %4332 = vmatprep.subr.bf16.mxu0 0
  %4333 = vmatpush1.bf16.msra.mxu0 0
  %4334 = vmatprep.subr.bf16.mxu0 0
  %4335 = vmatpush1.bf16.msra.mxu0 0
  %4336 = vmatprep.subr.bf16.mxu0 0
  %4337 = vmatpush1.bf16.msra.mxu0 0
  %4338 = vmatprep.mubr.bf16.mxu0 0
  %4339 = vmatmul.mubr.bf16.gmra.mrb[0].mxu0 %v4181
  %v4340 = vpop.f32.mrb[0].mxu0
  %v4341 = vadd.f32 %v4300, %v4340
  %v4342 = vpop.f32.mrb[0].mxu0
  %v4343 = vadd.f32 %v4302, %v4342
  %v4344 = vpop.f32.mrb[0].mxu0
  %v4345 = vpop.f32.mrb[0].mxu0
  %4346 = vdwg.mxu0
  %4347 = vmatprep.subr.bf16.mxu0 %v3946
  %4348 = vmatpush1.bf16.msra.mxu0 %v3945
  %4349 = vmatprep.subr.bf16.mxu0 %v3953
  %4350 = vmatpush1.bf16.msra.mxu0 %v3952
  %4351 = vmatprep.subr.bf16.mxu0 %v3960
  %4352 = vmatpush1.bf16.msra.mxu0 %v3959
  %4353 = vmatprep.subr.bf16.mxu0 %v3967
  %4354 = vmatpush1.bf16.msra.mxu0 %v3966
  %4355 = vmatprep.subr.bf16.mxu0 %v3974
  %4356 = vmatpush1.bf16.msra.mxu0 %v3973
  %4357 = vmatprep.subr.bf16.mxu0 %v3981
  %4358 = vmatpush1.bf16.msra.mxu0 %v3980
  %4359 = vmatprep.subr.bf16.mxu0 %v3988
  %4360 = vmatpush1.bf16.msra.mxu0 %v3987
  %4361 = vmatprep.subr.bf16.mxu0 %v3995
  %4362 = vmatpush1.bf16.msra.mxu0 %v3994
  %4363 = vmatprep.subr.bf16.mxu0 %v4002
  %4364 = vmatpush1.bf16.msra.mxu0 %v4001
  %4365 = vmatprep.subr.bf16.mxu0 %v4009
  %4366 = vmatpush1.bf16.msra.mxu0 %v4008
  %4367 = vmatprep.subr.bf16.mxu0 %v4016
  %4368 = vmatpush1.bf16.msra.mxu0 %v4015
  %4369 = vmatprep.subr.bf16.mxu0 %v4023
  %4370 = vmatpush1.bf16.msra.mxu0 %v4022
  %4371 = vmatprep.subr.bf16.mxu0 %v4030
  %4372 = vmatpush1.bf16.msra.mxu0 %v4029
  %4373 = vmatprep.subr.bf16.mxu0 %v4037
  %4374 = vmatpush1.bf16.msra.mxu0 %v4036
  %4375 = vmatprep.subr.bf16.mxu0 %v4044
  %4376 = vmatpush1.bf16.msra.mxu0 %v4043
  %4377 = vmatprep.subr.bf16.mxu0 %v4051
  %4378 = vmatpush1.bf16.msra.mxu0 %v4050
  %4379 = vmatprep.mubr.bf16.mxu0 %v3565
  %4380 = vmatmul.mubr.bf16.gmra.mrb[0].mxu0 %v3564
  %v4381 = vpop.f32.mrb[0].mxu0
  %v4382 = vadd.f32 0.0, %v4381
  %v4383 = vpop.f32.mrb[0].mxu0
  %v4384 = vadd.f32 0.0, %v4383
  %v4385 = vpop.f32.mrb[0].mxu0
  %v4386 = vpop.f32.mrb[0].mxu0
  %4387 = vdwg.mxu0
  %4388 = vmatprep.subr.bf16.mxu0 %v4058
  %4389 = vmatpush1.bf16.msra.mxu0 %v4057
  %4390 = vmatprep.subr.bf16.mxu0 0
  %4391 = vmatpush1.bf16.msra.mxu0 0
  %4392 = vmatprep.subr.bf16.mxu0 0
  %4393 = vmatpush1.bf16.msra.mxu0 0
  %4394 = vmatprep.subr.bf16.mxu0 0
  %4395 = vmatpush1.bf16.msra.mxu0 0
  %4396 = vmatprep.subr.bf16.mxu0 0
  %4397 = vmatpush1.bf16.msra.mxu0 0
  %4398 = vmatprep.subr.bf16.mxu0 0
  %4399 = vmatpush1.bf16.msra.mxu0 0
  %4400 = vmatprep.subr.bf16.mxu0 0
  %4401 = vmatpush1.bf16.msra.mxu0 0
  %4402 = vmatprep.subr.bf16.mxu0 0
  %4403 = vmatpush1.bf16.msra.mxu0 0
  %4404 = vmatprep.subr.bf16.mxu0 0
  %4405 = vmatpush1.bf16.msra.mxu0 0
  %4406 = vmatprep.subr.bf16.mxu0 0
  %4407 = vmatpush1.bf16.msra.mxu0 0
  %4408 = vmatprep.subr.bf16.mxu0 0
  %4409 = vmatpush1.bf16.msra.mxu0 0
  %4410 = vmatprep.subr.bf16.mxu0 0
  %4411 = vmatpush1.bf16.msra.mxu0 0
  %4412 = vmatprep.subr.bf16.mxu0 0
  %4413 = vmatpush1.bf16.msra.mxu0 0
  %4414 = vmatprep.subr.bf16.mxu0 0
  %4415 = vmatpush1.bf16.msra.mxu0 0
  %4416 = vmatprep.subr.bf16.mxu0 0
  %4417 = vmatpush1.bf16.msra.mxu0 0
  %4418 = vmatprep.subr.bf16.mxu0 0
  %4419 = vmatpush1.bf16.msra.mxu0 0
  %4420 = vmatprep.mubr.bf16.mxu0 0
  %4421 = vmatmul.mubr.bf16.gmra.mrb[0].mxu0 %v4181
  %v4422 = vpop.f32.mrb[0].mxu0
  %v4423 = vadd.f32 %v4382, %v4422
  %v4424 = vpop.f32.mrb[0].mxu0
  %v4425 = vadd.f32 %v4384, %v4424
  %v4426 = vpop.f32.mrb[0].mxu0
  %v4427 = vpop.f32.mrb[0].mxu0
  %4428 = vdwg.mxu0
  %4429 = vmatprep.subr.bf16.mxu0 0
  %4430 = vmatpush1.bf16.msra.mxu0 %v3947
  %4431 = vmatprep.subr.bf16.mxu0 0
  %4432 = vmatpush1.bf16.msra.mxu0 %v3954
  %4433 = vmatprep.subr.bf16.mxu0 0
  %4434 = vmatpush1.bf16.msra.mxu0 %v3961
  %4435 = vmatprep.subr.bf16.mxu0 0
  %4436 = vmatpush1.bf16.msra.mxu0 %v3968
  %4437 = vmatprep.subr.bf16.mxu0 0
  %4438 = vmatpush1.bf16.msra.mxu0 %v3975
  %4439 = vmatprep.subr.bf16.mxu0 0
  %4440 = vmatpush1.bf16.msra.mxu0 %v3982
  %4441 = vmatprep.subr.bf16.mxu0 0
  %4442 = vmatpush1.bf16.msra.mxu0 %v3989
  %4443 = vmatprep.subr.bf16.mxu0 0
  %4444 = vmatpush1.bf16.msra.mxu0 %v3996
  %4445 = vmatprep.subr.bf16.mxu0 0
  %4446 = vmatpush1.bf16.msra.mxu0 %v4003
  %4447 = vmatprep.subr.bf16.mxu0 0
  %4448 = vmatpush1.bf16.msra.mxu0 %v4010
  %4449 = vmatprep.subr.bf16.mxu0 0
  %4450 = vmatpush1.bf16.msra.mxu0 %v4017
  %4451 = vmatprep.subr.bf16.mxu0 0
  %4452 = vmatpush1.bf16.msra.mxu0 %v4024
  %4453 = vmatprep.subr.bf16.mxu0 0
  %4454 = vmatpush1.bf16.msra.mxu0 %v4031
  %4455 = vmatprep.subr.bf16.mxu0 0
  %4456 = vmatpush1.bf16.msra.mxu0 %v4038
  %4457 = vmatprep.subr.bf16.mxu0 0
  %4458 = vmatpush1.bf16.msra.mxu0 %v4045
  %4459 = vmatprep.subr.bf16.mxu0 0
  %4460 = vmatpush1.bf16.msra.mxu0 %v4052
  %4461 = vmatprep.mubr.bf16.mxu0 %v3565
  %4462 = vmatmul.mubr.bf16.gmra.mrb[0].mxu0 %v3564
  %v4463 = vpop.f32.mrb[0].mxu0
  %v4464 = vadd.f32 0.0, %v4463
  %v4465 = vpop.f32.mrb[0].mxu0
  %v4466 = vpop.f32.mrb[0].mxu0
  %v4467 = vpop.f32.mrb[0].mxu0
  %4468 = vdwg.mxu0
  %4469 = vmatprep.subr.bf16.mxu0 0
  %4470 = vmatpush1.bf16.msra.mxu0 %v4059
  %4471 = vmatprep.subr.bf16.mxu0 0
  %4472 = vmatpush1.bf16.msra.mxu0 0
  %4473 = vmatprep.subr.bf16.mxu0 0
  %4474 = vmatpush1.bf16.msra.mxu0 0
  %4475 = vmatprep.subr.bf16.mxu0 0
  %4476 = vmatpush1.bf16.msra.mxu0 0
  %4477 = vmatprep.subr.bf16.mxu0 0
  %4478 = vmatpush1.bf16.msra.mxu0 0
  %4479 = vmatprep.subr.bf16.mxu0 0
  %4480 = vmatpush1.bf16.msra.mxu0 0
  %4481 = vmatprep.subr.bf16.mxu0 0
  %4482 = vmatpush1.bf16.msra.mxu0 0
  %4483 = vmatprep.subr.bf16.mxu0 0
  %4484 = vmatpush1.bf16.msra.mxu0 0
  %4485 = vmatprep.subr.bf16.mxu0 0
  %4486 = vmatpush1.bf16.msra.mxu0 0
  %4487 = vmatprep.subr.bf16.mxu0 0
  %4488 = vmatpush1.bf16.msra.mxu0 0
  %4489 = vmatprep.subr.bf16.mxu0 0
  %4490 = vmatpush1.bf16.msra.mxu0 0
  %4491 = vmatprep.subr.bf16.mxu0 0
  %4492 = vmatpush1.bf16.msra.mxu0 0
  %4493 = vmatprep.subr.bf16.mxu0 0
  %4494 = vmatpush1.bf16.msra.mxu0 0
  %4495 = vmatprep.subr.bf16.mxu0 0
  %4496 = vmatpush1.bf16.msra.mxu0 0
  %4497 = vmatprep.subr.bf16.mxu0 0
  %4498 = vmatpush1.bf16.msra.mxu0 0
  %4499 = vmatprep.subr.bf16.mxu0 0
  %4500 = vmatpush1.bf16.msra.mxu0 0
  %4501 = vmatprep.mubr.bf16.mxu0 0
  %4502 = vmatmul.mubr.bf16.gmra.mrb[0].mxu0 %v4181
  %v4503 = vpop.f32.mrb[0].mxu0
  %v4504 = vadd.f32 %v4464, %v4503
  %v4505 = vpop.f32.mrb[0].mxu0
  %v4506 = vpop.f32.mrb[0].mxu0
  %v4507 = vpop.f32.mrb[0].mxu0
  %4508 = vdwg.mxu0
  %4512 = vrot.lane.b32.xlu0 %v3564, 112
  %v4513 = vpop.permute.xlu0 %4512
  %4514 = vrot.lane.b32.xlu0 %v3565, 112
  %v4515 = vpop.permute.xlu0 %4514
  %4516 = vrot.lane.b32.xlu0 %v3566, 112
  %v4517 = vpop.permute.xlu0 %4516
  %vm4518 = vcmask 916480
  %v4519 = vsel %vm4518, %v4513, %v4515
  %v4520 = vsel %vm4518, %v4515, %v4517
  %v4524 = vsel %vm4179, %v4517, 0
  %4526 = vmatprep.subr.bf16.mxu0 %v3942
  %4527 = vmatpush1.bf16.msra.mxu0 %v3941
  %4528 = vmatprep.subr.bf16.mxu0 %v3949
  %4529 = vmatpush1.bf16.msra.mxu0 %v3948
  %4530 = vmatprep.subr.bf16.mxu0 %v3956
  %4531 = vmatpush1.bf16.msra.mxu0 %v3955
  %4532 = vmatprep.subr.bf16.mxu0 %v3963
  %4533 = vmatpush1.bf16.msra.mxu0 %v3962
  %4534 = vmatprep.subr.bf16.mxu0 %v3970
  %4535 = vmatpush1.bf16.msra.mxu0 %v3969
  %4536 = vmatprep.subr.bf16.mxu0 %v3977
  %4537 = vmatpush1.bf16.msra.mxu0 %v3976
  %4538 = vmatprep.subr.bf16.mxu0 %v3984
  %4539 = vmatpush1.bf16.msra.mxu0 %v3983
  %4540 = vmatprep.subr.bf16.mxu0 %v3991
  %4541 = vmatpush1.bf16.msra.mxu0 %v3990
  %4542 = vmatprep.subr.bf16.mxu0 %v3998
  %4543 = vmatpush1.bf16.msra.mxu0 %v3997
  %4544 = vmatprep.subr.bf16.mxu0 %v4005
  %4545 = vmatpush1.bf16.msra.mxu0 %v4004
  %4546 = vmatprep.subr.bf16.mxu0 %v4012
  %4547 = vmatpush1.bf16.msra.mxu0 %v4011
  %4548 = vmatprep.subr.bf16.mxu0 %v4019
  %4549 = vmatpush1.bf16.msra.mxu0 %v4018
  %4550 = vmatprep.subr.bf16.mxu0 %v4026
  %4551 = vmatpush1.bf16.msra.mxu0 %v4025
  %4552 = vmatprep.subr.bf16.mxu0 %v4033
  %4553 = vmatpush1.bf16.msra.mxu0 %v4032
  %4554 = vmatprep.subr.bf16.mxu0 %v4040
  %4555 = vmatpush1.bf16.msra.mxu0 %v4039
  %4556 = vmatprep.subr.bf16.mxu0 %v4047
  %4557 = vmatpush1.bf16.msra.mxu0 %v4046
  %4558 = vmatprep.mubr.bf16.mxu0 %v4520
  %4559 = vmatmul.mubr.bf16.gmra.mrb[0].mxu0 %v4519
  %v4560 = vpop.f32.mrb[0].mxu0
  %v4561 = vadd.f32 0.0, %v4560
  %v4562 = vpop.f32.mrb[0].mxu0
  %v4563 = vadd.f32 0.0, %v4562
  %v4564 = vpop.f32.mrb[0].mxu0
  %v4565 = vpop.f32.mrb[0].mxu0
  %4566 = vdwg.mxu0
  %4567 = vmatprep.subr.bf16.mxu0 %v4054
  %4568 = vmatpush1.bf16.msra.mxu0 %v4053
  %4569 = vmatprep.subr.bf16.mxu0 0
  %4570 = vmatpush1.bf16.msra.mxu0 0
  %4571 = vmatprep.subr.bf16.mxu0 0
  %4572 = vmatpush1.bf16.msra.mxu0 0
  %4573 = vmatprep.subr.bf16.mxu0 0
  %4574 = vmatpush1.bf16.msra.mxu0 0
  %4575 = vmatprep.subr.bf16.mxu0 0
  %4576 = vmatpush1.bf16.msra.mxu0 0
  %4577 = vmatprep.subr.bf16.mxu0 0
  %4578 = vmatpush1.bf16.msra.mxu0 0
  %4579 = vmatprep.subr.bf16.mxu0 0
  %4580 = vmatpush1.bf16.msra.mxu0 0
  %4581 = vmatprep.subr.bf16.mxu0 0
  %4582 = vmatpush1.bf16.msra.mxu0 0
  %4583 = vmatprep.subr.bf16.mxu0 0
  %4584 = vmatpush1.bf16.msra.mxu0 0
  %4585 = vmatprep.subr.bf16.mxu0 0
  %4586 = vmatpush1.bf16.msra.mxu0 0
  %4587 = vmatprep.subr.bf16.mxu0 0
  %4588 = vmatpush1.bf16.msra.mxu0 0
  %4589 = vmatprep.subr.bf16.mxu0 0
  %4590 = vmatpush1.bf16.msra.mxu0 0
  %4591 = vmatprep.subr.bf16.mxu0 0
  %4592 = vmatpush1.bf16.msra.mxu0 0
  %4593 = vmatprep.subr.bf16.mxu0 0
  %4594 = vmatpush1.bf16.msra.mxu0 0
  %4595 = vmatprep.subr.bf16.mxu0 0
  %4596 = vmatpush1.bf16.msra.mxu0 0
  %4597 = vmatprep.subr.bf16.mxu0 0
  %4598 = vmatpush1.bf16.msra.mxu0 0
  %4599 = vmatprep.mubr.bf16.mxu0 0
  %4600 = vmatmul.mubr.bf16.gmra.mrb[0].mxu0 %v4524
  %v4601 = vpop.f32.mrb[0].mxu0
  %v4602 = vadd.f32 %v4561, %v4601
  %v4603 = vpop.f32.mrb[0].mxu0
  %v4604 = vadd.f32 %v4563, %v4603
  %v4605 = vpop.f32.mrb[0].mxu0
  %v4606 = vpop.f32.mrb[0].mxu0
  %4607 = vdwg.mxu0
  %4608 = vmatprep.subr.bf16.mxu0 %v3944
  %4609 = vmatpush1.bf16.msra.mxu0 %v3943
  %4610 = vmatprep.subr.bf16.mxu0 %v3951
  %4611 = vmatpush1.bf16.msra.mxu0 %v3950
  %4612 = vmatprep.subr.bf16.mxu0 %v3958
  %4613 = vmatpush1.bf16.msra.mxu0 %v3957
  %4614 = vmatprep.subr.bf16.mxu0 %v3965
  %4615 = vmatpush1.bf16.msra.mxu0 %v3964
  %4616 = vmatprep.subr.bf16.mxu0 %v3972
  %4617 = vmatpush1.bf16.msra.mxu0 %v3971
  %4618 = vmatprep.subr.bf16.mxu0 %v3979
  %4619 = vmatpush1.bf16.msra.mxu0 %v3978
  %4620 = vmatprep.subr.bf16.mxu0 %v3986
  %4621 = vmatpush1.bf16.msra.mxu0 %v3985
  %4622 = vmatprep.subr.bf16.mxu0 %v3993
  %4623 = vmatpush1.bf16.msra.mxu0 %v3992
  %4624 = vmatprep.subr.bf16.mxu0 %v4000
  %4625 = vmatpush1.bf16.msra.mxu0 %v3999
  %4626 = vmatprep.subr.bf16.mxu0 %v4007
  %4627 = vmatpush1.bf16.msra.mxu0 %v4006
  %4628 = vmatprep.subr.bf16.mxu0 %v4014
  %4629 = vmatpush1.bf16.msra.mxu0 %v4013
  %4630 = vmatprep.subr.bf16.mxu0 %v4021
  %4631 = vmatpush1.bf16.msra.mxu0 %v4020
  %4632 = vmatprep.subr.bf16.mxu0 %v4028
  %4633 = vmatpush1.bf16.msra.mxu0 %v4027
  %4634 = vmatprep.subr.bf16.mxu0 %v4035
  %4635 = vmatpush1.bf16.msra.mxu0 %v4034
  %4636 = vmatprep.subr.bf16.mxu0 %v4042
  %4637 = vmatpush1.bf16.msra.mxu0 %v4041
  %4638 = vmatprep.subr.bf16.mxu0 %v4049
  %4639 = vmatpush1.bf16.msra.mxu0 %v4048
  %4640 = vmatprep.mubr.bf16.mxu0 %v4520
  %4641 = vmatmul.mubr.bf16.gmra.mrb[0].mxu0 %v4519
  %v4642 = vpop.f32.mrb[0].mxu0
  %v4643 = vadd.f32 0.0, %v4642
  %v4644 = vpop.f32.mrb[0].mxu0
  %v4645 = vadd.f32 0.0, %v4644
  %v4646 = vpop.f32.mrb[0].mxu0
  %v4647 = vpop.f32.mrb[0].mxu0
  %4648 = vdwg.mxu0
  %4649 = vmatprep.subr.bf16.mxu0 %v4056
  %4650 = vmatpush1.bf16.msra.mxu0 %v4055
  %4651 = vmatprep.subr.bf16.mxu0 0
  %4652 = vmatpush1.bf16.msra.mxu0 0
  %4653 = vmatprep.subr.bf16.mxu0 0
  %4654 = vmatpush1.bf16.msra.mxu0 0
  %4655 = vmatprep.subr.bf16.mxu0 0
  %4656 = vmatpush1.bf16.msra.mxu0 0
  %4657 = vmatprep.subr.bf16.mxu0 0
  %4658 = vmatpush1.bf16.msra.mxu0 0
  %4659 = vmatprep.subr.bf16.mxu0 0
  %4660 = vmatpush1.bf16.msra.mxu0 0
  %4661 = vmatprep.subr.bf16.mxu0 0
  %4662 = vmatpush1.bf16.msra.mxu0 0
  %4663 = vmatprep.subr.bf16.mxu0 0
  %4664 = vmatpush1.bf16.msra.mxu0 0
  %4665 = vmatprep.subr.bf16.mxu0 0
  %4666 = vmatpush1.bf16.msra.mxu0 0
  %4667 = vmatprep.subr.bf16.mxu0 0
  %4668 = vmatpush1.bf16.msra.mxu0 0
  %4669 = vmatprep.subr.bf16.mxu0 0
  %4670 = vmatpush1.bf16.msra.mxu0 0
  %4671 = vmatprep.subr.bf16.mxu0 0
  %4672 = vmatpush1.bf16.msra.mxu0 0
  %4673 = vmatprep.subr.bf16.mxu0 0
  %4674 = vmatpush1.bf16.msra.mxu0 0
  %4675 = vmatprep.subr.bf16.mxu0 0
  %4676 = vmatpush1.bf16.msra.mxu0 0
  %4677 = vmatprep.subr.bf16.mxu0 0
  %4678 = vmatpush1.bf16.msra.mxu0 0
  %4679 = vmatprep.subr.bf16.mxu0 0
  %4680 = vmatpush1.bf16.msra.mxu0 0
  %4681 = vmatprep.mubr.bf16.mxu0 0
  %4682 = vmatmul.mubr.bf16.gmra.mrb[0].mxu0 %v4524
  %v4683 = vpop.f32.mrb[0].mxu0
  %v4684 = vadd.f32 %v4643, %v4683
  %v4685 = vpop.f32.mrb[0].mxu0
  %v4686 = vadd.f32 %v4645, %v4685
  %v4687 = vpop.f32.mrb[0].mxu0
  %v4688 = vpop.f32.mrb[0].mxu0
  %4689 = vdwg.mxu0
  %4690 = vmatprep.subr.bf16.mxu0 %v3946
  %4691 = vmatpush1.bf16.msra.mxu0 %v3945
  %4692 = vmatprep.subr.bf16.mxu0 %v3953
  %4693 = vmatpush1.bf16.msra.mxu0 %v3952
  %4694 = vmatprep.subr.bf16.mxu0 %v3960
  %4695 = vmatpush1.bf16.msra.mxu0 %v3959
  %4696 = vmatprep.subr.bf16.mxu0 %v3967
  %4697 = vmatpush1.bf16.msra.mxu0 %v3966
  %4698 = vmatprep.subr.bf16.mxu0 %v3974
  %4699 = vmatpush1.bf16.msra.mxu0 %v3973
  %4700 = vmatprep.subr.bf16.mxu0 %v3981
  %4701 = vmatpush1.bf16.msra.mxu0 %v3980
  %4702 = vmatprep.subr.bf16.mxu0 %v3988
  %4703 = vmatpush1.bf16.msra.mxu0 %v3987
  %4704 = vmatprep.subr.bf16.mxu0 %v3995
  %4705 = vmatpush1.bf16.msra.mxu0 %v3994
  %4706 = vmatprep.subr.bf16.mxu0 %v4002
  %4707 = vmatpush1.bf16.msra.mxu0 %v4001
  %4708 = vmatprep.subr.bf16.mxu0 %v4009
  %4709 = vmatpush1.bf16.msra.mxu0 %v4008
  %4710 = vmatprep.subr.bf16.mxu0 %v4016
  %4711 = vmatpush1.bf16.msra.mxu0 %v4015
  %4712 = vmatprep.subr.bf16.mxu0 %v4023
  %4713 = vmatpush1.bf16.msra.mxu0 %v4022
  %4714 = vmatprep.subr.bf16.mxu0 %v4030
  %4715 = vmatpush1.bf16.msra.mxu0 %v4029
  %4716 = vmatprep.subr.bf16.mxu0 %v4037
  %4717 = vmatpush1.bf16.msra.mxu0 %v4036
  %4718 = vmatprep.subr.bf16.mxu0 %v4044
  %4719 = vmatpush1.bf16.msra.mxu0 %v4043
  %4720 = vmatprep.subr.bf16.mxu0 %v4051
  %4721 = vmatpush1.bf16.msra.mxu0 %v4050
  %4722 = vmatprep.mubr.bf16.mxu0 %v4520
  %4723 = vmatmul.mubr.bf16.gmra.mrb[0].mxu0 %v4519
  %v4724 = vpop.f32.mrb[0].mxu0
  %v4725 = vadd.f32 0.0, %v4724
  %v4726 = vpop.f32.mrb[0].mxu0
  %v4727 = vadd.f32 0.0, %v4726
  %v4728 = vpop.f32.mrb[0].mxu0
  %v4729 = vpop.f32.mrb[0].mxu0
  %4730 = vdwg.mxu0
  %4731 = vmatprep.subr.bf16.mxu0 %v4058
  %4732 = vmatpush1.bf16.msra.mxu0 %v4057
  %4733 = vmatprep.subr.bf16.mxu0 0
  %4734 = vmatpush1.bf16.msra.mxu0 0
  %4735 = vmatprep.subr.bf16.mxu0 0
  %4736 = vmatpush1.bf16.msra.mxu0 0
  %4737 = vmatprep.subr.bf16.mxu0 0
  %4738 = vmatpush1.bf16.msra.mxu0 0
  %4739 = vmatprep.subr.bf16.mxu0 0
  %4740 = vmatpush1.bf16.msra.mxu0 0
  %4741 = vmatprep.subr.bf16.mxu0 0
  %4742 = vmatpush1.bf16.msra.mxu0 0
  %4743 = vmatprep.subr.bf16.mxu0 0
  %4744 = vmatpush1.bf16.msra.mxu0 0
  %4745 = vmatprep.subr.bf16.mxu0 0
  %4746 = vmatpush1.bf16.msra.mxu0 0
  %4747 = vmatprep.subr.bf16.mxu0 0
  %4748 = vmatpush1.bf16.msra.mxu0 0
  %4749 = vmatprep.subr.bf16.mxu0 0
  %4750 = vmatpush1.bf16.msra.mxu0 0
  %4751 = vmatprep.subr.bf16.mxu0 0
  %4752 = vmatpush1.bf16.msra.mxu0 0
  %4753 = vmatprep.subr.bf16.mxu0 0
  %4754 = vmatpush1.bf16.msra.mxu0 0
  %4755 = vmatprep.subr.bf16.mxu0 0
  %4756 = vmatpush1.bf16.msra.mxu0 0
  %4757 = vmatprep.subr.bf16.mxu0 0
  %4758 = vmatpush1.bf16.msra.mxu0 0
  %4759 = vmatprep.subr.bf16.mxu0 0
  %4760 = vmatpush1.bf16.msra.mxu0 0
  %4761 = vmatprep.subr.bf16.mxu0 0
  %4762 = vmatpush1.bf16.msra.mxu0 0
  %4763 = vmatprep.mubr.bf16.mxu0 0
  %4764 = vmatmul.mubr.bf16.gmra.mrb[0].mxu0 %v4524
  %v4765 = vpop.f32.mrb[0].mxu0
  %v4766 = vadd.f32 %v4725, %v4765
  %v4767 = vpop.f32.mrb[0].mxu0
  %v4768 = vadd.f32 %v4727, %v4767
  %v4769 = vpop.f32.mrb[0].mxu0
  %v4770 = vpop.f32.mrb[0].mxu0
  %4771 = vdwg.mxu0
  %4772 = vmatprep.subr.bf16.mxu0 0
  %4773 = vmatpush1.bf16.msra.mxu0 %v3947
  %4774 = vmatprep.subr.bf16.mxu0 0
  %4775 = vmatpush1.bf16.msra.mxu0 %v3954
  %4776 = vmatprep.subr.bf16.mxu0 0
  %4777 = vmatpush1.bf16.msra.mxu0 %v3961
  %4778 = vmatprep.subr.bf16.mxu0 0
  %4779 = vmatpush1.bf16.msra.mxu0 %v3968
  %4780 = vmatprep.subr.bf16.mxu0 0
  %4781 = vmatpush1.bf16.msra.mxu0 %v3975
  %4782 = vmatprep.subr.bf16.mxu0 0
  %4783 = vmatpush1.bf16.msra.mxu0 %v3982
  %4784 = vmatprep.subr.bf16.mxu0 0
  %4785 = vmatpush1.bf16.msra.mxu0 %v3989
  %4786 = vmatprep.subr.bf16.mxu0 0
  %4787 = vmatpush1.bf16.msra.mxu0 %v3996
  %4788 = vmatprep.subr.bf16.mxu0 0
  %4789 = vmatpush1.bf16.msra.mxu0 %v4003
  %4790 = vmatprep.subr.bf16.mxu0 0
  %4791 = vmatpush1.bf16.msra.mxu0 %v4010
  %4792 = vmatprep.subr.bf16.mxu0 0
  %4793 = vmatpush1.bf16.msra.mxu0 %v4017
  %4794 = vmatprep.subr.bf16.mxu0 0
  %4795 = vmatpush1.bf16.msra.mxu0 %v4024
  %4796 = vmatprep.subr.bf16.mxu0 0
  %4797 = vmatpush1.bf16.msra.mxu0 %v4031
  %4798 = vmatprep.subr.bf16.mxu0 0
  %4799 = vmatpush1.bf16.msra.mxu0 %v4038
  %4800 = vmatprep.subr.bf16.mxu0 0
  %4801 = vmatpush1.bf16.msra.mxu0 %v4045
  %4802 = vmatprep.subr.bf16.mxu0 0
  %4803 = vmatpush1.bf16.msra.mxu0 %v4052
  %4804 = vmatprep.mubr.bf16.mxu0 %v4520
  %4805 = vmatmul.mubr.bf16.gmra.mrb[0].mxu0 %v4519
  %v4806 = vpop.f32.mrb[0].mxu0
  %v4807 = vadd.f32 0.0, %v4806
  %v4808 = vpop.f32.mrb[0].mxu0
  %v4809 = vpop.f32.mrb[0].mxu0
  %v4810 = vpop.f32.mrb[0].mxu0
  %4811 = vdwg.mxu0
  %4812 = vmatprep.subr.bf16.mxu0 0
  %4813 = vmatpush1.bf16.msra.mxu0 %v4059
  %4814 = vmatprep.subr.bf16.mxu0 0
  %4815 = vmatpush1.bf16.msra.mxu0 0
  %4816 = vmatprep.subr.bf16.mxu0 0
  %4817 = vmatpush1.bf16.msra.mxu0 0
  %4818 = vmatprep.subr.bf16.mxu0 0
  %4819 = vmatpush1.bf16.msra.mxu0 0
  %4820 = vmatprep.subr.bf16.mxu0 0
  %4821 = vmatpush1.bf16.msra.mxu0 0
  %4822 = vmatprep.subr.bf16.mxu0 0
  %4823 = vmatpush1.bf16.msra.mxu0 0
  %4824 = vmatprep.subr.bf16.mxu0 0
  %4825 = vmatpush1.bf16.msra.mxu0 0
  %4826 = vmatprep.subr.bf16.mxu0 0
  %4827 = vmatpush1.bf16.msra.mxu0 0
  %4828 = vmatprep.subr.bf16.mxu0 0
  %4829 = vmatpush1.bf16.msra.mxu0 0
  %4830 = vmatprep.subr.bf16.mxu0 0
  %4831 = vmatpush1.bf16.msra.mxu0 0
  %4832 = vmatprep.subr.bf16.mxu0 0
  %4833 = vmatpush1.bf16.msra.mxu0 0
  %4834 = vmatprep.subr.bf16.mxu0 0
  %4835 = vmatpush1.bf16.msra.mxu0 0
  %4836 = vmatprep.subr.bf16.mxu0 0
  %4837 = vmatpush1.bf16.msra.mxu0 0
  %4838 = vmatprep.subr.bf16.mxu0 0
  %4839 = vmatpush1.bf16.msra.mxu0 0
  %4840 = vmatprep.subr.bf16.mxu0 0
  %4841 = vmatpush1.bf16.msra.mxu0 0
  %4842 = vmatprep.subr.bf16.mxu0 0
  %4843 = vmatpush1.bf16.msra.mxu0 0
  %4844 = vmatprep.mubr.bf16.mxu0 0
  %4845 = vmatmul.mubr.bf16.gmra.mrb[0].mxu0 %v4524
  %v4846 = vpop.f32.mrb[0].mxu0
  %v4847 = vadd.f32 %v4807, %v4846
  %v4848 = vpop.f32.mrb[0].mxu0
  %v4849 = vpop.f32.mrb[0].mxu0
  %v4850 = vpop.f32.mrb[0].mxu0
  %4851 = vdwg.mxu0
  %v4852 = vmax.f32 %v4259, %v4602
  %v4853 = vmax.f32 %v4261, %v4604
  %v4854 = vmax.f32 %v4341, %v4684
  %v4855 = vmax.f32 %v4343, %v4686
  %v4856 = vmax.f32 %v4423, %v4766
  %v4857 = vmax.f32 %v4425, %v4768
  %v4858 = vmax.f32 %v4504, %v4847
  %v4859 = vld [vmem:[%s5] sm:$0x7f]
  %v4861 = vlaneseq
  %v4862 = vshrl.u32 %v4861, 7
  %v4863 = vsub.s32 0, %v4862
  %v4864 = vrot.slane %v4859, %v4863
  %v4865 = vlaneseq
  %v4866 = vshrl.u32 %v4865, 7
  %v4867 = vsub.s32 1, %v4866
  %v4868 = vrot.slane %v4859, %v4867
  %v4869 = vlaneseq
  %v4870 = vshrl.u32 %v4869, 7
  %v4871 = vsub.s32 2, %v4870
  %v4872 = vrot.slane %v4859, %v4871
  %v4873 = vlaneseq
  %v4874 = vshrl.u32 %v4873, 7
  %v4875 = vsub.s32 3, %v4874
  %v4876 = vrot.slane %v4859, %v4875
  %v4877 = vlaneseq
  %v4878 = vshrl.u32 %v4877, 7
  %v4879 = vsub.s32 4, %v4878
  %v4880 = vrot.slane %v4859, %v4879
  %v4881 = vlaneseq
  %v4882 = vshrl.u32 %v4881, 7
  %v4883 = vsub.s32 5, %v4882
  %v4884 = vrot.slane %v4859, %v4883
  %v4885 = vlaneseq
  %v4886 = vshrl.u32 %v4885, 7
  %v4887 = vsub.s32 6, %v4886
  %v4888 = vrot.slane %v4859, %v4887
  %v4896 = vadd.f32 %v4852, %v4864
  %v4897 = vadd.f32 %v4853, %v4868
  %v4898 = vadd.f32 %v4854, %v4872
  %v4899 = vadd.f32 %v4855, %v4876
  %v4900 = vadd.f32 %v4856, %v4880
  %v4901 = vadd.f32 %v4857, %v4884
  %v4902 = vadd.f32 %v4858, %v4888
  %v4903 = vmul.f32 %v4896, 0.01
  %v4904 = vmul.f32 %v4897, 0.01
  %v4905 = vmul.f32 %v4898, 0.01
  %v4906 = vmul.f32 %v4899, 0.01
  %v4907 = vmul.f32 %v4900, 0.01
  %v4908 = vmul.f32 %v4901, 0.01
  %v4909 = vmul.f32 %v4902, 0.01
  %v4910 = vmax.f32 %v4896, %v4903
  %v4911 = vmax.f32 %v4897, %v4904
  %v4912 = vmax.f32 %v4898, %v4905
  %v4913 = vmax.f32 %v4899, %v4906
  %v4914 = vmax.f32 %v4900, %v4907
  %v4915 = vmax.f32 %v4901, %v4908
  %v4916 = vmax.f32 %v4902, %v4909
  %v4917 = vpack.c.bf16 %v4910, %v4910
  %v4918 = vpack.c.bf16 %v4911, %v4911
  %v4919 = vpack.c.bf16 %v4912, %v4912
  %v4920 = vpack.c.bf16 %v4913, %v4913
  %v4921 = vpack.c.bf16 %v4914, %v4914
  %v4922 = vpack.c.bf16 %v4915, %v4915
  %v4923 = vpack.c.bf16 %v4916, %v4916
  %v4924 = vld [vmem:[%s6] sm:$0xf]
  %v4925 = vld [vmem:[%s6 + $0x4] sm:$0xf]
  %v4926 = vld [vmem:[%s6 + $0x8] sm:$0xf]
  %v4927 = vld [vmem:[%s6 + $0xc] sm:$0xf]
  %v4928 = vld [vmem:[%s6 + $0x10] sm:$0xf]
  %v4929 = vld [vmem:[%s6 + $0x14] sm:$0xf]
  %v4930 = vld [vmem:[%s6 + $0x18] sm:$0xf]
  %v4931 = vld [vmem:[%s6 + $0x1c] sm:$0xf]
  %v4932 = vld [vmem:[%s6 + $0x20] sm:$0xf]
  %v4933 = vld [vmem:[%s6 + $0x24] sm:$0xf]
  %v4934 = vld [vmem:[%s6 + $0x28] sm:$0xf]
  %v4935 = vld [vmem:[%s6 + $0x2c] sm:$0xf]
  %v4936 = vld [vmem:[%s6 + $0x30] sm:$0xf]
  %v4937 = vld [vmem:[%s6 + $0x34] sm:$0xf]
  %v4938 = vld [vmem:[%s6 + $0x38] sm:$0xf]
  %v4939 = vld [vmem:[%s6 + $0x3c] sm:$0xf]
  %v4940 = vld [vmem:[%s6 + $0x40] sm:$0xf]
  %v4941 = vld [vmem:[%s6 + $0x44] sm:$0xf]
  %v4942 = vld [vmem:[%s6 + $0x48] sm:$0xf]
  %v4943 = vld [vmem:[%s6 + $0x4c] sm:$0xf]
  %v4944 = vld [vmem:[%s6 + $0x50] sm:$0xf]
  %v4945 = vld [vmem:[%s6 + $0x54] sm:$0xf]
  %v4946 = vld [vmem:[%s6 + $0x58] sm:$0xf]
  %v4947 = vld [vmem:[%s6 + $0x5c] sm:$0xf]
  %v4948 = vld [vmem:[%s6 + $0x60] sm:$0xf]
  %v4949 = vld [vmem:[%s6 + $0x64] sm:$0xf]
  %v4950 = vld [vmem:[%s6 + $0x68] sm:$0xf]
  %v4951 = vld [vmem:[%s6 + $0x6c] sm:$0xf]
  %v4952 = vld [vmem:[%s6 + $0x70] sm:$0xf]
  %v4953 = vld [vmem:[%s6 + $0x74] sm:$0xf]
  %v4954 = vld [vmem:[%s6 + $0x78] sm:$0xf]
  %v4955 = vld [vmem:[%s6 + $0x7c] sm:$0xf]
  %v4956 = vld [vmem:[%s6 + $0x80] sm:$0xf]
  %v4957 = vld [vmem:[%s6 + $0x84] sm:$0xf]
  %v4958 = vld [vmem:[%s6 + $0x88] sm:$0xf]
  %v4959 = vld [vmem:[%s6 + $0x8c] sm:$0xf]
  %v4960 = vld [vmem:[%s6 + $0x90] sm:$0xf]
  %v4961 = vld [vmem:[%s6 + $0x94] sm:$0xf]
  %v4962 = vld [vmem:[%s6 + $0x98] sm:$0xf]
  %v4963 = vld [vmem:[%s6 + $0x9c] sm:$0xf]
  %v4964 = vld [vmem:[%s6 + $0xa0] sm:$0xf]
  %v4965 = vld [vmem:[%s6 + $0xa4] sm:$0xf]
  %v4966 = vld [vmem:[%s6 + $0xa8] sm:$0xf]
  %v4967 = vld [vmem:[%s6 + $0xac] sm:$0xf]
  %v4968 = vld [vmem:[%s6 + $0xb0] sm:$0xf]
  %v4969 = vld [vmem:[%s6 + $0xb4] sm:$0xf]
  %v4970 = vld [vmem:[%s6 + $0xb8] sm:$0xf]
  %v4971 = vld [vmem:[%s6 + $0xbc] sm:$0xf]
  %v4972 = vld [vmem:[%s6 + $0xc0] sm:$0xf]
  %v4973 = vld [vmem:[%s6 + $0xc4] sm:$0xf]
  %v4974 = vld [vmem:[%s6 + $0xc8] sm:$0xf]
  %v4975 = vld [vmem:[%s6 + $0xcc] sm:$0xf]
  %v4976 = vld [vmem:[%s6 + $0xd0] sm:$0xf]
  %v4977 = vld [vmem:[%s6 + $0xd4] sm:$0xf]
  %v4978 = vld [vmem:[%s6 + $0xd8] sm:$0xf]
  %v4979 = vld [vmem:[%s6 + $0xdc] sm:$0xf]
  %v4980 = vld [vmem:[%s6 + $0xe0] sm:$0xf]
  %v4981 = vld [vmem:[%s6 + $0xe4] sm:$0xf]
  %v4982 = vld [vmem:[%s6 + $0xe8] sm:$0xf]
  %v4983 = vld [vmem:[%s6 + $0xec] sm:$0xf]
  %v4984 = vld [vmem:[%s6 + $0xf0] sm:$0xf]
  %v4985 = vld [vmem:[%s6 + $0xf4] sm:$0xf]
  %v4986 = vld [vmem:[%s6 + $0xf8] sm:$0xf]
  %v4987 = vld [vmem:[%s6 + $0xfc] sm:$0xf]
  %v4988 = vld [vmem:[%s6 + $0x100] sm:$0xf]
  %v4989 = vld [vmem:[%s6 + $0x104] sm:$0xf]
  %v4990 = vld [vmem:[%s6 + $0x108] sm:$0xf]
  %v4991 = vld [vmem:[%s6 + $0x10c] sm:$0xf]
  %v4992 = vld [vmem:[%s6 + $0x110] sm:$0xf]
  %v4993 = vld [vmem:[%s6 + $0x114] sm:$0xf]
  %v4994 = vld [vmem:[%s6 + $0x118] sm:$0xf]
  %v4995 = vld [vmem:[%s6 + $0x11c] sm:$0xf]
  %v4996 = vld [vmem:[%s6 + $0x120] sm:$0xf]
  %v4997 = vld [vmem:[%s6 + $0x124] sm:$0xf]
  %v4998 = vld [vmem:[%s6 + $0x128] sm:$0xf]
  %v4999 = vld [vmem:[%s6 + $0x12c] sm:$0xf]
  %v5000 = vld [vmem:[%s6 + $0x130] sm:$0xf]
  %v5001 = vld [vmem:[%s6 + $0x134] sm:$0xf]
  %v5002 = vld [vmem:[%s6 + $0x138] sm:$0xf]
  %v5003 = vld [vmem:[%s6 + $0x13c] sm:$0xf]
  %v5004 = vld [vmem:[%s6 + $0x140] sm:$0xf]
  %v5005 = vld [vmem:[%s6 + $0x144] sm:$0xf]
  %v5006 = vld [vmem:[%s6 + $0x148] sm:$0xf]
  %v5007 = vld [vmem:[%s6 + $0x14c] sm:$0xf]
  %v5008 = vld [vmem:[%s6 + $0x150] sm:$0xf]
  %v5009 = vld [vmem:[%s6 + $0x154] sm:$0xf]
  %v5010 = vld [vmem:[%s6 + $0x158] sm:$0xf]
  %v5011 = vld [vmem:[%s6 + $0x15c] sm:$0xf]
  %v5012 = vld [vmem:[%s6 + $0x160] sm:$0xf]
  %v5013 = vld [vmem:[%s6 + $0x164] sm:$0xf]
  %v5014 = vld [vmem:[%s6 + $0x168] sm:$0xf]
  %v5015 = vld [vmem:[%s6 + $0x16c] sm:$0xf]
  %v5016 = vld [vmem:[%s6 + $0x170] sm:$0xf]
  %v5017 = vld [vmem:[%s6 + $0x174] sm:$0xf]
  %v5018 = vld [vmem:[%s6 + $0x178] sm:$0xf]
  %v5019 = vld [vmem:[%s6 + $0x17c] sm:$0xf]
  %v5020 = vld [vmem:[%s6 + $0x180] sm:$0xf]
  %v5021 = vld [vmem:[%s6 + $0x184] sm:$0xf]
  %v5022 = vld [vmem:[%s6 + $0x188] sm:$0xf]
  %v5023 = vld [vmem:[%s6 + $0x18c] sm:$0xf]
  %v5024 = vld [vmem:[%s6 + $0x190] sm:$0xf]
  %v5025 = vld [vmem:[%s6 + $0x194] sm:$0xf]
  %v5026 = vld [vmem:[%s6 + $0x198] sm:$0xf]
  %v5027 = vld [vmem:[%s6 + $0x19c] sm:$0xf]
  %v5028 = vld [vmem:[%s6 + $0x1a0] sm:$0xf]
  %v5029 = vpack.c.bf16 %v3425, %v3425
  %5031 = vrot.lane.b32.xlu0 %v3565, 32
  %v5032 = vpop.permute.xlu0 %5031
  %5033 = vrot.lane.b32.xlu0 %v3566, 32
  %v5034 = vpop.permute.xlu0 %5033
  %5035 = vrot.lane.b32.xlu0 %v5029, 32
  %v5036 = vpop.permute.xlu0 %5035
  %vm5037 = vcmask 261120
  %v5038 = vsel %vm5037, %v5032, %v5034
  %v5039 = vsel %vm5037, %v5034, %v5036
  %v5043 = vsel %vm4179, %v5036, 0
  %5045 = vmatprep.subr.bf16.mxu0 %v3942
  %5046 = vmatpush1.bf16.msra.mxu0 %v3941
  %5047 = vmatprep.subr.bf16.mxu0 %v3949
  %5048 = vmatpush1.bf16.msra.mxu0 %v3948
  %5049 = vmatprep.subr.bf16.mxu0 %v3956
  %5050 = vmatpush1.bf16.msra.mxu0 %v3955
  %5051 = vmatprep.subr.bf16.mxu0 %v3963
  %5052 = vmatpush1.bf16.msra.mxu0 %v3962
  %5053 = vmatprep.subr.bf16.mxu0 %v3970
  %5054 = vmatpush1.bf16.msra.mxu0 %v3969
  %5055 = vmatprep.subr.bf16.mxu0 %v3977
  %5056 = vmatpush1.bf16.msra.mxu0 %v3976
  %5057 = vmatprep.subr.bf16.mxu0 %v3984
  %5058 = vmatpush1.bf16.msra.mxu0 %v3983
  %5059 = vmatprep.subr.bf16.mxu0 %v3991
  %5060 = vmatpush1.bf16.msra.mxu0 %v3990
  %5061 = vmatprep.subr.bf16.mxu0 %v3998
  %5062 = vmatpush1.bf16.msra.mxu0 %v3997
  %5063 = vmatprep.subr.bf16.mxu0 %v4005
  %5064 = vmatpush1.bf16.msra.mxu0 %v4004
  %5065 = vmatprep.subr.bf16.mxu0 %v4012
  %5066 = vmatpush1.bf16.msra.mxu0 %v4011
  %5067 = vmatprep.subr.bf16.mxu0 %v4019
  %5068 = vmatpush1.bf16.msra.mxu0 %v4018
  %5069 = vmatprep.subr.bf16.mxu0 %v4026
  %5070 = vmatpush1.bf16.msra.mxu0 %v4025
  %5071 = vmatprep.subr.bf16.mxu0 %v4033
  %5072 = vmatpush1.bf16.msra.mxu0 %v4032
  %5073 = vmatprep.subr.bf16.mxu0 %v4040
  %5074 = vmatpush1.bf16.msra.mxu0 %v4039
  %5075 = vmatprep.subr.bf16.mxu0 %v4047
  %5076 = vmatpush1.bf16.msra.mxu0 %v4046
  %5077 = vmatprep.mubr.bf16.mxu0 %v5039
  %5078 = vmatmul.mubr.bf16.gmra.mrb[0].mxu0 %v5038
  %v5079 = vpop.f32.mrb[0].mxu0
  %v5080 = vadd.f32 0.0, %v5079
  %v5081 = vpop.f32.mrb[0].mxu0
  %v5082 = vadd.f32 0.0, %v5081
  %v5083 = vpop.f32.mrb[0].mxu0
  %v5084 = vpop.f32.mrb[0].mxu0
  %5085 = vdwg.mxu0
  %5086 = vmatprep.subr.bf16.mxu0 %v4054
  %5087 = vmatpush1.bf16.msra.mxu0 %v4053
  %5088 = vmatprep.subr.bf16.mxu0 0
  %5089 = vmatpush1.bf16.msra.mxu0 0
  %5090 = vmatprep.subr.bf16.mxu0 0
  %5091 = vmatpush1.bf16.msra.mxu0 0
  %5092 = vmatprep.subr.bf16.mxu0 0
  %5093 = vmatpush1.bf16.msra.mxu0 0
  %5094 = vmatprep.subr.bf16.mxu0 0
  %5095 = vmatpush1.bf16.msra.mxu0 0
  %5096 = vmatprep.subr.bf16.mxu0 0
  %5097 = vmatpush1.bf16.msra.mxu0 0
  %5098 = vmatprep.subr.bf16.mxu0 0
  %5099 = vmatpush1.bf16.msra.mxu0 0
  %5100 = vmatprep.subr.bf16.mxu0 0
  %5101 = vmatpush1.bf16.msra.mxu0 0
  %5102 = vmatprep.subr.bf16.mxu0 0
  %5103 = vmatpush1.bf16.msra.mxu0 0
  %5104 = vmatprep.subr.bf16.mxu0 0
  %5105 = vmatpush1.bf16.msra.mxu0 0
  %5106 = vmatprep.subr.bf16.mxu0 0
  %5107 = vmatpush1.bf16.msra.mxu0 0
  %5108 = vmatprep.subr.bf16.mxu0 0
  %5109 = vmatpush1.bf16.msra.mxu0 0
  %5110 = vmatprep.subr.bf16.mxu0 0
  %5111 = vmatpush1.bf16.msra.mxu0 0
  %5112 = vmatprep.subr.bf16.mxu0 0
  %5113 = vmatpush1.bf16.msra.mxu0 0
  %5114 = vmatprep.subr.bf16.mxu0 0
  %5115 = vmatpush1.bf16.msra.mxu0 0
  %5116 = vmatprep.subr.bf16.mxu0 0
  %5117 = vmatpush1.bf16.msra.mxu0 0
  %5118 = vmatprep.mubr.bf16.mxu0 0
  %5119 = vmatmul.mubr.bf16.gmra.mrb[0].mxu0 %v5043
  %v5120 = vpop.f32.mrb[0].mxu0
  %v5121 = vadd.f32 %v5080, %v5120
  %v5122 = vpop.f32.mrb[0].mxu0
  %v5123 = vadd.f32 %v5082, %v5122
  %v5124 = vpop.f32.mrb[0].mxu0
  %v5125 = vpop.f32.mrb[0].mxu0
  %5126 = vdwg.mxu0
  %5127 = vmatprep.subr.bf16.mxu0 %v3944
  %5128 = vmatpush1.bf16.msra.mxu0 %v3943
  %5129 = vmatprep.subr.bf16.mxu0 %v3951
  %5130 = vmatpush1.bf16.msra.mxu0 %v3950
  %5131 = vmatprep.subr.bf16.mxu0 %v3958
  %5132 = vmatpush1.bf16.msra.mxu0 %v3957
  %5133 = vmatprep.subr.bf16.mxu0 %v3965
  %5134 = vmatpush1.bf16.msra.mxu0 %v3964
  %5135 = vmatprep.subr.bf16.mxu0 %v3972
  %5136 = vmatpush1.bf16.msra.mxu0 %v3971
  %5137 = vmatprep.subr.bf16.mxu0 %v3979
  %5138 = vmatpush1.bf16.msra.mxu0 %v3978
  %5139 = vmatprep.subr.bf16.mxu0 %v3986
  %5140 = vmatpush1.bf16.msra.mxu0 %v3985
  %5141 = vmatprep.subr.bf16.mxu0 %v3993
  %5142 = vmatpush1.bf16.msra.mxu0 %v3992
  %5143 = vmatprep.subr.bf16.mxu0 %v4000
  %5144 = vmatpush1.bf16.msra.mxu0 %v3999
  %5145 = vmatprep.subr.bf16.mxu0 %v4007
  %5146 = vmatpush1.bf16.msra.mxu0 %v4006
  %5147 = vmatprep.subr.bf16.mxu0 %v4014
  %5148 = vmatpush1.bf16.msra.mxu0 %v4013
  %5149 = vmatprep.subr.bf16.mxu0 %v4021
  %5150 = vmatpush1.bf16.msra.mxu0 %v4020
  %5151 = vmatprep.subr.bf16.mxu0 %v4028
  %5152 = vmatpush1.bf16.msra.mxu0 %v4027
  %5153 = vmatprep.subr.bf16.mxu0 %v4035
  %5154 = vmatpush1.bf16.msra.mxu0 %v4034
  %5155 = vmatprep.subr.bf16.mxu0 %v4042
  %5156 = vmatpush1.bf16.msra.mxu0 %v4041
  %5157 = vmatprep.subr.bf16.mxu0 %v4049
  %5158 = vmatpush1.bf16.msra.mxu0 %v4048
  %5159 = vmatprep.mubr.bf16.mxu0 %v5039
  %5160 = vmatmul.mubr.bf16.gmra.mrb[0].mxu0 %v5038
  %v5161 = vpop.f32.mrb[0].mxu0
  %v5162 = vadd.f32 0.0, %v5161
  %v5163 = vpop.f32.mrb[0].mxu0
  %v5164 = vadd.f32 0.0, %v5163
  %v5165 = vpop.f32.mrb[0].mxu0
  %v5166 = vpop.f32.mrb[0].mxu0
  %5167 = vdwg.mxu0
  %5168 = vmatprep.subr.bf16.mxu0 %v4056
  %5169 = vmatpush1.bf16.msra.mxu0 %v4055
  %5170 = vmatprep.subr.bf16.mxu0 0
  %5171 = vmatpush1.bf16.msra.mxu0 0
  %5172 = vmatprep.subr.bf16.mxu0 0
  %5173 = vmatpush1.bf16.msra.mxu0 0
  %5174 = vmatprep.subr.bf16.mxu0 0
  %5175 = vmatpush1.bf16.msra.mxu0 0
  %5176 = vmatprep.subr.bf16.mxu0 0
  %5177 = vmatpush1.bf16.msra.mxu0 0
  %5178 = vmatprep.subr.bf16.mxu0 0
  %5179 = vmatpush1.bf16.msra.mxu0 0
  %5180 = vmatprep.subr.bf16.mxu0 0
  %5181 = vmatpush1.bf16.msra.mxu0 0
  %5182 = vmatprep.subr.bf16.mxu0 0
  %5183 = vmatpush1.bf16.msra.mxu0 0
  %5184 = vmatprep.subr.bf16.mxu0 0
  %5185 = vmatpush1.bf16.msra.mxu0 0
  %5186 = vmatprep.subr.bf16.mxu0 0
  %5187 = vmatpush1.bf16.msra.mxu0 0
  %5188 = vmatprep.subr.bf16.mxu0 0
  %5189 = vmatpush1.bf16.msra.mxu0 0
  %5190 = vmatprep.subr.bf16.mxu0 0
  %5191 = vmatpush1.bf16.msra.mxu0 0
  %5192 = vmatprep.subr.bf16.mxu0 0
  %5193 = vmatpush1.bf16.msra.mxu0 0
  %5194 = vmatprep.subr.bf16.mxu0 0
  %5195 = vmatpush1.bf16.msra.mxu0 0
  %5196 = vmatprep.subr.bf16.mxu0 0
  %5197 = vmatpush1.bf16.msra.mxu0 0
  %5198 = vmatprep.subr.bf16.mxu0 0
  %5199 = vmatpush1.bf16.msra.mxu0 0
  %5200 = vmatprep.mubr.bf16.mxu0 0
  %5201 = vmatmul.mubr.bf16.gmra.mrb[0].mxu0 %v5043
  %v5202 = vpop.f32.mrb[0].mxu0
  %v5203 = vadd.f32 %v5162, %v5202
  %v5204 = vpop.f32.mrb[0].mxu0
  %v5205 = vadd.f32 %v5164, %v5204
  %v5206 = vpop.f32.mrb[0].mxu0
  %v5207 = vpop.f32.mrb[0].mxu0
  %5208 = vdwg.mxu0
  %5209 = vmatprep.subr.bf16.mxu0 %v3946
  %5210 = vmatpush1.bf16.msra.mxu0 %v3945
  %5211 = vmatprep.subr.bf16.mxu0 %v3953
  %5212 = vmatpush1.bf16.msra.mxu0 %v3952
  %5213 = vmatprep.subr.bf16.mxu0 %v3960
  %5214 = vmatpush1.bf16.msra.mxu0 %v3959
  %5215 = vmatprep.subr.bf16.mxu0 %v3967
  %5216 = vmatpush1.bf16.msra.mxu0 %v3966
  %5217 = vmatprep.subr.bf16.mxu0 %v3974
  %5218 = vmatpush1.bf16.msra.mxu0 %v3973
  %5219 = vmatprep.subr.bf16.mxu0 %v3981
  %5220 = vmatpush1.bf16.msra.mxu0 %v3980
  %5221 = vmatprep.subr.bf16.mxu0 %v3988
  %5222 = vmatpush1.bf16.msra.mxu0 %v3987
  %5223 = vmatprep.subr.bf16.mxu0 %v3995
  %5224 = vmatpush1.bf16.msra.mxu0 %v3994
  %5225 = vmatprep.subr.bf16.mxu0 %v4002
  %5226 = vmatpush1.bf16.msra.mxu0 %v4001
  %5227 = vmatprep.subr.bf16.mxu0 %v4009
  %5228 = vmatpush1.bf16.msra.mxu0 %v4008
  %5229 = vmatprep.subr.bf16.mxu0 %v4016
  %5230 = vmatpush1.bf16.msra.mxu0 %v4015
  %5231 = vmatprep.subr.bf16.mxu0 %v4023
  %5232 = vmatpush1.bf16.msra.mxu0 %v4022
  %5233 = vmatprep.subr.bf16.mxu0 %v4030
  %5234 = vmatpush1.bf16.msra.mxu0 %v4029
  %5235 = vmatprep.subr.bf16.mxu0 %v4037
  %5236 = vmatpush1.bf16.msra.mxu0 %v4036
  %5237 = vmatprep.subr.bf16.mxu0 %v4044
  %5238 = vmatpush1.bf16.msra.mxu0 %v4043
  %5239 = vmatprep.subr.bf16.mxu0 %v4051
  %5240 = vmatpush1.bf16.msra.mxu0 %v4050
  %5241 = vmatprep.mubr.bf16.mxu0 %v5039
  %5242 = vmatmul.mubr.bf16.gmra.mrb[0].mxu0 %v5038
  %v5243 = vpop.f32.mrb[0].mxu0
  %v5244 = vadd.f32 0.0, %v5243
  %v5245 = vpop.f32.mrb[0].mxu0
  %v5246 = vadd.f32 0.0, %v5245
  %v5247 = vpop.f32.mrb[0].mxu0
  %v5248 = vpop.f32.mrb[0].mxu0
  %5249 = vdwg.mxu0
  %5250 = vmatprep.subr.bf16.mxu0 %v4058
  %5251 = vmatpush1.bf16.msra.mxu0 %v4057
  %5252 = vmatprep.subr.bf16.mxu0 0
  %5253 = vmatpush1.bf16.msra.mxu0 0
  %5254 = vmatprep.subr.bf16.mxu0 0
  %5255 = vmatpush1.bf16.msra.mxu0 0
  %5256 = vmatprep.subr.bf16.mxu0 0
  %5257 = vmatpush1.bf16.msra.mxu0 0
  %5258 = vmatprep.subr.bf16.mxu0 0
  %5259 = vmatpush1.bf16.msra.mxu0 0
  %5260 = vmatprep.subr.bf16.mxu0 0
  %5261 = vmatpush1.bf16.msra.mxu0 0
  %5262 = vmatprep.subr.bf16.mxu0 0
  %5263 = vmatpush1.bf16.msra.mxu0 0
  %5264 = vmatprep.subr.bf16.mxu0 0
  %5265 = vmatpush1.bf16.msra.mxu0 0
  %5266 = vmatprep.subr.bf16.mxu0 0
  %5267 = vmatpush1.bf16.msra.mxu0 0
  %5268 = vmatprep.subr.bf16.mxu0 0
  %5269 = vmatpush1.bf16.msra.mxu0 0
  %5270 = vmatprep.subr.bf16.mxu0 0
  %5271 = vmatpush1.bf16.msra.mxu0 0
  %5272 = vmatprep.subr.bf16.mxu0 0
  %5273 = vmatpush1.bf16.msra.mxu0 0
  %5274 = vmatprep.subr.bf16.mxu0 0
  %5275 = vmatpush1.bf16.msra.mxu0 0
  %5276 = vmatprep.subr.bf16.mxu0 0
  %5277 = vmatpush1.bf16.msra.mxu0 0
  %5278 = vmatprep.subr.bf16.mxu0 0
  %5279 = vmatpush1.bf16.msra.mxu0 0
  %5280 = vmatprep.subr.bf16.mxu0 0
  %5281 = vmatpush1.bf16.msra.mxu0 0
  %5282 = vmatprep.mubr.bf16.mxu0 0
  %5283 = vmatmul.mubr.bf16.gmra.mrb[0].mxu0 %v5043
  %v5284 = vpop.f32.mrb[0].mxu0
  %v5285 = vadd.f32 %v5244, %v5284
  %v5286 = vpop.f32.mrb[0].mxu0
  %v5287 = vadd.f32 %v5246, %v5286
  %v5288 = vpop.f32.mrb[0].mxu0
  %v5289 = vpop.f32.mrb[0].mxu0
  %5290 = vdwg.mxu0
  %5291 = vmatprep.subr.bf16.mxu0 0
  %5292 = vmatpush1.bf16.msra.mxu0 %v3947
  %5293 = vmatprep.subr.bf16.mxu0 0
  %5294 = vmatpush1.bf16.msra.mxu0 %v3954
  %5295 = vmatprep.subr.bf16.mxu0 0
  %5296 = vmatpush1.bf16.msra.mxu0 %v3961
  %5297 = vmatprep.subr.bf16.mxu0 0
  %5298 = vmatpush1.bf16.msra.mxu0 %v3968
  %5299 = vmatprep.subr.bf16.mxu0 0
  %5300 = vmatpush1.bf16.msra.mxu0 %v3975
  %5301 = vmatprep.subr.bf16.mxu0 0
  %5302 = vmatpush1.bf16.msra.mxu0 %v3982
  %5303 = vmatprep.subr.bf16.mxu0 0
  %5304 = vmatpush1.bf16.msra.mxu0 %v3989
  %5305 = vmatprep.subr.bf16.mxu0 0
  %5306 = vmatpush1.bf16.msra.mxu0 %v3996
  %5307 = vmatprep.subr.bf16.mxu0 0
  %5308 = vmatpush1.bf16.msra.mxu0 %v4003
  %5309 = vmatprep.subr.bf16.mxu0 0
  %5310 = vmatpush1.bf16.msra.mxu0 %v4010
  %5311 = vmatprep.subr.bf16.mxu0 0
  %5312 = vmatpush1.bf16.msra.mxu0 %v4017
  %5313 = vmatprep.subr.bf16.mxu0 0
  %5314 = vmatpush1.bf16.msra.mxu0 %v4024
  %5315 = vmatprep.subr.bf16.mxu0 0
  %5316 = vmatpush1.bf16.msra.mxu0 %v4031
  %5317 = vmatprep.subr.bf16.mxu0 0
  %5318 = vmatpush1.bf16.msra.mxu0 %v4038
  %5319 = vmatprep.subr.bf16.mxu0 0
  %5320 = vmatpush1.bf16.msra.mxu0 %v4045
  %5321 = vmatprep.subr.bf16.mxu0 0
  %5322 = vmatpush1.bf16.msra.mxu0 %v4052
  %5323 = vmatprep.mubr.bf16.mxu0 %v5039
  %5324 = vmatmul.mubr.bf16.gmra.mrb[0].mxu0 %v5038
  %v5325 = vpop.f32.mrb[0].mxu0
  %v5326 = vadd.f32 0.0, %v5325
  %v5327 = vpop.f32.mrb[0].mxu0
  %v5328 = vpop.f32.mrb[0].mxu0
  %v5329 = vpop.f32.mrb[0].mxu0
  %5330 = vdwg.mxu0
  %5331 = vmatprep.subr.bf16.mxu0 0
  %5332 = vmatpush1.bf16.msra.mxu0 %v4059
  %5333 = vmatprep.subr.bf16.mxu0 0
  %5334 = vmatpush1.bf16.msra.mxu0 0
  %5335 = vmatprep.subr.bf16.mxu0 0
  %5336 = vmatpush1.bf16.msra.mxu0 0
  %5337 = vmatprep.subr.bf16.mxu0 0
  %5338 = vmatpush1.bf16.msra.mxu0 0
  %5339 = vmatprep.subr.bf16.mxu0 0
  %5340 = vmatpush1.bf16.msra.mxu0 0
  %5341 = vmatprep.subr.bf16.mxu0 0
  %5342 = vmatpush1.bf16.msra.mxu0 0
  %5343 = vmatprep.subr.bf16.mxu0 0
  %5344 = vmatpush1.bf16.msra.mxu0 0
  %5345 = vmatprep.subr.bf16.mxu0 0
  %5346 = vmatpush1.bf16.msra.mxu0 0
  %5347 = vmatprep.subr.bf16.mxu0 0
  %5348 = vmatpush1.bf16.msra.mxu0 0
  %5349 = vmatprep.subr.bf16.mxu0 0
  %5350 = vmatpush1.bf16.msra.mxu0 0
  %5351 = vmatprep.subr.bf16.mxu0 0
  %5352 = vmatpush1.bf16.msra.mxu0 0
  %5353 = vmatprep.subr.bf16.mxu0 0
  %5354 = vmatpush1.bf16.msra.mxu0 0
  %5355 = vmatprep.subr.bf16.mxu0 0
  %5356 = vmatpush1.bf16.msra.mxu0 0
  %5357 = vmatprep.subr.bf16.mxu0 0
  %5358 = vmatpush1.bf16.msra.mxu0 0
  %5359 = vmatprep.subr.bf16.mxu0 0
  %5360 = vmatpush1.bf16.msra.mxu0 0
  %5361 = vmatprep.subr.bf16.mxu0 0
  %5362 = vmatpush1.bf16.msra.mxu0 0
  %5363 = vmatprep.mubr.bf16.mxu0 0
  %5364 = vmatmul.mubr.bf16.gmra.mrb[0].mxu0 %v5043
  %v5365 = vpop.f32.mrb[0].mxu0
  %v5366 = vadd.f32 %v5326, %v5365
  %v5367 = vpop.f32.mrb[0].mxu0
  %v5368 = vpop.f32.mrb[0].mxu0
  %v5369 = vpop.f32.mrb[0].mxu0
  %5370 = vdwg.mxu0
  %5371 = vrot.lane.b32.xlu0 %v3565, 16
  %v5372 = vpop.permute.xlu0 %5371
  %5373 = vrot.lane.b32.xlu0 %v3566, 16
  %v5374 = vpop.permute.xlu0 %5373
  %5375 = vrot.lane.b32.xlu0 %v5029, 16
  %v5376 = vpop.permute.xlu0 %5375
  %vm5377 = vcmask 130048
  %v5378 = vsel %vm5377, %v5372, %v5374
  %v5379 = vsel %vm5377, %v5374, %v5376
  %v5383 = vsel %vm4179, %v5376, 0
  %5385 = vmatprep.subr.bf16.mxu0 %v3942
  %5386 = vmatpush1.bf16.msra.mxu0 %v3941
  %5387 = vmatprep.subr.bf16.mxu0 %v3949
  %5388 = vmatpush1.bf16.msra.mxu0 %v3948
  %5389 = vmatprep.subr.bf16.mxu0 %v3956
  %5390 = vmatpush1.bf16.msra.mxu0 %v3955
  %5391 = vmatprep.subr.bf16.mxu0 %v3963
  %5392 = vmatpush1.bf16.msra.mxu0 %v3962
  %5393 = vmatprep.subr.bf16.mxu0 %v3970
  %5394 = vmatpush1.bf16.msra.mxu0 %v3969
  %5395 = vmatprep.subr.bf16.mxu0 %v3977
  %5396 = vmatpush1.bf16.msra.mxu0 %v3976
  %5397 = vmatprep.subr.bf16.mxu0 %v3984
  %5398 = vmatpush1.bf16.msra.mxu0 %v3983
  %5399 = vmatprep.subr.bf16.mxu0 %v3991
  %5400 = vmatpush1.bf16.msra.mxu0 %v3990
  %5401 = vmatprep.subr.bf16.mxu0 %v3998
  %5402 = vmatpush1.bf16.msra.mxu0 %v3997
  %5403 = vmatprep.subr.bf16.mxu0 %v4005
  %5404 = vmatpush1.bf16.msra.mxu0 %v4004
  %5405 = vmatprep.subr.bf16.mxu0 %v4012
  %5406 = vmatpush1.bf16.msra.mxu0 %v4011
  %5407 = vmatprep.subr.bf16.mxu0 %v4019
  %5408 = vmatpush1.bf16.msra.mxu0 %v4018
  %5409 = vmatprep.subr.bf16.mxu0 %v4026
  %5410 = vmatpush1.bf16.msra.mxu0 %v4025
  %5411 = vmatprep.subr.bf16.mxu0 %v4033
  %5412 = vmatpush1.bf16.msra.mxu0 %v4032
  %5413 = vmatprep.subr.bf16.mxu0 %v4040
  %5414 = vmatpush1.bf16.msra.mxu0 %v4039
  %5415 = vmatprep.subr.bf16.mxu0 %v4047
  %5416 = vmatpush1.bf16.msra.mxu0 %v4046
  %5417 = vmatprep.mubr.bf16.mxu0 %v5379
  %5418 = vmatmul.mubr.bf16.gmra.mrb[0].mxu0 %v5378
  %v5419 = vpop.f32.mrb[0].mxu0
  %v5420 = vadd.f32 0.0, %v5419
  %v5421 = vpop.f32.mrb[0].mxu0
  %v5422 = vadd.f32 0.0, %v5421
  %v5423 = vpop.f32.mrb[0].mxu0
  %v5424 = vpop.f32.mrb[0].mxu0
  %5425 = vdwg.mxu0
  %5426 = vmatprep.subr.bf16.mxu0 %v4054
  %5427 = vmatpush1.bf16.msra.mxu0 %v4053
  %5428 = vmatprep.subr.bf16.mxu0 0
  %5429 = vmatpush1.bf16.msra.mxu0 0
  %5430 = vmatprep.subr.bf16.mxu0 0
  %5431 = vmatpush1.bf16.msra.mxu0 0
  %5432 = vmatprep.subr.bf16.mxu0 0
  %5433 = vmatpush1.bf16.msra.mxu0 0
  %5434 = vmatprep.subr.bf16.mxu0 0
  %5435 = vmatpush1.bf16.msra.mxu0 0
  %5436 = vmatprep.subr.bf16.mxu0 0
  %5437 = vmatpush1.bf16.msra.mxu0 0
  %5438 = vmatprep.subr.bf16.mxu0 0
  %5439 = vmatpush1.bf16.msra.mxu0 0
  %5440 = vmatprep.subr.bf16.mxu0 0
  %5441 = vmatpush1.bf16.msra.mxu0 0
  %5442 = vmatprep.subr.bf16.mxu0 0
  %5443 = vmatpush1.bf16.msra.mxu0 0
  %5444 = vmatprep.subr.bf16.mxu0 0
  %5445 = vmatpush1.bf16.msra.mxu0 0
  %5446 = vmatprep.subr.bf16.mxu0 0
  %5447 = vmatpush1.bf16.msra.mxu0 0
  %5448 = vmatprep.subr.bf16.mxu0 0
  %5449 = vmatpush1.bf16.msra.mxu0 0
  %5450 = vmatprep.subr.bf16.mxu0 0
  %5451 = vmatpush1.bf16.msra.mxu0 0
  %5452 = vmatprep.subr.bf16.mxu0 0
  %5453 = vmatpush1.bf16.msra.mxu0 0
  %5454 = vmatprep.subr.bf16.mxu0 0
  %5455 = vmatpush1.bf16.msra.mxu0 0
  %5456 = vmatprep.subr.bf16.mxu0 0
  %5457 = vmatpush1.bf16.msra.mxu0 0
  %5458 = vmatprep.mubr.bf16.mxu0 0
  %5459 = vmatmul.mubr.bf16.gmra.mrb[0].mxu0 %v5383
  %v5460 = vpop.f32.mrb[0].mxu0
  %v5461 = vadd.f32 %v5420, %v5460
  %v5462 = vpop.f32.mrb[0].mxu0
  %v5463 = vadd.f32 %v5422, %v5462
  %v5464 = vpop.f32.mrb[0].mxu0
  %v5465 = vpop.f32.mrb[0].mxu0
  %5466 = vdwg.mxu0
  %5467 = vmatprep.subr.bf16.mxu0 %v3944
  %5468 = vmatpush1.bf16.msra.mxu0 %v3943
  %5469 = vmatprep.subr.bf16.mxu0 %v3951
  %5470 = vmatpush1.bf16.msra.mxu0 %v3950
  %5471 = vmatprep.subr.bf16.mxu0 %v3958
  %5472 = vmatpush1.bf16.msra.mxu0 %v3957
  %5473 = vmatprep.subr.bf16.mxu0 %v3965
  %5474 = vmatpush1.bf16.msra.mxu0 %v3964
  %5475 = vmatprep.subr.bf16.mxu0 %v3972
  %5476 = vmatpush1.bf16.msra.mxu0 %v3971
  %5477 = vmatprep.subr.bf16.mxu0 %v3979
  %5478 = vmatpush1.bf16.msra.mxu0 %v3978
  %5479 = vmatprep.subr.bf16.mxu0 %v3986
  %5480 = vmatpush1.bf16.msra.mxu0 %v3985
  %5481 = vmatprep.subr.bf16.mxu0 %v3993
  %5482 = vmatpush1.bf16.msra.mxu0 %v3992
  %5483 = vmatprep.subr.bf16.mxu0 %v4000
  %5484 = vmatpush1.bf16.msra.mxu0 %v3999
  %5485 = vmatprep.subr.bf16.mxu0 %v4007
  %5486 = vmatpush1.bf16.msra.mxu0 %v4006
  %5487 = vmatprep.subr.bf16.mxu0 %v4014
  %5488 = vmatpush1.bf16.msra.mxu0 %v4013
  %5489 = vmatprep.subr.bf16.mxu0 %v4021
  %5490 = vmatpush1.bf16.msra.mxu0 %v4020
  %5491 = vmatprep.subr.bf16.mxu0 %v4028
  %5492 = vmatpush1.bf16.msra.mxu0 %v4027
  %5493 = vmatprep.subr.bf16.mxu0 %v4035
  %5494 = vmatpush1.bf16.msra.mxu0 %v4034
  %5495 = vmatprep.subr.bf16.mxu0 %v4042
  %5496 = vmatpush1.bf16.msra.mxu0 %v4041
  %5497 = vmatprep.subr.bf16.mxu0 %v4049
  %5498 = vmatpush1.bf16.msra.mxu0 %v4048
  %5499 = vmatprep.mubr.bf16.mxu0 %v5379
  %5500 = vmatmul.mubr.bf16.gmra.mrb[0].mxu0 %v5378
  %v5501 = vpop.f32.mrb[0].mxu0
  %v5502 = vadd.f32 0.0, %v5501
  %v5503 = vpop.f32.mrb[0].mxu0
  %v5504 = vadd.f32 0.0, %v5503
  %v5505 = vpop.f32.mrb[0].mxu0
  %v5506 = vpop.f32.mrb[0].mxu0
  %5507 = vdwg.mxu0
  %5508 = vmatprep.subr.bf16.mxu0 %v4056
  %5509 = vmatpush1.bf16.msra.mxu0 %v4055
  %5510 = vmatprep.subr.bf16.mxu0 0
  %5511 = vmatpush1.bf16.msra.mxu0 0
  %5512 = vmatprep.subr.bf16.mxu0 0
  %5513 = vmatpush1.bf16.msra.mxu0 0
  %5514 = vmatprep.subr.bf16.mxu0 0
  %5515 = vmatpush1.bf16.msra.mxu0 0
  %5516 = vmatprep.subr.bf16.mxu0 0
  %5517 = vmatpush1.bf16.msra.mxu0 0
  %5518 = vmatprep.subr.bf16.mxu0 0
  %5519 = vmatpush1.bf16.msra.mxu0 0
  %5520 = vmatprep.subr.bf16.mxu0 0
  %5521 = vmatpush1.bf16.msra.mxu0 0
  %5522 = vmatprep.subr.bf16.mxu0 0
  %5523 = vmatpush1.bf16.msra.mxu0 0
  %5524 = vmatprep.subr.bf16.mxu0 0
  %5525 = vmatpush1.bf16.msra.mxu0 0
  %5526 = vmatprep.subr.bf16.mxu0 0
  %5527 = vmatpush1.bf16.msra.mxu0 0
  %5528 = vmatprep.subr.bf16.mxu0 0
  %5529 = vmatpush1.bf16.msra.mxu0 0
  %5530 = vmatprep.subr.bf16.mxu0 0
  %5531 = vmatpush1.bf16.msra.mxu0 0
  %5532 = vmatprep.subr.bf16.mxu0 0
  %5533 = vmatpush1.bf16.msra.mxu0 0
  %5534 = vmatprep.subr.bf16.mxu0 0
  %5535 = vmatpush1.bf16.msra.mxu0 0
  %5536 = vmatprep.subr.bf16.mxu0 0
  %5537 = vmatpush1.bf16.msra.mxu0 0
  %5538 = vmatprep.subr.bf16.mxu0 0
  %5539 = vmatpush1.bf16.msra.mxu0 0
  %5540 = vmatprep.mubr.bf16.mxu0 0
  %5541 = vmatmul.mubr.bf16.gmra.mrb[0].mxu0 %v5383
  %v5542 = vpop.f32.mrb[0].mxu0
  %v5543 = vadd.f32 %v5502, %v5542
  %v5544 = vpop.f32.mrb[0].mxu0
  %v5545 = vadd.f32 %v5504, %v5544
  %v5546 = vpop.f32.mrb[0].mxu0
  %v5547 = vpop.f32.mrb[0].mxu0
  %5548 = vdwg.mxu0
  %5549 = vmatprep.subr.bf16.mxu0 %v3946
  %5550 = vmatpush1.bf16.msra.mxu0 %v3945
  %5551 = vmatprep.subr.bf16.mxu0 %v3953
  %5552 = vmatpush1.bf16.msra.mxu0 %v3952
  %5553 = vmatprep.subr.bf16.mxu0 %v3960
  %5554 = vmatpush1.bf16.msra.mxu0 %v3959
  %5555 = vmatprep.subr.bf16.mxu0 %v3967
  %5556 = vmatpush1.bf16.msra.mxu0 %v3966
  %5557 = vmatprep.subr.bf16.mxu0 %v3974
  %5558 = vmatpush1.bf16.msra.mxu0 %v3973
  %5559 = vmatprep.subr.bf16.mxu0 %v3981
  %5560 = vmatpush1.bf16.msra.mxu0 %v3980
  %5561 = vmatprep.subr.bf16.mxu0 %v3988
  %5562 = vmatpush1.bf16.msra.mxu0 %v3987
  %5563 = vmatprep.subr.bf16.mxu0 %v3995
  %5564 = vmatpush1.bf16.msra.mxu0 %v3994
  %5565 = vmatprep.subr.bf16.mxu0 %v4002
  %5566 = vmatpush1.bf16.msra.mxu0 %v4001
  %5567 = vmatprep.subr.bf16.mxu0 %v4009
  %5568 = vmatpush1.bf16.msra.mxu0 %v4008
  %5569 = vmatprep.subr.bf16.mxu0 %v4016
  %5570 = vmatpush1.bf16.msra.mxu0 %v4015
  %5571 = vmatprep.subr.bf16.mxu0 %v4023
  %5572 = vmatpush1.bf16.msra.mxu0 %v4022
  %5573 = vmatprep.subr.bf16.mxu0 %v4030
  %5574 = vmatpush1.bf16.msra.mxu0 %v4029
  %5575 = vmatprep.subr.bf16.mxu0 %v4037
  %5576 = vmatpush1.bf16.msra.mxu0 %v4036
  %5577 = vmatprep.subr.bf16.mxu0 %v4044
  %5578 = vmatpush1.bf16.msra.mxu0 %v4043
  %5579 = vmatprep.subr.bf16.mxu0 %v4051
  %5580 = vmatpush1.bf16.msra.mxu0 %v4050
  %5581 = vmatprep.mubr.bf16.mxu0 %v5379
  %5582 = vmatmul.mubr.bf16.gmra.mrb[0].mxu0 %v5378
  %v5583 = vpop.f32.mrb[0].mxu0
  %v5584 = vadd.f32 0.0, %v5583
  %v5585 = vpop.f32.mrb[0].mxu0
  %v5586 = vadd.f32 0.0, %v5585
  %v5587 = vpop.f32.mrb[0].mxu0
  %v5588 = vpop.f32.mrb[0].mxu0
  %5589 = vdwg.mxu0
  %5590 = vmatprep.subr.bf16.mxu0 %v4058
  %5591 = vmatpush1.bf16.msra.mxu0 %v4057
  %5592 = vmatprep.subr.bf16.mxu0 0
  %5593 = vmatpush1.bf16.msra.mxu0 0
  %5594 = vmatprep.subr.bf16.mxu0 0
  %5595 = vmatpush1.bf16.msra.mxu0 0
  %5596 = vmatprep.subr.bf16.mxu0 0
  %5597 = vmatpush1.bf16.msra.mxu0 0
  %5598 = vmatprep.subr.bf16.mxu0 0
  %5599 = vmatpush1.bf16.msra.mxu0 0
  %5600 = vmatprep.subr.bf16.mxu0 0
  %5601 = vmatpush1.bf16.msra.mxu0 0
  %5602 = vmatprep.subr.bf16.mxu0 0
  %5603 = vmatpush1.bf16.msra.mxu0 0
  %5604 = vmatprep.subr.bf16.mxu0 0
  %5605 = vmatpush1.bf16.msra.mxu0 0
  %5606 = vmatprep.subr.bf16.mxu0 0
  %5607 = vmatpush1.bf16.msra.mxu0 0
  %5608 = vmatprep.subr.bf16.mxu0 0
  %5609 = vmatpush1.bf16.msra.mxu0 0
  %5610 = vmatprep.subr.bf16.mxu0 0
  %5611 = vmatpush1.bf16.msra.mxu0 0
  %5612 = vmatprep.subr.bf16.mxu0 0
  %5613 = vmatpush1.bf16.msra.mxu0 0
  %5614 = vmatprep.subr.bf16.mxu0 0
  %5615 = vmatpush1.bf16.msra.mxu0 0
  %5616 = vmatprep.subr.bf16.mxu0 0
  %5617 = vmatpush1.bf16.msra.mxu0 0
  %5618 = vmatprep.subr.bf16.mxu0 0
  %5619 = vmatpush1.bf16.msra.mxu0 0
  %5620 = vmatprep.subr.bf16.mxu0 0
  %5621 = vmatpush1.bf16.msra.mxu0 0
  %5622 = vmatprep.mubr.bf16.mxu0 0
  %5623 = vmatmul.mubr.bf16.gmra.mrb[0].mxu0 %v5383
  %v5624 = vpop.f32.mrb[0].mxu0
  %v5625 = vadd.f32 %v5584, %v5624
  %v5626 = vpop.f32.mrb[0].mxu0
  %v5627 = vadd.f32 %v5586, %v5626
  %v5628 = vpop.f32.mrb[0].mxu0
  %v5629 = vpop.f32.mrb[0].mxu0
  %5630 = vdwg.mxu0
  %5631 = vmatprep.subr.bf16.mxu0 0
  %5632 = vmatpush1.bf16.msra.mxu0 %v3947
  %5633 = vmatprep.subr.bf16.mxu0 0
  %5634 = vmatpush1.bf16.msra.mxu0 %v3954
  %5635 = vmatprep.subr.bf16.mxu0 0
  %5636 = vmatpush1.bf16.msra.mxu0 %v3961
  %5637 = vmatprep.subr.bf16.mxu0 0
  %5638 = vmatpush1.bf16.msra.mxu0 %v3968
  %5639 = vmatprep.subr.bf16.mxu0 0
  %5640 = vmatpush1.bf16.msra.mxu0 %v3975
  %5641 = vmatprep.subr.bf16.mxu0 0
  %5642 = vmatpush1.bf16.msra.mxu0 %v3982
  %5643 = vmatprep.subr.bf16.mxu0 0
  %5644 = vmatpush1.bf16.msra.mxu0 %v3989
  %5645 = vmatprep.subr.bf16.mxu0 0
  %5646 = vmatpush1.bf16.msra.mxu0 %v3996
  %5647 = vmatprep.subr.bf16.mxu0 0
  %5648 = vmatpush1.bf16.msra.mxu0 %v4003
  %5649 = vmatprep.subr.bf16.mxu0 0
  %5650 = vmatpush1.bf16.msra.mxu0 %v4010
  %5651 = vmatprep.subr.bf16.mxu0 0
  %5652 = vmatpush1.bf16.msra.mxu0 %v4017
  %5653 = vmatprep.subr.bf16.mxu0 0
  %5654 = vmatpush1.bf16.msra.mxu0 %v4024
  %5655 = vmatprep.subr.bf16.mxu0 0
  %5656 = vmatpush1.bf16.msra.mxu0 %v4031
  %5657 = vmatprep.subr.bf16.mxu0 0
  %5658 = vmatpush1.bf16.msra.mxu0 %v4038
  %5659 = vmatprep.subr.bf16.mxu0 0
  %5660 = vmatpush1.bf16.msra.mxu0 %v4045
  %5661 = vmatprep.subr.bf16.mxu0 0
  %5662 = vmatpush1.bf16.msra.mxu0 %v4052
  %5663 = vmatprep.mubr.bf16.mxu0 %v5379
  %5664 = vmatmul.mubr.bf16.gmra.mrb[0].mxu0 %v5378
  %v5665 = vpop.f32.mrb[0].mxu0
  %v5666 = vadd.f32 0.0, %v5665
  %v5667 = vpop.f32.mrb[0].mxu0
  %v5668 = vpop.f32.mrb[0].mxu0
  %v5669 = vpop.f32.mrb[0].mxu0
  %5670 = vdwg.mxu0
  %5671 = vmatprep.subr.bf16.mxu0 0
  %5672 = vmatpush1.bf16.msra.mxu0 %v4059
  %5673 = vmatprep.subr.bf16.mxu0 0
  %5674 = vmatpush1.bf16.msra.mxu0 0
  %5675 = vmatprep.subr.bf16.mxu0 0
  %5676 = vmatpush1.bf16.msra.mxu0 0
  %5677 = vmatprep.subr.bf16.mxu0 0
  %5678 = vmatpush1.bf16.msra.mxu0 0
  %5679 = vmatprep.subr.bf16.mxu0 0
  %5680 = vmatpush1.bf16.msra.mxu0 0
  %5681 = vmatprep.subr.bf16.mxu0 0
  %5682 = vmatpush1.bf16.msra.mxu0 0
  %5683 = vmatprep.subr.bf16.mxu0 0
  %5684 = vmatpush1.bf16.msra.mxu0 0
  %5685 = vmatprep.subr.bf16.mxu0 0
  %5686 = vmatpush1.bf16.msra.mxu0 0
  %5687 = vmatprep.subr.bf16.mxu0 0
  %5688 = vmatpush1.bf16.msra.mxu0 0
  %5689 = vmatprep.subr.bf16.mxu0 0
  %5690 = vmatpush1.bf16.msra.mxu0 0
  %5691 = vmatprep.subr.bf16.mxu0 0
  %5692 = vmatpush1.bf16.msra.mxu0 0
  %5693 = vmatprep.subr.bf16.mxu0 0
  %5694 = vmatpush1.bf16.msra.mxu0 0
  %5695 = vmatprep.subr.bf16.mxu0 0
  %5696 = vmatpush1.bf16.msra.mxu0 0
  %5697 = vmatprep.subr.bf16.mxu0 0
  %5698 = vmatpush1.bf16.msra.mxu0 0
  %5699 = vmatprep.subr.bf16.mxu0 0
  %5700 = vmatpush1.bf16.msra.mxu0 0
  %5701 = vmatprep.subr.bf16.mxu0 0
  %5702 = vmatpush1.bf16.msra.mxu0 0
  %5703 = vmatprep.mubr.bf16.mxu0 0
  %5704 = vmatmul.mubr.bf16.gmra.mrb[0].mxu0 %v5383
  %v5705 = vpop.f32.mrb[0].mxu0
  %v5706 = vadd.f32 %v5666, %v5705
  %v5707 = vpop.f32.mrb[0].mxu0
  %v5708 = vpop.f32.mrb[0].mxu0
  %v5709 = vpop.f32.mrb[0].mxu0
  %5710 = vdwg.mxu0
  %v5711 = vmax.f32 %v5121, %v5461
  %v5712 = vmax.f32 %v5123, %v5463
  %v5713 = vmax.f32 %v5203, %v5543
  %v5714 = vmax.f32 %v5205, %v5545
  %v5715 = vmax.f32 %v5285, %v5625
  %v5716 = vmax.f32 %v5287, %v5627
  %v5717 = vmax.f32 %v5366, %v5706
  %v5718 = vadd.f32 %v5711, %v4864
  %v5719 = vadd.f32 %v5712, %v4868
  %v5720 = vadd.f32 %v5713, %v4872
  %v5721 = vadd.f32 %v5714, %v4876
  %v5722 = vadd.f32 %v5715, %v4880
  %v5723 = vadd.f32 %v5716, %v4884
  %v5724 = vadd.f32 %v5717, %v4888
  %v5725 = vmul.f32 %v5718, 0.01
  %v5726 = vmul.f32 %v5719, 0.01
  %v5727 = vmul.f32 %v5720, 0.01
  %v5728 = vmul.f32 %v5721, 0.01
  %v5729 = vmul.f32 %v5722, 0.01
  %v5730 = vmul.f32 %v5723, 0.01
  %v5731 = vmul.f32 %v5724, 0.01
  %v5732 = vmax.f32 %v5718, %v5725
  %v5733 = vmax.f32 %v5719, %v5726
  %v5734 = vmax.f32 %v5720, %v5727
  %v5735 = vmax.f32 %v5721, %v5728
  %v5736 = vmax.f32 %v5722, %v5729
  %v5737 = vmax.f32 %v5723, %v5730
  %v5738 = vmax.f32 %v5724, %v5731
  %v5739 = vpack.c.bf16 %v5732, %v5732
  %v5740 = vpack.c.bf16 %v5733, %v5733
  %v5741 = vpack.c.bf16 %v5734, %v5734
  %v5742 = vpack.c.bf16 %v5735, %v5735
  %v5743 = vpack.c.bf16 %v5736, %v5736
  %v5744 = vpack.c.bf16 %v5737, %v5737
  %v5745 = vpack.c.bf16 %v5738, %v5738
  %s5746 = scalar_lea.vmem %s6, 420
  %v5747 = vld [vmem:[%s5746] sm:$0xf]
  %v5748 = vld [vmem:[%s5746 + $0x4] sm:$0xf]
  %v5749 = vld [vmem:[%s5746 + $0x8] sm:$0xf]
  %v5750 = vld [vmem:[%s5746 + $0xc] sm:$0xf]
  %v5751 = vld [vmem:[%s5746 + $0x10] sm:$0xf]
  %v5752 = vld [vmem:[%s5746 + $0x14] sm:$0xf]
  %v5753 = vld [vmem:[%s5746 + $0x18] sm:$0xf]
  %v5754 = vld [vmem:[%s5746 + $0x1c] sm:$0xf]
  %v5755 = vld [vmem:[%s5746 + $0x20] sm:$0xf]
  %v5756 = vld [vmem:[%s5746 + $0x24] sm:$0xf]
  %v5757 = vld [vmem:[%s5746 + $0x28] sm:$0xf]
  %v5758 = vld [vmem:[%s5746 + $0x2c] sm:$0xf]
  %v5759 = vld [vmem:[%s5746 + $0x30] sm:$0xf]
  %v5760 = vld [vmem:[%s5746 + $0x34] sm:$0xf]
  %v5761 = vld [vmem:[%s5746 + $0x38] sm:$0xf]
  %v5762 = vld [vmem:[%s5746 + $0x3c] sm:$0xf]
  %v5763 = vld [vmem:[%s5746 + $0x40] sm:$0xf]
  %v5764 = vld [vmem:[%s5746 + $0x44] sm:$0xf]
  %v5765 = vld [vmem:[%s5746 + $0x48] sm:$0xf]
  %v5766 = vld [vmem:[%s5746 + $0x4c] sm:$0xf]
  %v5767 = vld [vmem:[%s5746 + $0x50] sm:$0xf]
  %v5768 = vld [vmem:[%s5746 + $0x54] sm:$0xf]
  %v5769 = vld [vmem:[%s5746 + $0x58] sm:$0xf]
  %v5770 = vld [vmem:[%s5746 + $0x5c] sm:$0xf]
  %v5771 = vld [vmem:[%s5746 + $0x60] sm:$0xf]
  %v5772 = vld [vmem:[%s5746 + $0x64] sm:$0xf]
  %v5773 = vld [vmem:[%s5746 + $0x68] sm:$0xf]
  %v5774 = vld [vmem:[%s5746 + $0x6c] sm:$0xf]
  %v5775 = vld [vmem:[%s5746 + $0x70] sm:$0xf]
  %v5776 = vld [vmem:[%s5746 + $0x74] sm:$0xf]
  %v5777 = vld [vmem:[%s5746 + $0x78] sm:$0xf]
  %v5778 = vld [vmem:[%s5746 + $0x7c] sm:$0xf]
  %v5779 = vld [vmem:[%s5746 + $0x80] sm:$0xf]
  %v5780 = vld [vmem:[%s5746 + $0x84] sm:$0xf]
  %v5781 = vld [vmem:[%s5746 + $0x88] sm:$0xf]
  %v5782 = vld [vmem:[%s5746 + $0x8c] sm:$0xf]
  %v5783 = vld [vmem:[%s5746 + $0x90] sm:$0xf]
  %v5784 = vld [vmem:[%s5746 + $0x94] sm:$0xf]
  %v5785 = vld [vmem:[%s5746 + $0x98] sm:$0xf]
  %v5786 = vld [vmem:[%s5746 + $0x9c] sm:$0xf]
  %v5787 = vld [vmem:[%s5746 + $0xa0] sm:$0xf]
  %v5788 = vld [vmem:[%s5746 + $0xa4] sm:$0xf]
  %v5789 = vld [vmem:[%s5746 + $0xa8] sm:$0xf]
  %v5790 = vld [vmem:[%s5746 + $0xac] sm:$0xf]
  %v5791 = vld [vmem:[%s5746 + $0xb0] sm:$0xf]
  %v5792 = vld [vmem:[%s5746 + $0xb4] sm:$0xf]
  %v5793 = vld [vmem:[%s5746 + $0xb8] sm:$0xf]
  %v5794 = vld [vmem:[%s5746 + $0xbc] sm:$0xf]
  %v5795 = vld [vmem:[%s5746 + $0xc0] sm:$0xf]
  %v5796 = vld [vmem:[%s5746 + $0xc4] sm:$0xf]
  %v5797 = vld [vmem:[%s5746 + $0xc8] sm:$0xf]
  %v5798 = vld [vmem:[%s5746 + $0xcc] sm:$0xf]
  %v5799 = vld [vmem:[%s5746 + $0xd0] sm:$0xf]
  %v5800 = vld [vmem:[%s5746 + $0xd4] sm:$0xf]
  %v5801 = vld [vmem:[%s5746 + $0xd8] sm:$0xf]
  %v5802 = vld [vmem:[%s5746 + $0xdc] sm:$0xf]
  %v5803 = vld [vmem:[%s5746 + $0xe0] sm:$0xf]
  %v5804 = vld [vmem:[%s5746 + $0xe4] sm:$0xf]
  %v5805 = vld [vmem:[%s5746 + $0xe8] sm:$0xf]
  %v5806 = vld [vmem:[%s5746 + $0xec] sm:$0xf]
  %v5807 = vld [vmem:[%s5746 + $0xf0] sm:$0xf]
  %v5808 = vld [vmem:[%s5746 + $0xf4] sm:$0xf]
  %v5809 = vld [vmem:[%s5746 + $0xf8] sm:$0xf]
  %v5810 = vld [vmem:[%s5746 + $0xfc] sm:$0xf]
  %v5811 = vld [vmem:[%s5746 + $0x100] sm:$0xf]
  %v5812 = vld [vmem:[%s5746 + $0x104] sm:$0xf]
  %v5813 = vld [vmem:[%s5746 + $0x108] sm:$0xf]
  %v5814 = vld [vmem:[%s5746 + $0x10c] sm:$0xf]
  %v5815 = vld [vmem:[%s5746 + $0x110] sm:$0xf]
  %v5816 = vld [vmem:[%s5746 + $0x114] sm:$0xf]
  %v5817 = vld [vmem:[%s5746 + $0x118] sm:$0xf]
  %v5818 = vld [vmem:[%s5746 + $0x11c] sm:$0xf]
  %v5819 = vld [vmem:[%s5746 + $0x120] sm:$0xf]
  %v5820 = vld [vmem:[%s5746 + $0x124] sm:$0xf]
  %v5821 = vld [vmem:[%s5746 + $0x128] sm:$0xf]
  %v5822 = vld [vmem:[%s5746 + $0x12c] sm:$0xf]
  %v5823 = vld [vmem:[%s5746 + $0x130] sm:$0xf]
  %v5824 = vld [vmem:[%s5746 + $0x134] sm:$0xf]
  %v5825 = vld [vmem:[%s5746 + $0x138] sm:$0xf]
  %v5826 = vld [vmem:[%s5746 + $0x13c] sm:$0xf]
  %v5827 = vld [vmem:[%s5746 + $0x140] sm:$0xf]
  %v5828 = vld [vmem:[%s5746 + $0x144] sm:$0xf]
  %v5829 = vld [vmem:[%s5746 + $0x148] sm:$0xf]
  %v5830 = vld [vmem:[%s5746 + $0x14c] sm:$0xf]
  %v5831 = vld [vmem:[%s5746 + $0x150] sm:$0xf]
  %v5832 = vld [vmem:[%s5746 + $0x154] sm:$0xf]
  %v5833 = vld [vmem:[%s5746 + $0x158] sm:$0xf]
  %v5834 = vld [vmem:[%s5746 + $0x15c] sm:$0xf]
  %v5835 = vld [vmem:[%s5746 + $0x160] sm:$0xf]
  %v5836 = vld [vmem:[%s5746 + $0x164] sm:$0xf]
  %v5837 = vld [vmem:[%s5746 + $0x168] sm:$0xf]
  %v5838 = vld [vmem:[%s5746 + $0x16c] sm:$0xf]
  %v5839 = vld [vmem:[%s5746 + $0x170] sm:$0xf]
  %v5840 = vld [vmem:[%s5746 + $0x174] sm:$0xf]
  %v5841 = vld [vmem:[%s5746 + $0x178] sm:$0xf]
  %v5842 = vld [vmem:[%s5746 + $0x17c] sm:$0xf]
  %v5843 = vld [vmem:[%s5746 + $0x180] sm:$0xf]
  %v5844 = vld [vmem:[%s5746 + $0x184] sm:$0xf]
  %v5845 = vld [vmem:[%s5746 + $0x188] sm:$0xf]
  %v5846 = vld [vmem:[%s5746 + $0x18c] sm:$0xf]
  %v5847 = vld [vmem:[%s5746 + $0x190] sm:$0xf]
  %v5848 = vld [vmem:[%s5746 + $0x194] sm:$0xf]
  %v5849 = vld [vmem:[%s5746 + $0x198] sm:$0xf]
  %v5850 = vld [vmem:[%s5746 + $0x19c] sm:$0xf]
  %v5851 = vld [vmem:[%s5746 + $0x1a0] sm:$0xf]
  %v5957 = vunpack.c.l.b16 %v5747
  %v5958 = vunpack.c.l.b16 %v5748
  %v5959 = vunpack.c.l.b16 %v5749
  %v5960 = vunpack.c.l.b16 %v5750
  %v5961 = vunpack.c.l.b16 %v5751
  %v5962 = vunpack.c.l.b16 %v5752
  %v5963 = vunpack.c.l.b16 %v5753
  %v5964 = vunpack.c.l.b16 %v5754
  %v5965 = vunpack.c.l.b16 %v5755
  %v5966 = vunpack.c.l.b16 %v5756
  %v5967 = vunpack.c.l.b16 %v5757
  %v5968 = vunpack.c.l.b16 %v5758
  %v5969 = vunpack.c.l.b16 %v5759
  %v5970 = vunpack.c.l.b16 %v5760
  %v5971 = vunpack.c.l.b16 %v5761
  %v5972 = vunpack.c.l.b16 %v5762
  %v5973 = vunpack.c.l.b16 %v5763
  %v5974 = vunpack.c.l.b16 %v5764
  %v5975 = vunpack.c.l.b16 %v5765
  %v5976 = vunpack.c.l.b16 %v5766
  %v5977 = vunpack.c.l.b16 %v5767
  %v5978 = vunpack.c.l.b16 %v5768
  %v5979 = vunpack.c.l.b16 %v5769
  %v5980 = vunpack.c.l.b16 %v5770
  %v5981 = vunpack.c.l.b16 %v5771
  %v5982 = vunpack.c.l.b16 %v5772
  %v5983 = vunpack.c.l.b16 %v5773
  %v5984 = vunpack.c.l.b16 %v5774
  %v5985 = vunpack.c.l.b16 %v5775
  %v5986 = vunpack.c.l.b16 %v5776
  %v5987 = vunpack.c.l.b16 %v5777
  %v5988 = vunpack.c.l.b16 %v5778
  %v5989 = vunpack.c.l.b16 %v5779
  %v5990 = vunpack.c.l.b16 %v5780
  %v5991 = vunpack.c.l.b16 %v5781
  %v5992 = vunpack.c.l.b16 %v5782
  %v5993 = vunpack.c.l.b16 %v5783
  %v5994 = vunpack.c.l.b16 %v5784
  %v5995 = vunpack.c.l.b16 %v5785
  %v5996 = vunpack.c.l.b16 %v5786
  %v5997 = vunpack.c.l.b16 %v5787
  %v5998 = vunpack.c.l.b16 %v5788
  %v5999 = vunpack.c.l.b16 %v5789
  %v6000 = vunpack.c.l.b16 %v5790
  %v6001 = vunpack.c.l.b16 %v5791
  %v6002 = vunpack.c.l.b16 %v5792
  %v6003 = vunpack.c.l.b16 %v5793
  %v6004 = vunpack.c.l.b16 %v5794
  %v6005 = vunpack.c.l.b16 %v5795
  %v6006 = vunpack.c.l.b16 %v5796
  %v6007 = vunpack.c.l.b16 %v5797
  %v6008 = vunpack.c.l.b16 %v5798
  %v6009 = vunpack.c.l.b16 %v5799
  %v6010 = vunpack.c.l.b16 %v5800
  %v6011 = vunpack.c.l.b16 %v5801
  %v6012 = vunpack.c.l.b16 %v5802
  %v6013 = vunpack.c.l.b16 %v5803
  %v6014 = vunpack.c.l.b16 %v5804
  %v6015 = vunpack.c.l.b16 %v5805
  %v6016 = vunpack.c.l.b16 %v5806
  %v6017 = vunpack.c.l.b16 %v5807
  %v6018 = vunpack.c.l.b16 %v5808
  %v6019 = vunpack.c.l.b16 %v5809
  %v6020 = vunpack.c.l.b16 %v5810
  %v6021 = vunpack.c.l.b16 %v5811
  %v6022 = vunpack.c.l.b16 %v5812
  %v6023 = vunpack.c.l.b16 %v5813
  %v6024 = vunpack.c.l.b16 %v5814
  %v6025 = vunpack.c.l.b16 %v5815
  %v6026 = vunpack.c.l.b16 %v5816
  %v6027 = vunpack.c.l.b16 %v5817
  %v6028 = vunpack.c.l.b16 %v5818
  %v6029 = vunpack.c.l.b16 %v5819
  %v6030 = vunpack.c.l.b16 %v5820
  %v6031 = vunpack.c.l.b16 %v5821
  %v6032 = vunpack.c.l.b16 %v5822
  %v6033 = vunpack.c.l.b16 %v5823
  %v6034 = vunpack.c.l.b16 %v5824
  %v6035 = vunpack.c.l.b16 %v5825
  %v6036 = vunpack.c.l.b16 %v5826
  %v6037 = vunpack.c.l.b16 %v5827
  %v6038 = vunpack.c.l.b16 %v5828
  %v6039 = vunpack.c.l.b16 %v5829
  %v6040 = vunpack.c.l.b16 %v5830
  %v6041 = vunpack.c.l.b16 %v5831
  %v6042 = vunpack.c.l.b16 %v5832
  %v6043 = vunpack.c.l.b16 %v5833
  %v6044 = vunpack.c.l.b16 %v5834
  %v6045 = vunpack.c.l.b16 %v5835
  %v6046 = vunpack.c.l.b16 %v5836
  %v6047 = vunpack.c.l.b16 %v5837
  %v6048 = vunpack.c.l.b16 %v5838
  %v6049 = vunpack.c.l.b16 %v5839
  %v6050 = vunpack.c.l.b16 %v5840
  %v6051 = vunpack.c.l.b16 %v5841
  %v6052 = vunpack.c.l.b16 %v5842
  %v6053 = vunpack.c.l.b16 %v5843
  %v6054 = vunpack.c.l.b16 %v5844
  %v6055 = vunpack.c.l.b16 %v5845
  %v6056 = vunpack.c.l.b16 %v5846
  %v6057 = vunpack.c.l.b16 %v5847
  %v6058 = vunpack.c.l.b16 %v5848
  %v6059 = vunpack.c.l.b16 %v5849
  %v6060 = vunpack.c.l.b16 %v5850
  %v6061 = vunpack.c.l.b16 %v5851
  %v6062 = vpack.c.b16 %v5958, %v5957
  %v6063 = vpack.c.b16 %v5960, %v5959
  %v6064 = vpack.c.b16 %v5962, %v5961
  %v6065 = vpack.c.b16 %v5964, %v5963
  %v6066 = vpack.c.b16 %v5966, %v5965
  %v6067 = vpack.c.b16 %v5968, %v5967
  %v6068 = vpack.c.b16 %v5970, %v5969
  %v6069 = vpack.c.b16 %v5972, %v5971
  %v6070 = vpack.c.b16 %v5974, %v5973
  %v6071 = vpack.c.b16 %v5976, %v5975
  %v6072 = vpack.c.b16 %v5978, %v5977
  %v6073 = vpack.c.b16 %v5980, %v5979
  %v6074 = vpack.c.b16 %v5982, %v5981
  %v6075 = vpack.c.b16 %v5984, %v5983
  %v6076 = vpack.c.b16 %v5986, %v5985
  %v6077 = vpack.c.b16 %v5988, %v5987
  %v6078 = vpack.c.b16 %v5990, %v5989
  %v6079 = vpack.c.b16 %v5992, %v5991
  %v6080 = vpack.c.b16 %v5994, %v5993
  %v6081 = vpack.c.b16 %v5996, %v5995
  %v6082 = vpack.c.b16 %v5998, %v5997
  %v6083 = vpack.c.b16 %v6000, %v5999
  %v6084 = vpack.c.b16 %v6002, %v6001
  %v6085 = vpack.c.b16 %v6004, %v6003
  %v6086 = vpack.c.b16 %v6006, %v6005
  %v6087 = vpack.c.b16 %v6008, %v6007
  %v6088 = vpack.c.b16 %v6010, %v6009
  %v6089 = vpack.c.b16 %v6012, %v6011
  %v6090 = vpack.c.b16 %v6014, %v6013
  %v6091 = vpack.c.b16 %v6016, %v6015
  %v6092 = vpack.c.b16 %v6018, %v6017
  %v6093 = vpack.c.b16 %v6020, %v6019
  %v6094 = vpack.c.b16 %v6022, %v6021
  %v6095 = vpack.c.b16 %v6024, %v6023
  %v6096 = vpack.c.b16 %v6026, %v6025
  %v6097 = vpack.c.b16 %v6028, %v6027
  %v6098 = vpack.c.b16 %v6030, %v6029
  %v6099 = vpack.c.b16 %v6032, %v6031
  %v6100 = vpack.c.b16 %v6034, %v6033
  %v6101 = vpack.c.b16 %v6036, %v6035
  %v6102 = vpack.c.b16 %v6038, %v6037
  %v6103 = vpack.c.b16 %v6040, %v6039
  %v6104 = vpack.c.b16 %v6042, %v6041
  %v6105 = vpack.c.b16 %v6044, %v6043
  %v6106 = vpack.c.b16 %v6046, %v6045
  %v6107 = vpack.c.b16 %v6048, %v6047
  %v6108 = vpack.c.b16 %v6050, %v6049
  %v6109 = vpack.c.b16 %v6052, %v6051
  %v6110 = vpack.c.b16 %v6054, %v6053
  %v6111 = vpack.c.b16 %v6056, %v6055
  %v6112 = vpack.c.b16 %v6058, %v6057
  %v6113 = vpack.c.b16 %v6060, %v6059
  %v6114 = vpack.c.b16 %v6061, %v6061
  %vm6167 = vcmask 588800
  %v6169 = vsel %vm6167, %v5745, 0
  %vm6171 = vcmask 1043456
  %v6173 = vsel %vm6171, %v6114, 0
  %6175 = vmatprep.subr.bf16.mxu0 0
  %6176 = vmatpush1.bf16.msra.mxu0 %v6062
  %6177 = vmatprep.subr.bf16.mxu0 0
  %6178 = vmatpush1.bf16.msra.mxu0 %v6063
  %6179 = vmatprep.subr.bf16.mxu0 0
  %6180 = vmatpush1.bf16.msra.mxu0 %v6064
  %6181 = vmatprep.subr.bf16.mxu0 0
  %6182 = vmatpush1.bf16.msra.mxu0 %v6065
  %6183 = vmatprep.subr.bf16.mxu0 0
  %6184 = vmatpush1.bf16.msra.mxu0 %v6066
  %6185 = vmatprep.subr.bf16.mxu0 0
  %6186 = vmatpush1.bf16.msra.mxu0 %v6067
  %6187 = vmatprep.subr.bf16.mxu0 0
  %6188 = vmatpush1.bf16.msra.mxu0 %v6068
  %6189 = vmatprep.subr.bf16.mxu0 0
  %6190 = vmatpush1.bf16.msra.mxu0 %v6069
  %6191 = vmatprep.subr.bf16.mxu0 0
  %6192 = vmatpush1.bf16.msra.mxu0 %v6070
  %6193 = vmatprep.subr.bf16.mxu0 0
  %6194 = vmatpush1.bf16.msra.mxu0 %v6071
  %6195 = vmatprep.subr.bf16.mxu0 0
  %6196 = vmatpush1.bf16.msra.mxu0 %v6072
  %6197 = vmatprep.subr.bf16.mxu0 0
  %6198 = vmatpush1.bf16.msra.mxu0 %v6073
  %6199 = vmatprep.subr.bf16.mxu0 0
  %6200 = vmatpush1.bf16.msra.mxu0 %v6074
  %6201 = vmatprep.subr.bf16.mxu0 0
  %6202 = vmatpush1.bf16.msra.mxu0 %v6075
  %6203 = vmatprep.subr.bf16.mxu0 0
  %6204 = vmatpush1.bf16.msra.mxu0 %v6076
  %6205 = vmatprep.subr.bf16.mxu0 0
  %6206 = vmatpush1.bf16.msra.mxu0 %v6077
  %6207 = vmatprep.mubr.bf16.mxu0 %v5740
  %6208 = vmatmul.mubr.bf16.gmra.mrb[0].mxu0 %v5739
  %v6209 = vpop.f32.mrb[0].mxu0
  %v6210 = vadd.f32 0.0, %v6209
  %v6211 = vpop.f32.mrb[0].mxu0
  %v6212 = vpop.f32.mrb[0].mxu0
  %v6213 = vpop.f32.mrb[0].mxu0
  %6214 = vdwg.mxu0
  %6215 = vmatprep.subr.bf16.mxu0 0
  %6216 = vmatpush1.bf16.msra.mxu0 %v6078
  %6217 = vmatprep.subr.bf16.mxu0 0
  %6218 = vmatpush1.bf16.msra.mxu0 %v6079
  %6219 = vmatprep.subr.bf16.mxu0 0
  %6220 = vmatpush1.bf16.msra.mxu0 %v6080
  %6221 = vmatprep.subr.bf16.mxu0 0
  %6222 = vmatpush1.bf16.msra.mxu0 %v6081
  %6223 = vmatprep.subr.bf16.mxu0 0
  %6224 = vmatpush1.bf16.msra.mxu0 %v6082
  %6225 = vmatprep.subr.bf16.mxu0 0
  %6226 = vmatpush1.bf16.msra.mxu0 %v6083
  %6227 = vmatprep.subr.bf16.mxu0 0
  %6228 = vmatpush1.bf16.msra.mxu0 %v6084
  %6229 = vmatprep.subr.bf16.mxu0 0
  %6230 = vmatpush1.bf16.msra.mxu0 %v6085
  %6231 = vmatprep.subr.bf16.mxu0 0
  %6232 = vmatpush1.bf16.msra.mxu0 %v6086
  %6233 = vmatprep.subr.bf16.mxu0 0
  %6234 = vmatpush1.bf16.msra.mxu0 %v6087
  %6235 = vmatprep.subr.bf16.mxu0 0
  %6236 = vmatpush1.bf16.msra.mxu0 %v6088
  %6237 = vmatprep.subr.bf16.mxu0 0
  %6238 = vmatpush1.bf16.msra.mxu0 %v6089
  %6239 = vmatprep.subr.bf16.mxu0 0
  %6240 = vmatpush1.bf16.msra.mxu0 %v6090
  %6241 = vmatprep.subr.bf16.mxu0 0
  %6242 = vmatpush1.bf16.msra.mxu0 %v6091
  %6243 = vmatprep.subr.bf16.mxu0 0
  %6244 = vmatpush1.bf16.msra.mxu0 %v6092
  %6245 = vmatprep.subr.bf16.mxu0 0
  %6246 = vmatpush1.bf16.msra.mxu0 %v6093
  %6247 = vmatprep.mubr.bf16.mxu0 %v5742
  %6248 = vmatmul.mubr.bf16.gmra.mrb[0].mxu0 %v5741
  %v6249 = vpop.f32.mrb[0].mxu0
  %v6250 = vadd.f32 %v6210, %v6249
  %v6251 = vpop.f32.mrb[0].mxu0
  %v6252 = vpop.f32.mrb[0].mxu0
  %v6253 = vpop.f32.mrb[0].mxu0
  %6254 = vdwg.mxu0
  %6255 = vmatprep.subr.bf16.mxu0 0
  %6256 = vmatpush1.bf16.msra.mxu0 %v6094
  %6257 = vmatprep.subr.bf16.mxu0 0
  %6258 = vmatpush1.bf16.msra.mxu0 %v6095
  %6259 = vmatprep.subr.bf16.mxu0 0
  %6260 = vmatpush1.bf16.msra.mxu0 %v6096
  %6261 = vmatprep.subr.bf16.mxu0 0
  %6262 = vmatpush1.bf16.msra.mxu0 %v6097
  %6263 = vmatprep.subr.bf16.mxu0 0
  %6264 = vmatpush1.bf16.msra.mxu0 %v6098
  %6265 = vmatprep.subr.bf16.mxu0 0
  %6266 = vmatpush1.bf16.msra.mxu0 %v6099
  %6267 = vmatprep.subr.bf16.mxu0 0
  %6268 = vmatpush1.bf16.msra.mxu0 %v6100
  %6269 = vmatprep.subr.bf16.mxu0 0
  %6270 = vmatpush1.bf16.msra.mxu0 %v6101
  %6271 = vmatprep.subr.bf16.mxu0 0
  %6272 = vmatpush1.bf16.msra.mxu0 %v6102
  %6273 = vmatprep.subr.bf16.mxu0 0
  %6274 = vmatpush1.bf16.msra.mxu0 %v6103
  %6275 = vmatprep.subr.bf16.mxu0 0
  %6276 = vmatpush1.bf16.msra.mxu0 %v6104
  %6277 = vmatprep.subr.bf16.mxu0 0
  %6278 = vmatpush1.bf16.msra.mxu0 %v6105
  %6279 = vmatprep.subr.bf16.mxu0 0
  %6280 = vmatpush1.bf16.msra.mxu0 %v6106
  %6281 = vmatprep.subr.bf16.mxu0 0
  %6282 = vmatpush1.bf16.msra.mxu0 %v6107
  %6283 = vmatprep.subr.bf16.mxu0 0
  %6284 = vmatpush1.bf16.msra.mxu0 %v6108
  %6285 = vmatprep.subr.bf16.mxu0 0
  %6286 = vmatpush1.bf16.msra.mxu0 %v6109
  %6287 = vmatprep.mubr.bf16.mxu0 %v5744
  %6288 = vmatmul.mubr.bf16.gmra.mrb[0].mxu0 %v5743
  %v6289 = vpop.f32.mrb[0].mxu0
  %v6290 = vadd.f32 %v6250, %v6289
  %v6291 = vpop.f32.mrb[0].mxu0
  %v6292 = vpop.f32.mrb[0].mxu0
  %v6293 = vpop.f32.mrb[0].mxu0
  %6294 = vdwg.mxu0
  %6295 = vmatprep.subr.bf16.mxu0 0
  %6296 = vmatpush1.bf16.msra.mxu0 %v6110
  %6297 = vmatprep.subr.bf16.mxu0 0
  %6298 = vmatpush1.bf16.msra.mxu0 %v6111
  %6299 = vmatprep.subr.bf16.mxu0 0
  %6300 = vmatpush1.bf16.msra.mxu0 %v6112
  %6301 = vmatprep.subr.bf16.mxu0 0
  %6302 = vmatpush1.bf16.msra.mxu0 %v6113
  %6303 = vmatprep.subr.bf16.mxu0 0
  %6304 = vmatpush1.bf16.msra.mxu0 %v6173
  %6305 = vmatprep.subr.bf16.mxu0 0
  %6306 = vmatpush1.bf16.msra.mxu0 0
  %6307 = vmatprep.subr.bf16.mxu0 0
  %6308 = vmatpush1.bf16.msra.mxu0 0
  %6309 = vmatprep.subr.bf16.mxu0 0
  %6310 = vmatpush1.bf16.msra.mxu0 0
  %6311 = vmatprep.subr.bf16.mxu0 0
  %6312 = vmatpush1.bf16.msra.mxu0 0
  %6313 = vmatprep.subr.bf16.mxu0 0
  %6314 = vmatpush1.bf16.msra.mxu0 0
  %6315 = vmatprep.subr.bf16.mxu0 0
  %6316 = vmatpush1.bf16.msra.mxu0 0
  %6317 = vmatprep.subr.bf16.mxu0 0
  %6318 = vmatpush1.bf16.msra.mxu0 0
  %6319 = vmatprep.subr.bf16.mxu0 0
  %6320 = vmatpush1.bf16.msra.mxu0 0
  %6321 = vmatprep.subr.bf16.mxu0 0
  %6322 = vmatpush1.bf16.msra.mxu0 0
  %6323 = vmatprep.subr.bf16.mxu0 0
  %6324 = vmatpush1.bf16.msra.mxu0 0
  %6325 = vmatprep.subr.bf16.mxu0 0
  %6326 = vmatpush1.bf16.msra.mxu0 0
  %6327 = vmatprep.mubr.bf16.mxu0 0
  %6328 = vmatmul.mubr.bf16.gmra.mrb[0].mxu0 %v6169
  %v6329 = vpop.f32.mrb[0].mxu0
  %v6330 = vadd.f32 %v6290, %v6329
  %v6331 = vpop.f32.mrb[0].mxu0
  %v6332 = vpop.f32.mrb[0].mxu0
  %v6333 = vpop.f32.mrb[0].mxu0
  %6334 = vdwg.mxu0
  %v6440 = vunpack.c.l.b16 %v4924
  %v6441 = vunpack.c.l.b16 %v4925
  %v6442 = vunpack.c.l.b16 %v4926
  %v6443 = vunpack.c.l.b16 %v4927
  %v6444 = vunpack.c.l.b16 %v4928
  %v6445 = vunpack.c.l.b16 %v4929
  %v6446 = vunpack.c.l.b16 %v4930
  %v6447 = vunpack.c.l.b16 %v4931
  %v6448 = vunpack.c.l.b16 %v4932
  %v6449 = vunpack.c.l.b16 %v4933
  %v6450 = vunpack.c.l.b16 %v4934
  %v6451 = vunpack.c.l.b16 %v4935
  %v6452 = vunpack.c.l.b16 %v4936
  %v6453 = vunpack.c.l.b16 %v4937
  %v6454 = vunpack.c.l.b16 %v4938
  %v6455 = vunpack.c.l.b16 %v4939
  %v6456 = vunpack.c.l.b16 %v4940
  %v6457 = vunpack.c.l.b16 %v4941
  %v6458 = vunpack.c.l.b16 %v4942
  %v6459 = vunpack.c.l.b16 %v4943
  %v6460 = vunpack.c.l.b16 %v4944
  %v6461 = vunpack.c.l.b16 %v4945
  %v6462 = vunpack.c.l.b16 %v4946
  %v6463 = vunpack.c.l.b16 %v4947
  %v6464 = vunpack.c.l.b16 %v4948
  %v6465 = vunpack.c.l.b16 %v4949
  %v6466 = vunpack.c.l.b16 %v4950
  %v6467 = vunpack.c.l.b16 %v4951
  %v6468 = vunpack.c.l.b16 %v4952
  %v6469 = vunpack.c.l.b16 %v4953
  %v6470 = vunpack.c.l.b16 %v4954
  %v6471 = vunpack.c.l.b16 %v4955
  %v6472 = vunpack.c.l.b16 %v4956
  %v6473 = vunpack.c.l.b16 %v4957
  %v6474 = vunpack.c.l.b16 %v4958
  %v6475 = vunpack.c.l.b16 %v4959
  %v6476 = vunpack.c.l.b16 %v4960
  %v6477 = vunpack.c.l.b16 %v4961
  %v6478 = vunpack.c.l.b16 %v4962
  %v6479 = vunpack.c.l.b16 %v4963
  %v6480 = vunpack.c.l.b16 %v4964
  %v6481 = vunpack.c.l.b16 %v4965
  %v6482 = vunpack.c.l.b16 %v4966
  %v6483 = vunpack.c.l.b16 %v4967
  %v6484 = vunpack.c.l.b16 %v4968
  %v6485 = vunpack.c.l.b16 %v4969
  %v6486 = vunpack.c.l.b16 %v4970
  %v6487 = vunpack.c.l.b16 %v4971
  %v6488 = vunpack.c.l.b16 %v4972
  %v6489 = vunpack.c.l.b16 %v4973
  %v6490 = vunpack.c.l.b16 %v4974
  %v6491 = vunpack.c.l.b16 %v4975
  %v6492 = vunpack.c.l.b16 %v4976
  %v6493 = vunpack.c.l.b16 %v4977
  %v6494 = vunpack.c.l.b16 %v4978
  %v6495 = vunpack.c.l.b16 %v4979
  %v6496 = vunpack.c.l.b16 %v4980
  %v6497 = vunpack.c.l.b16 %v4981
  %v6498 = vunpack.c.l.b16 %v4982
  %v6499 = vunpack.c.l.b16 %v4983
  %v6500 = vunpack.c.l.b16 %v4984
  %v6501 = vunpack.c.l.b16 %v4985
  %v6502 = vunpack.c.l.b16 %v4986
  %v6503 = vunpack.c.l.b16 %v4987
  %v6504 = vunpack.c.l.b16 %v4988
  %v6505 = vunpack.c.l.b16 %v4989
  %v6506 = vunpack.c.l.b16 %v4990
  %v6507 = vunpack.c.l.b16 %v4991
  %v6508 = vunpack.c.l.b16 %v4992
  %v6509 = vunpack.c.l.b16 %v4993
  %v6510 = vunpack.c.l.b16 %v4994
  %v6511 = vunpack.c.l.b16 %v4995
  %v6512 = vunpack.c.l.b16 %v4996
  %v6513 = vunpack.c.l.b16 %v4997
  %v6514 = vunpack.c.l.b16 %v4998
  %v6515 = vunpack.c.l.b16 %v4999
  %v6516 = vunpack.c.l.b16 %v5000
  %v6517 = vunpack.c.l.b16 %v5001
  %v6518 = vunpack.c.l.b16 %v5002
  %v6519 = vunpack.c.l.b16 %v5003
  %v6520 = vunpack.c.l.b16 %v5004
  %v6521 = vunpack.c.l.b16 %v5005
  %v6522 = vunpack.c.l.b16 %v5006
  %v6523 = vunpack.c.l.b16 %v5007
  %v6524 = vunpack.c.l.b16 %v5008
  %v6525 = vunpack.c.l.b16 %v5009
  %v6526 = vunpack.c.l.b16 %v5010
  %v6527 = vunpack.c.l.b16 %v5011
  %v6528 = vunpack.c.l.b16 %v5012
  %v6529 = vunpack.c.l.b16 %v5013
  %v6530 = vunpack.c.l.b16 %v5014
  %v6531 = vunpack.c.l.b16 %v5015
  %v6532 = vunpack.c.l.b16 %v5016
  %v6533 = vunpack.c.l.b16 %v5017
  %v6534 = vunpack.c.l.b16 %v5018
  %v6535 = vunpack.c.l.b16 %v5019
  %v6536 = vunpack.c.l.b16 %v5020
  %v6537 = vunpack.c.l.b16 %v5021
  %v6538 = vunpack.c.l.b16 %v5022
  %v6539 = vunpack.c.l.b16 %v5023
  %v6540 = vunpack.c.l.b16 %v5024
  %v6541 = vunpack.c.l.b16 %v5025
  %v6542 = vunpack.c.l.b16 %v5026
  %v6543 = vunpack.c.l.b16 %v5027
  %v6544 = vunpack.c.l.b16 %v5028
  %v6545 = vpack.c.b16 %v6441, %v6440
  %v6546 = vpack.c.b16 %v6443, %v6442
  %v6547 = vpack.c.b16 %v6445, %v6444
  %v6548 = vpack.c.b16 %v6447, %v6446
  %v6549 = vpack.c.b16 %v6449, %v6448
  %v6550 = vpack.c.b16 %v6451, %v6450
  %v6551 = vpack.c.b16 %v6453, %v6452
  %v6552 = vpack.c.b16 %v6455, %v6454
  %v6553 = vpack.c.b16 %v6457, %v6456
  %v6554 = vpack.c.b16 %v6459, %v6458
  %v6555 = vpack.c.b16 %v6461, %v6460
  %v6556 = vpack.c.b16 %v6463, %v6462
  %v6557 = vpack.c.b16 %v6465, %v6464
  %v6558 = vpack.c.b16 %v6467, %v6466
  %v6559 = vpack.c.b16 %v6469, %v6468
  %v6560 = vpack.c.b16 %v6471, %v6470
  %v6561 = vpack.c.b16 %v6473, %v6472
  %v6562 = vpack.c.b16 %v6475, %v6474
  %v6563 = vpack.c.b16 %v6477, %v6476
  %v6564 = vpack.c.b16 %v6479, %v6478
  %v6565 = vpack.c.b16 %v6481, %v6480
  %v6566 = vpack.c.b16 %v6483, %v6482
  %v6567 = vpack.c.b16 %v6485, %v6484
  %v6568 = vpack.c.b16 %v6487, %v6486
  %v6569 = vpack.c.b16 %v6489, %v6488
  %v6570 = vpack.c.b16 %v6491, %v6490
  %v6571 = vpack.c.b16 %v6493, %v6492
  %v6572 = vpack.c.b16 %v6495, %v6494
  %v6573 = vpack.c.b16 %v6497, %v6496
  %v6574 = vpack.c.b16 %v6499, %v6498
  %v6575 = vpack.c.b16 %v6501, %v6500
  %v6576 = vpack.c.b16 %v6503, %v6502
  %v6577 = vpack.c.b16 %v6505, %v6504
  %v6578 = vpack.c.b16 %v6507, %v6506
  %v6579 = vpack.c.b16 %v6509, %v6508
  %v6580 = vpack.c.b16 %v6511, %v6510
  %v6581 = vpack.c.b16 %v6513, %v6512
  %v6582 = vpack.c.b16 %v6515, %v6514
  %v6583 = vpack.c.b16 %v6517, %v6516
  %v6584 = vpack.c.b16 %v6519, %v6518
  %v6585 = vpack.c.b16 %v6521, %v6520
  %v6586 = vpack.c.b16 %v6523, %v6522
  %v6587 = vpack.c.b16 %v6525, %v6524
  %v6588 = vpack.c.b16 %v6527, %v6526
  %v6589 = vpack.c.b16 %v6529, %v6528
  %v6590 = vpack.c.b16 %v6531, %v6530
  %v6591 = vpack.c.b16 %v6533, %v6532
  %v6592 = vpack.c.b16 %v6535, %v6534
  %v6593 = vpack.c.b16 %v6537, %v6536
  %v6594 = vpack.c.b16 %v6539, %v6538
  %v6595 = vpack.c.b16 %v6541, %v6540
  %v6596 = vpack.c.b16 %v6543, %v6542
  %v6597 = vpack.c.b16 %v6544, %v6544
  %v6651 = vsel %vm6167, %v4923, 0
  %v6654 = vsel %vm6171, %v6597, 0
  %6656 = vmatprep.subr.bf16.mxu0 0
  %6657 = vmatpush1.bf16.msra.mxu0 %v6545
  %6658 = vmatprep.subr.bf16.mxu0 0
  %6659 = vmatpush1.bf16.msra.mxu0 %v6546
  %6660 = vmatprep.subr.bf16.mxu0 0
  %6661 = vmatpush1.bf16.msra.mxu0 %v6547
  %6662 = vmatprep.subr.bf16.mxu0 0
  %6663 = vmatpush1.bf16.msra.mxu0 %v6548
  %6664 = vmatprep.subr.bf16.mxu0 0
  %6665 = vmatpush1.bf16.msra.mxu0 %v6549
  %6666 = vmatprep.subr.bf16.mxu0 0
  %6667 = vmatpush1.bf16.msra.mxu0 %v6550
  %6668 = vmatprep.subr.bf16.mxu0 0
  %6669 = vmatpush1.bf16.msra.mxu0 %v6551
  %6670 = vmatprep.subr.bf16.mxu0 0
  %6671 = vmatpush1.bf16.msra.mxu0 %v6552
  %6672 = vmatprep.subr.bf16.mxu0 0
  %6673 = vmatpush1.bf16.msra.mxu0 %v6553
  %6674 = vmatprep.subr.bf16.mxu0 0
  %6675 = vmatpush1.bf16.msra.mxu0 %v6554
  %6676 = vmatprep.subr.bf16.mxu0 0
  %6677 = vmatpush1.bf16.msra.mxu0 %v6555
  %6678 = vmatprep.subr.bf16.mxu0 0
  %6679 = vmatpush1.bf16.msra.mxu0 %v6556
  %6680 = vmatprep.subr.bf16.mxu0 0
  %6681 = vmatpush1.bf16.msra.mxu0 %v6557
  %6682 = vmatprep.subr.bf16.mxu0 0
  %6683 = vmatpush1.bf16.msra.mxu0 %v6558
  %6684 = vmatprep.subr.bf16.mxu0 0
  %6685 = vmatpush1.bf16.msra.mxu0 %v6559
  %6686 = vmatprep.subr.bf16.mxu0 0
  %6687 = vmatpush1.bf16.msra.mxu0 %v6560
  %6688 = vmatprep.mubr.bf16.mxu0 %v4918
  %6689 = vmatmul.mubr.bf16.gmra.mrb[0].mxu0 %v4917
  %v6690 = vpop.f32.mrb[0].mxu0
  %v6691 = vadd.f32 %v6330, %v6690
  %v6692 = vpop.f32.mrb[0].mxu0
  %v6693 = vpop.f32.mrb[0].mxu0
  %v6694 = vpop.f32.mrb[0].mxu0
  %6695 = vdwg.mxu0
  %6696 = vmatprep.subr.bf16.mxu0 0
  %6697 = vmatpush1.bf16.msra.mxu0 %v6561
  %6698 = vmatprep.subr.bf16.mxu0 0
  %6699 = vmatpush1.bf16.msra.mxu0 %v6562
  %6700 = vmatprep.subr.bf16.mxu0 0
  %6701 = vmatpush1.bf16.msra.mxu0 %v6563
  %6702 = vmatprep.subr.bf16.mxu0 0
  %6703 = vmatpush1.bf16.msra.mxu0 %v6564
  %6704 = vmatprep.subr.bf16.mxu0 0
  %6705 = vmatpush1.bf16.msra.mxu0 %v6565
  %6706 = vmatprep.subr.bf16.mxu0 0
  %6707 = vmatpush1.bf16.msra.mxu0 %v6566
  %6708 = vmatprep.subr.bf16.mxu0 0
  %6709 = vmatpush1.bf16.msra.mxu0 %v6567
  %6710 = vmatprep.subr.bf16.mxu0 0
  %6711 = vmatpush1.bf16.msra.mxu0 %v6568
  %6712 = vmatprep.subr.bf16.mxu0 0
  %6713 = vmatpush1.bf16.msra.mxu0 %v6569
  %6714 = vmatprep.subr.bf16.mxu0 0
  %6715 = vmatpush1.bf16.msra.mxu0 %v6570
  %6716 = vmatprep.subr.bf16.mxu0 0
  %6717 = vmatpush1.bf16.msra.mxu0 %v6571
  %6718 = vmatprep.subr.bf16.mxu0 0
  %6719 = vmatpush1.bf16.msra.mxu0 %v6572
  %6720 = vmatprep.subr.bf16.mxu0 0
  %6721 = vmatpush1.bf16.msra.mxu0 %v6573
  %6722 = vmatprep.subr.bf16.mxu0 0
  %6723 = vmatpush1.bf16.msra.mxu0 %v6574
  %6724 = vmatprep.subr.bf16.mxu0 0
  %6725 = vmatpush1.bf16.msra.mxu0 %v6575
  %6726 = vmatprep.subr.bf16.mxu0 0
  %6727 = vmatpush1.bf16.msra.mxu0 %v6576
  %6728 = vmatprep.mubr.bf16.mxu0 %v4920
  %6729 = vmatmul.mubr.bf16.gmra.mrb[0].mxu0 %v4919
  %v6730 = vpop.f32.mrb[0].mxu0
  %v6731 = vadd.f32 %v6691, %v6730
  %v6732 = vpop.f32.mrb[0].mxu0
  %v6733 = vpop.f32.mrb[0].mxu0
  %v6734 = vpop.f32.mrb[0].mxu0
  %6735 = vdwg.mxu0
  %6736 = vmatprep.subr.bf16.mxu0 0
  %6737 = vmatpush1.bf16.msra.mxu0 %v6577
  %6738 = vmatprep.subr.bf16.mxu0 0
  %6739 = vmatpush1.bf16.msra.mxu0 %v6578
  %6740 = vmatprep.subr.bf16.mxu0 0
  %6741 = vmatpush1.bf16.msra.mxu0 %v6579
  %6742 = vmatprep.subr.bf16.mxu0 0
  %6743 = vmatpush1.bf16.msra.mxu0 %v6580
  %6744 = vmatprep.subr.bf16.mxu0 0
  %6745 = vmatpush1.bf16.msra.mxu0 %v6581
  %6746 = vmatprep.subr.bf16.mxu0 0
  %6747 = vmatpush1.bf16.msra.mxu0 %v6582
  %6748 = vmatprep.subr.bf16.mxu0 0
  %6749 = vmatpush1.bf16.msra.mxu0 %v6583
  %6750 = vmatprep.subr.bf16.mxu0 0
  %6751 = vmatpush1.bf16.msra.mxu0 %v6584
  %6752 = vmatprep.subr.bf16.mxu0 0
  %6753 = vmatpush1.bf16.msra.mxu0 %v6585
  %6754 = vmatprep.subr.bf16.mxu0 0
  %6755 = vmatpush1.bf16.msra.mxu0 %v6586
  %6756 = vmatprep.subr.bf16.mxu0 0
  %6757 = vmatpush1.bf16.msra.mxu0 %v6587
  %6758 = vmatprep.subr.bf16.mxu0 0
  %6759 = vmatpush1.bf16.msra.mxu0 %v6588
  %6760 = vmatprep.subr.bf16.mxu0 0
  %6761 = vmatpush1.bf16.msra.mxu0 %v6589
  %6762 = vmatprep.subr.bf16.mxu0 0
  %6763 = vmatpush1.bf16.msra.mxu0 %v6590
  %6764 = vmatprep.subr.bf16.mxu0 0
  %6765 = vmatpush1.bf16.msra.mxu0 %v6591
  %6766 = vmatprep.subr.bf16.mxu0 0
  %6767 = vmatpush1.bf16.msra.mxu0 %v6592
  %6768 = vmatprep.mubr.bf16.mxu0 %v4922
  %6769 = vmatmul.mubr.bf16.gmra.mrb[0].mxu0 %v4921
  %v6770 = vpop.f32.mrb[0].mxu0
  %v6771 = vadd.f32 %v6731, %v6770
  %v6772 = vpop.f32.mrb[0].mxu0
  %v6773 = vpop.f32.mrb[0].mxu0
  %v6774 = vpop.f32.mrb[0].mxu0
  %6775 = vdwg.mxu0
  %6776 = vmatprep.subr.bf16.mxu0 0
  %6777 = vmatpush1.bf16.msra.mxu0 %v6593
  %6778 = vmatprep.subr.bf16.mxu0 0
  %6779 = vmatpush1.bf16.msra.mxu0 %v6594
  %6780 = vmatprep.subr.bf16.mxu0 0
  %6781 = vmatpush1.bf16.msra.mxu0 %v6595
  %6782 = vmatprep.subr.bf16.mxu0 0
  %6783 = vmatpush1.bf16.msra.mxu0 %v6596
  %6784 = vmatprep.subr.bf16.mxu0 0
  %6785 = vmatpush1.bf16.msra.mxu0 %v6654
  %6786 = vmatprep.subr.bf16.mxu0 0
  %6787 = vmatpush1.bf16.msra.mxu0 0
  %6788 = vmatprep.subr.bf16.mxu0 0
  %6789 = vmatpush1.bf16.msra.mxu0 0
  %6790 = vmatprep.subr.bf16.mxu0 0
  %6791 = vmatpush1.bf16.msra.mxu0 0
  %6792 = vmatprep.subr.bf16.mxu0 0
  %6793 = vmatpush1.bf16.msra.mxu0 0
  %6794 = vmatprep.subr.bf16.mxu0 0
  %6795 = vmatpush1.bf16.msra.mxu0 0
  %6796 = vmatprep.subr.bf16.mxu0 0
  %6797 = vmatpush1.bf16.msra.mxu0 0
  %6798 = vmatprep.subr.bf16.mxu0 0
  %6799 = vmatpush1.bf16.msra.mxu0 0
  %6800 = vmatprep.subr.bf16.mxu0 0
  %6801 = vmatpush1.bf16.msra.mxu0 0
  %6802 = vmatprep.subr.bf16.mxu0 0
  %6803 = vmatpush1.bf16.msra.mxu0 0
  %6804 = vmatprep.subr.bf16.mxu0 0
  %6805 = vmatpush1.bf16.msra.mxu0 0
  %6806 = vmatprep.subr.bf16.mxu0 0
  %6807 = vmatpush1.bf16.msra.mxu0 0
  %6808 = vmatprep.mubr.bf16.mxu0 0
  %6809 = vmatmul.mubr.bf16.gmra.mrb[0].mxu0 %v6651
  %v6810 = vpop.f32.mrb[0].mxu0
  %v6811 = vadd.f32 %v6771, %v6810
  %v6812 = vpop.f32.mrb[0].mxu0
  %v6813 = vpop.f32.mrb[0].mxu0
  %v6814 = vpop.f32.mrb[0].mxu0
  %6815 = vdwg.mxu0
  %v6816 = vpack.c.bf16 %v3426, %v3426
  %v6817 = vpack.c.bf16 %v3427, %v3427
  %6820 = vrot.lane.b32.xlu0 %v5029, 64
  %v6821 = vpop.permute.xlu0 %6820
  %6822 = vrot.lane.b32.xlu0 %v6816, 64
  %v6823 = vpop.permute.xlu0 %6822
  %6824 = vrot.lane.b32.xlu0 %v6817, 64
  %v6825 = vpop.permute.xlu0 %6824
  %vm6826 = vcmask 523264
  %v6827 = vsel %vm6826, %v6821, %v6823
  %v6828 = vsel %vm6826, %v6823, %v6825
  %v6832 = vsel %vm4179, %v6825, 0
  %6834 = vmatprep.subr.bf16.mxu0 %v3942
  %6835 = vmatpush1.bf16.msra.mxu0 %v3941
  %6836 = vmatprep.subr.bf16.mxu0 %v3949
  %6837 = vmatpush1.bf16.msra.mxu0 %v3948
  %6838 = vmatprep.subr.bf16.mxu0 %v3956
  %6839 = vmatpush1.bf16.msra.mxu0 %v3955
  %6840 = vmatprep.subr.bf16.mxu0 %v3963
  %6841 = vmatpush1.bf16.msra.mxu0 %v3962
  %6842 = vmatprep.subr.bf16.mxu0 %v3970
  %6843 = vmatpush1.bf16.msra.mxu0 %v3969
  %6844 = vmatprep.subr.bf16.mxu0 %v3977
  %6845 = vmatpush1.bf16.msra.mxu0 %v3976
  %6846 = vmatprep.subr.bf16.mxu0 %v3984
  %6847 = vmatpush1.bf16.msra.mxu0 %v3983
  %6848 = vmatprep.subr.bf16.mxu0 %v3991
  %6849 = vmatpush1.bf16.msra.mxu0 %v3990
  %6850 = vmatprep.subr.bf16.mxu0 %v3998
  %6851 = vmatpush1.bf16.msra.mxu0 %v3997
  %6852 = vmatprep.subr.bf16.mxu0 %v4005
  %6853 = vmatpush1.bf16.msra.mxu0 %v4004
  %6854 = vmatprep.subr.bf16.mxu0 %v4012
  %6855 = vmatpush1.bf16.msra.mxu0 %v4011
  %6856 = vmatprep.subr.bf16.mxu0 %v4019
  %6857 = vmatpush1.bf16.msra.mxu0 %v4018
  %6858 = vmatprep.subr.bf16.mxu0 %v4026
  %6859 = vmatpush1.bf16.msra.mxu0 %v4025
  %6860 = vmatprep.subr.bf16.mxu0 %v4033
  %6861 = vmatpush1.bf16.msra.mxu0 %v4032
  %6862 = vmatprep.subr.bf16.mxu0 %v4040
  %6863 = vmatpush1.bf16.msra.mxu0 %v4039
  %6864 = vmatprep.subr.bf16.mxu0 %v4047
  %6865 = vmatpush1.bf16.msra.mxu0 %v4046
  %6866 = vmatprep.mubr.bf16.mxu0 %v6828
  %6867 = vmatmul.mubr.bf16.gmra.mrb[0].mxu0 %v6827
  %v6868 = vpop.f32.mrb[0].mxu0
  %v6869 = vadd.f32 0.0, %v6868
  %v6870 = vpop.f32.mrb[0].mxu0
  %v6871 = vadd.f32 0.0, %v6870
  %v6872 = vpop.f32.mrb[0].mxu0
  %v6873 = vpop.f32.mrb[0].mxu0
  %6874 = vdwg.mxu0
  %6875 = vmatprep.subr.bf16.mxu0 %v4054
  %6876 = vmatpush1.bf16.msra.mxu0 %v4053
  %6877 = vmatprep.subr.bf16.mxu0 0
  %6878 = vmatpush1.bf16.msra.mxu0 0
  %6879 = vmatprep.subr.bf16.mxu0 0
  %6880 = vmatpush1.bf16.msra.mxu0 0
  %6881 = vmatprep.subr.bf16.mxu0 0
  %6882 = vmatpush1.bf16.msra.mxu0 0
  %6883 = vmatprep.subr.bf16.mxu0 0
  %6884 = vmatpush1.bf16.msra.mxu0 0
  %6885 = vmatprep.subr.bf16.mxu0 0
  %6886 = vmatpush1.bf16.msra.mxu0 0
  %6887 = vmatprep.subr.bf16.mxu0 0
  %6888 = vmatpush1.bf16.msra.mxu0 0
  %6889 = vmatprep.subr.bf16.mxu0 0
  %6890 = vmatpush1.bf16.msra.mxu0 0
  %6891 = vmatprep.subr.bf16.mxu0 0
  %6892 = vmatpush1.bf16.msra.mxu0 0
  %6893 = vmatprep.subr.bf16.mxu0 0
  %6894 = vmatpush1.bf16.msra.mxu0 0
  %6895 = vmatprep.subr.bf16.mxu0 0
  %6896 = vmatpush1.bf16.msra.mxu0 0
  %6897 = vmatprep.subr.bf16.mxu0 0
  %6898 = vmatpush1.bf16.msra.mxu0 0
  %6899 = vmatprep.subr.bf16.mxu0 0
  %6900 = vmatpush1.bf16.msra.mxu0 0
  %6901 = vmatprep.subr.bf16.mxu0 0
  %6902 = vmatpush1.bf16.msra.mxu0 0
  %6903 = vmatprep.subr.bf16.mxu0 0
  %6904 = vmatpush1.bf16.msra.mxu0 0
  %6905 = vmatprep.subr.bf16.mxu0 0
  %6906 = vmatpush1.bf16.msra.mxu0 0
  %6907 = vmatprep.mubr.bf16.mxu0 0
  %6908 = vmatmul.mubr.bf16.gmra.mrb[0].mxu0 %v6832
  %v6909 = vpop.f32.mrb[0].mxu0
  %v6910 = vadd.f32 %v6869, %v6909
  %v6911 = vpop.f32.mrb[0].mxu0
  %v6912 = vadd.f32 %v6871, %v6911
  %v6913 = vpop.f32.mrb[0].mxu0
  %v6914 = vpop.f32.mrb[0].mxu0
  %6915 = vdwg.mxu0
  %6916 = vmatprep.subr.bf16.mxu0 %v3944
  %6917 = vmatpush1.bf16.msra.mxu0 %v3943
  %6918 = vmatprep.subr.bf16.mxu0 %v3951
  %6919 = vmatpush1.bf16.msra.mxu0 %v3950
  %6920 = vmatprep.subr.bf16.mxu0 %v3958
  %6921 = vmatpush1.bf16.msra.mxu0 %v3957
  %6922 = vmatprep.subr.bf16.mxu0 %v3965
  %6923 = vmatpush1.bf16.msra.mxu0 %v3964
  %6924 = vmatprep.subr.bf16.mxu0 %v3972
  %6925 = vmatpush1.bf16.msra.mxu0 %v3971
  %6926 = vmatprep.subr.bf16.mxu0 %v3979
  %6927 = vmatpush1.bf16.msra.mxu0 %v3978
  %6928 = vmatprep.subr.bf16.mxu0 %v3986
  %6929 = vmatpush1.bf16.msra.mxu0 %v3985
  %6930 = vmatprep.subr.bf16.mxu0 %v3993
  %6931 = vmatpush1.bf16.msra.mxu0 %v3992
  %6932 = vmatprep.subr.bf16.mxu0 %v4000
  %6933 = vmatpush1.bf16.msra.mxu0 %v3999
  %6934 = vmatprep.subr.bf16.mxu0 %v4007
  %6935 = vmatpush1.bf16.msra.mxu0 %v4006
  %6936 = vmatprep.subr.bf16.mxu0 %v4014
  %6937 = vmatpush1.bf16.msra.mxu0 %v4013
  %6938 = vmatprep.subr.bf16.mxu0 %v4021
  %6939 = vmatpush1.bf16.msra.mxu0 %v4020
  %6940 = vmatprep.subr.bf16.mxu0 %v4028
  %6941 = vmatpush1.bf16.msra.mxu0 %v4027
  %6942 = vmatprep.subr.bf16.mxu0 %v4035
  %6943 = vmatpush1.bf16.msra.mxu0 %v4034
  %6944 = vmatprep.subr.bf16.mxu0 %v4042
  %6945 = vmatpush1.bf16.msra.mxu0 %v4041
  %6946 = vmatprep.subr.bf16.mxu0 %v4049
  %6947 = vmatpush1.bf16.msra.mxu0 %v4048
  %6948 = vmatprep.mubr.bf16.mxu0 %v6828
  %6949 = vmatmul.mubr.bf16.gmra.mrb[0].mxu0 %v6827
  %v6950 = vpop.f32.mrb[0].mxu0
  %v6951 = vadd.f32 0.0, %v6950
  %v6952 = vpop.f32.mrb[0].mxu0
  %v6953 = vadd.f32 0.0, %v6952
  %v6954 = vpop.f32.mrb[0].mxu0
  %v6955 = vpop.f32.mrb[0].mxu0
  %6956 = vdwg.mxu0
  %6957 = vmatprep.subr.bf16.mxu0 %v4056
  %6958 = vmatpush1.bf16.msra.mxu0 %v4055
  %6959 = vmatprep.subr.bf16.mxu0 0
  %6960 = vmatpush1.bf16.msra.mxu0 0
  %6961 = vmatprep.subr.bf16.mxu0 0
  %6962 = vmatpush1.bf16.msra.mxu0 0
  %6963 = vmatprep.subr.bf16.mxu0 0
  %6964 = vmatpush1.bf16.msra.mxu0 0
  %6965 = vmatprep.subr.bf16.mxu0 0
  %6966 = vmatpush1.bf16.msra.mxu0 0
  %6967 = vmatprep.subr.bf16.mxu0 0
  %6968 = vmatpush1.bf16.msra.mxu0 0
  %6969 = vmatprep.subr.bf16.mxu0 0
  %6970 = vmatpush1.bf16.msra.mxu0 0
  %6971 = vmatprep.subr.bf16.mxu0 0
  %6972 = vmatpush1.bf16.msra.mxu0 0
  %6973 = vmatprep.subr.bf16.mxu0 0
  %6974 = vmatpush1.bf16.msra.mxu0 0
  %6975 = vmatprep.subr.bf16.mxu0 0
  %6976 = vmatpush1.bf16.msra.mxu0 0
  %6977 = vmatprep.subr.bf16.mxu0 0
  %6978 = vmatpush1.bf16.msra.mxu0 0
  %6979 = vmatprep.subr.bf16.mxu0 0
  %6980 = vmatpush1.bf16.msra.mxu0 0
  %6981 = vmatprep.subr.bf16.mxu0 0
  %6982 = vmatpush1.bf16.msra.mxu0 0
  %6983 = vmatprep.subr.bf16.mxu0 0
  %6984 = vmatpush1.bf16.msra.mxu0 0
  %6985 = vmatprep.subr.bf16.mxu0 0
  %6986 = vmatpush1.bf16.msra.mxu0 0
  %6987 = vmatprep.subr.bf16.mxu0 0
  %6988 = vmatpush1.bf16.msra.mxu0 0
  %6989 = vmatprep.mubr.bf16.mxu0 0
  %6990 = vmatmul.mubr.bf16.gmra.mrb[0].mxu0 %v6832
  %v6991 = vpop.f32.mrb[0].mxu0
  %v6992 = vadd.f32 %v6951, %v6991
  %v6993 = vpop.f32.mrb[0].mxu0
  %v6994 = vadd.f32 %v6953, %v6993
  %v6995 = vpop.f32.mrb[0].mxu0
  %v6996 = vpop.f32.mrb[0].mxu0
  %6997 = vdwg.mxu0
  %6998 = vmatprep.subr.bf16.mxu0 %v3946
  %6999 = vmatpush1.bf16.msra.mxu0 %v3945
  %7000 = vmatprep.subr.bf16.mxu0 %v3953
  %7001 = vmatpush1.bf16.msra.mxu0 %v3952
  %7002 = vmatprep.subr.bf16.mxu0 %v3960
  %7003 = vmatpush1.bf16.msra.mxu0 %v3959
  %7004 = vmatprep.subr.bf16.mxu0 %v3967
  %7005 = vmatpush1.bf16.msra.mxu0 %v3966
  %7006 = vmatprep.subr.bf16.mxu0 %v3974
  %7007 = vmatpush1.bf16.msra.mxu0 %v3973
  %7008 = vmatprep.subr.bf16.mxu0 %v3981
  %7009 = vmatpush1.bf16.msra.mxu0 %v3980
  %7010 = vmatprep.subr.bf16.mxu0 %v3988
  %7011 = vmatpush1.bf16.msra.mxu0 %v3987
  %7012 = vmatprep.subr.bf16.mxu0 %v3995
  %7013 = vmatpush1.bf16.msra.mxu0 %v3994
  %7014 = vmatprep.subr.bf16.mxu0 %v4002
  %7015 = vmatpush1.bf16.msra.mxu0 %v4001
  %7016 = vmatprep.subr.bf16.mxu0 %v4009
  %7017 = vmatpush1.bf16.msra.mxu0 %v4008
  %7018 = vmatprep.subr.bf16.mxu0 %v4016
  %7019 = vmatpush1.bf16.msra.mxu0 %v4015
  %7020 = vmatprep.subr.bf16.mxu0 %v4023
  %7021 = vmatpush1.bf16.msra.mxu0 %v4022
  %7022 = vmatprep.subr.bf16.mxu0 %v4030
  %7023 = vmatpush1.bf16.msra.mxu0 %v4029
  %7024 = vmatprep.subr.bf16.mxu0 %v4037
  %7025 = vmatpush1.bf16.msra.mxu0 %v4036
  %7026 = vmatprep.subr.bf16.mxu0 %v4044
  %7027 = vmatpush1.bf16.msra.mxu0 %v4043
  %7028 = vmatprep.subr.bf16.mxu0 %v4051
  %7029 = vmatpush1.bf16.msra.mxu0 %v4050
  %7030 = vmatprep.mubr.bf16.mxu0 %v6828
  %7031 = vmatmul.mubr.bf16.gmra.mrb[0].mxu0 %v6827
  %v7032 = vpop.f32.mrb[0].mxu0
  %v7033 = vadd.f32 0.0, %v7032
  %v7034 = vpop.f32.mrb[0].mxu0
  %v7035 = vadd.f32 0.0, %v7034
  %v7036 = vpop.f32.mrb[0].mxu0
  %v7037 = vpop.f32.mrb[0].mxu0
  %7038 = vdwg.mxu0
  %7039 = vmatprep.subr.bf16.mxu0 %v4058
  %7040 = vmatpush1.bf16.msra.mxu0 %v4057
  %7041 = vmatprep.subr.bf16.mxu0 0
  %7042 = vmatpush1.bf16.msra.mxu0 0
  %7043 = vmatprep.subr.bf16.mxu0 0
  %7044 = vmatpush1.bf16.msra.mxu0 0
  %7045 = vmatprep.subr.bf16.mxu0 0
  %7046 = vmatpush1.bf16.msra.mxu0 0
  %7047 = vmatprep.subr.bf16.mxu0 0
  %7048 = vmatpush1.bf16.msra.mxu0 0
  %7049 = vmatprep.subr.bf16.mxu0 0
  %7050 = vmatpush1.bf16.msra.mxu0 0
  %7051 = vmatprep.subr.bf16.mxu0 0
  %7052 = vmatpush1.bf16.msra.mxu0 0
  %7053 = vmatprep.subr.bf16.mxu0 0
  %7054 = vmatpush1.bf16.msra.mxu0 0
  %7055 = vmatprep.subr.bf16.mxu0 0
  %7056 = vmatpush1.bf16.msra.mxu0 0
  %7057 = vmatprep.subr.bf16.mxu0 0
  %7058 = vmatpush1.bf16.msra.mxu0 0
  %7059 = vmatprep.subr.bf16.mxu0 0
  %7060 = vmatpush1.bf16.msra.mxu0 0
  %7061 = vmatprep.subr.bf16.mxu0 0
  %7062 = vmatpush1.bf16.msra.mxu0 0
  %7063 = vmatprep.subr.bf16.mxu0 0
  %7064 = vmatpush1.bf16.msra.mxu0 0
  %7065 = vmatprep.subr.bf16.mxu0 0
  %7066 = vmatpush1.bf16.msra.mxu0 0
  %7067 = vmatprep.subr.bf16.mxu0 0
  %7068 = vmatpush1.bf16.msra.mxu0 0
  %7069 = vmatprep.subr.bf16.mxu0 0
  %7070 = vmatpush1.bf16.msra.mxu0 0
  %7071 = vmatprep.mubr.bf16.mxu0 0
  %7072 = vmatmul.mubr.bf16.gmra.mrb[0].mxu0 %v6832
  %v7073 = vpop.f32.mrb[0].mxu0
  %v7074 = vadd.f32 %v7033, %v7073
  %v7075 = vpop.f32.mrb[0].mxu0
  %v7076 = vadd.f32 %v7035, %v7075
  %v7077 = vpop.f32.mrb[0].mxu0
  %v7078 = vpop.f32.mrb[0].mxu0
  %7079 = vdwg.mxu0
  %7080 = vmatprep.subr.bf16.mxu0 0
  %7081 = vmatpush1.bf16.msra.mxu0 %v3947
  %7082 = vmatprep.subr.bf16.mxu0 0
  %7083 = vmatpush1.bf16.msra.mxu0 %v3954
  %7084 = vmatprep.subr.bf16.mxu0 0
  %7085 = vmatpush1.bf16.msra.mxu0 %v3961
  %7086 = vmatprep.subr.bf16.mxu0 0
  %7087 = vmatpush1.bf16.msra.mxu0 %v3968
  %7088 = vmatprep.subr.bf16.mxu0 0
  %7089 = vmatpush1.bf16.msra.mxu0 %v3975
  %7090 = vmatprep.subr.bf16.mxu0 0
  %7091 = vmatpush1.bf16.msra.mxu0 %v3982
  %7092 = vmatprep.subr.bf16.mxu0 0
  %7093 = vmatpush1.bf16.msra.mxu0 %v3989
  %7094 = vmatprep.subr.bf16.mxu0 0
  %7095 = vmatpush1.bf16.msra.mxu0 %v3996
  %7096 = vmatprep.subr.bf16.mxu0 0
  %7097 = vmatpush1.bf16.msra.mxu0 %v4003
  %7098 = vmatprep.subr.bf16.mxu0 0
  %7099 = vmatpush1.bf16.msra.mxu0 %v4010
  %7100 = vmatprep.subr.bf16.mxu0 0
  %7101 = vmatpush1.bf16.msra.mxu0 %v4017
  %7102 = vmatprep.subr.bf16.mxu0 0
  %7103 = vmatpush1.bf16.msra.mxu0 %v4024
  %7104 = vmatprep.subr.bf16.mxu0 0
  %7105 = vmatpush1.bf16.msra.mxu0 %v4031
  %7106 = vmatprep.subr.bf16.mxu0 0
  %7107 = vmatpush1.bf16.msra.mxu0 %v4038
  %7108 = vmatprep.subr.bf16.mxu0 0
  %7109 = vmatpush1.bf16.msra.mxu0 %v4045
  %7110 = vmatprep.subr.bf16.mxu0 0
  %7111 = vmatpush1.bf16.msra.mxu0 %v4052
  %7112 = vmatprep.mubr.bf16.mxu0 %v6828
  %7113 = vmatmul.mubr.bf16.gmra.mrb[0].mxu0 %v6827
  %v7114 = vpop.f32.mrb[0].mxu0
  %v7115 = vadd.f32 0.0, %v7114
  %v7116 = vpop.f32.mrb[0].mxu0
  %v7117 = vpop.f32.mrb[0].mxu0
  %v7118 = vpop.f32.mrb[0].mxu0
  %7119 = vdwg.mxu0
  %7120 = vmatprep.subr.bf16.mxu0 0
  %7121 = vmatpush1.bf16.msra.mxu0 %v4059
  %7122 = vmatprep.subr.bf16.mxu0 0
  %7123 = vmatpush1.bf16.msra.mxu0 0
  %7124 = vmatprep.subr.bf16.mxu0 0
  %7125 = vmatpush1.bf16.msra.mxu0 0
  %7126 = vmatprep.subr.bf16.mxu0 0
  %7127 = vmatpush1.bf16.msra.mxu0 0
  %7128 = vmatprep.subr.bf16.mxu0 0
  %7129 = vmatpush1.bf16.msra.mxu0 0
  %7130 = vmatprep.subr.bf16.mxu0 0
  %7131 = vmatpush1.bf16.msra.mxu0 0
  %7132 = vmatprep.subr.bf16.mxu0 0
  %7133 = vmatpush1.bf16.msra.mxu0 0
  %7134 = vmatprep.subr.bf16.mxu0 0
  %7135 = vmatpush1.bf16.msra.mxu0 0
  %7136 = vmatprep.subr.bf16.mxu0 0
  %7137 = vmatpush1.bf16.msra.mxu0 0
  %7138 = vmatprep.subr.bf16.mxu0 0
  %7139 = vmatpush1.bf16.msra.mxu0 0
  %7140 = vmatprep.subr.bf16.mxu0 0
  %7141 = vmatpush1.bf16.msra.mxu0 0
  %7142 = vmatprep.subr.bf16.mxu0 0
  %7143 = vmatpush1.bf16.msra.mxu0 0
  %7144 = vmatprep.subr.bf16.mxu0 0
  %7145 = vmatpush1.bf16.msra.mxu0 0
  %7146 = vmatprep.subr.bf16.mxu0 0
  %7147 = vmatpush1.bf16.msra.mxu0 0
  %7148 = vmatprep.subr.bf16.mxu0 0
  %7149 = vmatpush1.bf16.msra.mxu0 0
  %7150 = vmatprep.subr.bf16.mxu0 0
  %7151 = vmatpush1.bf16.msra.mxu0 0
  %7152 = vmatprep.mubr.bf16.mxu0 0
  %7153 = vmatmul.mubr.bf16.gmra.mrb[0].mxu0 %v6832
  %v7154 = vpop.f32.mrb[0].mxu0
  %v7155 = vadd.f32 %v7115, %v7154
  %v7156 = vpop.f32.mrb[0].mxu0
  %v7157 = vpop.f32.mrb[0].mxu0
  %v7158 = vpop.f32.mrb[0].mxu0
  %7159 = vdwg.mxu0
  %7160 = vrot.lane.b32.xlu0 %v5029, 48
  %v7161 = vpop.permute.xlu0 %7160
  %7162 = vrot.lane.b32.xlu0 %v6816, 48
  %v7163 = vpop.permute.xlu0 %7162
  %7164 = vrot.lane.b32.xlu0 %v6817, 48
  %v7165 = vpop.permute.xlu0 %7164
  %vm7166 = vcmask 392192
  %v7167 = vsel %vm7166, %v7161, %v7163
  %v7168 = vsel %vm7166, %v7163, %v7165
  %v7172 = vsel %vm4179, %v7165, 0
  %7174 = vmatprep.subr.bf16.mxu0 %v3942
  %7175 = vmatpush1.bf16.msra.mxu0 %v3941
  %7176 = vmatprep.subr.bf16.mxu0 %v3949
  %7177 = vmatpush1.bf16.msra.mxu0 %v3948
  %7178 = vmatprep.subr.bf16.mxu0 %v3956
  %7179 = vmatpush1.bf16.msra.mxu0 %v3955
  %7180 = vmatprep.subr.bf16.mxu0 %v3963
  %7181 = vmatpush1.bf16.msra.mxu0 %v3962
  %7182 = vmatprep.subr.bf16.mxu0 %v3970
  %7183 = vmatpush1.bf16.msra.mxu0 %v3969
  %7184 = vmatprep.subr.bf16.mxu0 %v3977
  %7185 = vmatpush1.bf16.msra.mxu0 %v3976
  %7186 = vmatprep.subr.bf16.mxu0 %v3984
  %7187 = vmatpush1.bf16.msra.mxu0 %v3983
  %7188 = vmatprep.subr.bf16.mxu0 %v3991
  %7189 = vmatpush1.bf16.msra.mxu0 %v3990
  %7190 = vmatprep.subr.bf16.mxu0 %v3998
  %7191 = vmatpush1.bf16.msra.mxu0 %v3997
  %7192 = vmatprep.subr.bf16.mxu0 %v4005
  %7193 = vmatpush1.bf16.msra.mxu0 %v4004
  %7194 = vmatprep.subr.bf16.mxu0 %v4012
  %7195 = vmatpush1.bf16.msra.mxu0 %v4011
  %7196 = vmatprep.subr.bf16.mxu0 %v4019
  %7197 = vmatpush1.bf16.msra.mxu0 %v4018
  %7198 = vmatprep.subr.bf16.mxu0 %v4026
  %7199 = vmatpush1.bf16.msra.mxu0 %v4025
  %7200 = vmatprep.subr.bf16.mxu0 %v4033
  %7201 = vmatpush1.bf16.msra.mxu0 %v4032
  %7202 = vmatprep.subr.bf16.mxu0 %v4040
  %7203 = vmatpush1.bf16.msra.mxu0 %v4039
  %7204 = vmatprep.subr.bf16.mxu0 %v4047
  %7205 = vmatpush1.bf16.msra.mxu0 %v4046
  %7206 = vmatprep.mubr.bf16.mxu0 %v7168
  %7207 = vmatmul.mubr.bf16.gmra.mrb[0].mxu0 %v7167
  %v7208 = vpop.f32.mrb[0].mxu0
  %v7209 = vadd.f32 0.0, %v7208
  %v7210 = vpop.f32.mrb[0].mxu0
  %v7211 = vadd.f32 0.0, %v7210
  %v7212 = vpop.f32.mrb[0].mxu0
  %v7213 = vpop.f32.mrb[0].mxu0
  %7214 = vdwg.mxu0
  %7215 = vmatprep.subr.bf16.mxu0 %v4054
  %7216 = vmatpush1.bf16.msra.mxu0 %v4053
  %7217 = vmatprep.subr.bf16.mxu0 0
  %7218 = vmatpush1.bf16.msra.mxu0 0
  %7219 = vmatprep.subr.bf16.mxu0 0
  %7220 = vmatpush1.bf16.msra.mxu0 0
  %7221 = vmatprep.subr.bf16.mxu0 0
  %7222 = vmatpush1.bf16.msra.mxu0 0
  %7223 = vmatprep.subr.bf16.mxu0 0
  %7224 = vmatpush1.bf16.msra.mxu0 0
  %7225 = vmatprep.subr.bf16.mxu0 0
  %7226 = vmatpush1.bf16.msra.mxu0 0
  %7227 = vmatprep.subr.bf16.mxu0 0
  %7228 = vmatpush1.bf16.msra.mxu0 0
  %7229 = vmatprep.subr.bf16.mxu0 0
  %7230 = vmatpush1.bf16.msra.mxu0 0
  %7231 = vmatprep.subr.bf16.mxu0 0
  %7232 = vmatpush1.bf16.msra.mxu0 0
  %7233 = vmatprep.subr.bf16.mxu0 0
  %7234 = vmatpush1.bf16.msra.mxu0 0
  %7235 = vmatprep.subr.bf16.mxu0 0
  %7236 = vmatpush1.bf16.msra.mxu0 0
  %7237 = vmatprep.subr.bf16.mxu0 0
  %7238 = vmatpush1.bf16.msra.mxu0 0
  %7239 = vmatprep.subr.bf16.mxu0 0
  %7240 = vmatpush1.bf16.msra.mxu0 0
  %7241 = vmatprep.subr.bf16.mxu0 0
  %7242 = vmatpush1.bf16.msra.mxu0 0
  %7243 = vmatprep.subr.bf16.mxu0 0
  %7244 = vmatpush1.bf16.msra.mxu0 0
  %7245 = vmatprep.subr.bf16.mxu0 0
  %7246 = vmatpush1.bf16.msra.mxu0 0
  %7247 = vmatprep.mubr.bf16.mxu0 0
  %7248 = vmatmul.mubr.bf16.gmra.mrb[0].mxu0 %v7172
  %v7249 = vpop.f32.mrb[0].mxu0
  %v7250 = vadd.f32 %v7209, %v7249
  %v7251 = vpop.f32.mrb[0].mxu0
  %v7252 = vadd.f32 %v7211, %v7251
  %v7253 = vpop.f32.mrb[0].mxu0
  %v7254 = vpop.f32.mrb[0].mxu0
  %7255 = vdwg.mxu0
  %7256 = vmatprep.subr.bf16.mxu0 %v3944
  %7257 = vmatpush1.bf16.msra.mxu0 %v3943
  %7258 = vmatprep.subr.bf16.mxu0 %v3951
  %7259 = vmatpush1.bf16.msra.mxu0 %v3950
  %7260 = vmatprep.subr.bf16.mxu0 %v3958
  %7261 = vmatpush1.bf16.msra.mxu0 %v3957
  %7262 = vmatprep.subr.bf16.mxu0 %v3965
  %7263 = vmatpush1.bf16.msra.mxu0 %v3964
  %7264 = vmatprep.subr.bf16.mxu0 %v3972
  %7265 = vmatpush1.bf16.msra.mxu0 %v3971
  %7266 = vmatprep.subr.bf16.mxu0 %v3979
  %7267 = vmatpush1.bf16.msra.mxu0 %v3978
  %7268 = vmatprep.subr.bf16.mxu0 %v3986
  %7269 = vmatpush1.bf16.msra.mxu0 %v3985
  %7270 = vmatprep.subr.bf16.mxu0 %v3993
  %7271 = vmatpush1.bf16.msra.mxu0 %v3992
  %7272 = vmatprep.subr.bf16.mxu0 %v4000
  %7273 = vmatpush1.bf16.msra.mxu0 %v3999
  %7274 = vmatprep.subr.bf16.mxu0 %v4007
  %7275 = vmatpush1.bf16.msra.mxu0 %v4006
  %7276 = vmatprep.subr.bf16.mxu0 %v4014
  %7277 = vmatpush1.bf16.msra.mxu0 %v4013
  %7278 = vmatprep.subr.bf16.mxu0 %v4021
  %7279 = vmatpush1.bf16.msra.mxu0 %v4020
  %7280 = vmatprep.subr.bf16.mxu0 %v4028
  %7281 = vmatpush1.bf16.msra.mxu0 %v4027
  %7282 = vmatprep.subr.bf16.mxu0 %v4035
  %7283 = vmatpush1.bf16.msra.mxu0 %v4034
  %7284 = vmatprep.subr.bf16.mxu0 %v4042
  %7285 = vmatpush1.bf16.msra.mxu0 %v4041
  %7286 = vmatprep.subr.bf16.mxu0 %v4049
  %7287 = vmatpush1.bf16.msra.mxu0 %v4048
  %7288 = vmatprep.mubr.bf16.mxu0 %v7168
  %7289 = vmatmul.mubr.bf16.gmra.mrb[0].mxu0 %v7167
  %v7290 = vpop.f32.mrb[0].mxu0
  %v7291 = vadd.f32 0.0, %v7290
  %v7292 = vpop.f32.mrb[0].mxu0
  %v7293 = vadd.f32 0.0, %v7292
  %v7294 = vpop.f32.mrb[0].mxu0
  %v7295 = vpop.f32.mrb[0].mxu0
  %7296 = vdwg.mxu0
  %7297 = vmatprep.subr.bf16.mxu0 %v4056
  %7298 = vmatpush1.bf16.msra.mxu0 %v4055
  %7299 = vmatprep.subr.bf16.mxu0 0
  %7300 = vmatpush1.bf16.msra.mxu0 0
  %7301 = vmatprep.subr.bf16.mxu0 0
  %7302 = vmatpush1.bf16.msra.mxu0 0
  %7303 = vmatprep.subr.bf16.mxu0 0
  %7304 = vmatpush1.bf16.msra.mxu0 0
  %7305 = vmatprep.subr.bf16.mxu0 0
  %7306 = vmatpush1.bf16.msra.mxu0 0
  %7307 = vmatprep.subr.bf16.mxu0 0
  %7308 = vmatpush1.bf16.msra.mxu0 0
  %7309 = vmatprep.subr.bf16.mxu0 0
  %7310 = vmatpush1.bf16.msra.mxu0 0
  %7311 = vmatprep.subr.bf16.mxu0 0
  %7312 = vmatpush1.bf16.msra.mxu0 0
  %7313 = vmatprep.subr.bf16.mxu0 0
  %7314 = vmatpush1.bf16.msra.mxu0 0
  %7315 = vmatprep.subr.bf16.mxu0 0
  %7316 = vmatpush1.bf16.msra.mxu0 0
  %7317 = vmatprep.subr.bf16.mxu0 0
  %7318 = vmatpush1.bf16.msra.mxu0 0
  %7319 = vmatprep.subr.bf16.mxu0 0
  %7320 = vmatpush1.bf16.msra.mxu0 0
  %7321 = vmatprep.subr.bf16.mxu0 0
  %7322 = vmatpush1.bf16.msra.mxu0 0
  %7323 = vmatprep.subr.bf16.mxu0 0
  %7324 = vmatpush1.bf16.msra.mxu0 0
  %7325 = vmatprep.subr.bf16.mxu0 0
  %7326 = vmatpush1.bf16.msra.mxu0 0
  %7327 = vmatprep.subr.bf16.mxu0 0
  %7328 = vmatpush1.bf16.msra.mxu0 0
  %7329 = vmatprep.mubr.bf16.mxu0 0
  %7330 = vmatmul.mubr.bf16.gmra.mrb[0].mxu0 %v7172
  %v7331 = vpop.f32.mrb[0].mxu0
  %v7332 = vadd.f32 %v7291, %v7331
  %v7333 = vpop.f32.mrb[0].mxu0
  %v7334 = vadd.f32 %v7293, %v7333
  %v7335 = vpop.f32.mrb[0].mxu0
  %v7336 = vpop.f32.mrb[0].mxu0
  %7337 = vdwg.mxu0
  %7338 = vmatprep.subr.bf16.mxu0 %v3946
  %7339 = vmatpush1.bf16.msra.mxu0 %v3945
  %7340 = vmatprep.subr.bf16.mxu0 %v3953
  %7341 = vmatpush1.bf16.msra.mxu0 %v3952
  %7342 = vmatprep.subr.bf16.mxu0 %v3960
  %7343 = vmatpush1.bf16.msra.mxu0 %v3959
  %7344 = vmatprep.subr.bf16.mxu0 %v3967
  %7345 = vmatpush1.bf16.msra.mxu0 %v3966
  %7346 = vmatprep.subr.bf16.mxu0 %v3974
  %7347 = vmatpush1.bf16.msra.mxu0 %v3973
  %7348 = vmatprep.subr.bf16.mxu0 %v3981
  %7349 = vmatpush1.bf16.msra.mxu0 %v3980
  %7350 = vmatprep.subr.bf16.mxu0 %v3988
  %7351 = vmatpush1.bf16.msra.mxu0 %v3987
  %7352 = vmatprep.subr.bf16.mxu0 %v3995
  %7353 = vmatpush1.bf16.msra.mxu0 %v3994
  %7354 = vmatprep.subr.bf16.mxu0 %v4002
  %7355 = vmatpush1.bf16.msra.mxu0 %v4001
  %7356 = vmatprep.subr.bf16.mxu0 %v4009
  %7357 = vmatpush1.bf16.msra.mxu0 %v4008
  %7358 = vmatprep.subr.bf16.mxu0 %v4016
  %7359 = vmatpush1.bf16.msra.mxu0 %v4015
  %7360 = vmatprep.subr.bf16.mxu0 %v4023
  %7361 = vmatpush1.bf16.msra.mxu0 %v4022
  %7362 = vmatprep.subr.bf16.mxu0 %v4030
  %7363 = vmatpush1.bf16.msra.mxu0 %v4029
  %7364 = vmatprep.subr.bf16.mxu0 %v4037
  %7365 = vmatpush1.bf16.msra.mxu0 %v4036
  %7366 = vmatprep.subr.bf16.mxu0 %v4044
  %7367 = vmatpush1.bf16.msra.mxu0 %v4043
  %7368 = vmatprep.subr.bf16.mxu0 %v4051
  %7369 = vmatpush1.bf16.msra.mxu0 %v4050
  %7370 = vmatprep.mubr.bf16.mxu0 %v7168
  %7371 = vmatmul.mubr.bf16.gmra.mrb[0].mxu0 %v7167
  %v7372 = vpop.f32.mrb[0].mxu0
  %v7373 = vadd.f32 0.0, %v7372
  %v7374 = vpop.f32.mrb[0].mxu0
  %v7375 = vadd.f32 0.0, %v7374
  %v7376 = vpop.f32.mrb[0].mxu0
  %v7377 = vpop.f32.mrb[0].mxu0
  %7378 = vdwg.mxu0
  %7379 = vmatprep.subr.bf16.mxu0 %v4058
  %7380 = vmatpush1.bf16.msra.mxu0 %v4057
  %7381 = vmatprep.subr.bf16.mxu0 0
  %7382 = vmatpush1.bf16.msra.mxu0 0
  %7383 = vmatprep.subr.bf16.mxu0 0
  %7384 = vmatpush1.bf16.msra.mxu0 0
  %7385 = vmatprep.subr.bf16.mxu0 0
  %7386 = vmatpush1.bf16.msra.mxu0 0
  %7387 = vmatprep.subr.bf16.mxu0 0
  %7388 = vmatpush1.bf16.msra.mxu0 0
  %7389 = vmatprep.subr.bf16.mxu0 0
  %7390 = vmatpush1.bf16.msra.mxu0 0
  %7391 = vmatprep.subr.bf16.mxu0 0
  %7392 = vmatpush1.bf16.msra.mxu0 0
  %7393 = vmatprep.subr.bf16.mxu0 0
  %7394 = vmatpush1.bf16.msra.mxu0 0
  %7395 = vmatprep.subr.bf16.mxu0 0
  %7396 = vmatpush1.bf16.msra.mxu0 0
  %7397 = vmatprep.subr.bf16.mxu0 0
  %7398 = vmatpush1.bf16.msra.mxu0 0
  %7399 = vmatprep.subr.bf16.mxu0 0
  %7400 = vmatpush1.bf16.msra.mxu0 0
  %7401 = vmatprep.subr.bf16.mxu0 0
  %7402 = vmatpush1.bf16.msra.mxu0 0
  %7403 = vmatprep.subr.bf16.mxu0 0
  %7404 = vmatpush1.bf16.msra.mxu0 0
  %7405 = vmatprep.subr.bf16.mxu0 0
  %7406 = vmatpush1.bf16.msra.mxu0 0
  %7407 = vmatprep.subr.bf16.mxu0 0
  %7408 = vmatpush1.bf16.msra.mxu0 0
  %7409 = vmatprep.subr.bf16.mxu0 0
  %7410 = vmatpush1.bf16.msra.mxu0 0
  %7411 = vmatprep.mubr.bf16.mxu0 0
  %7412 = vmatmul.mubr.bf16.gmra.mrb[0].mxu0 %v7172
  %v7413 = vpop.f32.mrb[0].mxu0
  %v7414 = vadd.f32 %v7373, %v7413
  %v7415 = vpop.f32.mrb[0].mxu0
  %v7416 = vadd.f32 %v7375, %v7415
  %v7417 = vpop.f32.mrb[0].mxu0
  %v7418 = vpop.f32.mrb[0].mxu0
  %7419 = vdwg.mxu0
  %7420 = vmatprep.subr.bf16.mxu0 0
  %7421 = vmatpush1.bf16.msra.mxu0 %v3947
  %7422 = vmatprep.subr.bf16.mxu0 0
  %7423 = vmatpush1.bf16.msra.mxu0 %v3954
  %7424 = vmatprep.subr.bf16.mxu0 0
  %7425 = vmatpush1.bf16.msra.mxu0 %v3961
  %7426 = vmatprep.subr.bf16.mxu0 0
  %7427 = vmatpush1.bf16.msra.mxu0 %v3968
  %7428 = vmatprep.subr.bf16.mxu0 0
  %7429 = vmatpush1.bf16.msra.mxu0 %v3975
  %7430 = vmatprep.subr.bf16.mxu0 0
  %7431 = vmatpush1.bf16.msra.mxu0 %v3982
  %7432 = vmatprep.subr.bf16.mxu0 0
  %7433 = vmatpush1.bf16.msra.mxu0 %v3989
  %7434 = vmatprep.subr.bf16.mxu0 0
  %7435 = vmatpush1.bf16.msra.mxu0 %v3996
  %7436 = vmatprep.subr.bf16.mxu0 0
  %7437 = vmatpush1.bf16.msra.mxu0 %v4003
  %7438 = vmatprep.subr.bf16.mxu0 0
  %7439 = vmatpush1.bf16.msra.mxu0 %v4010
  %7440 = vmatprep.subr.bf16.mxu0 0
  %7441 = vmatpush1.bf16.msra.mxu0 %v4017
  %7442 = vmatprep.subr.bf16.mxu0 0
  %7443 = vmatpush1.bf16.msra.mxu0 %v4024
  %7444 = vmatprep.subr.bf16.mxu0 0
  %7445 = vmatpush1.bf16.msra.mxu0 %v4031
  %7446 = vmatprep.subr.bf16.mxu0 0
  %7447 = vmatpush1.bf16.msra.mxu0 %v4038
  %7448 = vmatprep.subr.bf16.mxu0 0
  %7449 = vmatpush1.bf16.msra.mxu0 %v4045
  %7450 = vmatprep.subr.bf16.mxu0 0
  %7451 = vmatpush1.bf16.msra.mxu0 %v4052
  %7452 = vmatprep.mubr.bf16.mxu0 %v7168
  %7453 = vmatmul.mubr.bf16.gmra.mrb[0].mxu0 %v7167
  %v7454 = vpop.f32.mrb[0].mxu0
  %v7455 = vadd.f32 0.0, %v7454
  %v7456 = vpop.f32.mrb[0].mxu0
  %v7457 = vpop.f32.mrb[0].mxu0
  %v7458 = vpop.f32.mrb[0].mxu0
  %7459 = vdwg.mxu0
  %7460 = vmatprep.subr.bf16.mxu0 0
  %7461 = vmatpush1.bf16.msra.mxu0 %v4059
  %7462 = vmatprep.subr.bf16.mxu0 0
  %7463 = vmatpush1.bf16.msra.mxu0 0
  %7464 = vmatprep.subr.bf16.mxu0 0
  %7465 = vmatpush1.bf16.msra.mxu0 0
  %7466 = vmatprep.subr.bf16.mxu0 0
  %7467 = vmatpush1.bf16.msra.mxu0 0
  %7468 = vmatprep.subr.bf16.mxu0 0
  %7469 = vmatpush1.bf16.msra.mxu0 0
  %7470 = vmatprep.subr.bf16.mxu0 0
  %7471 = vmatpush1.bf16.msra.mxu0 0
  %7472 = vmatprep.subr.bf16.mxu0 0
  %7473 = vmatpush1.bf16.msra.mxu0 0
  %7474 = vmatprep.subr.bf16.mxu0 0
  %7475 = vmatpush1.bf16.msra.mxu0 0
  %7476 = vmatprep.subr.bf16.mxu0 0
  %7477 = vmatpush1.bf16.msra.mxu0 0
  %7478 = vmatprep.subr.bf16.mxu0 0
  %7479 = vmatpush1.bf16.msra.mxu0 0
  %7480 = vmatprep.subr.bf16.mxu0 0
  %7481 = vmatpush1.bf16.msra.mxu0 0
  %7482 = vmatprep.subr.bf16.mxu0 0
  %7483 = vmatpush1.bf16.msra.mxu0 0
  %7484 = vmatprep.subr.bf16.mxu0 0
  %7485 = vmatpush1.bf16.msra.mxu0 0
  %7486 = vmatprep.subr.bf16.mxu0 0
  %7487 = vmatpush1.bf16.msra.mxu0 0
  %7488 = vmatprep.subr.bf16.mxu0 0
  %7489 = vmatpush1.bf16.msra.mxu0 0
  %7490 = vmatprep.subr.bf16.mxu0 0
  %7491 = vmatpush1.bf16.msra.mxu0 0
  %7492 = vmatprep.mubr.bf16.mxu0 0
  %7493 = vmatmul.mubr.bf16.gmra.mrb[0].mxu0 %v7172
  %v7494 = vpop.f32.mrb[0].mxu0
  %v7495 = vadd.f32 %v7455, %v7494
  %v7496 = vpop.f32.mrb[0].mxu0
  %v7497 = vpop.f32.mrb[0].mxu0
  %v7498 = vpop.f32.mrb[0].mxu0
  %7499 = vdwg.mxu0
  %v7500 = vmax.f32 %v6910, %v7250
  %v7501 = vmax.f32 %v6912, %v7252
  %v7502 = vmax.f32 %v6992, %v7332
  %v7503 = vmax.f32 %v6994, %v7334
  %v7504 = vmax.f32 %v7074, %v7414
  %v7505 = vmax.f32 %v7076, %v7416
  %v7506 = vmax.f32 %v7155, %v7495
  %v7507 = vadd.f32 %v7500, %v4864
  %v7508 = vadd.f32 %v7501, %v4868
  %v7509 = vadd.f32 %v7502, %v4872
  %v7510 = vadd.f32 %v7503, %v4876
  %v7511 = vadd.f32 %v7504, %v4880
  %v7512 = vadd.f32 %v7505, %v4884
  %v7513 = vadd.f32 %v7506, %v4888
  %v7514 = vmul.f32 %v7507, 0.01
  %v7515 = vmul.f32 %v7508, 0.01
  %v7516 = vmul.f32 %v7509, 0.01
  %v7517 = vmul.f32 %v7510, 0.01
  %v7518 = vmul.f32 %v7511, 0.01
  %v7519 = vmul.f32 %v7512, 0.01
  %v7520 = vmul.f32 %v7513, 0.01
  %v7521 = vmax.f32 %v7507, %v7514
  %v7522 = vmax.f32 %v7508, %v7515
  %v7523 = vmax.f32 %v7509, %v7516
  %v7524 = vmax.f32 %v7510, %v7517
  %v7525 = vmax.f32 %v7511, %v7518
  %v7526 = vmax.f32 %v7512, %v7519
  %v7527 = vmax.f32 %v7513, %v7520
  %v7528 = vpack.c.bf16 %v7521, %v7521
  %v7529 = vpack.c.bf16 %v7522, %v7522
  %v7530 = vpack.c.bf16 %v7523, %v7523
  %v7531 = vpack.c.bf16 %v7524, %v7524
  %v7532 = vpack.c.bf16 %v7525, %v7525
  %v7533 = vpack.c.bf16 %v7526, %v7526
  %v7534 = vpack.c.bf16 %v7527, %v7527
  %s7535 = scalar_lea.vmem %s6, 840
  %v7536 = vld [vmem:[%s7535] sm:$0xf]
  %v7537 = vld [vmem:[%s7535 + $0x4] sm:$0xf]
  %v7538 = vld [vmem:[%s7535 + $0x8] sm:$0xf]
  %v7539 = vld [vmem:[%s7535 + $0xc] sm:$0xf]
  %v7540 = vld [vmem:[%s7535 + $0x10] sm:$0xf]
  %v7541 = vld [vmem:[%s7535 + $0x14] sm:$0xf]
  %v7542 = vld [vmem:[%s7535 + $0x18] sm:$0xf]
  %v7543 = vld [vmem:[%s7535 + $0x1c] sm:$0xf]
  %v7544 = vld [vmem:[%s7535 + $0x20] sm:$0xf]
  %v7545 = vld [vmem:[%s7535 + $0x24] sm:$0xf]
  %v7546 = vld [vmem:[%s7535 + $0x28] sm:$0xf]
  %v7547 = vld [vmem:[%s7535 + $0x2c] sm:$0xf]
  %v7548 = vld [vmem:[%s7535 + $0x30] sm:$0xf]
  %v7549 = vld [vmem:[%s7535 + $0x34] sm:$0xf]
  %v7550 = vld [vmem:[%s7535 + $0x38] sm:$0xf]
  %v7551 = vld [vmem:[%s7535 + $0x3c] sm:$0xf]
  %v7552 = vld [vmem:[%s7535 + $0x40] sm:$0xf]
  %v7553 = vld [vmem:[%s7535 + $0x44] sm:$0xf]
  %v7554 = vld [vmem:[%s7535 + $0x48] sm:$0xf]
  %v7555 = vld [vmem:[%s7535 + $0x4c] sm:$0xf]
  %v7556 = vld [vmem:[%s7535 + $0x50] sm:$0xf]
  %v7557 = vld [vmem:[%s7535 + $0x54] sm:$0xf]
  %v7558 = vld [vmem:[%s7535 + $0x58] sm:$0xf]
  %v7559 = vld [vmem:[%s7535 + $0x5c] sm:$0xf]
  %v7560 = vld [vmem:[%s7535 + $0x60] sm:$0xf]
  %v7561 = vld [vmem:[%s7535 + $0x64] sm:$0xf]
  %v7562 = vld [vmem:[%s7535 + $0x68] sm:$0xf]
  %v7563 = vld [vmem:[%s7535 + $0x6c] sm:$0xf]
  %v7564 = vld [vmem:[%s7535 + $0x70] sm:$0xf]
  %v7565 = vld [vmem:[%s7535 + $0x74] sm:$0xf]
  %v7566 = vld [vmem:[%s7535 + $0x78] sm:$0xf]
  %v7567 = vld [vmem:[%s7535 + $0x7c] sm:$0xf]
  %v7568 = vld [vmem:[%s7535 + $0x80] sm:$0xf]
  %v7569 = vld [vmem:[%s7535 + $0x84] sm:$0xf]
  %v7570 = vld [vmem:[%s7535 + $0x88] sm:$0xf]
  %v7571 = vld [vmem:[%s7535 + $0x8c] sm:$0xf]
  %v7572 = vld [vmem:[%s7535 + $0x90] sm:$0xf]
  %v7573 = vld [vmem:[%s7535 + $0x94] sm:$0xf]
  %v7574 = vld [vmem:[%s7535 + $0x98] sm:$0xf]
  %v7575 = vld [vmem:[%s7535 + $0x9c] sm:$0xf]
  %v7576 = vld [vmem:[%s7535 + $0xa0] sm:$0xf]
  %v7577 = vld [vmem:[%s7535 + $0xa4] sm:$0xf]
  %v7578 = vld [vmem:[%s7535 + $0xa8] sm:$0xf]
  %v7579 = vld [vmem:[%s7535 + $0xac] sm:$0xf]
  %v7580 = vld [vmem:[%s7535 + $0xb0] sm:$0xf]
  %v7581 = vld [vmem:[%s7535 + $0xb4] sm:$0xf]
  %v7582 = vld [vmem:[%s7535 + $0xb8] sm:$0xf]
  %v7583 = vld [vmem:[%s7535 + $0xbc] sm:$0xf]
  %v7584 = vld [vmem:[%s7535 + $0xc0] sm:$0xf]
  %v7585 = vld [vmem:[%s7535 + $0xc4] sm:$0xf]
  %v7586 = vld [vmem:[%s7535 + $0xc8] sm:$0xf]
  %v7587 = vld [vmem:[%s7535 + $0xcc] sm:$0xf]
  %v7588 = vld [vmem:[%s7535 + $0xd0] sm:$0xf]
  %v7589 = vld [vmem:[%s7535 + $0xd4] sm:$0xf]
  %v7590 = vld [vmem:[%s7535 + $0xd8] sm:$0xf]
  %v7591 = vld [vmem:[%s7535 + $0xdc] sm:$0xf]
  %v7592 = vld [vmem:[%s7535 + $0xe0] sm:$0xf]
  %v7593 = vld [vmem:[%s7535 + $0xe4] sm:$0xf]
  %v7594 = vld [vmem:[%s7535 + $0xe8] sm:$0xf]
  %v7595 = vld [vmem:[%s7535 + $0xec] sm:$0xf]
  %v7596 = vld [vmem:[%s7535 + $0xf0] sm:$0xf]
  %v7597 = vld [vmem:[%s7535 + $0xf4] sm:$0xf]
  %v7598 = vld [vmem:[%s7535 + $0xf8] sm:$0xf]
  %v7599 = vld [vmem:[%s7535 + $0xfc] sm:$0xf]
  %v7600 = vld [vmem:[%s7535 + $0x100] sm:$0xf]
  %v7601 = vld [vmem:[%s7535 + $0x104] sm:$0xf]
  %v7602 = vld [vmem:[%s7535 + $0x108] sm:$0xf]
  %v7603 = vld [vmem:[%s7535 + $0x10c] sm:$0xf]
  %v7604 = vld [vmem:[%s7535 + $0x110] sm:$0xf]
  %v7605 = vld [vmem:[%s7535 + $0x114] sm:$0xf]
  %v7606 = vld [vmem:[%s7535 + $0x118] sm:$0xf]
  %v7607 = vld [vmem:[%s7535 + $0x11c] sm:$0xf]
  %v7608 = vld [vmem:[%s7535 + $0x120] sm:$0xf]
  %v7609 = vld [vmem:[%s7535 + $0x124] sm:$0xf]
  %v7610 = vld [vmem:[%s7535 + $0x128] sm:$0xf]
  %v7611 = vld [vmem:[%s7535 + $0x12c] sm:$0xf]
  %v7612 = vld [vmem:[%s7535 + $0x130] sm:$0xf]
  %v7613 = vld [vmem:[%s7535 + $0x134] sm:$0xf]
  %v7614 = vld [vmem:[%s7535 + $0x138] sm:$0xf]
  %v7615 = vld [vmem:[%s7535 + $0x13c] sm:$0xf]
  %v7616 = vld [vmem:[%s7535 + $0x140] sm:$0xf]
  %v7617 = vld [vmem:[%s7535 + $0x144] sm:$0xf]
  %v7618 = vld [vmem:[%s7535 + $0x148] sm:$0xf]
  %v7619 = vld [vmem:[%s7535 + $0x14c] sm:$0xf]
  %v7620 = vld [vmem:[%s7535 + $0x150] sm:$0xf]
  %v7621 = vld [vmem:[%s7535 + $0x154] sm:$0xf]
  %v7622 = vld [vmem:[%s7535 + $0x158] sm:$0xf]
  %v7623 = vld [vmem:[%s7535 + $0x15c] sm:$0xf]
  %v7624 = vld [vmem:[%s7535 + $0x160] sm:$0xf]
  %v7625 = vld [vmem:[%s7535 + $0x164] sm:$0xf]
  %v7626 = vld [vmem:[%s7535 + $0x168] sm:$0xf]
  %v7627 = vld [vmem:[%s7535 + $0x16c] sm:$0xf]
  %v7628 = vld [vmem:[%s7535 + $0x170] sm:$0xf]
  %v7629 = vld [vmem:[%s7535 + $0x174] sm:$0xf]
  %v7630 = vld [vmem:[%s7535 + $0x178] sm:$0xf]
  %v7631 = vld [vmem:[%s7535 + $0x17c] sm:$0xf]
  %v7632 = vld [vmem:[%s7535 + $0x180] sm:$0xf]
  %v7633 = vld [vmem:[%s7535 + $0x184] sm:$0xf]
  %v7634 = vld [vmem:[%s7535 + $0x188] sm:$0xf]
  %v7635 = vld [vmem:[%s7535 + $0x18c] sm:$0xf]
  %v7636 = vld [vmem:[%s7535 + $0x190] sm:$0xf]
  %v7637 = vld [vmem:[%s7535 + $0x194] sm:$0xf]
  %v7638 = vld [vmem:[%s7535 + $0x198] sm:$0xf]
  %v7639 = vld [vmem:[%s7535 + $0x19c] sm:$0xf]
  %v7640 = vld [vmem:[%s7535 + $0x1a0] sm:$0xf]
  %v7746 = vunpack.c.l.b16 %v7536
  %v7747 = vunpack.c.l.b16 %v7537
  %v7748 = vunpack.c.l.b16 %v7538
  %v7749 = vunpack.c.l.b16 %v7539
  %v7750 = vunpack.c.l.b16 %v7540
  %v7751 = vunpack.c.l.b16 %v7541
  %v7752 = vunpack.c.l.b16 %v7542
  %v7753 = vunpack.c.l.b16 %v7543
  %v7754 = vunpack.c.l.b16 %v7544
  %v7755 = vunpack.c.l.b16 %v7545
  %v7756 = vunpack.c.l.b16 %v7546
  %v7757 = vunpack.c.l.b16 %v7547
  %v7758 = vunpack.c.l.b16 %v7548
  %v7759 = vunpack.c.l.b16 %v7549
  %v7760 = vunpack.c.l.b16 %v7550
  %v7761 = vunpack.c.l.b16 %v7551
  %v7762 = vunpack.c.l.b16 %v7552
  %v7763 = vunpack.c.l.b16 %v7553
  %v7764 = vunpack.c.l.b16 %v7554
  %v7765 = vunpack.c.l.b16 %v7555
  %v7766 = vunpack.c.l.b16 %v7556
  %v7767 = vunpack.c.l.b16 %v7557
  %v7768 = vunpack.c.l.b16 %v7558
  %v7769 = vunpack.c.l.b16 %v7559
  %v7770 = vunpack.c.l.b16 %v7560
  %v7771 = vunpack.c.l.b16 %v7561
  %v7772 = vunpack.c.l.b16 %v7562
  %v7773 = vunpack.c.l.b16 %v7563
  %v7774 = vunpack.c.l.b16 %v7564
  %v7775 = vunpack.c.l.b16 %v7565
  %v7776 = vunpack.c.l.b16 %v7566
  %v7777 = vunpack.c.l.b16 %v7567
  %v7778 = vunpack.c.l.b16 %v7568
  %v7779 = vunpack.c.l.b16 %v7569
  %v7780 = vunpack.c.l.b16 %v7570
  %v7781 = vunpack.c.l.b16 %v7571
  %v7782 = vunpack.c.l.b16 %v7572
  %v7783 = vunpack.c.l.b16 %v7573
  %v7784 = vunpack.c.l.b16 %v7574
  %v7785 = vunpack.c.l.b16 %v7575
  %v7786 = vunpack.c.l.b16 %v7576
  %v7787 = vunpack.c.l.b16 %v7577
  %v7788 = vunpack.c.l.b16 %v7578
  %v7789 = vunpack.c.l.b16 %v7579
  %v7790 = vunpack.c.l.b16 %v7580
  %v7791 = vunpack.c.l.b16 %v7581
  %v7792 = vunpack.c.l.b16 %v7582
  %v7793 = vunpack.c.l.b16 %v7583
  %v7794 = vunpack.c.l.b16 %v7584
  %v7795 = vunpack.c.l.b16 %v7585
  %v7796 = vunpack.c.l.b16 %v7586
  %v7797 = vunpack.c.l.b16 %v7587
  %v7798 = vunpack.c.l.b16 %v7588
  %v7799 = vunpack.c.l.b16 %v7589
  %v7800 = vunpack.c.l.b16 %v7590
  %v7801 = vunpack.c.l.b16 %v7591
  %v7802 = vunpack.c.l.b16 %v7592
  %v7803 = vunpack.c.l.b16 %v7593
  %v7804 = vunpack.c.l.b16 %v7594
  %v7805 = vunpack.c.l.b16 %v7595
  %v7806 = vunpack.c.l.b16 %v7596
  %v7807 = vunpack.c.l.b16 %v7597
  %v7808 = vunpack.c.l.b16 %v7598
  %v7809 = vunpack.c.l.b16 %v7599
  %v7810 = vunpack.c.l.b16 %v7600
  %v7811 = vunpack.c.l.b16 %v7601
  %v7812 = vunpack.c.l.b16 %v7602
  %v7813 = vunpack.c.l.b16 %v7603
  %v7814 = vunpack.c.l.b16 %v7604
  %v7815 = vunpack.c.l.b16 %v7605
  %v7816 = vunpack.c.l.b16 %v7606
  %v7817 = vunpack.c.l.b16 %v7607
  %v7818 = vunpack.c.l.b16 %v7608
  %v7819 = vunpack.c.l.b16 %v7609
  %v7820 = vunpack.c.l.b16 %v7610
  %v7821 = vunpack.c.l.b16 %v7611
  %v7822 = vunpack.c.l.b16 %v7612
  %v7823 = vunpack.c.l.b16 %v7613
  %v7824 = vunpack.c.l.b16 %v7614
  %v7825 = vunpack.c.l.b16 %v7615
  %v7826 = vunpack.c.l.b16 %v7616
  %v7827 = vunpack.c.l.b16 %v7617
  %v7828 = vunpack.c.l.b16 %v7618
  %v7829 = vunpack.c.l.b16 %v7619
  %v7830 = vunpack.c.l.b16 %v7620
  %v7831 = vunpack.c.l.b16 %v7621
  %v7832 = vunpack.c.l.b16 %v7622
  %v7833 = vunpack.c.l.b16 %v7623
  %v7834 = vunpack.c.l.b16 %v7624
  %v7835 = vunpack.c.l.b16 %v7625
  %v7836 = vunpack.c.l.b16 %v7626
  %v7837 = vunpack.c.l.b16 %v7627
  %v7838 = vunpack.c.l.b16 %v7628
  %v7839 = vunpack.c.l.b16 %v7629
  %v7840 = vunpack.c.l.b16 %v7630
  %v7841 = vunpack.c.l.b16 %v7631
  %v7842 = vunpack.c.l.b16 %v7632
  %v7843 = vunpack.c.l.b16 %v7633
  %v7844 = vunpack.c.l.b16 %v7634
  %v7845 = vunpack.c.l.b16 %v7635
  %v7846 = vunpack.c.l.b16 %v7636
  %v7847 = vunpack.c.l.b16 %v7637
  %v7848 = vunpack.c.l.b16 %v7638
  %v7849 = vunpack.c.l.b16 %v7639
  %v7850 = vunpack.c.l.b16 %v7640
  %v7851 = vpack.c.b16 %v7747, %v7746
  %v7852 = vpack.c.b16 %v7749, %v7748
  %v7853 = vpack.c.b16 %v7751, %v7750
  %v7854 = vpack.c.b16 %v7753, %v7752
  %v7855 = vpack.c.b16 %v7755, %v7754
  %v7856 = vpack.c.b16 %v7757, %v7756
  %v7857 = vpack.c.b16 %v7759, %v7758
  %v7858 = vpack.c.b16 %v7761, %v7760
  %v7859 = vpack.c.b16 %v7763, %v7762
  %v7860 = vpack.c.b16 %v7765, %v7764
  %v7861 = vpack.c.b16 %v7767, %v7766
  %v7862 = vpack.c.b16 %v7769, %v7768
  %v7863 = vpack.c.b16 %v7771, %v7770
  %v7864 = vpack.c.b16 %v7773, %v7772
  %v7865 = vpack.c.b16 %v7775, %v7774
  %v7866 = vpack.c.b16 %v7777, %v7776
  %v7867 = vpack.c.b16 %v7779, %v7778
  %v7868 = vpack.c.b16 %v7781, %v7780
  %v7869 = vpack.c.b16 %v7783, %v7782
  %v7870 = vpack.c.b16 %v7785, %v7784
  %v7871 = vpack.c.b16 %v7787, %v7786
  %v7872 = vpack.c.b16 %v7789, %v7788
  %v7873 = vpack.c.b16 %v7791, %v7790
  %v7874 = vpack.c.b16 %v7793, %v7792
  %v7875 = vpack.c.b16 %v7795, %v7794
  %v7876 = vpack.c.b16 %v7797, %v7796
  %v7877 = vpack.c.b16 %v7799, %v7798
  %v7878 = vpack.c.b16 %v7801, %v7800
  %v7879 = vpack.c.b16 %v7803, %v7802
  %v7880 = vpack.c.b16 %v7805, %v7804
  %v7881 = vpack.c.b16 %v7807, %v7806
  %v7882 = vpack.c.b16 %v7809, %v7808
  %v7883 = vpack.c.b16 %v7811, %v7810
  %v7884 = vpack.c.b16 %v7813, %v7812
  %v7885 = vpack.c.b16 %v7815, %v7814
  %v7886 = vpack.c.b16 %v7817, %v7816
  %v7887 = vpack.c.b16 %v7819, %v7818
  %v7888 = vpack.c.b16 %v7821, %v7820
  %v7889 = vpack.c.b16 %v7823, %v7822
  %v7890 = vpack.c.b16 %v7825, %v7824
  %v7891 = vpack.c.b16 %v7827, %v7826
  %v7892 = vpack.c.b16 %v7829, %v7828
  %v7893 = vpack.c.b16 %v7831, %v7830
  %v7894 = vpack.c.b16 %v7833, %v7832
  %v7895 = vpack.c.b16 %v7835, %v7834
  %v7896 = vpack.c.b16 %v7837, %v7836
  %v7897 = vpack.c.b16 %v7839, %v7838
  %v7898 = vpack.c.b16 %v7841, %v7840
  %v7899 = vpack.c.b16 %v7843, %v7842
  %v7900 = vpack.c.b16 %v7845, %v7844
  %v7901 = vpack.c.b16 %v7847, %v7846
  %v7902 = vpack.c.b16 %v7849, %v7848
  %v7903 = vpack.c.b16 %v7850, %v7850
  %v7957 = vsel %vm6167, %v7534, 0
  %v7960 = vsel %vm6171, %v7903, 0
  %7962 = vmatprep.subr.bf16.mxu0 0
  %7963 = vmatpush1.bf16.msra.mxu0 %v7851
  %7964 = vmatprep.subr.bf16.mxu0 0
  %7965 = vmatpush1.bf16.msra.mxu0 %v7852
  %7966 = vmatprep.subr.bf16.mxu0 0
  %7967 = vmatpush1.bf16.msra.mxu0 %v7853
  %7968 = vmatprep.subr.bf16.mxu0 0
  %7969 = vmatpush1.bf16.msra.mxu0 %v7854
  %7970 = vmatprep.subr.bf16.mxu0 0
  %7971 = vmatpush1.bf16.msra.mxu0 %v7855
  %7972 = vmatprep.subr.bf16.mxu0 0
  %7973 = vmatpush1.bf16.msra.mxu0 %v7856
  %7974 = vmatprep.subr.bf16.mxu0 0
  %7975 = vmatpush1.bf16.msra.mxu0 %v7857
  %7976 = vmatprep.subr.bf16.mxu0 0
  %7977 = vmatpush1.bf16.msra.mxu0 %v7858
  %7978 = vmatprep.subr.bf16.mxu0 0
  %7979 = vmatpush1.bf16.msra.mxu0 %v7859
  %7980 = vmatprep.subr.bf16.mxu0 0
  %7981 = vmatpush1.bf16.msra.mxu0 %v7860
  %7982 = vmatprep.subr.bf16.mxu0 0
  %7983 = vmatpush1.bf16.msra.mxu0 %v7861
  %7984 = vmatprep.subr.bf16.mxu0 0
  %7985 = vmatpush1.bf16.msra.mxu0 %v7862
  %7986 = vmatprep.subr.bf16.mxu0 0
  %7987 = vmatpush1.bf16.msra.mxu0 %v7863
  %7988 = vmatprep.subr.bf16.mxu0 0
  %7989 = vmatpush1.bf16.msra.mxu0 %v7864
  %7990 = vmatprep.subr.bf16.mxu0 0
  %7991 = vmatpush1.bf16.msra.mxu0 %v7865
  %7992 = vmatprep.subr.bf16.mxu0 0
  %7993 = vmatpush1.bf16.msra.mxu0 %v7866
  %7994 = vmatprep.mubr.bf16.mxu0 %v7529
  %7995 = vmatmul.mubr.bf16.gmra.mrb[0].mxu0 %v7528
  %v7996 = vpop.f32.mrb[0].mxu0
  %v7997 = vadd.f32 0.0, %v7996
  %v7998 = vpop.f32.mrb[0].mxu0
  %v7999 = vpop.f32.mrb[0].mxu0
  %v8000 = vpop.f32.mrb[0].mxu0
  %8001 = vdwg.mxu0
  %8002 = vmatprep.subr.bf16.mxu0 0
  %8003 = vmatpush1.bf16.msra.mxu0 %v7867
  %8004 = vmatprep.subr.bf16.mxu0 0
  %8005 = vmatpush1.bf16.msra.mxu0 %v7868
  %8006 = vmatprep.subr.bf16.mxu0 0
  %8007 = vmatpush1.bf16.msra.mxu0 %v7869
  %8008 = vmatprep.subr.bf16.mxu0 0
  %8009 = vmatpush1.bf16.msra.mxu0 %v7870
  %8010 = vmatprep.subr.bf16.mxu0 0
  %8011 = vmatpush1.bf16.msra.mxu0 %v7871
  %8012 = vmatprep.subr.bf16.mxu0 0
  %8013 = vmatpush1.bf16.msra.mxu0 %v7872
  %8014 = vmatprep.subr.bf16.mxu0 0
  %8015 = vmatpush1.bf16.msra.mxu0 %v7873
  %8016 = vmatprep.subr.bf16.mxu0 0
  %8017 = vmatpush1.bf16.msra.mxu0 %v7874
  %8018 = vmatprep.subr.bf16.mxu0 0
  %8019 = vmatpush1.bf16.msra.mxu0 %v7875
  %8020 = vmatprep.subr.bf16.mxu0 0
  %8021 = vmatpush1.bf16.msra.mxu0 %v7876
  %8022 = vmatprep.subr.bf16.mxu0 0
  %8023 = vmatpush1.bf16.msra.mxu0 %v7877
  %8024 = vmatprep.subr.bf16.mxu0 0
  %8025 = vmatpush1.bf16.msra.mxu0 %v7878
  %8026 = vmatprep.subr.bf16.mxu0 0
  %8027 = vmatpush1.bf16.msra.mxu0 %v7879
  %8028 = vmatprep.subr.bf16.mxu0 0
  %8029 = vmatpush1.bf16.msra.mxu0 %v7880
  %8030 = vmatprep.subr.bf16.mxu0 0
  %8031 = vmatpush1.bf16.msra.mxu0 %v7881
  %8032 = vmatprep.subr.bf16.mxu0 0
  %8033 = vmatpush1.bf16.msra.mxu0 %v7882
  %8034 = vmatprep.mubr.bf16.mxu0 %v7531
  %8035 = vmatmul.mubr.bf16.gmra.mrb[0].mxu0 %v7530
  %v8036 = vpop.f32.mrb[0].mxu0
  %v8037 = vadd.f32 %v7997, %v8036
  %v8038 = vpop.f32.mrb[0].mxu0
  %v8039 = vpop.f32.mrb[0].mxu0
  %v8040 = vpop.f32.mrb[0].mxu0
  %8041 = vdwg.mxu0
  %8042 = vmatprep.subr.bf16.mxu0 0
  %8043 = vmatpush1.bf16.msra.mxu0 %v7883
  %8044 = vmatprep.subr.bf16.mxu0 0
  %8045 = vmatpush1.bf16.msra.mxu0 %v7884
  %8046 = vmatprep.subr.bf16.mxu0 0
  %8047 = vmatpush1.bf16.msra.mxu0 %v7885
  %8048 = vmatprep.subr.bf16.mxu0 0
  %8049 = vmatpush1.bf16.msra.mxu0 %v7886
  %8050 = vmatprep.subr.bf16.mxu0 0
  %8051 = vmatpush1.bf16.msra.mxu0 %v7887
  %8052 = vmatprep.subr.bf16.mxu0 0
  %8053 = vmatpush1.bf16.msra.mxu0 %v7888
  %8054 = vmatprep.subr.bf16.mxu0 0
  %8055 = vmatpush1.bf16.msra.mxu0 %v7889
  %8056 = vmatprep.subr.bf16.mxu0 0
  %8057 = vmatpush1.bf16.msra.mxu0 %v7890
  %8058 = vmatprep.subr.bf16.mxu0 0
  %8059 = vmatpush1.bf16.msra.mxu0 %v7891
  %8060 = vmatprep.subr.bf16.mxu0 0
  %8061 = vmatpush1.bf16.msra.mxu0 %v7892
  %8062 = vmatprep.subr.bf16.mxu0 0
  %8063 = vmatpush1.bf16.msra.mxu0 %v7893
  %8064 = vmatprep.subr.bf16.mxu0 0
  %8065 = vmatpush1.bf16.msra.mxu0 %v7894
  %8066 = vmatprep.subr.bf16.mxu0 0
  %8067 = vmatpush1.bf16.msra.mxu0 %v7895
  %8068 = vmatprep.subr.bf16.mxu0 0
  %8069 = vmatpush1.bf16.msra.mxu0 %v7896
  %8070 = vmatprep.subr.bf16.mxu0 0
  %8071 = vmatpush1.bf16.msra.mxu0 %v7897
  %8072 = vmatprep.subr.bf16.mxu0 0
  %8073 = vmatpush1.bf16.msra.mxu0 %v7898
  %8074 = vmatprep.mubr.bf16.mxu0 %v7533
  %8075 = vmatmul.mubr.bf16.gmra.mrb[0].mxu0 %v7532
  %v8076 = vpop.f32.mrb[0].mxu0
  %v8077 = vadd.f32 %v8037, %v8076
  %v8078 = vpop.f32.mrb[0].mxu0
  %v8079 = vpop.f32.mrb[0].mxu0
  %v8080 = vpop.f32.mrb[0].mxu0
  %8081 = vdwg.mxu0
  %8082 = vmatprep.subr.bf16.mxu0 0
  %8083 = vmatpush1.bf16.msra.mxu0 %v7899
  %8084 = vmatprep.subr.bf16.mxu0 0
  %8085 = vmatpush1.bf16.msra.mxu0 %v7900
  %8086 = vmatprep.subr.bf16.mxu0 0
  %8087 = vmatpush1.bf16.msra.mxu0 %v7901
  %8088 = vmatprep.subr.bf16.mxu0 0
  %8089 = vmatpush1.bf16.msra.mxu0 %v7902
  %8090 = vmatprep.subr.bf16.mxu0 0
  %8091 = vmatpush1.bf16.msra.mxu0 %v7960
  %8092 = vmatprep.subr.bf16.mxu0 0
  %8093 = vmatpush1.bf16.msra.mxu0 0
  %8094 = vmatprep.subr.bf16.mxu0 0
  %8095 = vmatpush1.bf16.msra.mxu0 0
  %8096 = vmatprep.subr.bf16.mxu0 0
  %8097 = vmatpush1.bf16.msra.mxu0 0
  %8098 = vmatprep.subr.bf16.mxu0 0
  %8099 = vmatpush1.bf16.msra.mxu0 0
  %8100 = vmatprep.subr.bf16.mxu0 0
  %8101 = vmatpush1.bf16.msra.mxu0 0
  %8102 = vmatprep.subr.bf16.mxu0 0
  %8103 = vmatpush1.bf16.msra.mxu0 0
  %8104 = vmatprep.subr.bf16.mxu0 0
  %8105 = vmatpush1.bf16.msra.mxu0 0
  %8106 = vmatprep.subr.bf16.mxu0 0
  %8107 = vmatpush1.bf16.msra.mxu0 0
  %8108 = vmatprep.subr.bf16.mxu0 0
  %8109 = vmatpush1.bf16.msra.mxu0 0
  %8110 = vmatprep.subr.bf16.mxu0 0
  %8111 = vmatpush1.bf16.msra.mxu0 0
  %8112 = vmatprep.subr.bf16.mxu0 0
  %8113 = vmatpush1.bf16.msra.mxu0 0
  %8114 = vmatprep.mubr.bf16.mxu0 0
  %8115 = vmatmul.mubr.bf16.gmra.mrb[0].mxu0 %v7957
  %v8116 = vpop.f32.mrb[0].mxu0
  %v8117 = vadd.f32 %v8077, %v8116
  %v8118 = vpop.f32.mrb[0].mxu0
  %v8119 = vpop.f32.mrb[0].mxu0
  %v8120 = vpop.f32.mrb[0].mxu0
  %8121 = vdwg.mxu0
  %v8122 = vadd.f32 %v6811, %v8117
  %v8123 = vld [vmem:[%s7] sm:$0x1]
  %v8125 = vlaneseq
  %v8126 = vshrl.u32 %v8125, 7
  %v8127 = vsub.s32 0, %v8126
  %v8128 = vrot.slane %v8123, %v8127
  %v8130 = vadd.f32 %v8122, %v8128
  %v8131 = vmul.f32 %v8130, 0.01
  %v8132 = vmax.f32 %v8130, %v8131
  %v8133 = vld [vmem:[%s8] sm:$0xff]
  %v8134 = vld [vmem:[%s8 + $0x8] sm:$0xff]
  %v8135 = vld [vmem:[%s8 + $0x10] sm:$0xff]
  %v8136 = vld [vmem:[%s8 + $0x18] sm:$0xff]
  %v8137 = vld [vmem:[%s8 + $0x20] sm:$0xff]
  %v8138 = vld [vmem:[%s8 + $0x28] sm:$0xff]
  %v8139 = vld [vmem:[%s8 + $0x30] sm:$0xff]
  %v8140 = vld [vmem:[%s8 + $0x38] sm:$0xff]
  %v8141 = vld [vmem:[%s9] sm:$0x1]
  %v8143 = vlaneseq
  %v8144 = vshrl.u32 %v8143, 7
  %v8145 = vsub.s32 0, %v8144
  %v8146 = vrot.slane %v8141, %v8145
  %vm8148 = vcmask 523264
  %v8150 = vsel %vm8148, %v8132, 0
  %8152 = vmatprep.subr.mxu0 0.0
  %8153 = vmatpush1.msra.mxu0 %v8133
  %8154 = vmatprep.subr.mxu0 0.0
  %8155 = vmatpush1.msra.mxu0 %v8134
  %8156 = vmatprep.subr.mxu0 0.0
  %8157 = vmatpush1.msra.mxu0 %v8135
  %8158 = vmatprep.subr.mxu0 0.0
  %8159 = vmatpush1.msra.mxu0 %v8136
  %8160 = vmatprep.subr.mxu0 0.0
  %8161 = vmatpush1.msra.mxu0 %v8137
  %8162 = vmatprep.subr.mxu0 0.0
  %8163 = vmatpush1.msra.mxu0 %v8138
  %8164 = vmatprep.subr.mxu0 0.0
  %8165 = vmatpush1.msra.mxu0 %v8139
  %8166 = vmatprep.subr.mxu0 0.0
  %8167 = vmatpush1.msra.mxu0 %v8140
  %8168 = vmatprep.subr.mxu0 0.0
  %8169 = vmatpush1.msra.mxu0 0.0
  %8170 = vmatprep.subr.mxu0 0.0
  %8171 = vmatpush1.msra.mxu0 0.0
  %8172 = vmatprep.subr.mxu0 0.0
  %8173 = vmatpush1.msra.mxu0 0.0
  %8174 = vmatprep.subr.mxu0 0.0
  %8175 = vmatpush1.msra.mxu0 0.0
  %8176 = vmatprep.subr.mxu0 0.0
  %8177 = vmatpush1.msra.mxu0 0.0
  %8178 = vmatprep.subr.mxu0 0.0
  %8179 = vmatpush1.msra.mxu0 0.0
  %8180 = vmatprep.subr.mxu0 0.0
  %8181 = vmatpush1.msra.mxu0 0.0
  %8182 = vmatprep.subr.mxu0 0.0
  %8183 = vmatpush1.msra.mxu0 0.0
  %8184 = vmatprep.subr.mxu0 0.0
  %8185 = vmatpush1.msra.mxu0 0.0
  %8186 = vmatprep.subr.mxu0 0.0
  %8187 = vmatpush1.msra.mxu0 0.0
  %8188 = vmatprep.subr.mxu0 0.0
  %8189 = vmatpush1.msra.mxu0 0.0
  %8190 = vmatprep.subr.mxu0 0.0
  %8191 = vmatpush1.msra.mxu0 0.0
  %8192 = vmatprep.subr.mxu0 0.0
  %8193 = vmatpush1.msra.mxu0 0.0
  %8194 = vmatprep.subr.mxu0 0.0
  %8195 = vmatpush1.msra.mxu0 0.0
  %8196 = vmatprep.subr.mxu0 0.0
  %8197 = vmatpush1.msra.mxu0 0.0
  %8198 = vmatprep.subr.mxu0 0.0
  %8199 = vmatpush1.msra.mxu0 0.0
  %8200 = vmatprep.subr.mxu0 0.0
  %8201 = vmatpush1.msra.mxu0 0.0
  %8202 = vmatprep.subr.mxu0 0.0
  %8203 = vmatpush1.msra.mxu0 0.0
  %8204 = vmatprep.subr.mxu0 0.0
  %8205 = vmatpush1.msra.mxu0 0.0
  %8206 = vmatprep.subr.mxu0 0.0
  %8207 = vmatpush1.msra.mxu0 0.0
  %8208 = vmatprep.subr.mxu0 0.0
  %8209 = vmatpush1.msra.mxu0 0.0
  %8210 = vmatprep.subr.mxu0 0.0
  %8211 = vmatpush1.msra.mxu0 0.0
  %8212 = vmatprep.subr.mxu0 0.0
  %8213 = vmatpush1.msra.mxu0 0.0
  %8214 = vmatprep.subr.mxu0 0.0
  %8215 = vmatpush1.msra.mxu0 0.0
  %8216 = vmatprep.mubr.f32.mxu0 0.0
  %8217 = vmatmul.mubr.f32.gmra.mrb[0].mxu0 %v8150
  %v8218 = vpop.f32.mrb[0].mxu0
  %v8219 = vadd.f32 %v8146, %v8218
  %v8220 = vpop.f32.mrb[0].mxu0
  %8221 = vdwg.mxu0
  %v8222 = vmul.f32 %v8219, 0.01
  %v8223 = vmax.f32 %v8219, %v8222
  %v8224 = vld [vmem:[%s10] sm:$0xff]
  %v8225 = vld [vmem:[%s10 + $0x8] sm:$0xff]
  %v8226 = vld [vmem:[%s10 + $0x10] sm:$0xff]
  %v8227 = vld [vmem:[%s10 + $0x18] sm:$0xff]
  %v8228 = vld [vmem:[%s1] sm:$0xff]
  %v8229 = vld [vmem:[%s11] sm:$0xff]
  %vm8230 = vcmask 64512
  %v8232 = vsel %vm8230, %v8228, 0
  %8234 = vmatprep.subr.mxu0 0.0
  %8235 = vmatpush1.msra.mxu0 %v8229
  %8236 = vmatprep.subr.mxu0 0.0
  %8237 = vmatpush1.msra.mxu0 0.0
  %8238 = vmatprep.subr.mxu0 0.0
  %8239 = vmatpush1.msra.mxu0 0.0
  %8240 = vmatprep.subr.mxu0 0.0
  %8241 = vmatpush1.msra.mxu0 0.0
  %8242 = vmatprep.subr.mxu0 0.0
  %8243 = vmatpush1.msra.mxu0 0.0
  %8244 = vmatprep.subr.mxu0 0.0
  %8245 = vmatpush1.msra.mxu0 0.0
  %8246 = vmatprep.subr.mxu0 0.0
  %8247 = vmatpush1.msra.mxu0 0.0
  %8248 = vmatprep.subr.mxu0 0.0
  %8249 = vmatpush1.msra.mxu0 0.0
  %8250 = vmatprep.subr.mxu0 0.0
  %8251 = vmatpush1.msra.mxu0 0.0
  %8252 = vmatprep.subr.mxu0 0.0
  %8253 = vmatpush1.msra.mxu0 0.0
  %8254 = vmatprep.subr.mxu0 0.0
  %8255 = vmatpush1.msra.mxu0 0.0
  %8256 = vmatprep.subr.mxu0 0.0
  %8257 = vmatpush1.msra.mxu0 0.0
  %8258 = vmatprep.subr.mxu0 0.0
  %8259 = vmatpush1.msra.mxu0 0.0
  %8260 = vmatprep.subr.mxu0 0.0
  %8261 = vmatpush1.msra.mxu0 0.0
  %8262 = vmatprep.subr.mxu0 0.0
  %8263 = vmatpush1.msra.mxu0 0.0
  %8264 = vmatprep.subr.mxu0 0.0
  %8265 = vmatpush1.msra.mxu0 0.0
  %8266 = vmatprep.subr.mxu0 0.0
  %8267 = vmatpush1.msra.mxu0 0.0
  %8268 = vmatprep.subr.mxu0 0.0
  %8269 = vmatpush1.msra.mxu0 0.0
  %8270 = vmatprep.subr.mxu0 0.0
  %8271 = vmatpush1.msra.mxu0 0.0
  %8272 = vmatprep.subr.mxu0 0.0
  %8273 = vmatpush1.msra.mxu0 0.0
  %8274 = vmatprep.subr.mxu0 0.0
  %8275 = vmatpush1.msra.mxu0 0.0
  %8276 = vmatprep.subr.mxu0 0.0
  %8277 = vmatpush1.msra.mxu0 0.0
  %8278 = vmatprep.subr.mxu0 0.0
  %8279 = vmatpush1.msra.mxu0 0.0
  %8280 = vmatprep.subr.mxu0 0.0
  %8281 = vmatpush1.msra.mxu0 0.0
  %8282 = vmatprep.subr.mxu0 0.0
  %8283 = vmatpush1.msra.mxu0 0.0
  %8284 = vmatprep.subr.mxu0 0.0
  %8285 = vmatpush1.msra.mxu0 0.0
  %8286 = vmatprep.subr.mxu0 0.0
  %8287 = vmatpush1.msra.mxu0 0.0
  %8288 = vmatprep.subr.mxu0 0.0
  %8289 = vmatpush1.msra.mxu0 0.0
  %8290 = vmatprep.subr.mxu0 0.0
  %8291 = vmatpush1.msra.mxu0 0.0
  %8292 = vmatprep.subr.mxu0 0.0
  %8293 = vmatpush1.msra.mxu0 0.0
  %8294 = vmatprep.subr.mxu0 0.0
  %8295 = vmatpush1.msra.mxu0 0.0
  %8296 = vmatprep.subr.mxu0 0.0
  %8297 = vmatpush1.msra.mxu0 0.0
  %8298 = vmatprep.mubr.f32.mxu0 0.0
  %8299 = vmatmul.mubr.f32.gmra.mrb[0].mxu0 %v8232
  %v8300 = vpop.f32.mrb[0].mxu0
  %v8301 = vadd.f32 0.0, %v8300
  %v8302 = vpop.f32.mrb[0].mxu0
  %8303 = vdwg.mxu0
  %vm8304 = vcmask 261120
  %v8306 = vsel %vm8304, %v8223, 0
  %8308 = vmatprep.subr.mxu0 0.0
  %8309 = vmatpush1.msra.mxu0 %v8224
  %8310 = vmatprep.subr.mxu0 0.0
  %8311 = vmatpush1.msra.mxu0 %v8225
  %8312 = vmatprep.subr.mxu0 0.0
  %8313 = vmatpush1.msra.mxu0 %v8226
  %8314 = vmatprep.subr.mxu0 0.0
  %8315 = vmatpush1.msra.mxu0 %v8227
  %8316 = vmatprep.subr.mxu0 0.0
  %8317 = vmatpush1.msra.mxu0 0.0
  %8318 = vmatprep.subr.mxu0 0.0
  %8319 = vmatpush1.msra.mxu0 0.0
  %8320 = vmatprep.subr.mxu0 0.0
  %8321 = vmatpush1.msra.mxu0 0.0
  %8322 = vmatprep.subr.mxu0 0.0
  %8323 = vmatpush1.msra.mxu0 0.0
  %8324 = vmatprep.subr.mxu0 0.0
  %8325 = vmatpush1.msra.mxu0 0.0
  %8326 = vmatprep.subr.mxu0 0.0
  %8327 = vmatpush1.msra.mxu0 0.0
  %8328 = vmatprep.subr.mxu0 0.0
  %8329 = vmatpush1.msra.mxu0 0.0
  %8330 = vmatprep.subr.mxu0 0.0
  %8331 = vmatpush1.msra.mxu0 0.0
  %8332 = vmatprep.subr.mxu0 0.0
  %8333 = vmatpush1.msra.mxu0 0.0
  %8334 = vmatprep.subr.mxu0 0.0
  %8335 = vmatpush1.msra.mxu0 0.0
  %8336 = vmatprep.subr.mxu0 0.0
  %8337 = vmatpush1.msra.mxu0 0.0
  %8338 = vmatprep.subr.mxu0 0.0
  %8339 = vmatpush1.msra.mxu0 0.0
  %8340 = vmatprep.subr.mxu0 0.0
  %8341 = vmatpush1.msra.mxu0 0.0
  %8342 = vmatprep.subr.mxu0 0.0
  %8343 = vmatpush1.msra.mxu0 0.0
  %8344 = vmatprep.subr.mxu0 0.0
  %8345 = vmatpush1.msra.mxu0 0.0
  %8346 = vmatprep.subr.mxu0 0.0
  %8347 = vmatpush1.msra.mxu0 0.0
  %8348 = vmatprep.subr.mxu0 0.0
  %8349 = vmatpush1.msra.mxu0 0.0
  %8350 = vmatprep.subr.mxu0 0.0
  %8351 = vmatpush1.msra.mxu0 0.0
  %8352 = vmatprep.subr.mxu0 0.0
  %8353 = vmatpush1.msra.mxu0 0.0
  %8354 = vmatprep.subr.mxu0 0.0
  %8355 = vmatpush1.msra.mxu0 0.0
  %8356 = vmatprep.subr.mxu0 0.0
  %8357 = vmatpush1.msra.mxu0 0.0
  %8358 = vmatprep.subr.mxu0 0.0
  %8359 = vmatpush1.msra.mxu0 0.0
  %8360 = vmatprep.subr.mxu0 0.0
  %8361 = vmatpush1.msra.mxu0 0.0
  %8362 = vmatprep.subr.mxu0 0.0
  %8363 = vmatpush1.msra.mxu0 0.0
  %8364 = vmatprep.subr.mxu0 0.0
  %8365 = vmatpush1.msra.mxu0 0.0
  %8366 = vmatprep.subr.mxu0 0.0
  %8367 = vmatpush1.msra.mxu0 0.0
  %8368 = vmatprep.subr.mxu0 0.0
  %8369 = vmatpush1.msra.mxu0 0.0
  %8370 = vmatprep.subr.mxu0 0.0
  %8371 = vmatpush1.msra.mxu0 0.0
  %8372 = vmatprep.mubr.f32.mxu0 0.0
  %8373 = vmatmul.mubr.f32.gmra.mrb[0].mxu0 %v8306
  %v8374 = vpop.f32.mrb[0].mxu0
  %v8375 = vadd.f32 %v8301, %v8374
  %v8376 = vpop.f32.mrb[0].mxu0
  %8377 = vdwg.mxu0
  %v8378 = vld [vmem:[%s12] sm:$0x1]
  %v8380 = vlaneseq
  %v8381 = vshrl.u32 %v8380, 7
  %v8382 = vsub.s32 0, %v8381
  %v8383 = vrot.slane %v8378, %v8382
  %v8385 = vadd.f32 %v8375, %v8383
  %v8386 = vmul.f32 %v8385, %v8385
  %v8387 = vsel %vm8230, %v8386, 0.0
  %8388 = vadd.xlane.f32.xlu0 %v8387
  %v8389 = vpop.xlane.xlu0 %8388
  %v8390 = vadd.f32 %v8389, 1e-12
  %v8391 = vrsqrt.pop %v8390
  %v8392 = vmul.f32 %v8385, %v8391
  %8393 = vst.msk [vmem:[%s13] sm:$0xff] %vm8230, %v8392
  // Predicated region
  $region54: #{actor_forward.1} parent=0 // pred_check
    _
  $region55: #{actor_forward.1} parent=0 // pred_check_branch
    %8395 = sbr.rel (0) target = $region57
  $region56: #{actor_forward.1} parent=0 // pred_region
    _
  $region57: #{actor_forward.1} parent=0 // pred_fallthru
    _
  // Predicated region
  $region58: #{actor_forward.1} parent=0 // pred_check
    _
  $region59: #{actor_forward.1} parent=0 // pred_check_branch
    %8397 = sbr.rel (0) target = $region61
  $region60: #{actor_forward.1} parent=0 // pred_region
    _
  $region61: #{actor_forward.1} parent=0 // pred_fallthru
    _

</llo_original>
